<compile_context>
chip_gen: v5e
topology: v5e:2x2
jax: 0.10.0
libtpu: 0.0.40
codegen_flags: <defaults>
</compile_context>

<pallas_src>
import functools

import jax
import jax.numpy as jnp
from jax.experimental import pallas as pl
from jax.experimental.pallas import tpu as pltpu


def _upsample_kernel(w_ref, e_ref, x_ref, o_ref, *, th, s, cout):
    """One (image, row-tile) grid step.

    w_ref: (Cout*s*s, Cin)      rows ordered (kh, kw, co)   -- resident
    e_ref: (s, W, W*s)          f32 0/1 interleave mats, E[kw, w, w*s+kw] = 1
    x_ref: (1, Cin, Th, W)      input row tile
    o_ref: (1, Cout, Th, s*W*s) output row tile in the fused final layout
    """
    w_all = w_ref[...]
    e_mats = [e_ref[kw] for kw in range(s)]          # (W, W*s) each, hoisted

    for h in range(th):                              # static unroll over rows
        xh = x_ref[0, :, h, :]                       # (Cin, W)
        # Channel GEMM: all (kh, kw, co) rows against this pixel row.
        y = jnp.dot(w_all, xh,
                    preferred_element_type=jnp.float32,
                    precision=jax.lax.Precision.HIGHEST)       # (Cout*s*s, W)
        parts = []
        for kh in range(s):
            z = None
            for kw in range(s):
                r0 = (kh * s + kw) * cout
                # Lane interleave: column w of y lands at lane w*s + kw.
                zk = jnp.dot(y[r0:r0 + cout, :], e_mats[kw],
                             preferred_element_type=jnp.float32,
                             precision=jax.lax.Precision.HIGHEST)  # (Cout, W*s)
                z = zk if z is None else z + zk
            parts.append(z)
        row = jnp.concatenate(parts, axis=-1)        # (Cout, s*W*s)
        o_ref[0, :, h, :] = row.astype(o_ref.dtype)


def _pick_row_tile(n, h, w, cin, cout, s, itemsize):
    """Largest sublane-aligned row tile that (a) divides H, (b) fits a
    conservative per-step VMEM budget (double-buffered blocks + f32
    intermediates; safe under v5e's 16 MiB default scoped limit and v7x's
    64 MiB physical VMEM) and (c) keeps >= 4 parallel grid steps when possible
    (v7x has 2 TensorCores)."""
    cands = sorted({t for t in range(8, h + 1, 8) if h % t == 0} | {h},
                   reverse=True)
    cands = [t for t in cands if t <= 32] or [min(cands)]

    ncols = cout * s * s
    budget = 12 * 1024 * 1024

    def vmem_bytes(t):
        return (2 * itemsize * cin * t * w                 # x block (2 bufs)
                + 2 * itemsize * cout * t * s * w * s      # out block (2 bufs)
                + 2 * itemsize * ncols * cin               # weight block (2 bufs)
                + 2 * 4 * s * w * w * s                    # interleave mats (2 bufs)
                + 4 * ncols * w + 4 * cout * w * s)        # f32 dot intermediates

    fitting = [t for t in cands if vmem_bytes(t) <= budget] or [min(cands)]
    for t in fitting:                                      # biggest tile first
        if n * (h // t) >= 4:
            return t
    return fitting[0]


@functools.partial(jax.jit, static_argnames=("stride",))
def upsample_block(x, weight, *, stride):
    """ConvTranspose2d(Cin, Cout, kernel_size=stride, stride=stride, bias=False).

    x:      (N, Cin, H, W)     NCHW, like PyTorch
    weight: (Cin, Cout, s, s)  PyTorch ConvTranspose2d weight layout
    returns (N, Cout, H*s, W*s) in x.dtype
    """
    n, cin, h, w = x.shape
    cin_w, cout, s, s2 = weight.shape
    assert cin == cin_w and s == stride and s2 == stride

    dtype = x.dtype
    itemsize = jnp.dtype(dtype).itemsize
    ncols = cout * s * s

    # Tiny weight relayout: (Cin, Cout, s, s) -> (Cout*s*s, Cin), rows = (kh, kw, co).
    w2 = jnp.transpose(weight, (2, 3, 1, 0)).reshape(ncols, cin).astype(dtype)

    # 0/1 interleave matrices E[kw, w, w*s + kw] = 1 (f32 so the selection pass
    # through the MXU is exact).
    lane = jnp.arange(w * s)[None, None, :]
    src = jnp.arange(w)[None, :, None] * s + jnp.arange(s)[:, None, None]
    e_mats = (lane == src).astype(jnp.float32)             # (s, W, W*s)

    th = _pick_row_tile(n, h, w, cin, cout, s, itemsize)
    assert h % th == 0
    grid = (n, h // th)

    cost = pl.CostEstimate(
        flops=(2 * n * h * w * cin * ncols                 # channel GEMM
               + 2 * n * h * s * s * cout * w * w * s),    # interleave GEMMs
        transcendentals=0,
        bytes_accessed=((x.size + w2.size + n * ncols * h * w) * itemsize
                        + e_mats.size * 4),
    )

    kernel = functools.partial(_upsample_kernel, th=th, s=s, cout=cout)

    out5 = pl.pallas_call(
        kernel,
        out_shape=jax.ShapeDtypeStruct((n, cout, h, s * w * s), dtype),
        grid_spec=pltpu.PrefetchScalarGridSpec(
            num_scalar_prefetch=0,
            grid=grid,
            in_specs=[
                pl.BlockSpec((ncols, cin), lambda ni, ti: (0, 0)),
                pl.BlockSpec((s, w, w * s), lambda ni, ti: (0, 0, 0)),
                pl.BlockSpec((1, cin, th, w), lambda ni, ti: (ni, 0, ti, 0)),
            ],
            out_specs=pl.BlockSpec((1, cout, th, s * w * s),
                                   lambda ni, ti: (ni, 0, ti, 0)),
        ),
        compiler_params=pltpu.CompilerParams(
            dimension_semantics=("parallel", "parallel"),
            vmem_limit_bytes=32 * 1024 * 1024,
        ),
        cost_estimate=cost,
    )(w2, e_mats, x)

    # (N, Cout, H, s*W*s) -> (N, Cout, H*s, W*s): contiguous merge, free bitcast.
    return out5.reshape(n, cout, h * s, w * s)


def _reference(x, weight, stride):
    # Pure-JAX high-precision reference for the non-overlapping transposed conv.
    n, cin, h, w = x.shape
    _, cout, s, _ = weight.shape
    out = jnp.einsum(
        "nihw,iokl->nohkwl",
        x.astype(jnp.float32), weight.astype(jnp.float32),
        precision=jax.lax.Precision.HIGHEST,
    )
    return out.reshape(n, cout, h * s, w * s)


if __name__ == "__main__":
    key = jax.random.PRNGKey(0)
    k_x, k_w = jax.random.split(key)

    # Small shapes: batch=2, input_channels=4, spatial=16, out_channels=8, stride=2
    N, Cin, H, W = 2, 4, 16, 16
    Cout, stride = 8, 2

    x = jax.random.normal(k_x, (N, Cin, H, W), dtype=jnp.float32)
    weight = 0.1 * jax.random.normal(
        k_w, (Cin, Cout, stride, stride), dtype=jnp.float32
    )  # conv_bias=False -> no bias term.

    # f32 path (PyTorch module default dtype).
    out = jax.block_until_ready(upsample_block(x, weight, stride=stride))
    ref = _reference(x, weight, stride)
    assert out.shape == (N, Cout, H * stride, W * stride), out.shape
    assert out.dtype == x.dtype
    assert jnp.allclose(out, ref, atol=1e-3, rtol=1e-3), "f32 mismatch vs reference"

    # bf16 path: operands stay bf16 into the MXU (f32 accumulation), bf16 output.
    x_bf = x.astype(jnp.bfloat16)
    w_bf = weight.astype(jnp.bfloat16)
    out_bf = jax.block_until_ready(upsample_block(x_bf, w_bf, stride=stride))
    ref_bf = _reference(x_bf, w_bf, stride)
    assert out_bf.dtype == jnp.bfloat16
    assert jnp.allclose(
        out_bf.astype(jnp.float32), ref_bf, atol=3e-2, rtol=3e-2
    ), "bf16 mismatch vs reference"

    print("KERNEL_OK")
</pallas_src>

<mosaic_0001>
module attributes {stable_mosaic.version = 11 : i64} {
  func.func @_upsample_kernel(%arg0: i32, %arg1: i32, %arg2: memref<32x4xf32, #tpu.memory_space<vmem>>, %arg3: memref<2x16x32xf32, #tpu.memory_space<vmem>>, %arg4: memref<1x4x8x16xf32, #tpu.memory_space<vmem>>, %arg5: memref<1x8x8x64xf32, #tpu.memory_space<vmem>>) attributes {dimension_semantics = [#tpu.dimension_semantics<parallel>, #tpu.dimension_semantics<parallel>], iteration_bounds = array<i64: 2, 2>, scalar_prefetch = 0 : i64, scratch_operands = 0 : i64, tpu.core_type = #tpu.core_type<tc>, window_params = [{pipeline_mode = #tpu.pipeline_mode<synchronous>, transform_indices = @transform_0, window_bounds = array<i64: 32, 4>}, {pipeline_mode = #tpu.pipeline_mode<synchronous>, transform_indices = @transform_1, window_bounds = array<i64: 2, 16, 32>}, {transform_indices = @transform_2, window_bounds = array<i64: 1, 4, 8, 16>}, {transform_indices = @transform_3, window_bounds = array<i64: 1, 8, 8, 64>}]} {
    %c0 = arith.constant 0 : index
    %c0_0 = arith.constant 0 : index
    %0 = vector.load %arg2[%c0, %c0_0] : memref<32x4xf32, #tpu.memory_space<vmem>>, vector<32x4xf32>
    %c0_1 = arith.constant 0 : index
    %c0_2 = arith.constant 0 : index
    %c0_3 = arith.constant 0 : index
    %1 = vector.load %arg3[%c0_1, %c0_2, %c0_3] : memref<2x16x32xf32, #tpu.memory_space<vmem>>, vector<1x16x32xf32>
    %2 = vector.shape_cast %1 : vector<1x16x32xf32> to vector<16x32xf32>
    %c1 = arith.constant 1 : index
    %c0_4 = arith.constant 0 : index
    %c0_5 = arith.constant 0 : index
    %3 = vector.load %arg3[%c1, %c0_4, %c0_5] : memref<2x16x32xf32, #tpu.memory_space<vmem>>, vector<1x16x32xf32>
    %4 = vector.shape_cast %3 : vector<1x16x32xf32> to vector<16x32xf32>
    %c0_6 = arith.constant 0 : index
    %c0_7 = arith.constant 0 : index
    %c0_8 = arith.constant 0 : index
    %c0_9 = arith.constant 0 : index
    %5 = vector.load %arg4[%c0_6, %c0_7, %c0_8, %c0_9] : memref<1x4x8x16xf32, #tpu.memory_space<vmem>>, vector<1x4x1x16xf32>
    %6 = vector.shape_cast %5 : vector<1x4x1x16xf32> to vector<4x16xf32>
    %cst = arith.constant dense<0.000000e+00> : vector<32x16xf32>
    %7 = tpu.matmul %0, %6, %cst {dimension_numbers = #tpu.dot_dimension_numbers<[1], [0], [0], [1], [0, 0, 1, 1], [], []>, precision = #tpu.contract_precision<fp32>} : vector<32x4xf32>, vector<4x16xf32>, vector<32x16xf32> -> vector<32x16xf32>
    %8 = vector.extract_strided_slice %7 {offsets = [0, 0], sizes = [8, 16], strides = [1, 1]} : vector<32x16xf32> to vector<8x16xf32>
    %cst_10 = arith.constant dense<0.000000e+00> : vector<8x32xf32>
    %9 = tpu.matmul %8, %2, %cst_10 {dimension_numbers = #tpu.dot_dimension_numbers<[1], [0], [0], [1], [0, 0, 1, 1], [], []>, precision = #tpu.contract_precision<fp32>} : vector<8x16xf32>, vector<16x32xf32>, vector<8x32xf32> -> vector<8x32xf32>
    %10 = vector.extract_strided_slice %7 {offsets = [8, 0], sizes = [8, 16], strides = [1, 1]} : vector<32x16xf32> to vector<8x16xf32>
    %cst_11 = arith.constant dense<0.000000e+00> : vector<8x32xf32>
    %11 = tpu.matmul %10, %4, %cst_11 {dimension_numbers = #tpu.dot_dimension_numbers<[1], [0], [0], [1], [0, 0, 1, 1], [], []>, precision = #tpu.contract_precision<fp32>} : vector<8x16xf32>, vector<16x32xf32>, vector<8x32xf32> -> vector<8x32xf32>
    %12 = arith.addf %9, %11 : vector<8x32xf32>
    %13 = vector.extract_strided_slice %7 {offsets = [16, 0], sizes = [8, 16], strides = [1, 1]} : vector<32x16xf32> to vector<8x16xf32>
    %cst_12 = arith.constant dense<0.000000e+00> : vector<8x32xf32>
    %14 = tpu.matmul %13, %2, %cst_12 {dimension_numbers = #tpu.dot_dimension_numbers<[1], [0], [0], [1], [0, 0, 1, 1], [], []>, precision = #tpu.contract_precision<fp32>} : vector<8x16xf32>, vector<16x32xf32>, vector<8x32xf32> -> vector<8x32xf32>
    %15 = vector.extract_strided_slice %7 {offsets = [24, 0], sizes = [8, 16], strides = [1, 1]} : vector<32x16xf32> to vector<8x16xf32>
    %cst_13 = arith.constant dense<0.000000e+00> : vector<8x32xf32>
    %16 = tpu.matmul %15, %4, %cst_13 {dimension_numbers = #tpu.dot_dimension_numbers<[1], [0], [0], [1], [0, 0, 1, 1], [], []>, precision = #tpu.contract_precision<fp32>} : vector<8x16xf32>, vector<16x32xf32>, vector<8x32xf32> -> vector<8x32xf32>
    %17 = arith.addf %14, %16 : vector<8x32xf32>
    %18 = tpu.concatenate %12, %17 in 1 : vector<8x32xf32>, vector<8x32xf32> -> vector<8x64xf32>
    %c0_14 = arith.constant 0 : index
    %c0_15 = arith.constant 0 : index
    %c0_16 = arith.constant 0 : index
    %c0_17 = arith.constant 0 : index
    %19 = vector.load %arg5[%c0_14, %c0_15, %c0_16, %c0_17] : memref<1x8x8x64xf32, #tpu.memory_space<vmem>>, vector<1x8x1x64xf32>
    %20 = vector.shape_cast %19 : vector<1x8x1x64xf32> to vector<8x64xf32>
    %21 = vector.shape_cast %18 : vector<8x64xf32> to vector<1x8x1x64xf32>
    tpu.vector_store %arg5[%c0_14, %c0_15, %c0_16, %c0_17], %21 {strides = array<i32>} : memref<1x8x8x64xf32, #tpu.memory_space<vmem>>, vector<1x8x1x64xf32>,
    %c0_18 = arith.constant 0 : index
    %c0_19 = arith.constant 0 : index
    %c1_20 = arith.constant 1 : index
    %c0_21 = arith.constant 0 : index
    %22 = vector.load %arg4[%c0_18, %c0_19, %c1_20, %c0_21] : memref<1x4x8x16xf32, #tpu.memory_space<vmem>>, vector<1x4x1x16xf32>
    %23 = vector.shape_cast %22 : vector<1x4x1x16xf32> to vector<4x16xf32>
    %cst_22 = arith.constant dense<0.000000e+00> : vector<32x16xf32>
    %24 = tpu.matmul %0, %23, %cst_22 {dimension_numbers = #tpu.dot_dimension_numbers<[1], [0], [0], [1], [0, 0, 1, 1], [], []>, precision = #tpu.contract_precision<fp32>} : vector<32x4xf32>, vector<4x16xf32>, vector<32x16xf32> -> vector<32x16xf32>
    %25 = vector.extract_strided_slice %24 {offsets = [0, 0], sizes = [8, 16], strides = [1, 1]} : vector<32x16xf32> to vector<8x16xf32>
    %cst_23 = arith.constant dense<0.000000e+00> : vector<8x32xf32>
    %26 = tpu.matmul %25, %2, %cst_23 {dimension_numbers = #tpu.dot_dimension_numbers<[1], [0], [0], [1], [0, 0, 1, 1], [], []>, precision = #tpu.contract_precision<fp32>} : vector<8x16xf32>, vector<16x32xf32>, vector<8x32xf32> -> vector<8x32xf32>
    %27 = vector.extract_strided_slice %24 {offsets = [8, 0], sizes = [8, 16], strides = [1, 1]} : vector<32x16xf32> to vector<8x16xf32>
    %cst_24 = arith.constant dense<0.000000e+00> : vector<8x32xf32>
    %28 = tpu.matmul %27, %4, %cst_24 {dimension_numbers = #tpu.dot_dimension_numbers<[1], [0], [0], [1], [0, 0, 1, 1], [], []>, precision = #tpu.contract_precision<fp32>} : vector<8x16xf32>, vector<16x32xf32>, vector<8x32xf32> -> vector<8x32xf32>
    %29 = arith.addf %26, %28 : vector<8x32xf32>
    %30 = vector.extract_strided_slice %24 {offsets = [16, 0], sizes = [8, 16], strides = [1, 1]} : vector<32x16xf32> to vector<8x16xf32>
    %cst_25 = arith.constant dense<0.000000e+00> : vector<8x32xf32>
    %31 = tpu.matmul %30, %2, %cst_25 {dimension_numbers = #tpu.dot_dimension_numbers<[1], [0], [0], [1], [0, 0, 1, 1], [], []>, precision = #tpu.contract_precision<fp32>} : vector<8x16xf32>, vector<16x32xf32>, vector<8x32xf32> -> vector<8x32xf32>
    %32 = vector.extract_strided_slice %24 {offsets = [24, 0], sizes = [8, 16], strides = [1, 1]} : vector<32x16xf32> to vector<8x16xf32>
    %cst_26 = arith.constant dense<0.000000e+00> : vector<8x32xf32>
    %33 = tpu.matmul %32, %4, %cst_26 {dimension_numbers = #tpu.dot_dimension_numbers<[1], [0], [0], [1], [0, 0, 1, 1], [], []>, precision = #tpu.contract_precision<fp32>} : vector<8x16xf32>, vector<16x32xf32>, vector<8x32xf32> -> vector<8x32xf32>
    %34 = arith.addf %31, %33 : vector<8x32xf32>
    %35 = tpu.concatenate %29, %34 in 1 : vector<8x32xf32>, vector<8x32xf32> -> vector<8x64xf32>
    %c0_27 = arith.constant 0 : index
    %c0_28 = arith.constant 0 : index
    %c1_29 = arith.constant 1 : index
    %c0_30 = arith.constant 0 : index
    %36 = vector.load %arg5[%c0_27, %c0_28, %c1_29, %c0_30] : memref<1x8x8x64xf32, #tpu.memory_space<vmem>>, vector<1x8x1x64xf32>
    %37 = vector.shape_cast %36 : vector<1x8x1x64xf32> to vector<8x64xf32>
    %38 = vector.shape_cast %35 : vector<8x64xf32> to vector<1x8x1x64xf32>
    tpu.vector_store %arg5[%c0_27, %c0_28, %c1_29, %c0_30], %38 {strides = array<i32>} : memref<1x8x8x64xf32, #tpu.memory_space<vmem>>, vector<1x8x1x64xf32>,
    %c0_31 = arith.constant 0 : index
    %c0_32 = arith.constant 0 : index
    %c2 = arith.constant 2 : index
    %c0_33 = arith.constant 0 : index
    %39 = vector.load %arg4[%c0_31, %c0_32, %c2, %c0_33] : memref<1x4x8x16xf32, #tpu.memory_space<vmem>>, vector<1x4x1x16xf32>
    %40 = vector.shape_cast %39 : vector<1x4x1x16xf32> to vector<4x16xf32>
    %cst_34 = arith.constant dense<0.000000e+00> : vector<32x16xf32>
    %41 = tpu.matmul %0, %40, %cst_34 {dimension_numbers = #tpu.dot_dimension_numbers<[1], [0], [0], [1], [0, 0, 1, 1], [], []>, precision = #tpu.contract_precision<fp32>} : vector<32x4xf32>, vector<4x16xf32>, vector<32x16xf32> -> vector<32x16xf32>
    %42 = vector.extract_strided_slice %41 {offsets = [0, 0], sizes = [8, 16], strides = [1, 1]} : vector<32x16xf32> to vector<8x16xf32>
    %cst_35 = arith.constant dense<0.000000e+00> : vector<8x32xf32>
    %43 = tpu.matmul %42, %2, %cst_35 {dimension_numbers = #tpu.dot_dimension_numbers<[1], [0], [0], [1], [0, 0, 1, 1], [], []>, precision = #tpu.contract_precision<fp32>} : vector<8x16xf32>, vector<16x32xf32>, vector<8x32xf32> -> vector<8x32xf32>
    %44 = vector.extract_strided_slice %41 {offsets = [8, 0], sizes = [8, 16], strides = [1, 1]} : vector<32x16xf32> to vector<8x16xf32>
    %cst_36 = arith.constant dense<0.000000e+00> : vector<8x32xf32>
    %45 = tpu.matmul %44, %4, %cst_36 {dimension_numbers = #tpu.dot_dimension_numbers<[1], [0], [0], [1], [0, 0, 1, 1], [], []>, precision = #tpu.contract_precision<fp32>} : vector<8x16xf32>, vector<16x32xf32>, vector<8x32xf32> -> vector<8x32xf32>
    %46 = arith.addf %43, %45 : vector<8x32xf32>
    %47 = vector.extract_strided_slice %41 {offsets = [16, 0], sizes = [8, 16], strides = [1, 1]} : vector<32x16xf32> to vector<8x16xf32>
    %cst_37 = arith.constant dense<0.000000e+00> : vector<8x32xf32>
    %48 = tpu.matmul %47, %2, %cst_37 {dimension_numbers = #tpu.dot_dimension_numbers<[1], [0], [0], [1], [0, 0, 1, 1], [], []>, precision = #tpu.contract_precision<fp32>} : vector<8x16xf32>, vector<16x32xf32>, vector<8x32xf32> -> vector<8x32xf32>
    %49 = vector.extract_strided_slice %41 {offsets = [24, 0], sizes = [8, 16], strides = [1, 1]} : vector<32x16xf32> to vector<8x16xf32>
    %cst_38 = arith.constant dense<0.000000e+00> : vector<8x32xf32>
    %50 = tpu.matmul %49, %4, %cst_38 {dimension_numbers = #tpu.dot_dimension_numbers<[1], [0], [0], [1], [0, 0, 1, 1], [], []>, precision = #tpu.contract_precision<fp32>} : vector<8x16xf32>, vector<16x32xf32>, vector<8x32xf32> -> vector<8x32xf32>
    %51 = arith.addf %48, %50 : vector<8x32xf32>
    %52 = tpu.concatenate %46, %51 in 1 : vector<8x32xf32>, vector<8x32xf32> -> vector<8x64xf32>
    %c0_39 = arith.constant 0 : index
    %c0_40 = arith.constant 0 : index
    %c2_41 = arith.constant 2 : index
    %c0_42 = arith.constant 0 : index
    %53 = vector.load %arg5[%c0_39, %c0_40, %c2_41, %c0_42] : memref<1x8x8x64xf32, #tpu.memory_space<vmem>>, vector<1x8x1x64xf32>
    %54 = vector.shape_cast %53 : vector<1x8x1x64xf32> to vector<8x64xf32>
    %55 = vector.shape_cast %52 : vector<8x64xf32> to vector<1x8x1x64xf32>
    tpu.vector_store %arg5[%c0_39, %c0_40, %c2_41, %c0_42], %55 {strides = array<i32>} : memref<1x8x8x64xf32, #tpu.memory_space<vmem>>, vector<1x8x1x64xf32>,
    %c0_43 = arith.constant 0 : index
    %c0_44 = arith.constant 0 : index
    %c3 = arith.constant 3 : index
    %c0_45 = arith.constant 0 : index
    %56 = vector.load %arg4[%c0_43, %c0_44, %c3, %c0_45] : memref<1x4x8x16xf32, #tpu.memory_space<vmem>>, vector<1x4x1x16xf32>
    %57 = vector.shape_cast %56 : vector<1x4x1x16xf32> to vector<4x16xf32>
    %cst_46 = arith.constant dense<0.000000e+00> : vector<32x16xf32>
    %58 = tpu.matmul %0, %57, %cst_46 {dimension_numbers = #tpu.dot_dimension_numbers<[1], [0], [0], [1], [0, 0, 1, 1], [], []>, precision = #tpu.contract_precision<fp32>} : vector<32x4xf32>, vector<4x16xf32>, vector<32x16xf32> -> vector<32x16xf32>
    %59 = vector.extract_strided_slice %58 {offsets = [0, 0], sizes = [8, 16], strides = [1, 1]} : vector<32x16xf32> to vector<8x16xf32>
    %cst_47 = arith.constant dense<0.000000e+00> : vector<8x32xf32>
    %60 = tpu.matmul %59, %2, %cst_47 {dimension_numbers = #tpu.dot_dimension_numbers<[1], [0], [0], [1], [0, 0, 1, 1], [], []>, precision = #tpu.contract_precision<fp32>} : vector<8x16xf32>, vector<16x32xf32>, vector<8x32xf32> -> vector<8x32xf32>
    %61 = vector.extract_strided_slice %58 {offsets = [8, 0], sizes = [8, 16], strides = [1, 1]} : vector<32x16xf32> to vector<8x16xf32>
    %cst_48 = arith.constant dense<0.000000e+00> : vector<8x32xf32>
    %62 = tpu.matmul %61, %4, %cst_48 {dimension_numbers = #tpu.dot_dimension_numbers<[1], [0], [0], [1], [0, 0, 1, 1], [], []>, precision = #tpu.contract_precision<fp32>} : vector<8x16xf32>, vector<16x32xf32>, vector<8x32xf32> -> vector<8x32xf32>
    %63 = arith.addf %60, %62 : vector<8x32xf32>
    %64 = vector.extract_strided_slice %58 {offsets = [16, 0], sizes = [8, 16], strides = [1, 1]} : vector<32x16xf32> to vector<8x16xf32>
    %cst_49 = arith.constant dense<0.000000e+00> : vector<8x32xf32>
    %65 = tpu.matmul %64, %2, %cst_49 {dimension_numbers = #tpu.dot_dimension_numbers<[1], [0], [0], [1], [0, 0, 1, 1], [], []>, precision = #tpu.contract_precision<fp32>} : vector<8x16xf32>, vector<16x32xf32>, vector<8x32xf32> -> vector<8x32xf32>
    %66 = vector.extract_strided_slice %58 {offsets = [24, 0], sizes = [8, 16], strides = [1, 1]} : vector<32x16xf32> to vector<8x16xf32>
    %cst_50 = arith.constant dense<0.000000e+00> : vector<8x32xf32>
    %67 = tpu.matmul %66, %4, %cst_50 {dimension_numbers = #tpu.dot_dimension_numbers<[1], [0], [0], [1], [0, 0, 1, 1], [], []>, precision = #tpu.contract_precision<fp32>} : vector<8x16xf32>, vector<16x32xf32>, vector<8x32xf32> -> vector<8x32xf32>
    %68 = arith.addf %65, %67 : vector<8x32xf32>
    %69 = tpu.concatenate %63, %68 in 1 : vector<8x32xf32>, vector<8x32xf32> -> vector<8x64xf32>
    %c0_51 = arith.constant 0 : index
    %c0_52 = arith.constant 0 : index
    %c3_53 = arith.constant 3 : index
    %c0_54 = arith.constant 0 : index
    %70 = vector.load %arg5[%c0_51, %c0_52, %c3_53, %c0_54] : memref<1x8x8x64xf32, #tpu.memory_space<vmem>>, vector<1x8x1x64xf32>
    %71 = vector.shape_cast %70 : vector<1x8x1x64xf32> to vector<8x64xf32>
    %72 = vector.shape_cast %69 : vector<8x64xf32> to vector<1x8x1x64xf32>
    tpu.vector_store %arg5[%c0_51, %c0_52, %c3_53, %c0_54], %72 {strides = array<i32>} : memref<1x8x8x64xf32, #tpu.memory_space<vmem>>, vector<1x8x1x64xf32>,
    %c0_55 = arith.constant 0 : index
    %c0_56 = arith.constant 0 : index
    %c4 = arith.constant 4 : index
    %c0_57 = arith.constant 0 : index
    %73 = vector.load %arg4[%c0_55, %c0_56, %c4, %c0_57] : memref<1x4x8x16xf32, #tpu.memory_space<vmem>>, vector<1x4x1x16xf32>
    %74 = vector.shape_cast %73 : vector<1x4x1x16xf32> to vector<4x16xf32>
    %cst_58 = arith.constant dense<0.000000e+00> : vector<32x16xf32>
    %75 = tpu.matmul %0, %74, %cst_58 {dimension_numbers = #tpu.dot_dimension_numbers<[1], [0], [0], [1], [0, 0, 1, 1], [], []>, precision = #tpu.contract_precision<fp32>} : vector<32x4xf32>, vector<4x16xf32>, vector<32x16xf32> -> vector<32x16xf32>
    %76 = vector.extract_strided_slice %75 {offsets = [0, 0], sizes = [8, 16], strides = [1, 1]} : vector<32x16xf32> to vector<8x16xf32>
    %cst_59 = arith.constant dense<0.000000e+00> : vector<8x32xf32>
    %77 = tpu.matmul %76, %2, %cst_59 {dimension_numbers = #tpu.dot_dimension_numbers<[1], [0], [0], [1], [0, 0, 1, 1], [], []>, precision = #tpu.contract_precision<fp32>} : vector<8x16xf32>, vector<16x32xf32>, vector<8x32xf32> -> vector<8x32xf32>
    %78 = vector.extract_strided_slice %75 {offsets = [8, 0], sizes = [8, 16], strides = [1, 1]} : vector<32x16xf32> to vector<8x16xf32>
    %cst_60 = arith.constant dense<0.000000e+00> : vector<8x32xf32>
    %79 = tpu.matmul %78, %4, %cst_60 {dimension_numbers = #tpu.dot_dimension_numbers<[1], [0], [0], [1], [0, 0, 1, 1], [], []>, precision = #tpu.contract_precision<fp32>} : vector<8x16xf32>, vector<16x32xf32>, vector<8x32xf32> -> vector<8x32xf32>
    %80 = arith.addf %77, %79 : vector<8x32xf32>
    %81 = vector.extract_strided_slice %75 {offsets = [16, 0], sizes = [8, 16], strides = [1, 1]} : vector<32x16xf32> to vector<8x16xf32>
    %cst_61 = arith.constant dense<0.000000e+00> : vector<8x32xf32>
    %82 = tpu.matmul %81, %2, %cst_61 {dimension_numbers = #tpu.dot_dimension_numbers<[1], [0], [0], [1], [0, 0, 1, 1], [], []>, precision = #tpu.contract_precision<fp32>} : vector<8x16xf32>, vector<16x32xf32>, vector<8x32xf32> -> vector<8x32xf32>
    %83 = vector.extract_strided_slice %75 {offsets = [24, 0], sizes = [8, 16], strides = [1, 1]} : vector<32x16xf32> to vector<8x16xf32>
    %cst_62 = arith.constant dense<0.000000e+00> : vector<8x32xf32>
    %84 = tpu.matmul %83, %4, %cst_62 {dimension_numbers = #tpu.dot_dimension_numbers<[1], [0], [0], [1], [0, 0, 1, 1], [], []>, precision = #tpu.contract_precision<fp32>} : vector<8x16xf32>, vector<16x32xf32>, vector<8x32xf32> -> vector<8x32xf32>
    %85 = arith.addf %82, %84 : vector<8x32xf32>
    %86 = tpu.concatenate %80, %85 in 1 : vector<8x32xf32>, vector<8x32xf32> -> vector<8x64xf32>
    %c0_63 = arith.constant 0 : index
    %c0_64 = arith.constant 0 : index
    %c4_65 = arith.constant 4 : index
    %c0_66 = arith.constant 0 : index
    %87 = vector.load %arg5[%c0_63, %c0_64, %c4_65, %c0_66] : memref<1x8x8x64xf32, #tpu.memory_space<vmem>>, vector<1x8x1x64xf32>
    %88 = vector.shape_cast %87 : vector<1x8x1x64xf32> to vector<8x64xf32>
    %89 = vector.shape_cast %86 : vector<8x64xf32> to vector<1x8x1x64xf32>
    tpu.vector_store %arg5[%c0_63, %c0_64, %c4_65, %c0_66], %89 {strides = array<i32>} : memref<1x8x8x64xf32, #tpu.memory_space<vmem>>, vector<1x8x1x64xf32>,
    %c0_67 = arith.constant 0 : index
    %c0_68 = arith.constant 0 : index
    %c5 = arith.constant 5 : index
    %c0_69 = arith.constant 0 : index
    %90 = vector.load %arg4[%c0_67, %c0_68, %c5, %c0_69] : memref<1x4x8x16xf32, #tpu.memory_space<vmem>>, vector<1x4x1x16xf32>
    %91 = vector.shape_cast %90 : vector<1x4x1x16xf32> to vector<4x16xf32>
    %cst_70 = arith.constant dense<0.000000e+00> : vector<32x16xf32>
    %92 = tpu.matmul %0, %91, %cst_70 {dimension_numbers = #tpu.dot_dimension_numbers<[1], [0], [0], [1], [0, 0, 1, 1], [], []>, precision = #tpu.contract_precision<fp32>} : vector<32x4xf32>, vector<4x16xf32>, vector<32x16xf32> -> vector<32x16xf32>
    %93 = vector.extract_strided_slice %92 {offsets = [0, 0], sizes = [8, 16], strides = [1, 1]} : vector<32x16xf32> to vector<8x16xf32>
    %cst_71 = arith.constant dense<0.000000e+00> : vector<8x32xf32>
    %94 = tpu.matmul %93, %2, %cst_71 {dimension_numbers = #tpu.dot_dimension_numbers<[1], [0], [0], [1], [0, 0, 1, 1], [], []>, precision = #tpu.contract_precision<fp32>} : vector<8x16xf32>, vector<16x32xf32>, vector<8x32xf32> -> vector<8x32xf32>
    %95 = vector.extract_strided_slice %92 {offsets = [8, 0], sizes = [8, 16], strides = [1, 1]} : vector<32x16xf32> to vector<8x16xf32>
    %cst_72 = arith.constant dense<0.000000e+00> : vector<8x32xf32>
    %96 = tpu.matmul %95, %4, %cst_72 {dimension_numbers = #tpu.dot_dimension_numbers<[1], [0], [0], [1], [0, 0, 1, 1], [], []>, precision = #tpu.contract_precision<fp32>} : vector<8x16xf32>, vector<16x32xf32>, vector<8x32xf32> -> vector<8x32xf32>
    %97 = arith.addf %94, %96 : vector<8x32xf32>
    %98 = vector.extract_strided_slice %92 {offsets = [16, 0], sizes = [8, 16], strides = [1, 1]} : vector<32x16xf32> to vector<8x16xf32>
    %cst_73 = arith.constant dense<0.000000e+00> : vector<8x32xf32>
    %99 = tpu.matmul %98, %2, %cst_73 {dimension_numbers = #tpu.dot_dimension_numbers<[1], [0], [0], [1], [0, 0, 1, 1], [], []>, precision = #tpu.contract_precision<fp32>} : vector<8x16xf32>, vector<16x32xf32>, vector<8x32xf32> -> vector<8x32xf32>
    %100 = vector.extract_strided_slice %92 {offsets = [24, 0], sizes = [8, 16], strides = [1, 1]} : vector<32x16xf32> to vector<8x16xf32>
    %cst_74 = arith.constant dense<0.000000e+00> : vector<8x32xf32>
    %101 = tpu.matmul %100, %4, %cst_74 {dimension_numbers = #tpu.dot_dimension_numbers<[1], [0], [0], [1], [0, 0, 1, 1], [], []>, precision = #tpu.contract_precision<fp32>} : vector<8x16xf32>, vector<16x32xf32>, vector<8x32xf32> -> vector<8x32xf32>
    %102 = arith.addf %99, %101 : vector<8x32xf32>
    %103 = tpu.concatenate %97, %102 in 1 : vector<8x32xf32>, vector<8x32xf32> -> vector<8x64xf32>
    %c0_75 = arith.constant 0 : index
    %c0_76 = arith.constant 0 : index
    %c5_77 = arith.constant 5 : index
    %c0_78 = arith.constant 0 : index
    %104 = vector.load %arg5[%c0_75, %c0_76, %c5_77, %c0_78] : memref<1x8x8x64xf32, #tpu.memory_space<vmem>>, vector<1x8x1x64xf32>
    %105 = vector.shape_cast %104 : vector<1x8x1x64xf32> to vector<8x64xf32>
    %106 = vector.shape_cast %103 : vector<8x64xf32> to vector<1x8x1x64xf32>
    tpu.vector_store %arg5[%c0_75, %c0_76, %c5_77, %c0_78], %106 {strides = array<i32>} : memref<1x8x8x64xf32, #tpu.memory_space<vmem>>, vector<1x8x1x64xf32>,
    %c0_79 = arith.constant 0 : index
    %c0_80 = arith.constant 0 : index
    %c6 = arith.constant 6 : index
    %c0_81 = arith.constant 0 : index
    %107 = vector.load %arg4[%c0_79, %c0_80, %c6, %c0_81] : memref<1x4x8x16xf32, #tpu.memory_space<vmem>>, vector<1x4x1x16xf32>
    %108 = vector.shape_cast %107 : vector<1x4x1x16xf32> to vector<4x16xf32>
    %cst_82 = arith.constant dense<0.000000e+00> : vector<32x16xf32>
    %109 = tpu.matmul %0, %108, %cst_82 {dimension_numbers = #tpu.dot_dimension_numbers<[1], [0], [0], [1], [0, 0, 1, 1], [], []>, precision = #tpu.contract_precision<fp32>} : vector<32x4xf32>, vector<4x16xf32>, vector<32x16xf32> -> vector<32x16xf32>
    %110 = vector.extract_strided_slice %109 {offsets = [0, 0], sizes = [8, 16], strides = [1, 1]} : vector<32x16xf32> to vector<8x16xf32>
    %cst_83 = arith.constant dense<0.000000e+00> : vector<8x32xf32>
    %111 = tpu.matmul %110, %2, %cst_83 {dimension_numbers = #tpu.dot_dimension_numbers<[1], [0], [0], [1], [0, 0, 1, 1], [], []>, precision = #tpu.contract_precision<fp32>} : vector<8x16xf32>, vector<16x32xf32>, vector<8x32xf32> -> vector<8x32xf32>
    %112 = vector.extract_strided_slice %109 {offsets = [8, 0], sizes = [8, 16], strides = [1, 1]} : vector<32x16xf32> to vector<8x16xf32>
    %cst_84 = arith.constant dense<0.000000e+00> : vector<8x32xf32>
    %113 = tpu.matmul %112, %4, %cst_84 {dimension_numbers = #tpu.dot_dimension_numbers<[1], [0], [0], [1], [0, 0, 1, 1], [], []>, precision = #tpu.contract_precision<fp32>} : vector<8x16xf32>, vector<16x32xf32>, vector<8x32xf32> -> vector<8x32xf32>
    %114 = arith.addf %111, %113 : vector<8x32xf32>
    %115 = vector.extract_strided_slice %109 {offsets = [16, 0], sizes = [8, 16], strides = [1, 1]} : vector<32x16xf32> to vector<8x16xf32>
    %cst_85 = arith.constant dense<0.000000e+00> : vector<8x32xf32>
    %116 = tpu.matmul %115, %2, %cst_85 {dimension_numbers = #tpu.dot_dimension_numbers<[1], [0], [0], [1], [0, 0, 1, 1], [], []>, precision = #tpu.contract_precision<fp32>} : vector<8x16xf32>, vector<16x32xf32>, vector<8x32xf32> -> vector<8x32xf32>
    %117 = vector.extract_strided_slice %109 {offsets = [24, 0], sizes = [8, 16], strides = [1, 1]} : vector<32x16xf32> to vector<8x16xf32>
    %cst_86 = arith.constant dense<0.000000e+00> : vector<8x32xf32>
    %118 = tpu.matmul %117, %4, %cst_86 {dimension_numbers = #tpu.dot_dimension_numbers<[1], [0], [0], [1], [0, 0, 1, 1], [], []>, precision = #tpu.contract_precision<fp32>} : vector<8x16xf32>, vector<16x32xf32>, vector<8x32xf32> -> vector<8x32xf32>
    %119 = arith.addf %116, %118 : vector<8x32xf32>
    %120 = tpu.concatenate %114, %119 in 1 : vector<8x32xf32>, vector<8x32xf32> -> vector<8x64xf32>
    %c0_87 = arith.constant 0 : index
    %c0_88 = arith.constant 0 : index
    %c6_89 = arith.constant 6 : index
    %c0_90 = arith.constant 0 : index
    %121 = vector.load %arg5[%c0_87, %c0_88, %c6_89, %c0_90] : memref<1x8x8x64xf32, #tpu.memory_space<vmem>>, vector<1x8x1x64xf32>
    %122 = vector.shape_cast %121 : vector<1x8x1x64xf32> to vector<8x64xf32>
    %123 = vector.shape_cast %120 : vector<8x64xf32> to vector<1x8x1x64xf32>
    tpu.vector_store %arg5[%c0_87, %c0_88, %c6_89, %c0_90], %123 {strides = array<i32>} : memref<1x8x8x64xf32, #tpu.memory_space<vmem>>, vector<1x8x1x64xf32>,
    %c0_91 = arith.constant 0 : index
    %c0_92 = arith.constant 0 : index
    %c7 = arith.constant 7 : index
    %c0_93 = arith.constant 0 : index
    %124 = vector.load %arg4[%c0_91, %c0_92, %c7, %c0_93] : memref<1x4x8x16xf32, #tpu.memory_space<vmem>>, vector<1x4x1x16xf32>
    %125 = vector.shape_cast %124 : vector<1x4x1x16xf32> to vector<4x16xf32>
    %cst_94 = arith.constant dense<0.000000e+00> : vector<32x16xf32>
    %126 = tpu.matmul %0, %125, %cst_94 {dimension_numbers = #tpu.dot_dimension_numbers<[1], [0], [0], [1], [0, 0, 1, 1], [], []>, precision = #tpu.contract_precision<fp32>} : vector<32x4xf32>, vector<4x16xf32>, vector<32x16xf32> -> vector<32x16xf32>
    %127 = vector.extract_strided_slice %126 {offsets = [0, 0], sizes = [8, 16], strides = [1, 1]} : vector<32x16xf32> to vector<8x16xf32>
    %cst_95 = arith.constant dense<0.000000e+00> : vector<8x32xf32>
    %128 = tpu.matmul %127, %2, %cst_95 {dimension_numbers = #tpu.dot_dimension_numbers<[1], [0], [0], [1], [0, 0, 1, 1], [], []>, precision = #tpu.contract_precision<fp32>} : vector<8x16xf32>, vector<16x32xf32>, vector<8x32xf32> -> vector<8x32xf32>
    %129 = vector.extract_strided_slice %126 {offsets = [8, 0], sizes = [8, 16], strides = [1, 1]} : vector<32x16xf32> to vector<8x16xf32>
    %cst_96 = arith.constant dense<0.000000e+00> : vector<8x32xf32>
    %130 = tpu.matmul %129, %4, %cst_96 {dimension_numbers = #tpu.dot_dimension_numbers<[1], [0], [0], [1], [0, 0, 1, 1], [], []>, precision = #tpu.contract_precision<fp32>} : vector<8x16xf32>, vector<16x32xf32>, vector<8x32xf32> -> vector<8x32xf32>
    %131 = arith.addf %128, %130 : vector<8x32xf32>
    %132 = vector.extract_strided_slice %126 {offsets = [16, 0], sizes = [8, 16], strides = [1, 1]} : vector<32x16xf32> to vector<8x16xf32>
    %cst_97 = arith.constant dense<0.000000e+00> : vector<8x32xf32>
    %133 = tpu.matmul %132, %2, %cst_97 {dimension_numbers = #tpu.dot_dimension_numbers<[1], [0], [0], [1], [0, 0, 1, 1], [], []>, precision = #tpu.contract_precision<fp32>} : vector<8x16xf32>, vector<16x32xf32>, vector<8x32xf32> -> vector<8x32xf32>
    %134 = vector.extract_strided_slice %126 {offsets = [24, 0], sizes = [8, 16], strides = [1, 1]} : vector<32x16xf32> to vector<8x16xf32>
    %cst_98 = arith.constant dense<0.000000e+00> : vector<8x32xf32>
    %135 = tpu.matmul %134, %4, %cst_98 {dimension_numbers = #tpu.dot_dimension_numbers<[1], [0], [0], [1], [0, 0, 1, 1], [], []>, precision = #tpu.contract_precision<fp32>} : vector<8x16xf32>, vector<16x32xf32>, vector<8x32xf32> -> vector<8x32xf32>
    %136 = arith.addf %133, %135 : vector<8x32xf32>
    %137 = tpu.concatenate %131, %136 in 1 : vector<8x32xf32>, vector<8x32xf32> -> vector<8x64xf32>
    %c0_99 = arith.constant 0 : index
    %c0_100 = arith.constant 0 : index
    %c7_101 = arith.constant 7 : index
    %c0_102 = arith.constant 0 : index
    %138 = vector.load %arg5[%c0_99, %c0_100, %c7_101, %c0_102] : memref<1x8x8x64xf32, #tpu.memory_space<vmem>>, vector<1x8x1x64xf32>
    %139 = vector.shape_cast %138 : vector<1x8x1x64xf32> to vector<8x64xf32>
    %140 = vector.shape_cast %137 : vector<8x64xf32> to vector<1x8x1x64xf32>
    tpu.vector_store %arg5[%c0_99, %c0_100, %c7_101, %c0_102], %140 {strides = array<i32>} : memref<1x8x8x64xf32, #tpu.memory_space<vmem>>, vector<1x8x1x64xf32>,
    return
  }
  func.func @transform_0(%arg0: i32, %arg1: i32) -> (i32, i32) {
    %c0_i32 = arith.constant 0 : i32
    %c0_i32_0 = arith.constant 0 : i32
    %c0_i32_1 = arith.constant 0 : i32
    return %c0_i32, %c0_i32_0 : i32, i32
  }
  func.func @transform_1(%arg0: i32, %arg1: i32) -> (i32, i32, i32) {
    %c0_i32 = arith.constant 0 : i32
    %c0_i32_0 = arith.constant 0 : i32
    %c0_i32_1 = arith.constant 0 : i32
    %c0_i32_2 = arith.constant 0 : i32
    return %c0_i32, %c0_i32_0, %c0_i32_1 : i32, i32, i32
  }
  func.func @transform_2(%arg0: i32, %arg1: i32) -> (i32, i32, i32, i32) {
    %c0_i32 = arith.constant 0 : i32
    %c0_i32_0 = arith.constant 0 : i32
    %c0_i32_1 = arith.constant 0 : i32
    return %arg0, %c0_i32, %arg1, %c0_i32_0 : i32, i32, i32, i32
  }
  func.func @transform_3(%arg0: i32, %arg1: i32) -> (i32, i32, i32, i32) {
    %c0_i32 = arith.constant 0 : i32
    %c0_i32_0 = arith.constant 0 : i32
    %c0_i32_1 = arith.constant 0 : i32
    return %arg0, %c0_i32, %arg1, %c0_i32_0 : i32, i32, i32, i32
  }
}

</mosaic_0001>

<llo_original>
// kernel: upsample_block.1
$region0: #{upsample_block.1}
  #allocation0 [shape = 'u32[]', space=smem, size = 0x4, offset = 0x4, fixed_abs, tag = 'smem constant byte address 0x4 - core index']
  #allocation1 [shape = 'u32[72,128]{1,0:T(1,128)}', space=vmem, size = 0x9000, scoped, tag = 'internal scratch']
  %s0 = inlined_call_operand.vmem [shape: f32[32,4], index: 0, kind: input, shape index: {}]
  %s1 = inlined_call_operand.vmem [shape: f32[2,16,32], index: 1, kind: input, shape index: {}]
  %s2 = inlined_call_operand.hbm [shape: f32[2,4,16,16], index: 2, kind: input, shape index: {}]
  %s3 = inlined_call_operand.vmem [shape: f32[2,8,16,64], index: 3, kind: output, shape index: {}]
  %s4 = sld [smem:[#allocation0]]
  $region83: #{upsample_block.1} parent=0
    _
  %s6 = ssub.s32 1, %s4
  %s7 = scalar_select 0, %s6, %s4
  $region1: #{upsample_block.1} parent=0
    #allocation2 [shape = 'u8[32768]{0}', space=vmem, size = 0x8000, scoped, tag = 'input window, operand 2']
    #allocation3 [shape = 's32[2]{0}', space=sflag, size = 0x8, scoped, tag = 'scoped memory for upsample_block.1']
    #allocation4 [shape = 'u8[65536]{0}', space=vmem, size = 0x10000, scoped, tag = 'output window, operand 0']
    %8 = vsyncpa [#allocation3], 0
    %s9 = scalar_lea.sflag [#allocation3], 1
    %10 = vsyncpa %s9, 0
    loop: start=0, step=1, limit=6
    $region2: #{upsample_block.1} parent=1 // loop_pre_header
      _
    $region3: #{upsample_block.1} parent=1 // loop_header
      %s12 = sphi 0, %s16
      %p13 = scmp.ge.s32.totalorder %s12, 6
      %s19 = sphi 0, %s31
      %s20 = sphi 0, %s27
      %s21 = sphi 0, %s19
      %s22 = sphi 0, %s20
      %s23 = sphi 0, %s21
      %s24 = sphi 0, %s22
      %s32 = sphi 0, %s32
      %s34 = sphi 0, %s32
      %s35 = sphi 0, %s34
      %s49 = sphi 0, %s35
      %s53 = sphi 0, %s53
      %s55 = sphi 0, %s53
      %s56 = sphi 0, %s55
      %s70 = sphi 0, %s56
      %s78 = sphi 0, %s80
      %s81 = sphi 0, %s78
      %s82 = sphi 0, %s81
      %s98 = sphi 0, %s82
      %s106 = sphi 0, %s108
      %s109 = sphi 0, %s106
      %s110 = sphi 0, %s109
      %s126 = sphi 0, %s110
    $region4: #{upsample_block.1} parent=1 // loop_header_branch
      %15 = sbr.rel (%p13) target = $region8
    $region5: #{upsample_block.1} parent=1 // loop_body
      %s17 = ssub.s32 %s12, 1
      %s18 = ssub.s32 %s12, 2
      %s25 = sadd.s32 1, %s20
      %p26 = scmp.ge.s32.totalorder %s25, 2
      %s27 = scalar_select %p26, 0, %s25
      %s28 = sadd.s32 1, %s19
      %s29 = scalar_select %p26, %s28, %s19
      %p30 = scmp.ge.s32.totalorder %s29, 2
      %s31 = scalar_select %p30, 0, %s29
      %s33 = sadd.s32 %s32, 1
      %p36 = scmp.eq.s32.totalorder %s12, 3
      %p37 = scmp.ne.s32.totalorder %s32, %s34
      %p38 = scmp.eq.s32.totalorder %s12, 0
      %p39 = por %p37, %p38
      %p40 = scmp.ne.s32.totalorder %s32, %s34
      %p41 = scmp.eq.s32.totalorder %s17, 3
      %p42 = por %p40, %p41
      %p43 = scmp.ne.s32.totalorder %s34, %s35
      %p44 = scmp.eq.s32.totalorder %s17, 0
      %p45 = por %p43, %p44
      %p46 = scmp.ne.s32.totalorder %s34, %s35
      %p47 = scmp.eq.s32.totalorder %s18, 3
      %p48 = por %p46, %p47
      %p50 = scmp.ne.s32.totalorder %s35, %s49
      %p51 = scmp.eq.s32.totalorder %s18, 0
      %p52 = por %p50, %p51
      %s54 = sadd.s32 %s53, 1
      %p57 = scmp.eq.s32.totalorder %s12, 3
      %p58 = scmp.ne.s32.totalorder %s53, %s55
      %p59 = scmp.eq.s32.totalorder %s12, 0
      %p60 = por %p58, %p59
      %p61 = scmp.ne.s32.totalorder %s53, %s55
      %p62 = scmp.eq.s32.totalorder %s17, 3
      %p63 = por %p61, %p62
      %p64 = scmp.ne.s32.totalorder %s55, %s56
      %p65 = scmp.eq.s32.totalorder %s17, 0
      %p66 = por %p64, %p65
      %p67 = scmp.ne.s32.totalorder %s55, %s56
      %p68 = scmp.eq.s32.totalorder %s18, 3
      %p69 = por %p67, %p68
      %p71 = scmp.ne.s32.totalorder %s56, %s70
      %p72 = scmp.eq.s32.totalorder %s18, 0
      %p73 = por %p71, %p72
      %s74 = ssub.s32 %s19, %s31
      %s75 = ssub.s32 %s20, %s27
      %s76 = sor.u32 %s74, %s75
      %p77 = scmp.eq.s32.totalorder %s76, 0
      %s79 = sadd.s32 %s78, 1
      %s80 = scalar_select %p77, %s78, %s79
      %p83 = pneg %p77
      %p84 = scmp.eq.s32.totalorder %s12, 3
      %p85 = por %p83, %p84
      %p86 = scmp.ne.s32.totalorder %s78, %s81
      %p87 = scmp.eq.s32.totalorder %s12, 0
      %p88 = por %p86, %p87
      %p89 = scmp.ne.s32.totalorder %s78, %s81
      %p90 = scmp.eq.s32.totalorder %s17, 3
      %p91 = por %p89, %p90
      %p92 = scmp.ne.s32.totalorder %s81, %s82
      %p93 = scmp.eq.s32.totalorder %s17, 0
      %p94 = por %p92, %p93
      %p95 = scmp.ne.s32.totalorder %s81, %s82
      %p96 = scmp.eq.s32.totalorder %s18, 3
      %p97 = por %p95, %p96
      %p99 = scmp.ne.s32.totalorder %s82, %s98
      %p100 = scmp.eq.s32.totalorder %s18, 0
      %p101 = por %p99, %p100
      %s102 = ssub.s32 %s19, %s31
      %s103 = ssub.s32 %s20, %s27
      %s104 = sor.u32 %s102, %s103
      %p105 = scmp.eq.s32.totalorder %s104, 0
      %s107 = sadd.s32 %s106, 1
      %s108 = scalar_select %p105, %s106, %s107
      %p111 = pneg %p105
      %p112 = scmp.eq.s32.totalorder %s12, 3
      %p113 = por %p111, %p112
      %p114 = scmp.ne.s32.totalorder %s106, %s109
      %p115 = scmp.eq.s32.totalorder %s12, 0
      %p116 = por %p114, %p115
      %p117 = scmp.ne.s32.totalorder %s106, %s109
      %p118 = scmp.eq.s32.totalorder %s17, 3
      %p119 = por %p117, %p118
      %p120 = scmp.ne.s32.totalorder %s109, %s110
      %p121 = scmp.eq.s32.totalorder %s17, 0
      %p122 = por %p120, %p121
      %p123 = scmp.ne.s32.totalorder %s109, %s110
      %p124 = scmp.eq.s32.totalorder %s18, 3
      %p125 = por %p123, %p124
      %p127 = scmp.ne.s32.totalorder %s110, %s126
      %p128 = scmp.eq.s32.totalorder %s18, 0
      %p129 = por %p127, %p128
      %p130 = scmp.le.s32.totalorder 1, %s12
      %p131 = scmp.lt.s32.totalorder %s12, 5
      %p132 = pnand %p130, %p131
      %p133 = pneg %p132
      // Predicated region
      $region9: #{upsample_block.1} parent=5 // pred_check
        _
      $region10: #{upsample_block.1} parent=5 // pred_check_branch
        %135 = sbr.rel (%p132) target = $region12
      $region11: #{upsample_block.1} parent=5 // pred_region
        %s136 = ssub.s32 %s12, 1
        // Predicated region
        $region13: #{upsample_block.1} parent=11 // pred_check
          %p137 = pneg %p45
        $region14: #{upsample_block.1} parent=11 // pred_check_branch
          %139 = sbr.rel (%p137) target = $region16
        $region15: #{upsample_block.1} parent=11 // pred_region
          _
        $region16: #{upsample_block.1} parent=11 // pred_fallthru
          _
        // Predicated region
        $region17: #{upsample_block.1} parent=11 // pred_check
          %p140 = pneg %p66
        $region18: #{upsample_block.1} parent=11 // pred_check_branch
          %142 = sbr.rel (%p140) target = $region20
        $region19: #{upsample_block.1} parent=11 // pred_region
          _
        $region20: #{upsample_block.1} parent=11 // pred_fallthru
          _
      $region12: #{upsample_block.1} parent=5 // pred_fallthru
        _
      %p143 = scmp.lt.s32.totalorder %s12, 4
      // Predicated region
      $region21: #{upsample_block.1} parent=5 // pred_check
        %p144 = pneg %p143
      $region22: #{upsample_block.1} parent=5 // pred_check_branch
        %146 = sbr.rel (%p144) target = $region24
      $region23: #{upsample_block.1} parent=5 // pred_region
        // Predicated region
        $region25: #{upsample_block.1} parent=23 // pred_check
          %p147 = pneg %p88
        $region26: #{upsample_block.1} parent=23 // pred_check_branch
          %149 = sbr.rel (%p147) target = $region28
        $region27: #{upsample_block.1} parent=23 // pred_region
          %s150 = sand.u32 %s78, 1
          %s151 = scalar_lea.sflag [#allocation3], %s150
          %s152 = sand.u32 %s78, 1
          %s153 = smul.addr %s152, 32
          %s154 = scalar_lea.vmem [#allocation2], %s153
          %156 = vsyncadd %s151, 0
          %s157 = smul.addr %s19, 8
          %s158 = sadd.s32 %s20, %s157
          %s159 = smul.addr %s158, 8
          %s160 = scalar_lea.hbm %s2, %s159
          %s161 = sshll.u32 %s160, 4
          %s162 = int_to_ptr.hbm [resolvable:$true] %s161
          %s163 = sshll.u32 %s154, 4
          %s164 = int_to_ptr.vmem [resolvable:$true] %s163
          %169 = dma.hbm_to_vmem [thread:$0]  %s162, 512, %s164, %s151, 256, 128, 8
        $region28: #{upsample_block.1} parent=23 // pred_fallthru
          _
      $region24: #{upsample_block.1} parent=5 // pred_fallthru
        _
      %p170 = scmp.le.s32.totalorder 1, %s12
      %p171 = scmp.lt.s32.totalorder %s12, 5
      %p172 = pnand %p170, %p171
      %p173 = pneg %p172
      // Predicated region
      $region29: #{upsample_block.1} parent=5 // pred_check
        _
      $region30: #{upsample_block.1} parent=5 // pred_check_branch
        %175 = sbr.rel (%p172) target = $region32
      $region31: #{upsample_block.1} parent=5 // pred_region
        %s176 = ssub.s32 %s12, 1
        %s177 = sand.u32 %s81, 1
        %s178 = scalar_lea.sflag [#allocation3], %s177
        %s179 = sand.u32 %s81, 1
        %s180 = smul.addr %s179, 32
        %s181 = scalar_lea.vmem [#allocation2], %s180
        // Predicated region
        $region33: #{upsample_block.1} parent=31 // pred_check
          %p182 = pneg %p94
        $region34: #{upsample_block.1} parent=31 // pred_check_branch
          %184 = sbr.rel (%p182) target = $region36
        $region35: #{upsample_block.1} parent=31 // pred_region
          %186 = dma.done %s178, 512
        $region36: #{upsample_block.1} parent=31 // pred_fallthru
          _
        %p187 = pneg %p45
        %p188 = pneg %p42
        %p189 = pneg %p66
        %p190 = pneg %p63
        %s191 = sand.u32 %s81, 1
        %s192 = scalar_lea.sflag [#allocation3], %s191
        %s193 = sand.u32 %s81, 1
        %s194 = smul.addr %s193, 32
        %s195 = scalar_lea.vmem [#allocation2], %s194
        %p196 = pneg %p94
        %p197 = pneg %p91
        %p198 = pneg %p122
        %p199 = pneg %p119
        %s200 = sand.u32 %s109, 1
        %s201 = sand.u32 %s109, 1
        %s202 = smul.addr %s201, 64
        %s203 = scalar_lea.vmem [#allocation4], %s202
        %v204 = vld [vmem:[%s0] sm:$0xff]
        %v205 = vld [vmem:[%s0 + $0x8] sm:$0xff]
        %v206 = vld [vmem:[%s0 + $0x10] sm:$0xff]
        %v207 = vld [vmem:[%s0 + $0x18] sm:$0xff]
        %v208 = vld [vmem:[%s1] sm:$0xff]
        %v209 = vld [vmem:[%s1 + $0x8] sm:$0xff]
        %s210 = scalar_lea.vmem %s1, 16
        %v211 = vld [vmem:[%s210] sm:$0xff]
        %v212 = vld [vmem:[%s210 + $0x8] sm:$0xff]
        %v213 = vld [vmem:[%s181] sm:$0x1]
        %v214 = vld [vmem:[%s181 + $0x8] sm:$0x1]
        %v215 = vld [vmem:[%s181 + $0x10] sm:$0x1]
        %v216 = vld [vmem:[%s181 + $0x18] sm:$0x1]
        %v221 = vrot.slane %v214, 7
        %vm222 = vcmask 1041409
        %v223 = vsel %vm222, %v221, %v213
        %v224 = vrot.slane %v215, 6
        %vm225 = vcmask 1042434
        %v226 = vsel %vm225, %v224, %v223
        %v227 = vrot.slane %v216, 5
        %vm228 = vcmask 1043459
        %v229 = vsel %vm228, %v227, %v226
        %vm230 = vcmask 31744
        %v232 = vsel %vm230, %v204, 0
        %v235 = vsel %vm230, %v205, 0
        %v238 = vsel %vm230, %v206, 0
        %v241 = vsel %vm230, %v207, 0
        %vm243 = vcmask 1043456
        %v244 = vsel %vm243, %v229, 0
        %246 = vmatpush.msra.mxu0 0.0
        %247 = vmatpush.msra.mxu0 0.0
        %248 = vmatpush.msra.mxu0 0.0
        %249 = vmatpush.msra.mxu0 0.0
        %250 = vmatpush.msra.mxu0 0.0
        %251 = vmatpush.msra.mxu0 0.0
        %252 = vmatpush.msra.mxu0 0.0
        %253 = vmatpush.msra.mxu0 0.0
        %254 = vmatpush.msra.mxu0 0.0
        %255 = vmatpush.msra.mxu0 0.0
        %256 = vmatpush.msra.mxu0 0.0
        %257 = vmatpush.msra.mxu0 0.0
        %258 = vmatpush.msra.mxu0 0.0
        %259 = vmatpush.msra.mxu0 0.0
        %260 = vmatpush.msra.mxu0 0.0
        %v261 = vand.u32 %v244, 4294901760
        %262 = vmatpush.msra.mxu0 %v261
        %v263 = vand.u32 %v232, 4294901760
        %v264 = vsub.f32 %v232, %v263
        %v265 = vand.u32 %v264, 4294901760
        %v266 = vsub.f32 %v264, %v265
        %v267 = vand.u32 %v266, 4294901760
        %268 = vmatmul.f32.gmra.mxu0 %v267
        %v269 = vpop.f32.mrf.mxu0
        %v270 = vadd.f32 0.0, %v269
        %v271 = vand.u32 %v235, 4294901760
        %v272 = vsub.f32 %v235, %v271
        %v273 = vand.u32 %v272, 4294901760
        %v274 = vsub.f32 %v272, %v273
        %v275 = vand.u32 %v274, 4294901760
        %276 = vmatmul.f32.gmra.mxu0 %v275
        %v277 = vpop.f32.mrf.mxu0
        %v278 = vadd.f32 0.0, %v277
        %v279 = vand.u32 %v238, 4294901760
        %v280 = vsub.f32 %v238, %v279
        %v281 = vand.u32 %v280, 4294901760
        %v282 = vsub.f32 %v280, %v281
        %v283 = vand.u32 %v282, 4294901760
        %284 = vmatmul.f32.gmra.mxu0 %v283
        %v285 = vpop.f32.mrf.mxu0
        %v286 = vadd.f32 0.0, %v285
        %v287 = vand.u32 %v241, 4294901760
        %v288 = vsub.f32 %v241, %v287
        %v289 = vand.u32 %v288, 4294901760
        %v290 = vsub.f32 %v288, %v289
        %v291 = vand.u32 %v290, 4294901760
        %292 = vmatmul.f32.gmra.mxu0 %v291
        %v293 = vpop.f32.mrf.mxu0
        %v294 = vadd.f32 0.0, %v293
        %295 = vdwg.mxu0
        %296 = vmatpush.msra.mxu0 0.0
        %297 = vmatpush.msra.mxu0 0.0
        %298 = vmatpush.msra.mxu0 0.0
        %299 = vmatpush.msra.mxu0 0.0
        %300 = vmatpush.msra.mxu0 0.0
        %301 = vmatpush.msra.mxu0 0.0
        %302 = vmatpush.msra.mxu0 0.0
        %303 = vmatpush.msra.mxu0 0.0
        %304 = vmatpush.msra.mxu0 0.0
        %305 = vmatpush.msra.mxu0 0.0
        %306 = vmatpush.msra.mxu0 0.0
        %307 = vmatpush.msra.mxu0 0.0
        %308 = vmatpush.msra.mxu0 0.0
        %309 = vmatpush.msra.mxu0 0.0
        %310 = vmatpush.msra.mxu0 0.0
        %v311 = vand.u32 %v244, 4294901760
        %v312 = vsub.f32 %v244, %v311
        %v313 = vand.u32 %v312, 4294901760
        %v314 = vsub.f32 %v312, %v313
        %v315 = vand.u32 %v314, 4294901760
        %316 = vmatpush.msra.mxu0 %v315
        %v317 = vand.u32 %v232, 4294901760
        %318 = vmatmul.f32.gmra.mxu0 %v317
        %v319 = vpop.f32.mrf.mxu0
        %v320 = vadd.f32 %v270, %v319
        %v321 = vand.u32 %v235, 4294901760
        %322 = vmatmul.f32.gmra.mxu0 %v321
        %v323 = vpop.f32.mrf.mxu0
        %v324 = vadd.f32 %v278, %v323
        %v325 = vand.u32 %v238, 4294901760
        %326 = vmatmul.f32.gmra.mxu0 %v325
        %v327 = vpop.f32.mrf.mxu0
        %v328 = vadd.f32 %v286, %v327
        %v329 = vand.u32 %v241, 4294901760
        %330 = vmatmul.f32.gmra.mxu0 %v329
        %v331 = vpop.f32.mrf.mxu0
        %v332 = vadd.f32 %v294, %v331
        %333 = vdwg.mxu0
        %334 = vmatpush.msra.mxu0 0.0
        %335 = vmatpush.msra.mxu0 0.0
        %336 = vmatpush.msra.mxu0 0.0
        %337 = vmatpush.msra.mxu0 0.0
        %338 = vmatpush.msra.mxu0 0.0
        %339 = vmatpush.msra.mxu0 0.0
        %340 = vmatpush.msra.mxu0 0.0
        %341 = vmatpush.msra.mxu0 0.0
        %342 = vmatpush.msra.mxu0 0.0
        %343 = vmatpush.msra.mxu0 0.0
        %344 = vmatpush.msra.mxu0 0.0
        %345 = vmatpush.msra.mxu0 0.0
        %346 = vmatpush.msra.mxu0 0.0
        %347 = vmatpush.msra.mxu0 0.0
        %348 = vmatpush.msra.mxu0 0.0
        %v349 = vand.u32 %v244, 4294901760
        %v350 = vsub.f32 %v244, %v349
        %351 = vmatpush.msra.mxu0 %v350
        %v352 = vand.u32 %v232, 4294901760
        %v353 = vsub.f32 %v232, %v352
        %354 = vmatmul.f32.gmra.mxu0 %v353
        %v355 = vpop.f32.mrf.mxu0
        %v356 = vadd.f32 %v320, %v355
        %v357 = vand.u32 %v235, 4294901760
        %v358 = vsub.f32 %v235, %v357
        %359 = vmatmul.f32.gmra.mxu0 %v358
        %v360 = vpop.f32.mrf.mxu0
        %v361 = vadd.f32 %v324, %v360
        %v362 = vand.u32 %v238, 4294901760
        %v363 = vsub.f32 %v238, %v362
        %364 = vmatmul.f32.gmra.mxu0 %v363
        %v365 = vpop.f32.mrf.mxu0
        %v366 = vadd.f32 %v328, %v365
        %v367 = vand.u32 %v241, 4294901760
        %v368 = vsub.f32 %v241, %v367
        %369 = vmatmul.f32.gmra.mxu0 %v368
        %v370 = vpop.f32.mrf.mxu0
        %v371 = vadd.f32 %v332, %v370
        %372 = vdwg.mxu0
        %373 = vmatpush.msra.mxu0 0.0
        %374 = vmatpush.msra.mxu0 0.0
        %375 = vmatpush.msra.mxu0 0.0
        %376 = vmatpush.msra.mxu0 0.0
        %377 = vmatpush.msra.mxu0 0.0
        %378 = vmatpush.msra.mxu0 0.0
        %379 = vmatpush.msra.mxu0 0.0
        %380 = vmatpush.msra.mxu0 0.0
        %381 = vmatpush.msra.mxu0 0.0
        %382 = vmatpush.msra.mxu0 0.0
        %383 = vmatpush.msra.mxu0 0.0
        %384 = vmatpush.msra.mxu0 0.0
        %385 = vmatpush.msra.mxu0 0.0
        %386 = vmatpush.msra.mxu0 0.0
        %387 = vmatpush.msra.mxu0 0.0
        %v388 = vand.u32 %v244, 4294901760
        %389 = vmatpush.msra.mxu0 %v388
        %v390 = vand.u32 %v232, 4294901760
        %v391 = vsub.f32 %v232, %v390
        %v392 = vand.u32 %v391, 4294901760
        %393 = vmatmul.f32.gmra.mxu0 %v392
        %v394 = vpop.f32.mrf.mxu0
        %v395 = vadd.f32 %v356, %v394
        %v396 = vand.u32 %v235, 4294901760
        %v397 = vsub.f32 %v235, %v396
        %v398 = vand.u32 %v397, 4294901760
        %399 = vmatmul.f32.gmra.mxu0 %v398
        %v400 = vpop.f32.mrf.mxu0
        %v401 = vadd.f32 %v361, %v400
        %v402 = vand.u32 %v238, 4294901760
        %v403 = vsub.f32 %v238, %v402
        %v404 = vand.u32 %v403, 4294901760
        %405 = vmatmul.f32.gmra.mxu0 %v404
        %v406 = vpop.f32.mrf.mxu0
        %v407 = vadd.f32 %v366, %v406
        %v408 = vand.u32 %v241, 4294901760
        %v409 = vsub.f32 %v241, %v408
        %v410 = vand.u32 %v409, 4294901760
        %411 = vmatmul.f32.gmra.mxu0 %v410
        %v412 = vpop.f32.mrf.mxu0
        %v413 = vadd.f32 %v371, %v412
        %414 = vdwg.mxu0
        %415 = vmatpush.msra.mxu0 0.0
        %416 = vmatpush.msra.mxu0 0.0
        %417 = vmatpush.msra.mxu0 0.0
        %418 = vmatpush.msra.mxu0 0.0
        %419 = vmatpush.msra.mxu0 0.0
        %420 = vmatpush.msra.mxu0 0.0
        %421 = vmatpush.msra.mxu0 0.0
        %422 = vmatpush.msra.mxu0 0.0
        %423 = vmatpush.msra.mxu0 0.0
        %424 = vmatpush.msra.mxu0 0.0
        %425 = vmatpush.msra.mxu0 0.0
        %426 = vmatpush.msra.mxu0 0.0
        %427 = vmatpush.msra.mxu0 0.0
        %428 = vmatpush.msra.mxu0 0.0
        %429 = vmatpush.msra.mxu0 0.0
        %v430 = vand.u32 %v244, 4294901760
        %v431 = vsub.f32 %v244, %v430
        %v432 = vand.u32 %v431, 4294901760
        %433 = vmatpush.msra.mxu0 %v432
        %v434 = vand.u32 %v232, 4294901760
        %435 = vmatmul.f32.gmra.mxu0 %v434
        %v436 = vpop.f32.mrf.mxu0
        %v437 = vadd.f32 %v395, %v436
        %v438 = vand.u32 %v235, 4294901760
        %439 = vmatmul.f32.gmra.mxu0 %v438
        %v440 = vpop.f32.mrf.mxu0
        %v441 = vadd.f32 %v401, %v440
        %v442 = vand.u32 %v238, 4294901760
        %443 = vmatmul.f32.gmra.mxu0 %v442
        %v444 = vpop.f32.mrf.mxu0
        %v445 = vadd.f32 %v407, %v444
        %v446 = vand.u32 %v241, 4294901760
        %447 = vmatmul.f32.gmra.mxu0 %v446
        %v448 = vpop.f32.mrf.mxu0
        %v449 = vadd.f32 %v413, %v448
        %450 = vdwg.mxu0
        %451 = vmatpush.msra.mxu0 0.0
        %452 = vmatpush.msra.mxu0 0.0
        %453 = vmatpush.msra.mxu0 0.0
        %454 = vmatpush.msra.mxu0 0.0
        %455 = vmatpush.msra.mxu0 0.0
        %456 = vmatpush.msra.mxu0 0.0
        %457 = vmatpush.msra.mxu0 0.0
        %458 = vmatpush.msra.mxu0 0.0
        %459 = vmatpush.msra.mxu0 0.0
        %460 = vmatpush.msra.mxu0 0.0
        %461 = vmatpush.msra.mxu0 0.0
        %462 = vmatpush.msra.mxu0 0.0
        %463 = vmatpush.msra.mxu0 0.0
        %464 = vmatpush.msra.mxu0 0.0
        %465 = vmatpush.msra.mxu0 0.0
        %v466 = vand.u32 %v244, 4294901760
        %467 = vmatpush.msra.mxu0 %v466
        %v468 = vand.u32 %v232, 4294901760
        %469 = vmatmul.f32.gmra.mxu0 %v468
        %v470 = vpop.f32.mrf.mxu0
        %v471 = vadd.f32 %v437, %v470
        %v472 = vand.u32 %v235, 4294901760
        %473 = vmatmul.f32.gmra.mxu0 %v472
        %v474 = vpop.f32.mrf.mxu0
        %v475 = vadd.f32 %v441, %v474
        %v476 = vand.u32 %v238, 4294901760
        %477 = vmatmul.f32.gmra.mxu0 %v476
        %v478 = vpop.f32.mrf.mxu0
        %v479 = vadd.f32 %v445, %v478
        %v480 = vand.u32 %v241, 4294901760
        %481 = vmatmul.f32.gmra.mxu0 %v480
        %v482 = vpop.f32.mrf.mxu0
        %v483 = vadd.f32 %v449, %v482
        %484 = vdwg.mxu0
        %vm485 = vcmask 130048
        %v487 = vsel %vm485, %v475, 0
        %489 = vmatpush.msra.mxu0 0.0
        %490 = vmatpush.msra.mxu0 0.0
        %491 = vmatpush.msra.mxu0 0.0
        %492 = vmatpush.msra.mxu0 0.0
        %493 = vmatpush.msra.mxu0 0.0
        %494 = vmatpush.msra.mxu0 0.0
        %495 = vmatpush.msra.mxu0 0.0
        %496 = vmatpush.msra.mxu0 0.0
        %497 = vmatpush.msra.mxu0 0.0
        %498 = vmatpush.msra.mxu0 0.0
        %499 = vmatpush.msra.mxu0 0.0
        %500 = vmatpush.msra.mxu0 0.0
        %501 = vmatpush.msra.mxu0 0.0
        %502 = vmatpush.msra.mxu0 0.0
        %v503 = vand.u32 %v212, 4294901760
        %504 = vmatpush.msra.mxu0 %v503
        %v505 = vand.u32 %v211, 4294901760
        %506 = vmatpush.msra.mxu0 %v505
        %v507 = vand.u32 %v487, 4294901760
        %v508 = vsub.f32 %v487, %v507
        %v509 = vand.u32 %v508, 4294901760
        %v510 = vsub.f32 %v508, %v509
        %v511 = vand.u32 %v510, 4294901760
        %512 = vmatmul.f32.gmra.mxu0 %v511
        %v513 = vpop.f32.mrf.mxu0
        %v514 = vadd.f32 0.0, %v513
        %515 = vdwg.mxu0
        %516 = vmatpush.msra.mxu0 0.0
        %517 = vmatpush.msra.mxu0 0.0
        %518 = vmatpush.msra.mxu0 0.0
        %519 = vmatpush.msra.mxu0 0.0
        %520 = vmatpush.msra.mxu0 0.0
        %521 = vmatpush.msra.mxu0 0.0
        %522 = vmatpush.msra.mxu0 0.0
        %523 = vmatpush.msra.mxu0 0.0
        %524 = vmatpush.msra.mxu0 0.0
        %525 = vmatpush.msra.mxu0 0.0
        %526 = vmatpush.msra.mxu0 0.0
        %527 = vmatpush.msra.mxu0 0.0
        %528 = vmatpush.msra.mxu0 0.0
        %529 = vmatpush.msra.mxu0 0.0
        %v530 = vand.u32 %v212, 4294901760
        %v531 = vsub.f32 %v212, %v530
        %v532 = vand.u32 %v531, 4294901760
        %v533 = vsub.f32 %v531, %v532
        %v534 = vand.u32 %v533, 4294901760
        %535 = vmatpush.msra.mxu0 %v534
        %v536 = vand.u32 %v211, 4294901760
        %v537 = vsub.f32 %v211, %v536
        %v538 = vand.u32 %v537, 4294901760
        %v539 = vsub.f32 %v537, %v538
        %v540 = vand.u32 %v539, 4294901760
        %541 = vmatpush.msra.mxu0 %v540
        %v542 = vand.u32 %v487, 4294901760
        %543 = vmatmul.f32.gmra.mxu0 %v542
        %v544 = vpop.f32.mrf.mxu0
        %v545 = vadd.f32 %v514, %v544
        %546 = vdwg.mxu0
        %547 = vmatpush.msra.mxu0 0.0
        %548 = vmatpush.msra.mxu0 0.0
        %549 = vmatpush.msra.mxu0 0.0
        %550 = vmatpush.msra.mxu0 0.0
        %551 = vmatpush.msra.mxu0 0.0
        %552 = vmatpush.msra.mxu0 0.0
        %553 = vmatpush.msra.mxu0 0.0
        %554 = vmatpush.msra.mxu0 0.0
        %555 = vmatpush.msra.mxu0 0.0
        %556 = vmatpush.msra.mxu0 0.0
        %557 = vmatpush.msra.mxu0 0.0
        %558 = vmatpush.msra.mxu0 0.0
        %559 = vmatpush.msra.mxu0 0.0
        %560 = vmatpush.msra.mxu0 0.0
        %v561 = vand.u32 %v212, 4294901760
        %v562 = vsub.f32 %v212, %v561
        %563 = vmatpush.msra.mxu0 %v562
        %v564 = vand.u32 %v211, 4294901760
        %v565 = vsub.f32 %v211, %v564
        %566 = vmatpush.msra.mxu0 %v565
        %v567 = vand.u32 %v487, 4294901760
        %v568 = vsub.f32 %v487, %v567
        %569 = vmatmul.f32.gmra.mxu0 %v568
        %v570 = vpop.f32.mrf.mxu0
        %v571 = vadd.f32 %v545, %v570
        %572 = vdwg.mxu0
        %573 = vmatpush.msra.mxu0 0.0
        %574 = vmatpush.msra.mxu0 0.0
        %575 = vmatpush.msra.mxu0 0.0
        %576 = vmatpush.msra.mxu0 0.0
        %577 = vmatpush.msra.mxu0 0.0
        %578 = vmatpush.msra.mxu0 0.0
        %579 = vmatpush.msra.mxu0 0.0
        %580 = vmatpush.msra.mxu0 0.0
        %581 = vmatpush.msra.mxu0 0.0
        %582 = vmatpush.msra.mxu0 0.0
        %583 = vmatpush.msra.mxu0 0.0
        %584 = vmatpush.msra.mxu0 0.0
        %585 = vmatpush.msra.mxu0 0.0
        %586 = vmatpush.msra.mxu0 0.0
        %v587 = vand.u32 %v212, 4294901760
        %588 = vmatpush.msra.mxu0 %v587
        %v589 = vand.u32 %v211, 4294901760
        %590 = vmatpush.msra.mxu0 %v589
        %v591 = vand.u32 %v487, 4294901760
        %v592 = vsub.f32 %v487, %v591
        %v593 = vand.u32 %v592, 4294901760
        %594 = vmatmul.f32.gmra.mxu0 %v593
        %v595 = vpop.f32.mrf.mxu0
        %v596 = vadd.f32 %v571, %v595
        %597 = vdwg.mxu0
        %598 = vmatpush.msra.mxu0 0.0
        %599 = vmatpush.msra.mxu0 0.0
        %600 = vmatpush.msra.mxu0 0.0
        %601 = vmatpush.msra.mxu0 0.0
        %602 = vmatpush.msra.mxu0 0.0
        %603 = vmatpush.msra.mxu0 0.0
        %604 = vmatpush.msra.mxu0 0.0
        %605 = vmatpush.msra.mxu0 0.0
        %606 = vmatpush.msra.mxu0 0.0
        %607 = vmatpush.msra.mxu0 0.0
        %608 = vmatpush.msra.mxu0 0.0
        %609 = vmatpush.msra.mxu0 0.0
        %610 = vmatpush.msra.mxu0 0.0
        %611 = vmatpush.msra.mxu0 0.0
        %v612 = vand.u32 %v212, 4294901760
        %v613 = vsub.f32 %v212, %v612
        %v614 = vand.u32 %v613, 4294901760
        %615 = vmatpush.msra.mxu0 %v614
        %v616 = vand.u32 %v211, 4294901760
        %v617 = vsub.f32 %v211, %v616
        %v618 = vand.u32 %v617, 4294901760
        %619 = vmatpush.msra.mxu0 %v618
        %v620 = vand.u32 %v487, 4294901760
        %621 = vmatmul.f32.gmra.mxu0 %v620
        %v622 = vpop.f32.mrf.mxu0
        %v623 = vadd.f32 %v596, %v622
        %624 = vdwg.mxu0
        %625 = vmatpush.msra.mxu0 0.0
        %626 = vmatpush.msra.mxu0 0.0
        %627 = vmatpush.msra.mxu0 0.0
        %628 = vmatpush.msra.mxu0 0.0
        %629 = vmatpush.msra.mxu0 0.0
        %630 = vmatpush.msra.mxu0 0.0
        %631 = vmatpush.msra.mxu0 0.0
        %632 = vmatpush.msra.mxu0 0.0
        %633 = vmatpush.msra.mxu0 0.0
        %634 = vmatpush.msra.mxu0 0.0
        %635 = vmatpush.msra.mxu0 0.0
        %636 = vmatpush.msra.mxu0 0.0
        %637 = vmatpush.msra.mxu0 0.0
        %638 = vmatpush.msra.mxu0 0.0
        %v639 = vand.u32 %v212, 4294901760
        %640 = vmatpush.msra.mxu0 %v639
        %v641 = vand.u32 %v211, 4294901760
        %642 = vmatpush.msra.mxu0 %v641
        %v643 = vand.u32 %v487, 4294901760
        %644 = vmatmul.f32.gmra.mxu0 %v643
        %v645 = vpop.f32.mrf.mxu0
        %v646 = vadd.f32 %v623, %v645
        %647 = vdwg.mxu0
        %v649 = vsel %vm485, %v471, 0
        %651 = vmatpush.msra.mxu0 0.0
        %652 = vmatpush.msra.mxu0 0.0
        %653 = vmatpush.msra.mxu0 0.0
        %654 = vmatpush.msra.mxu0 0.0
        %655 = vmatpush.msra.mxu0 0.0
        %656 = vmatpush.msra.mxu0 0.0
        %657 = vmatpush.msra.mxu0 0.0
        %658 = vmatpush.msra.mxu0 0.0
        %659 = vmatpush.msra.mxu0 0.0
        %660 = vmatpush.msra.mxu0 0.0
        %661 = vmatpush.msra.mxu0 0.0
        %662 = vmatpush.msra.mxu0 0.0
        %663 = vmatpush.msra.mxu0 0.0
        %664 = vmatpush.msra.mxu0 0.0
        %v665 = vand.u32 %v209, 4294901760
        %666 = vmatpush.msra.mxu0 %v665
        %v667 = vand.u32 %v208, 4294901760
        %668 = vmatpush.msra.mxu0 %v667
        %v669 = vand.u32 %v649, 4294901760
        %v670 = vsub.f32 %v649, %v669
        %v671 = vand.u32 %v670, 4294901760
        %v672 = vsub.f32 %v670, %v671
        %v673 = vand.u32 %v672, 4294901760
        %674 = vmatmul.f32.gmra.mxu0 %v673
        %v675 = vpop.f32.mrf.mxu0
        %v676 = vadd.f32 %v646, %v675
        %677 = vdwg.mxu0
        %678 = vmatpush.msra.mxu0 0.0
        %679 = vmatpush.msra.mxu0 0.0
        %680 = vmatpush.msra.mxu0 0.0
        %681 = vmatpush.msra.mxu0 0.0
        %682 = vmatpush.msra.mxu0 0.0
        %683 = vmatpush.msra.mxu0 0.0
        %684 = vmatpush.msra.mxu0 0.0
        %685 = vmatpush.msra.mxu0 0.0
        %686 = vmatpush.msra.mxu0 0.0
        %687 = vmatpush.msra.mxu0 0.0
        %688 = vmatpush.msra.mxu0 0.0
        %689 = vmatpush.msra.mxu0 0.0
        %690 = vmatpush.msra.mxu0 0.0
        %691 = vmatpush.msra.mxu0 0.0
        %v692 = vand.u32 %v209, 4294901760
        %v693 = vsub.f32 %v209, %v692
        %v694 = vand.u32 %v693, 4294901760
        %v695 = vsub.f32 %v693, %v694
        %v696 = vand.u32 %v695, 4294901760
        %697 = vmatpush.msra.mxu0 %v696
        %v698 = vand.u32 %v208, 4294901760
        %v699 = vsub.f32 %v208, %v698
        %v700 = vand.u32 %v699, 4294901760
        %v701 = vsub.f32 %v699, %v700
        %v702 = vand.u32 %v701, 4294901760
        %703 = vmatpush.msra.mxu0 %v702
        %v704 = vand.u32 %v649, 4294901760
        %705 = vmatmul.f32.gmra.mxu0 %v704
        %v706 = vpop.f32.mrf.mxu0
        %v707 = vadd.f32 %v676, %v706
        %708 = vdwg.mxu0
        %709 = vmatpush.msra.mxu0 0.0
        %710 = vmatpush.msra.mxu0 0.0
        %711 = vmatpush.msra.mxu0 0.0
        %712 = vmatpush.msra.mxu0 0.0
        %713 = vmatpush.msra.mxu0 0.0
        %714 = vmatpush.msra.mxu0 0.0
        %715 = vmatpush.msra.mxu0 0.0
        %716 = vmatpush.msra.mxu0 0.0
        %717 = vmatpush.msra.mxu0 0.0
        %718 = vmatpush.msra.mxu0 0.0
        %719 = vmatpush.msra.mxu0 0.0
        %720 = vmatpush.msra.mxu0 0.0
        %721 = vmatpush.msra.mxu0 0.0
        %722 = vmatpush.msra.mxu0 0.0
        %v723 = vand.u32 %v209, 4294901760
        %v724 = vsub.f32 %v209, %v723
        %725 = vmatpush.msra.mxu0 %v724
        %v726 = vand.u32 %v208, 4294901760
        %v727 = vsub.f32 %v208, %v726
        %728 = vmatpush.msra.mxu0 %v727
        %v729 = vand.u32 %v649, 4294901760
        %v730 = vsub.f32 %v649, %v729
        %731 = vmatmul.f32.gmra.mxu0 %v730
        %v732 = vpop.f32.mrf.mxu0
        %v733 = vadd.f32 %v707, %v732
        %734 = vdwg.mxu0
        %735 = vmatpush.msra.mxu0 0.0
        %736 = vmatpush.msra.mxu0 0.0
        %737 = vmatpush.msra.mxu0 0.0
        %738 = vmatpush.msra.mxu0 0.0
        %739 = vmatpush.msra.mxu0 0.0
        %740 = vmatpush.msra.mxu0 0.0
        %741 = vmatpush.msra.mxu0 0.0
        %742 = vmatpush.msra.mxu0 0.0
        %743 = vmatpush.msra.mxu0 0.0
        %744 = vmatpush.msra.mxu0 0.0
        %745 = vmatpush.msra.mxu0 0.0
        %746 = vmatpush.msra.mxu0 0.0
        %747 = vmatpush.msra.mxu0 0.0
        %748 = vmatpush.msra.mxu0 0.0
        %v749 = vand.u32 %v209, 4294901760
        %750 = vmatpush.msra.mxu0 %v749
        %v751 = vand.u32 %v208, 4294901760
        %752 = vmatpush.msra.mxu0 %v751
        %v753 = vand.u32 %v649, 4294901760
        %v754 = vsub.f32 %v649, %v753
        %v755 = vand.u32 %v754, 4294901760
        %756 = vmatmul.f32.gmra.mxu0 %v755
        %v757 = vpop.f32.mrf.mxu0
        %v758 = vadd.f32 %v733, %v757
        %759 = vdwg.mxu0
        %760 = vmatpush.msra.mxu0 0.0
        %761 = vmatpush.msra.mxu0 0.0
        %762 = vmatpush.msra.mxu0 0.0
        %763 = vmatpush.msra.mxu0 0.0
        %764 = vmatpush.msra.mxu0 0.0
        %765 = vmatpush.msra.mxu0 0.0
        %766 = vmatpush.msra.mxu0 0.0
        %767 = vmatpush.msra.mxu0 0.0
        %768 = vmatpush.msra.mxu0 0.0
        %769 = vmatpush.msra.mxu0 0.0
        %770 = vmatpush.msra.mxu0 0.0
        %771 = vmatpush.msra.mxu0 0.0
        %772 = vmatpush.msra.mxu0 0.0
        %773 = vmatpush.msra.mxu0 0.0
        %v774 = vand.u32 %v209, 4294901760
        %v775 = vsub.f32 %v209, %v774
        %v776 = vand.u32 %v775, 4294901760
        %777 = vmatpush.msra.mxu0 %v776
        %v778 = vand.u32 %v208, 4294901760
        %v779 = vsub.f32 %v208, %v778
        %v780 = vand.u32 %v779, 4294901760
        %781 = vmatpush.msra.mxu0 %v780
        %v782 = vand.u32 %v649, 4294901760
        %783 = vmatmul.f32.gmra.mxu0 %v782
        %v784 = vpop.f32.mrf.mxu0
        %v785 = vadd.f32 %v758, %v784
        %786 = vdwg.mxu0
        %787 = vmatpush.msra.mxu0 0.0
        %788 = vmatpush.msra.mxu0 0.0
        %789 = vmatpush.msra.mxu0 0.0
        %790 = vmatpush.msra.mxu0 0.0
        %791 = vmatpush.msra.mxu0 0.0
        %792 = vmatpush.msra.mxu0 0.0
        %793 = vmatpush.msra.mxu0 0.0
        %794 = vmatpush.msra.mxu0 0.0
        %795 = vmatpush.msra.mxu0 0.0
        %796 = vmatpush.msra.mxu0 0.0
        %797 = vmatpush.msra.mxu0 0.0
        %798 = vmatpush.msra.mxu0 0.0
        %799 = vmatpush.msra.mxu0 0.0
        %800 = vmatpush.msra.mxu0 0.0
        %v801 = vand.u32 %v209, 4294901760
        %802 = vmatpush.msra.mxu0 %v801
        %v803 = vand.u32 %v208, 4294901760
        %804 = vmatpush.msra.mxu0 %v803
        %v805 = vand.u32 %v649, 4294901760
        %806 = vmatmul.f32.gmra.mxu0 %v805
        %v807 = vpop.f32.mrf.mxu0
        %v808 = vadd.f32 %v785, %v807
        %809 = vdwg.mxu0
        %v811 = vsel %vm485, %v483, 0
        %813 = vmatpush.msra.mxu0 0.0
        %814 = vmatpush.msra.mxu0 0.0
        %815 = vmatpush.msra.mxu0 0.0
        %816 = vmatpush.msra.mxu0 0.0
        %817 = vmatpush.msra.mxu0 0.0
        %818 = vmatpush.msra.mxu0 0.0
        %819 = vmatpush.msra.mxu0 0.0
        %820 = vmatpush.msra.mxu0 0.0
        %821 = vmatpush.msra.mxu0 0.0
        %822 = vmatpush.msra.mxu0 0.0
        %823 = vmatpush.msra.mxu0 0.0
        %824 = vmatpush.msra.mxu0 0.0
        %825 = vmatpush.msra.mxu0 0.0
        %826 = vmatpush.msra.mxu0 0.0
        %v827 = vand.u32 %v212, 4294901760
        %828 = vmatpush.msra.mxu0 %v827
        %v829 = vand.u32 %v211, 4294901760
        %830 = vmatpush.msra.mxu0 %v829
        %v831 = vand.u32 %v811, 4294901760
        %v832 = vsub.f32 %v811, %v831
        %v833 = vand.u32 %v832, 4294901760
        %v834 = vsub.f32 %v832, %v833
        %v835 = vand.u32 %v834, 4294901760
        %836 = vmatmul.f32.gmra.mxu0 %v835
        %v837 = vpop.f32.mrf.mxu0
        %v838 = vadd.f32 0.0, %v837
        %839 = vdwg.mxu0
        %840 = vmatpush.msra.mxu0 0.0
        %841 = vmatpush.msra.mxu0 0.0
        %842 = vmatpush.msra.mxu0 0.0
        %843 = vmatpush.msra.mxu0 0.0
        %844 = vmatpush.msra.mxu0 0.0
        %845 = vmatpush.msra.mxu0 0.0
        %846 = vmatpush.msra.mxu0 0.0
        %847 = vmatpush.msra.mxu0 0.0
        %848 = vmatpush.msra.mxu0 0.0
        %849 = vmatpush.msra.mxu0 0.0
        %850 = vmatpush.msra.mxu0 0.0
        %851 = vmatpush.msra.mxu0 0.0
        %852 = vmatpush.msra.mxu0 0.0
        %853 = vmatpush.msra.mxu0 0.0
        %v854 = vand.u32 %v212, 4294901760
        %v855 = vsub.f32 %v212, %v854
        %v856 = vand.u32 %v855, 4294901760
        %v857 = vsub.f32 %v855, %v856
        %v858 = vand.u32 %v857, 4294901760
        %859 = vmatpush.msra.mxu0 %v858
        %v860 = vand.u32 %v211, 4294901760
        %v861 = vsub.f32 %v211, %v860
        %v862 = vand.u32 %v861, 4294901760
        %v863 = vsub.f32 %v861, %v862
        %v864 = vand.u32 %v863, 4294901760
        %865 = vmatpush.msra.mxu0 %v864
        %v866 = vand.u32 %v811, 4294901760
        %867 = vmatmul.f32.gmra.mxu0 %v866
        %v868 = vpop.f32.mrf.mxu0
        %v869 = vadd.f32 %v838, %v868
        %870 = vdwg.mxu0
        %871 = vmatpush.msra.mxu0 0.0
        %872 = vmatpush.msra.mxu0 0.0
        %873 = vmatpush.msra.mxu0 0.0
        %874 = vmatpush.msra.mxu0 0.0
        %875 = vmatpush.msra.mxu0 0.0
        %876 = vmatpush.msra.mxu0 0.0
        %877 = vmatpush.msra.mxu0 0.0
        %878 = vmatpush.msra.mxu0 0.0
        %879 = vmatpush.msra.mxu0 0.0
        %880 = vmatpush.msra.mxu0 0.0
        %881 = vmatpush.msra.mxu0 0.0
        %882 = vmatpush.msra.mxu0 0.0
        %883 = vmatpush.msra.mxu0 0.0
        %884 = vmatpush.msra.mxu0 0.0
        %v885 = vand.u32 %v212, 4294901760
        %v886 = vsub.f32 %v212, %v885
        %887 = vmatpush.msra.mxu0 %v886
        %v888 = vand.u32 %v211, 4294901760
        %v889 = vsub.f32 %v211, %v888
        %890 = vmatpush.msra.mxu0 %v889
        %v891 = vand.u32 %v811, 4294901760
        %v892 = vsub.f32 %v811, %v891
        %893 = vmatmul.f32.gmra.mxu0 %v892
        %v894 = vpop.f32.mrf.mxu0
        %v895 = vadd.f32 %v869, %v894
        %896 = vdwg.mxu0
        %897 = vmatpush.msra.mxu0 0.0
        %898 = vmatpush.msra.mxu0 0.0
        %899 = vmatpush.msra.mxu0 0.0
        %900 = vmatpush.msra.mxu0 0.0
        %901 = vmatpush.msra.mxu0 0.0
        %902 = vmatpush.msra.mxu0 0.0
        %903 = vmatpush.msra.mxu0 0.0
        %904 = vmatpush.msra.mxu0 0.0
        %905 = vmatpush.msra.mxu0 0.0
        %906 = vmatpush.msra.mxu0 0.0
        %907 = vmatpush.msra.mxu0 0.0
        %908 = vmatpush.msra.mxu0 0.0
        %909 = vmatpush.msra.mxu0 0.0
        %910 = vmatpush.msra.mxu0 0.0
        %v911 = vand.u32 %v212, 4294901760
        %912 = vmatpush.msra.mxu0 %v911
        %v913 = vand.u32 %v211, 4294901760
        %914 = vmatpush.msra.mxu0 %v913
        %v915 = vand.u32 %v811, 4294901760
        %v916 = vsub.f32 %v811, %v915
        %v917 = vand.u32 %v916, 4294901760
        %918 = vmatmul.f32.gmra.mxu0 %v917
        %v919 = vpop.f32.mrf.mxu0
        %v920 = vadd.f32 %v895, %v919
        %921 = vdwg.mxu0
        %922 = vmatpush.msra.mxu0 0.0
        %923 = vmatpush.msra.mxu0 0.0
        %924 = vmatpush.msra.mxu0 0.0
        %925 = vmatpush.msra.mxu0 0.0
        %926 = vmatpush.msra.mxu0 0.0
        %927 = vmatpush.msra.mxu0 0.0
        %928 = vmatpush.msra.mxu0 0.0
        %929 = vmatpush.msra.mxu0 0.0
        %930 = vmatpush.msra.mxu0 0.0
        %931 = vmatpush.msra.mxu0 0.0
        %932 = vmatpush.msra.mxu0 0.0
        %933 = vmatpush.msra.mxu0 0.0
        %934 = vmatpush.msra.mxu0 0.0
        %935 = vmatpush.msra.mxu0 0.0
        %v936 = vand.u32 %v212, 4294901760
        %v937 = vsub.f32 %v212, %v936
        %v938 = vand.u32 %v937, 4294901760
        %939 = vmatpush.msra.mxu0 %v938
        %v940 = vand.u32 %v211, 4294901760
        %v941 = vsub.f32 %v211, %v940
        %v942 = vand.u32 %v941, 4294901760
        %943 = vmatpush.msra.mxu0 %v942
        %v944 = vand.u32 %v811, 4294901760
        %945 = vmatmul.f32.gmra.mxu0 %v944
        %v946 = vpop.f32.mrf.mxu0
        %v947 = vadd.f32 %v920, %v946
        %948 = vdwg.mxu0
        %949 = vmatpush.msra.mxu0 0.0
        %950 = vmatpush.msra.mxu0 0.0
        %951 = vmatpush.msra.mxu0 0.0
        %952 = vmatpush.msra.mxu0 0.0
        %953 = vmatpush.msra.mxu0 0.0
        %954 = vmatpush.msra.mxu0 0.0
        %955 = vmatpush.msra.mxu0 0.0
        %956 = vmatpush.msra.mxu0 0.0
        %957 = vmatpush.msra.mxu0 0.0
        %958 = vmatpush.msra.mxu0 0.0
        %959 = vmatpush.msra.mxu0 0.0
        %960 = vmatpush.msra.mxu0 0.0
        %961 = vmatpush.msra.mxu0 0.0
        %962 = vmatpush.msra.mxu0 0.0
        %v963 = vand.u32 %v212, 4294901760
        %964 = vmatpush.msra.mxu0 %v963
        %v965 = vand.u32 %v211, 4294901760
        %966 = vmatpush.msra.mxu0 %v965
        %v967 = vand.u32 %v811, 4294901760
        %968 = vmatmul.f32.gmra.mxu0 %v967
        %v969 = vpop.f32.mrf.mxu0
        %v970 = vadd.f32 %v947, %v969
        %971 = vdwg.mxu0
        %v973 = vsel %vm485, %v479, 0
        %975 = vmatpush.msra.mxu0 0.0
        %976 = vmatpush.msra.mxu0 0.0
        %977 = vmatpush.msra.mxu0 0.0
        %978 = vmatpush.msra.mxu0 0.0
        %979 = vmatpush.msra.mxu0 0.0
        %980 = vmatpush.msra.mxu0 0.0
        %981 = vmatpush.msra.mxu0 0.0
        %982 = vmatpush.msra.mxu0 0.0
        %983 = vmatpush.msra.mxu0 0.0
        %984 = vmatpush.msra.mxu0 0.0
        %985 = vmatpush.msra.mxu0 0.0
        %986 = vmatpush.msra.mxu0 0.0
        %987 = vmatpush.msra.mxu0 0.0
        %988 = vmatpush.msra.mxu0 0.0
        %v989 = vand.u32 %v209, 4294901760
        %990 = vmatpush.msra.mxu0 %v989
        %v991 = vand.u32 %v208, 4294901760
        %992 = vmatpush.msra.mxu0 %v991
        %v993 = vand.u32 %v973, 4294901760
        %v994 = vsub.f32 %v973, %v993
        %v995 = vand.u32 %v994, 4294901760
        %v996 = vsub.f32 %v994, %v995
        %v997 = vand.u32 %v996, 4294901760
        %998 = vmatmul.f32.gmra.mxu0 %v997
        %v999 = vpop.f32.mrf.mxu0
        %v1000 = vadd.f32 %v970, %v999
        %1001 = vdwg.mxu0
        %1002 = vmatpush.msra.mxu0 0.0
        %1003 = vmatpush.msra.mxu0 0.0
        %1004 = vmatpush.msra.mxu0 0.0
        %1005 = vmatpush.msra.mxu0 0.0
        %1006 = vmatpush.msra.mxu0 0.0
        %1007 = vmatpush.msra.mxu0 0.0
        %1008 = vmatpush.msra.mxu0 0.0
        %1009 = vmatpush.msra.mxu0 0.0
        %1010 = vmatpush.msra.mxu0 0.0
        %1011 = vmatpush.msra.mxu0 0.0
        %1012 = vmatpush.msra.mxu0 0.0
        %1013 = vmatpush.msra.mxu0 0.0
        %1014 = vmatpush.msra.mxu0 0.0
        %1015 = vmatpush.msra.mxu0 0.0
        %v1016 = vand.u32 %v209, 4294901760
        %v1017 = vsub.f32 %v209, %v1016
        %v1018 = vand.u32 %v1017, 4294901760
        %v1019 = vsub.f32 %v1017, %v1018
        %v1020 = vand.u32 %v1019, 4294901760
        %1021 = vmatpush.msra.mxu0 %v1020
        %v1022 = vand.u32 %v208, 4294901760
        %v1023 = vsub.f32 %v208, %v1022
        %v1024 = vand.u32 %v1023, 4294901760
        %v1025 = vsub.f32 %v1023, %v1024
        %v1026 = vand.u32 %v1025, 4294901760
        %1027 = vmatpush.msra.mxu0 %v1026
        %v1028 = vand.u32 %v973, 4294901760
        %1029 = vmatmul.f32.gmra.mxu0 %v1028
        %v1030 = vpop.f32.mrf.mxu0
        %v1031 = vadd.f32 %v1000, %v1030
        %1032 = vdwg.mxu0
        %1033 = vmatpush.msra.mxu0 0.0
        %1034 = vmatpush.msra.mxu0 0.0
        %1035 = vmatpush.msra.mxu0 0.0
        %1036 = vmatpush.msra.mxu0 0.0
        %1037 = vmatpush.msra.mxu0 0.0
        %1038 = vmatpush.msra.mxu0 0.0
        %1039 = vmatpush.msra.mxu0 0.0
        %1040 = vmatpush.msra.mxu0 0.0
        %1041 = vmatpush.msra.mxu0 0.0
        %1042 = vmatpush.msra.mxu0 0.0
        %1043 = vmatpush.msra.mxu0 0.0
        %1044 = vmatpush.msra.mxu0 0.0
        %1045 = vmatpush.msra.mxu0 0.0
        %1046 = vmatpush.msra.mxu0 0.0
        %v1047 = vand.u32 %v209, 4294901760
        %v1048 = vsub.f32 %v209, %v1047
        %1049 = vmatpush.msra.mxu0 %v1048
        %v1050 = vand.u32 %v208, 4294901760
        %v1051 = vsub.f32 %v208, %v1050
        %1052 = vmatpush.msra.mxu0 %v1051
        %v1053 = vand.u32 %v973, 4294901760
        %v1054 = vsub.f32 %v973, %v1053
        %1055 = vmatmul.f32.gmra.mxu0 %v1054
        %v1056 = vpop.f32.mrf.mxu0
        %v1057 = vadd.f32 %v1031, %v1056
        %1058 = vdwg.mxu0
        %1059 = vmatpush.msra.mxu0 0.0
        %1060 = vmatpush.msra.mxu0 0.0
        %1061 = vmatpush.msra.mxu0 0.0
        %1062 = vmatpush.msra.mxu0 0.0
        %1063 = vmatpush.msra.mxu0 0.0
        %1064 = vmatpush.msra.mxu0 0.0
        %1065 = vmatpush.msra.mxu0 0.0
        %1066 = vmatpush.msra.mxu0 0.0
        %1067 = vmatpush.msra.mxu0 0.0
        %1068 = vmatpush.msra.mxu0 0.0
        %1069 = vmatpush.msra.mxu0 0.0
        %1070 = vmatpush.msra.mxu0 0.0
        %1071 = vmatpush.msra.mxu0 0.0
        %1072 = vmatpush.msra.mxu0 0.0
        %v1073 = vand.u32 %v209, 4294901760
        %1074 = vmatpush.msra.mxu0 %v1073
        %v1075 = vand.u32 %v208, 4294901760
        %1076 = vmatpush.msra.mxu0 %v1075
        %v1077 = vand.u32 %v973, 4294901760
        %v1078 = vsub.f32 %v973, %v1077
        %v1079 = vand.u32 %v1078, 4294901760
        %1080 = vmatmul.f32.gmra.mxu0 %v1079
        %v1081 = vpop.f32.mrf.mxu0
        %v1082 = vadd.f32 %v1057, %v1081
        %1083 = vdwg.mxu0
        %1084 = vmatpush.msra.mxu0 0.0
        %1085 = vmatpush.msra.mxu0 0.0
        %1086 = vmatpush.msra.mxu0 0.0
        %1087 = vmatpush.msra.mxu0 0.0
        %1088 = vmatpush.msra.mxu0 0.0
        %1089 = vmatpush.msra.mxu0 0.0
        %1090 = vmatpush.msra.mxu0 0.0
        %1091 = vmatpush.msra.mxu0 0.0
        %1092 = vmatpush.msra.mxu0 0.0
        %1093 = vmatpush.msra.mxu0 0.0
        %1094 = vmatpush.msra.mxu0 0.0
        %1095 = vmatpush.msra.mxu0 0.0
        %1096 = vmatpush.msra.mxu0 0.0
        %1097 = vmatpush.msra.mxu0 0.0
        %v1098 = vand.u32 %v209, 4294901760
        %v1099 = vsub.f32 %v209, %v1098
        %v1100 = vand.u32 %v1099, 4294901760
        %1101 = vmatpush.msra.mxu0 %v1100
        %v1102 = vand.u32 %v208, 4294901760
        %v1103 = vsub.f32 %v208, %v1102
        %v1104 = vand.u32 %v1103, 4294901760
        %1105 = vmatpush.msra.mxu0 %v1104
        %v1106 = vand.u32 %v973, 4294901760
        %1107 = vmatmul.f32.gmra.mxu0 %v1106
        %v1108 = vpop.f32.mrf.mxu0
        %v1109 = vadd.f32 %v1082, %v1108
        %1110 = vdwg.mxu0
        %1111 = vmatpush.msra.mxu0 0.0
        %1112 = vmatpush.msra.mxu0 0.0
        %1113 = vmatpush.msra.mxu0 0.0
        %1114 = vmatpush.msra.mxu0 0.0
        %1115 = vmatpush.msra.mxu0 0.0
        %1116 = vmatpush.msra.mxu0 0.0
        %1117 = vmatpush.msra.mxu0 0.0
        %1118 = vmatpush.msra.mxu0 0.0
        %1119 = vmatpush.msra.mxu0 0.0
        %1120 = vmatpush.msra.mxu0 0.0
        %1121 = vmatpush.msra.mxu0 0.0
        %1122 = vmatpush.msra.mxu0 0.0
        %1123 = vmatpush.msra.mxu0 0.0
        %1124 = vmatpush.msra.mxu0 0.0
        %v1125 = vand.u32 %v209, 4294901760
        %1126 = vmatpush.msra.mxu0 %v1125
        %v1127 = vand.u32 %v208, 4294901760
        %1128 = vmatpush.msra.mxu0 %v1127
        %v1129 = vand.u32 %v973, 4294901760
        %1130 = vmatmul.f32.gmra.mxu0 %v1129
        %v1131 = vpop.f32.mrf.mxu0
        %v1132 = vadd.f32 %v1109, %v1131
        %1133 = vdwg.mxu0
        %1135 = vrot.lane.b32.xlu0 %v1132, 32
        %v1136 = vpop.permute.xlu0 %1135
        %vm1138 = vcmask 261120
        %v1139 = vsel %vm1138, %v808, %v1136
        %v1141 = vrot.slane %v1139, 1
        %v1142 = vrot.slane %v1139, 2
        %v1143 = vrot.slane %v1139, 3
        %v1144 = vrot.slane %v1139, 4
        %v1145 = vrot.slane %v1139, 5
        %v1146 = vrot.slane %v1139, 6
        %v1147 = vrot.slane %v1139, 7
        %vm1155 = vcmask 516096
        %1156 = vst.msk [vmem:[%s203] sm:$0x1] %vm1155, %v1139
        %1157 = vst.msk [vmem:[%s203 + $0x8] sm:$0x1] %vm1155, %v1141
        %1158 = vst.msk [vmem:[%s203 + $0x10] sm:$0x1] %vm1155, %v1142
        %1159 = vst.msk [vmem:[%s203 + $0x18] sm:$0x1] %vm1155, %v1143
        %1160 = vst.msk [vmem:[%s203 + $0x20] sm:$0x1] %vm1155, %v1144
        %1161 = vst.msk [vmem:[%s203 + $0x28] sm:$0x1] %vm1155, %v1145
        %1162 = vst.msk [vmem:[%s203 + $0x30] sm:$0x1] %vm1155, %v1146
        %1163 = vst.msk [vmem:[%s203 + $0x38] sm:$0x1] %vm1155, %v1147
        %v1164 = vld [vmem:[%s181 + $0x1] sm:$0x1]
        %v1165 = vld [vmem:[%s181 + $0x9] sm:$0x1]
        %v1166 = vld [vmem:[%s181 + $0x11] sm:$0x1]
        %v1167 = vld [vmem:[%s181 + $0x19] sm:$0x1]
        %v1172 = vrot.slane %v1165, 7
        %v1173 = vsel %vm222, %v1172, %v1164
        %v1174 = vrot.slane %v1166, 6
        %v1175 = vsel %vm225, %v1174, %v1173
        %v1176 = vrot.slane %v1167, 5
        %v1177 = vsel %vm228, %v1176, %v1175
        %v1178 = vsel %vm243, %v1177, 0
        %1180 = vmatpush.msra.mxu0 0.0
        %1181 = vmatpush.msra.mxu0 0.0
        %1182 = vmatpush.msra.mxu0 0.0
        %1183 = vmatpush.msra.mxu0 0.0
        %1184 = vmatpush.msra.mxu0 0.0
        %1185 = vmatpush.msra.mxu0 0.0
        %1186 = vmatpush.msra.mxu0 0.0
        %1187 = vmatpush.msra.mxu0 0.0
        %1188 = vmatpush.msra.mxu0 0.0
        %1189 = vmatpush.msra.mxu0 0.0
        %1190 = vmatpush.msra.mxu0 0.0
        %1191 = vmatpush.msra.mxu0 0.0
        %1192 = vmatpush.msra.mxu0 0.0
        %1193 = vmatpush.msra.mxu0 0.0
        %1194 = vmatpush.msra.mxu0 0.0
        %v1195 = vand.u32 %v1178, 4294901760
        %1196 = vmatpush.msra.mxu0 %v1195
        %v1197 = vand.u32 %v232, 4294901760
        %v1198 = vsub.f32 %v232, %v1197
        %v1199 = vand.u32 %v1198, 4294901760
        %v1200 = vsub.f32 %v1198, %v1199
        %v1201 = vand.u32 %v1200, 4294901760
        %1202 = vmatmul.f32.gmra.mxu0 %v1201
        %v1203 = vpop.f32.mrf.mxu0
        %v1204 = vadd.f32 0.0, %v1203
        %v1205 = vand.u32 %v235, 4294901760
        %v1206 = vsub.f32 %v235, %v1205
        %v1207 = vand.u32 %v1206, 4294901760
        %v1208 = vsub.f32 %v1206, %v1207
        %v1209 = vand.u32 %v1208, 4294901760
        %1210 = vmatmul.f32.gmra.mxu0 %v1209
        %v1211 = vpop.f32.mrf.mxu0
        %v1212 = vadd.f32 0.0, %v1211
        %v1213 = vand.u32 %v238, 4294901760
        %v1214 = vsub.f32 %v238, %v1213
        %v1215 = vand.u32 %v1214, 4294901760
        %v1216 = vsub.f32 %v1214, %v1215
        %v1217 = vand.u32 %v1216, 4294901760
        %1218 = vmatmul.f32.gmra.mxu0 %v1217
        %v1219 = vpop.f32.mrf.mxu0
        %v1220 = vadd.f32 0.0, %v1219
        %v1221 = vand.u32 %v241, 4294901760
        %v1222 = vsub.f32 %v241, %v1221
        %v1223 = vand.u32 %v1222, 4294901760
        %v1224 = vsub.f32 %v1222, %v1223
        %v1225 = vand.u32 %v1224, 4294901760
        %1226 = vmatmul.f32.gmra.mxu0 %v1225
        %v1227 = vpop.f32.mrf.mxu0
        %v1228 = vadd.f32 0.0, %v1227
        %1229 = vdwg.mxu0
        %1230 = vmatpush.msra.mxu0 0.0
        %1231 = vmatpush.msra.mxu0 0.0
        %1232 = vmatpush.msra.mxu0 0.0
        %1233 = vmatpush.msra.mxu0 0.0
        %1234 = vmatpush.msra.mxu0 0.0
        %1235 = vmatpush.msra.mxu0 0.0
        %1236 = vmatpush.msra.mxu0 0.0
        %1237 = vmatpush.msra.mxu0 0.0
        %1238 = vmatpush.msra.mxu0 0.0
        %1239 = vmatpush.msra.mxu0 0.0
        %1240 = vmatpush.msra.mxu0 0.0
        %1241 = vmatpush.msra.mxu0 0.0
        %1242 = vmatpush.msra.mxu0 0.0
        %1243 = vmatpush.msra.mxu0 0.0
        %1244 = vmatpush.msra.mxu0 0.0
        %v1245 = vand.u32 %v1178, 4294901760
        %v1246 = vsub.f32 %v1178, %v1245
        %v1247 = vand.u32 %v1246, 4294901760
        %v1248 = vsub.f32 %v1246, %v1247
        %v1249 = vand.u32 %v1248, 4294901760
        %1250 = vmatpush.msra.mxu0 %v1249
        %v1251 = vand.u32 %v232, 4294901760
        %1252 = vmatmul.f32.gmra.mxu0 %v1251
        %v1253 = vpop.f32.mrf.mxu0
        %v1254 = vadd.f32 %v1204, %v1253
        %v1255 = vand.u32 %v235, 4294901760
        %1256 = vmatmul.f32.gmra.mxu0 %v1255
        %v1257 = vpop.f32.mrf.mxu0
        %v1258 = vadd.f32 %v1212, %v1257
        %v1259 = vand.u32 %v238, 4294901760
        %1260 = vmatmul.f32.gmra.mxu0 %v1259
        %v1261 = vpop.f32.mrf.mxu0
        %v1262 = vadd.f32 %v1220, %v1261
        %v1263 = vand.u32 %v241, 4294901760
        %1264 = vmatmul.f32.gmra.mxu0 %v1263
        %v1265 = vpop.f32.mrf.mxu0
        %v1266 = vadd.f32 %v1228, %v1265
        %1267 = vdwg.mxu0
        %1268 = vmatpush.msra.mxu0 0.0
        %1269 = vmatpush.msra.mxu0 0.0
        %1270 = vmatpush.msra.mxu0 0.0
        %1271 = vmatpush.msra.mxu0 0.0
        %1272 = vmatpush.msra.mxu0 0.0
        %1273 = vmatpush.msra.mxu0 0.0
        %1274 = vmatpush.msra.mxu0 0.0
        %1275 = vmatpush.msra.mxu0 0.0
        %1276 = vmatpush.msra.mxu0 0.0
        %1277 = vmatpush.msra.mxu0 0.0
        %1278 = vmatpush.msra.mxu0 0.0
        %1279 = vmatpush.msra.mxu0 0.0
        %1280 = vmatpush.msra.mxu0 0.0
        %1281 = vmatpush.msra.mxu0 0.0
        %1282 = vmatpush.msra.mxu0 0.0
        %v1283 = vand.u32 %v1178, 4294901760
        %v1284 = vsub.f32 %v1178, %v1283
        %1285 = vmatpush.msra.mxu0 %v1284
        %v1286 = vand.u32 %v232, 4294901760
        %v1287 = vsub.f32 %v232, %v1286
        %1288 = vmatmul.f32.gmra.mxu0 %v1287
        %v1289 = vpop.f32.mrf.mxu0
        %v1290 = vadd.f32 %v1254, %v1289
        %v1291 = vand.u32 %v235, 4294901760
        %v1292 = vsub.f32 %v235, %v1291
        %1293 = vmatmul.f32.gmra.mxu0 %v1292
        %v1294 = vpop.f32.mrf.mxu0
        %v1295 = vadd.f32 %v1258, %v1294
        %v1296 = vand.u32 %v238, 4294901760
        %v1297 = vsub.f32 %v238, %v1296
        %1298 = vmatmul.f32.gmra.mxu0 %v1297
        %v1299 = vpop.f32.mrf.mxu0
        %v1300 = vadd.f32 %v1262, %v1299
        %v1301 = vand.u32 %v241, 4294901760
        %v1302 = vsub.f32 %v241, %v1301
        %1303 = vmatmul.f32.gmra.mxu0 %v1302
        %v1304 = vpop.f32.mrf.mxu0
        %v1305 = vadd.f32 %v1266, %v1304
        %1306 = vdwg.mxu0
        %1307 = vmatpush.msra.mxu0 0.0
        %1308 = vmatpush.msra.mxu0 0.0
        %1309 = vmatpush.msra.mxu0 0.0
        %1310 = vmatpush.msra.mxu0 0.0
        %1311 = vmatpush.msra.mxu0 0.0
        %1312 = vmatpush.msra.mxu0 0.0
        %1313 = vmatpush.msra.mxu0 0.0
        %1314 = vmatpush.msra.mxu0 0.0
        %1315 = vmatpush.msra.mxu0 0.0
        %1316 = vmatpush.msra.mxu0 0.0
        %1317 = vmatpush.msra.mxu0 0.0
        %1318 = vmatpush.msra.mxu0 0.0
        %1319 = vmatpush.msra.mxu0 0.0
        %1320 = vmatpush.msra.mxu0 0.0
        %1321 = vmatpush.msra.mxu0 0.0
        %v1322 = vand.u32 %v1178, 4294901760
        %1323 = vmatpush.msra.mxu0 %v1322
        %v1324 = vand.u32 %v232, 4294901760
        %v1325 = vsub.f32 %v232, %v1324
        %v1326 = vand.u32 %v1325, 4294901760
        %1327 = vmatmul.f32.gmra.mxu0 %v1326
        %v1328 = vpop.f32.mrf.mxu0
        %v1329 = vadd.f32 %v1290, %v1328
        %v1330 = vand.u32 %v235, 4294901760
        %v1331 = vsub.f32 %v235, %v1330
        %v1332 = vand.u32 %v1331, 4294901760
        %1333 = vmatmul.f32.gmra.mxu0 %v1332
        %v1334 = vpop.f32.mrf.mxu0
        %v1335 = vadd.f32 %v1295, %v1334
        %v1336 = vand.u32 %v238, 4294901760
        %v1337 = vsub.f32 %v238, %v1336
        %v1338 = vand.u32 %v1337, 4294901760
        %1339 = vmatmul.f32.gmra.mxu0 %v1338
        %v1340 = vpop.f32.mrf.mxu0
        %v1341 = vadd.f32 %v1300, %v1340
        %v1342 = vand.u32 %v241, 4294901760
        %v1343 = vsub.f32 %v241, %v1342
        %v1344 = vand.u32 %v1343, 4294901760
        %1345 = vmatmul.f32.gmra.mxu0 %v1344
        %v1346 = vpop.f32.mrf.mxu0
        %v1347 = vadd.f32 %v1305, %v1346
        %1348 = vdwg.mxu0
        %1349 = vmatpush.msra.mxu0 0.0
        %1350 = vmatpush.msra.mxu0 0.0
        %1351 = vmatpush.msra.mxu0 0.0
        %1352 = vmatpush.msra.mxu0 0.0
        %1353 = vmatpush.msra.mxu0 0.0
        %1354 = vmatpush.msra.mxu0 0.0
        %1355 = vmatpush.msra.mxu0 0.0
        %1356 = vmatpush.msra.mxu0 0.0
        %1357 = vmatpush.msra.mxu0 0.0
        %1358 = vmatpush.msra.mxu0 0.0
        %1359 = vmatpush.msra.mxu0 0.0
        %1360 = vmatpush.msra.mxu0 0.0
        %1361 = vmatpush.msra.mxu0 0.0
        %1362 = vmatpush.msra.mxu0 0.0
        %1363 = vmatpush.msra.mxu0 0.0
        %v1364 = vand.u32 %v1178, 4294901760
        %v1365 = vsub.f32 %v1178, %v1364
        %v1366 = vand.u32 %v1365, 4294901760
        %1367 = vmatpush.msra.mxu0 %v1366
        %v1368 = vand.u32 %v232, 4294901760
        %1369 = vmatmul.f32.gmra.mxu0 %v1368
        %v1370 = vpop.f32.mrf.mxu0
        %v1371 = vadd.f32 %v1329, %v1370
        %v1372 = vand.u32 %v235, 4294901760
        %1373 = vmatmul.f32.gmra.mxu0 %v1372
        %v1374 = vpop.f32.mrf.mxu0
        %v1375 = vadd.f32 %v1335, %v1374
        %v1376 = vand.u32 %v238, 4294901760
        %1377 = vmatmul.f32.gmra.mxu0 %v1376
        %v1378 = vpop.f32.mrf.mxu0
        %v1379 = vadd.f32 %v1341, %v1378
        %v1380 = vand.u32 %v241, 4294901760
        %1381 = vmatmul.f32.gmra.mxu0 %v1380
        %v1382 = vpop.f32.mrf.mxu0
        %v1383 = vadd.f32 %v1347, %v1382
        %1384 = vdwg.mxu0
        %1385 = vmatpush.msra.mxu0 0.0
        %1386 = vmatpush.msra.mxu0 0.0
        %1387 = vmatpush.msra.mxu0 0.0
        %1388 = vmatpush.msra.mxu0 0.0
        %1389 = vmatpush.msra.mxu0 0.0
        %1390 = vmatpush.msra.mxu0 0.0
        %1391 = vmatpush.msra.mxu0 0.0
        %1392 = vmatpush.msra.mxu0 0.0
        %1393 = vmatpush.msra.mxu0 0.0
        %1394 = vmatpush.msra.mxu0 0.0
        %1395 = vmatpush.msra.mxu0 0.0
        %1396 = vmatpush.msra.mxu0 0.0
        %1397 = vmatpush.msra.mxu0 0.0
        %1398 = vmatpush.msra.mxu0 0.0
        %1399 = vmatpush.msra.mxu0 0.0
        %v1400 = vand.u32 %v1178, 4294901760
        %1401 = vmatpush.msra.mxu0 %v1400
        %v1402 = vand.u32 %v232, 4294901760
        %1403 = vmatmul.f32.gmra.mxu0 %v1402
        %v1404 = vpop.f32.mrf.mxu0
        %v1405 = vadd.f32 %v1371, %v1404
        %v1406 = vand.u32 %v235, 4294901760
        %1407 = vmatmul.f32.gmra.mxu0 %v1406
        %v1408 = vpop.f32.mrf.mxu0
        %v1409 = vadd.f32 %v1375, %v1408
        %v1410 = vand.u32 %v238, 4294901760
        %1411 = vmatmul.f32.gmra.mxu0 %v1410
        %v1412 = vpop.f32.mrf.mxu0
        %v1413 = vadd.f32 %v1379, %v1412
        %v1414 = vand.u32 %v241, 4294901760
        %1415 = vmatmul.f32.gmra.mxu0 %v1414
        %v1416 = vpop.f32.mrf.mxu0
        %v1417 = vadd.f32 %v1383, %v1416
        %1418 = vdwg.mxu0
        %v1420 = vsel %vm485, %v1409, 0
        %1422 = vmatpush.msra.mxu0 0.0
        %1423 = vmatpush.msra.mxu0 0.0
        %1424 = vmatpush.msra.mxu0 0.0
        %1425 = vmatpush.msra.mxu0 0.0
        %1426 = vmatpush.msra.mxu0 0.0
        %1427 = vmatpush.msra.mxu0 0.0
        %1428 = vmatpush.msra.mxu0 0.0
        %1429 = vmatpush.msra.mxu0 0.0
        %1430 = vmatpush.msra.mxu0 0.0
        %1431 = vmatpush.msra.mxu0 0.0
        %1432 = vmatpush.msra.mxu0 0.0
        %1433 = vmatpush.msra.mxu0 0.0
        %1434 = vmatpush.msra.mxu0 0.0
        %1435 = vmatpush.msra.mxu0 0.0
        %v1436 = vand.u32 %v212, 4294901760
        %1437 = vmatpush.msra.mxu0 %v1436
        %v1438 = vand.u32 %v211, 4294901760
        %1439 = vmatpush.msra.mxu0 %v1438
        %v1440 = vand.u32 %v1420, 4294901760
        %v1441 = vsub.f32 %v1420, %v1440
        %v1442 = vand.u32 %v1441, 4294901760
        %v1443 = vsub.f32 %v1441, %v1442
        %v1444 = vand.u32 %v1443, 4294901760
        %1445 = vmatmul.f32.gmra.mxu0 %v1444
        %v1446 = vpop.f32.mrf.mxu0
        %v1447 = vadd.f32 0.0, %v1446
        %1448 = vdwg.mxu0
        %1449 = vmatpush.msra.mxu0 0.0
        %1450 = vmatpush.msra.mxu0 0.0
        %1451 = vmatpush.msra.mxu0 0.0
        %1452 = vmatpush.msra.mxu0 0.0
        %1453 = vmatpush.msra.mxu0 0.0
        %1454 = vmatpush.msra.mxu0 0.0
        %1455 = vmatpush.msra.mxu0 0.0
        %1456 = vmatpush.msra.mxu0 0.0
        %1457 = vmatpush.msra.mxu0 0.0
        %1458 = vmatpush.msra.mxu0 0.0
        %1459 = vmatpush.msra.mxu0 0.0
        %1460 = vmatpush.msra.mxu0 0.0
        %1461 = vmatpush.msra.mxu0 0.0
        %1462 = vmatpush.msra.mxu0 0.0
        %v1463 = vand.u32 %v212, 4294901760
        %v1464 = vsub.f32 %v212, %v1463
        %v1465 = vand.u32 %v1464, 4294901760
        %v1466 = vsub.f32 %v1464, %v1465
        %v1467 = vand.u32 %v1466, 4294901760
        %1468 = vmatpush.msra.mxu0 %v1467
        %v1469 = vand.u32 %v211, 4294901760
        %v1470 = vsub.f32 %v211, %v1469
        %v1471 = vand.u32 %v1470, 4294901760
        %v1472 = vsub.f32 %v1470, %v1471
        %v1473 = vand.u32 %v1472, 4294901760
        %1474 = vmatpush.msra.mxu0 %v1473
        %v1475 = vand.u32 %v1420, 4294901760
        %1476 = vmatmul.f32.gmra.mxu0 %v1475
        %v1477 = vpop.f32.mrf.mxu0
        %v1478 = vadd.f32 %v1447, %v1477
        %1479 = vdwg.mxu0
        %1480 = vmatpush.msra.mxu0 0.0
        %1481 = vmatpush.msra.mxu0 0.0
        %1482 = vmatpush.msra.mxu0 0.0
        %1483 = vmatpush.msra.mxu0 0.0
        %1484 = vmatpush.msra.mxu0 0.0
        %1485 = vmatpush.msra.mxu0 0.0
        %1486 = vmatpush.msra.mxu0 0.0
        %1487 = vmatpush.msra.mxu0 0.0
        %1488 = vmatpush.msra.mxu0 0.0
        %1489 = vmatpush.msra.mxu0 0.0
        %1490 = vmatpush.msra.mxu0 0.0
        %1491 = vmatpush.msra.mxu0 0.0
        %1492 = vmatpush.msra.mxu0 0.0
        %1493 = vmatpush.msra.mxu0 0.0
        %v1494 = vand.u32 %v212, 4294901760
        %v1495 = vsub.f32 %v212, %v1494
        %1496 = vmatpush.msra.mxu0 %v1495
        %v1497 = vand.u32 %v211, 4294901760
        %v1498 = vsub.f32 %v211, %v1497
        %1499 = vmatpush.msra.mxu0 %v1498
        %v1500 = vand.u32 %v1420, 4294901760
        %v1501 = vsub.f32 %v1420, %v1500
        %1502 = vmatmul.f32.gmra.mxu0 %v1501
        %v1503 = vpop.f32.mrf.mxu0
        %v1504 = vadd.f32 %v1478, %v1503
        %1505 = vdwg.mxu0
        %1506 = vmatpush.msra.mxu0 0.0
        %1507 = vmatpush.msra.mxu0 0.0
        %1508 = vmatpush.msra.mxu0 0.0
        %1509 = vmatpush.msra.mxu0 0.0
        %1510 = vmatpush.msra.mxu0 0.0
        %1511 = vmatpush.msra.mxu0 0.0
        %1512 = vmatpush.msra.mxu0 0.0
        %1513 = vmatpush.msra.mxu0 0.0
        %1514 = vmatpush.msra.mxu0 0.0
        %1515 = vmatpush.msra.mxu0 0.0
        %1516 = vmatpush.msra.mxu0 0.0
        %1517 = vmatpush.msra.mxu0 0.0
        %1518 = vmatpush.msra.mxu0 0.0
        %1519 = vmatpush.msra.mxu0 0.0
        %v1520 = vand.u32 %v212, 4294901760
        %1521 = vmatpush.msra.mxu0 %v1520
        %v1522 = vand.u32 %v211, 4294901760
        %1523 = vmatpush.msra.mxu0 %v1522
        %v1524 = vand.u32 %v1420, 4294901760
        %v1525 = vsub.f32 %v1420, %v1524
        %v1526 = vand.u32 %v1525, 4294901760
        %1527 = vmatmul.f32.gmra.mxu0 %v1526
        %v1528 = vpop.f32.mrf.mxu0
        %v1529 = vadd.f32 %v1504, %v1528
        %1530 = vdwg.mxu0
        %1531 = vmatpush.msra.mxu0 0.0
        %1532 = vmatpush.msra.mxu0 0.0
        %1533 = vmatpush.msra.mxu0 0.0
        %1534 = vmatpush.msra.mxu0 0.0
        %1535 = vmatpush.msra.mxu0 0.0
        %1536 = vmatpush.msra.mxu0 0.0
        %1537 = vmatpush.msra.mxu0 0.0
        %1538 = vmatpush.msra.mxu0 0.0
        %1539 = vmatpush.msra.mxu0 0.0
        %1540 = vmatpush.msra.mxu0 0.0
        %1541 = vmatpush.msra.mxu0 0.0
        %1542 = vmatpush.msra.mxu0 0.0
        %1543 = vmatpush.msra.mxu0 0.0
        %1544 = vmatpush.msra.mxu0 0.0
        %v1545 = vand.u32 %v212, 4294901760
        %v1546 = vsub.f32 %v212, %v1545
        %v1547 = vand.u32 %v1546, 4294901760
        %1548 = vmatpush.msra.mxu0 %v1547
        %v1549 = vand.u32 %v211, 4294901760
        %v1550 = vsub.f32 %v211, %v1549
        %v1551 = vand.u32 %v1550, 4294901760
        %1552 = vmatpush.msra.mxu0 %v1551
        %v1553 = vand.u32 %v1420, 4294901760
        %1554 = vmatmul.f32.gmra.mxu0 %v1553
        %v1555 = vpop.f32.mrf.mxu0
        %v1556 = vadd.f32 %v1529, %v1555
        %1557 = vdwg.mxu0
        %1558 = vmatpush.msra.mxu0 0.0
        %1559 = vmatpush.msra.mxu0 0.0
        %1560 = vmatpush.msra.mxu0 0.0
        %1561 = vmatpush.msra.mxu0 0.0
        %1562 = vmatpush.msra.mxu0 0.0
        %1563 = vmatpush.msra.mxu0 0.0
        %1564 = vmatpush.msra.mxu0 0.0
        %1565 = vmatpush.msra.mxu0 0.0
        %1566 = vmatpush.msra.mxu0 0.0
        %1567 = vmatpush.msra.mxu0 0.0
        %1568 = vmatpush.msra.mxu0 0.0
        %1569 = vmatpush.msra.mxu0 0.0
        %1570 = vmatpush.msra.mxu0 0.0
        %1571 = vmatpush.msra.mxu0 0.0
        %v1572 = vand.u32 %v212, 4294901760
        %1573 = vmatpush.msra.mxu0 %v1572
        %v1574 = vand.u32 %v211, 4294901760
        %1575 = vmatpush.msra.mxu0 %v1574
        %v1576 = vand.u32 %v1420, 4294901760
        %1577 = vmatmul.f32.gmra.mxu0 %v1576
        %v1578 = vpop.f32.mrf.mxu0
        %v1579 = vadd.f32 %v1556, %v1578
        %1580 = vdwg.mxu0
        %v1582 = vsel %vm485, %v1405, 0
        %1584 = vmatpush.msra.mxu0 0.0
        %1585 = vmatpush.msra.mxu0 0.0
        %1586 = vmatpush.msra.mxu0 0.0
        %1587 = vmatpush.msra.mxu0 0.0
        %1588 = vmatpush.msra.mxu0 0.0
        %1589 = vmatpush.msra.mxu0 0.0
        %1590 = vmatpush.msra.mxu0 0.0
        %1591 = vmatpush.msra.mxu0 0.0
        %1592 = vmatpush.msra.mxu0 0.0
        %1593 = vmatpush.msra.mxu0 0.0
        %1594 = vmatpush.msra.mxu0 0.0
        %1595 = vmatpush.msra.mxu0 0.0
        %1596 = vmatpush.msra.mxu0 0.0
        %1597 = vmatpush.msra.mxu0 0.0
        %v1598 = vand.u32 %v209, 4294901760
        %1599 = vmatpush.msra.mxu0 %v1598
        %v1600 = vand.u32 %v208, 4294901760
        %1601 = vmatpush.msra.mxu0 %v1600
        %v1602 = vand.u32 %v1582, 4294901760
        %v1603 = vsub.f32 %v1582, %v1602
        %v1604 = vand.u32 %v1603, 4294901760
        %v1605 = vsub.f32 %v1603, %v1604
        %v1606 = vand.u32 %v1605, 4294901760
        %1607 = vmatmul.f32.gmra.mxu0 %v1606
        %v1608 = vpop.f32.mrf.mxu0
        %v1609 = vadd.f32 %v1579, %v1608
        %1610 = vdwg.mxu0
        %1611 = vmatpush.msra.mxu0 0.0
        %1612 = vmatpush.msra.mxu0 0.0
        %1613 = vmatpush.msra.mxu0 0.0
        %1614 = vmatpush.msra.mxu0 0.0
        %1615 = vmatpush.msra.mxu0 0.0
        %1616 = vmatpush.msra.mxu0 0.0
        %1617 = vmatpush.msra.mxu0 0.0
        %1618 = vmatpush.msra.mxu0 0.0
        %1619 = vmatpush.msra.mxu0 0.0
        %1620 = vmatpush.msra.mxu0 0.0
        %1621 = vmatpush.msra.mxu0 0.0
        %1622 = vmatpush.msra.mxu0 0.0
        %1623 = vmatpush.msra.mxu0 0.0
        %1624 = vmatpush.msra.mxu0 0.0
        %v1625 = vand.u32 %v209, 4294901760
        %v1626 = vsub.f32 %v209, %v1625
        %v1627 = vand.u32 %v1626, 4294901760
        %v1628 = vsub.f32 %v1626, %v1627
        %v1629 = vand.u32 %v1628, 4294901760
        %1630 = vmatpush.msra.mxu0 %v1629
        %v1631 = vand.u32 %v208, 4294901760
        %v1632 = vsub.f32 %v208, %v1631
        %v1633 = vand.u32 %v1632, 4294901760
        %v1634 = vsub.f32 %v1632, %v1633
        %v1635 = vand.u32 %v1634, 4294901760
        %1636 = vmatpush.msra.mxu0 %v1635
        %v1637 = vand.u32 %v1582, 4294901760
        %1638 = vmatmul.f32.gmra.mxu0 %v1637
        %v1639 = vpop.f32.mrf.mxu0
        %v1640 = vadd.f32 %v1609, %v1639
        %1641 = vdwg.mxu0
        %1642 = vmatpush.msra.mxu0 0.0
        %1643 = vmatpush.msra.mxu0 0.0
        %1644 = vmatpush.msra.mxu0 0.0
        %1645 = vmatpush.msra.mxu0 0.0
        %1646 = vmatpush.msra.mxu0 0.0
        %1647 = vmatpush.msra.mxu0 0.0
        %1648 = vmatpush.msra.mxu0 0.0
        %1649 = vmatpush.msra.mxu0 0.0
        %1650 = vmatpush.msra.mxu0 0.0
        %1651 = vmatpush.msra.mxu0 0.0
        %1652 = vmatpush.msra.mxu0 0.0
        %1653 = vmatpush.msra.mxu0 0.0
        %1654 = vmatpush.msra.mxu0 0.0
        %1655 = vmatpush.msra.mxu0 0.0
        %v1656 = vand.u32 %v209, 4294901760
        %v1657 = vsub.f32 %v209, %v1656
        %1658 = vmatpush.msra.mxu0 %v1657
        %v1659 = vand.u32 %v208, 4294901760
        %v1660 = vsub.f32 %v208, %v1659
        %1661 = vmatpush.msra.mxu0 %v1660
        %v1662 = vand.u32 %v1582, 4294901760
        %v1663 = vsub.f32 %v1582, %v1662
        %1664 = vmatmul.f32.gmra.mxu0 %v1663
        %v1665 = vpop.f32.mrf.mxu0
        %v1666 = vadd.f32 %v1640, %v1665
        %1667 = vdwg.mxu0
        %1668 = vmatpush.msra.mxu0 0.0
        %1669 = vmatpush.msra.mxu0 0.0
        %1670 = vmatpush.msra.mxu0 0.0
        %1671 = vmatpush.msra.mxu0 0.0
        %1672 = vmatpush.msra.mxu0 0.0
        %1673 = vmatpush.msra.mxu0 0.0
        %1674 = vmatpush.msra.mxu0 0.0
        %1675 = vmatpush.msra.mxu0 0.0
        %1676 = vmatpush.msra.mxu0 0.0
        %1677 = vmatpush.msra.mxu0 0.0
        %1678 = vmatpush.msra.mxu0 0.0
        %1679 = vmatpush.msra.mxu0 0.0
        %1680 = vmatpush.msra.mxu0 0.0
        %1681 = vmatpush.msra.mxu0 0.0
        %v1682 = vand.u32 %v209, 4294901760
        %1683 = vmatpush.msra.mxu0 %v1682
        %v1684 = vand.u32 %v208, 4294901760
        %1685 = vmatpush.msra.mxu0 %v1684
        %v1686 = vand.u32 %v1582, 4294901760
        %v1687 = vsub.f32 %v1582, %v1686
        %v1688 = vand.u32 %v1687, 4294901760
        %1689 = vmatmul.f32.gmra.mxu0 %v1688
        %v1690 = vpop.f32.mrf.mxu0
        %v1691 = vadd.f32 %v1666, %v1690
        %1692 = vdwg.mxu0
        %1693 = vmatpush.msra.mxu0 0.0
        %1694 = vmatpush.msra.mxu0 0.0
        %1695 = vmatpush.msra.mxu0 0.0
        %1696 = vmatpush.msra.mxu0 0.0
        %1697 = vmatpush.msra.mxu0 0.0
        %1698 = vmatpush.msra.mxu0 0.0
        %1699 = vmatpush.msra.mxu0 0.0
        %1700 = vmatpush.msra.mxu0 0.0
        %1701 = vmatpush.msra.mxu0 0.0
        %1702 = vmatpush.msra.mxu0 0.0
        %1703 = vmatpush.msra.mxu0 0.0
        %1704 = vmatpush.msra.mxu0 0.0
        %1705 = vmatpush.msra.mxu0 0.0
        %1706 = vmatpush.msra.mxu0 0.0
        %v1707 = vand.u32 %v209, 4294901760
        %v1708 = vsub.f32 %v209, %v1707
        %v1709 = vand.u32 %v1708, 4294901760
        %1710 = vmatpush.msra.mxu0 %v1709
        %v1711 = vand.u32 %v208, 4294901760
        %v1712 = vsub.f32 %v208, %v1711
        %v1713 = vand.u32 %v1712, 4294901760
        %1714 = vmatpush.msra.mxu0 %v1713
        %v1715 = vand.u32 %v1582, 4294901760
        %1716 = vmatmul.f32.gmra.mxu0 %v1715
        %v1717 = vpop.f32.mrf.mxu0
        %v1718 = vadd.f32 %v1691, %v1717
        %1719 = vdwg.mxu0
        %1720 = vmatpush.msra.mxu0 0.0
        %1721 = vmatpush.msra.mxu0 0.0
        %1722 = vmatpush.msra.mxu0 0.0
        %1723 = vmatpush.msra.mxu0 0.0
        %1724 = vmatpush.msra.mxu0 0.0
        %1725 = vmatpush.msra.mxu0 0.0
        %1726 = vmatpush.msra.mxu0 0.0
        %1727 = vmatpush.msra.mxu0 0.0
        %1728 = vmatpush.msra.mxu0 0.0
        %1729 = vmatpush.msra.mxu0 0.0
        %1730 = vmatpush.msra.mxu0 0.0
        %1731 = vmatpush.msra.mxu0 0.0
        %1732 = vmatpush.msra.mxu0 0.0
        %1733 = vmatpush.msra.mxu0 0.0
        %v1734 = vand.u32 %v209, 4294901760
        %1735 = vmatpush.msra.mxu0 %v1734
        %v1736 = vand.u32 %v208, 4294901760
        %1737 = vmatpush.msra.mxu0 %v1736
        %v1738 = vand.u32 %v1582, 4294901760
        %1739 = vmatmul.f32.gmra.mxu0 %v1738
        %v1740 = vpop.f32.mrf.mxu0
        %v1741 = vadd.f32 %v1718, %v1740
        %1742 = vdwg.mxu0
        %v1744 = vsel %vm485, %v1417, 0
        %1746 = vmatpush.msra.mxu0 0.0
        %1747 = vmatpush.msra.mxu0 0.0
        %1748 = vmatpush.msra.mxu0 0.0
        %1749 = vmatpush.msra.mxu0 0.0
        %1750 = vmatpush.msra.mxu0 0.0
        %1751 = vmatpush.msra.mxu0 0.0
        %1752 = vmatpush.msra.mxu0 0.0
        %1753 = vmatpush.msra.mxu0 0.0
        %1754 = vmatpush.msra.mxu0 0.0
        %1755 = vmatpush.msra.mxu0 0.0
        %1756 = vmatpush.msra.mxu0 0.0
        %1757 = vmatpush.msra.mxu0 0.0
        %1758 = vmatpush.msra.mxu0 0.0
        %1759 = vmatpush.msra.mxu0 0.0
        %v1760 = vand.u32 %v212, 4294901760
        %1761 = vmatpush.msra.mxu0 %v1760
        %v1762 = vand.u32 %v211, 4294901760
        %1763 = vmatpush.msra.mxu0 %v1762
        %v1764 = vand.u32 %v1744, 4294901760
        %v1765 = vsub.f32 %v1744, %v1764
        %v1766 = vand.u32 %v1765, 4294901760
        %v1767 = vsub.f32 %v1765, %v1766
        %v1768 = vand.u32 %v1767, 4294901760
        %1769 = vmatmul.f32.gmra.mxu0 %v1768
        %v1770 = vpop.f32.mrf.mxu0
        %v1771 = vadd.f32 0.0, %v1770
        %1772 = vdwg.mxu0
        %1773 = vmatpush.msra.mxu0 0.0
        %1774 = vmatpush.msra.mxu0 0.0
        %1775 = vmatpush.msra.mxu0 0.0
        %1776 = vmatpush.msra.mxu0 0.0
        %1777 = vmatpush.msra.mxu0 0.0
        %1778 = vmatpush.msra.mxu0 0.0
        %1779 = vmatpush.msra.mxu0 0.0
        %1780 = vmatpush.msra.mxu0 0.0
        %1781 = vmatpush.msra.mxu0 0.0
        %1782 = vmatpush.msra.mxu0 0.0
        %1783 = vmatpush.msra.mxu0 0.0
        %1784 = vmatpush.msra.mxu0 0.0
        %1785 = vmatpush.msra.mxu0 0.0
        %1786 = vmatpush.msra.mxu0 0.0
        %v1787 = vand.u32 %v212, 4294901760
        %v1788 = vsub.f32 %v212, %v1787
        %v1789 = vand.u32 %v1788, 4294901760
        %v1790 = vsub.f32 %v1788, %v1789
        %v1791 = vand.u32 %v1790, 4294901760
        %1792 = vmatpush.msra.mxu0 %v1791
        %v1793 = vand.u32 %v211, 4294901760
        %v1794 = vsub.f32 %v211, %v1793
        %v1795 = vand.u32 %v1794, 4294901760
        %v1796 = vsub.f32 %v1794, %v1795
        %v1797 = vand.u32 %v1796, 4294901760
        %1798 = vmatpush.msra.mxu0 %v1797
        %v1799 = vand.u32 %v1744, 4294901760
        %1800 = vmatmul.f32.gmra.mxu0 %v1799
        %v1801 = vpop.f32.mrf.mxu0
        %v1802 = vadd.f32 %v1771, %v1801
        %1803 = vdwg.mxu0
        %1804 = vmatpush.msra.mxu0 0.0
        %1805 = vmatpush.msra.mxu0 0.0
        %1806 = vmatpush.msra.mxu0 0.0
        %1807 = vmatpush.msra.mxu0 0.0
        %1808 = vmatpush.msra.mxu0 0.0
        %1809 = vmatpush.msra.mxu0 0.0
        %1810 = vmatpush.msra.mxu0 0.0
        %1811 = vmatpush.msra.mxu0 0.0
        %1812 = vmatpush.msra.mxu0 0.0
        %1813 = vmatpush.msra.mxu0 0.0
        %1814 = vmatpush.msra.mxu0 0.0
        %1815 = vmatpush.msra.mxu0 0.0
        %1816 = vmatpush.msra.mxu0 0.0
        %1817 = vmatpush.msra.mxu0 0.0
        %v1818 = vand.u32 %v212, 4294901760
        %v1819 = vsub.f32 %v212, %v1818
        %1820 = vmatpush.msra.mxu0 %v1819
        %v1821 = vand.u32 %v211, 4294901760
        %v1822 = vsub.f32 %v211, %v1821
        %1823 = vmatpush.msra.mxu0 %v1822
        %v1824 = vand.u32 %v1744, 4294901760
        %v1825 = vsub.f32 %v1744, %v1824
        %1826 = vmatmul.f32.gmra.mxu0 %v1825
        %v1827 = vpop.f32.mrf.mxu0
        %v1828 = vadd.f32 %v1802, %v1827
        %1829 = vdwg.mxu0
        %1830 = vmatpush.msra.mxu0 0.0
        %1831 = vmatpush.msra.mxu0 0.0
        %1832 = vmatpush.msra.mxu0 0.0
        %1833 = vmatpush.msra.mxu0 0.0
        %1834 = vmatpush.msra.mxu0 0.0
        %1835 = vmatpush.msra.mxu0 0.0
        %1836 = vmatpush.msra.mxu0 0.0
        %1837 = vmatpush.msra.mxu0 0.0
        %1838 = vmatpush.msra.mxu0 0.0
        %1839 = vmatpush.msra.mxu0 0.0
        %1840 = vmatpush.msra.mxu0 0.0
        %1841 = vmatpush.msra.mxu0 0.0
        %1842 = vmatpush.msra.mxu0 0.0
        %1843 = vmatpush.msra.mxu0 0.0
        %v1844 = vand.u32 %v212, 4294901760
        %1845 = vmatpush.msra.mxu0 %v1844
        %v1846 = vand.u32 %v211, 4294901760
        %1847 = vmatpush.msra.mxu0 %v1846
        %v1848 = vand.u32 %v1744, 4294901760
        %v1849 = vsub.f32 %v1744, %v1848
        %v1850 = vand.u32 %v1849, 4294901760
        %1851 = vmatmul.f32.gmra.mxu0 %v1850
        %v1852 = vpop.f32.mrf.mxu0
        %v1853 = vadd.f32 %v1828, %v1852
        %1854 = vdwg.mxu0
        %1855 = vmatpush.msra.mxu0 0.0
        %1856 = vmatpush.msra.mxu0 0.0
        %1857 = vmatpush.msra.mxu0 0.0
        %1858 = vmatpush.msra.mxu0 0.0
        %1859 = vmatpush.msra.mxu0 0.0
        %1860 = vmatpush.msra.mxu0 0.0
        %1861 = vmatpush.msra.mxu0 0.0
        %1862 = vmatpush.msra.mxu0 0.0
        %1863 = vmatpush.msra.mxu0 0.0
        %1864 = vmatpush.msra.mxu0 0.0
        %1865 = vmatpush.msra.mxu0 0.0
        %1866 = vmatpush.msra.mxu0 0.0
        %1867 = vmatpush.msra.mxu0 0.0
        %1868 = vmatpush.msra.mxu0 0.0
        %v1869 = vand.u32 %v212, 4294901760
        %v1870 = vsub.f32 %v212, %v1869
        %v1871 = vand.u32 %v1870, 4294901760
        %1872 = vmatpush.msra.mxu0 %v1871
        %v1873 = vand.u32 %v211, 4294901760
        %v1874 = vsub.f32 %v211, %v1873
        %v1875 = vand.u32 %v1874, 4294901760
        %1876 = vmatpush.msra.mxu0 %v1875
        %v1877 = vand.u32 %v1744, 4294901760
        %1878 = vmatmul.f32.gmra.mxu0 %v1877
        %v1879 = vpop.f32.mrf.mxu0
        %v1880 = vadd.f32 %v1853, %v1879
        %1881 = vdwg.mxu0
        %1882 = vmatpush.msra.mxu0 0.0
        %1883 = vmatpush.msra.mxu0 0.0
        %1884 = vmatpush.msra.mxu0 0.0
        %1885 = vmatpush.msra.mxu0 0.0
        %1886 = vmatpush.msra.mxu0 0.0
        %1887 = vmatpush.msra.mxu0 0.0
        %1888 = vmatpush.msra.mxu0 0.0
        %1889 = vmatpush.msra.mxu0 0.0
        %1890 = vmatpush.msra.mxu0 0.0
        %1891 = vmatpush.msra.mxu0 0.0
        %1892 = vmatpush.msra.mxu0 0.0
        %1893 = vmatpush.msra.mxu0 0.0
        %1894 = vmatpush.msra.mxu0 0.0
        %1895 = vmatpush.msra.mxu0 0.0
        %v1896 = vand.u32 %v212, 4294901760
        %1897 = vmatpush.msra.mxu0 %v1896
        %v1898 = vand.u32 %v211, 4294901760
        %1899 = vmatpush.msra.mxu0 %v1898
        %v1900 = vand.u32 %v1744, 4294901760
        %1901 = vmatmul.f32.gmra.mxu0 %v1900
        %v1902 = vpop.f32.mrf.mxu0
        %v1903 = vadd.f32 %v1880, %v1902
        %1904 = vdwg.mxu0
        %v1906 = vsel %vm485, %v1413, 0
        %1908 = vmatpush.msra.mxu0 0.0
        %1909 = vmatpush.msra.mxu0 0.0
        %1910 = vmatpush.msra.mxu0 0.0
        %1911 = vmatpush.msra.mxu0 0.0
        %1912 = vmatpush.msra.mxu0 0.0
        %1913 = vmatpush.msra.mxu0 0.0
        %1914 = vmatpush.msra.mxu0 0.0
        %1915 = vmatpush.msra.mxu0 0.0
        %1916 = vmatpush.msra.mxu0 0.0
        %1917 = vmatpush.msra.mxu0 0.0
        %1918 = vmatpush.msra.mxu0 0.0
        %1919 = vmatpush.msra.mxu0 0.0
        %1920 = vmatpush.msra.mxu0 0.0
        %1921 = vmatpush.msra.mxu0 0.0
        %v1922 = vand.u32 %v209, 4294901760
        %1923 = vmatpush.msra.mxu0 %v1922
        %v1924 = vand.u32 %v208, 4294901760
        %1925 = vmatpush.msra.mxu0 %v1924
        %v1926 = vand.u32 %v1906, 4294901760
        %v1927 = vsub.f32 %v1906, %v1926
        %v1928 = vand.u32 %v1927, 4294901760
        %v1929 = vsub.f32 %v1927, %v1928
        %v1930 = vand.u32 %v1929, 4294901760
        %1931 = vmatmul.f32.gmra.mxu0 %v1930
        %v1932 = vpop.f32.mrf.mxu0
        %v1933 = vadd.f32 %v1903, %v1932
        %1934 = vdwg.mxu0
        %1935 = vmatpush.msra.mxu0 0.0
        %1936 = vmatpush.msra.mxu0 0.0
        %1937 = vmatpush.msra.mxu0 0.0
        %1938 = vmatpush.msra.mxu0 0.0
        %1939 = vmatpush.msra.mxu0 0.0
        %1940 = vmatpush.msra.mxu0 0.0
        %1941 = vmatpush.msra.mxu0 0.0
        %1942 = vmatpush.msra.mxu0 0.0
        %1943 = vmatpush.msra.mxu0 0.0
        %1944 = vmatpush.msra.mxu0 0.0
        %1945 = vmatpush.msra.mxu0 0.0
        %1946 = vmatpush.msra.mxu0 0.0
        %1947 = vmatpush.msra.mxu0 0.0
        %1948 = vmatpush.msra.mxu0 0.0
        %v1949 = vand.u32 %v209, 4294901760
        %v1950 = vsub.f32 %v209, %v1949
        %v1951 = vand.u32 %v1950, 4294901760
        %v1952 = vsub.f32 %v1950, %v1951
        %v1953 = vand.u32 %v1952, 4294901760
        %1954 = vmatpush.msra.mxu0 %v1953
        %v1955 = vand.u32 %v208, 4294901760
        %v1956 = vsub.f32 %v208, %v1955
        %v1957 = vand.u32 %v1956, 4294901760
        %v1958 = vsub.f32 %v1956, %v1957
        %v1959 = vand.u32 %v1958, 4294901760
        %1960 = vmatpush.msra.mxu0 %v1959
        %v1961 = vand.u32 %v1906, 4294901760
        %1962 = vmatmul.f32.gmra.mxu0 %v1961
        %v1963 = vpop.f32.mrf.mxu0
        %v1964 = vadd.f32 %v1933, %v1963
        %1965 = vdwg.mxu0
        %1966 = vmatpush.msra.mxu0 0.0
        %1967 = vmatpush.msra.mxu0 0.0
        %1968 = vmatpush.msra.mxu0 0.0
        %1969 = vmatpush.msra.mxu0 0.0
        %1970 = vmatpush.msra.mxu0 0.0
        %1971 = vmatpush.msra.mxu0 0.0
        %1972 = vmatpush.msra.mxu0 0.0
        %1973 = vmatpush.msra.mxu0 0.0
        %1974 = vmatpush.msra.mxu0 0.0
        %1975 = vmatpush.msra.mxu0 0.0
        %1976 = vmatpush.msra.mxu0 0.0
        %1977 = vmatpush.msra.mxu0 0.0
        %1978 = vmatpush.msra.mxu0 0.0
        %1979 = vmatpush.msra.mxu0 0.0
        %v1980 = vand.u32 %v209, 4294901760
        %v1981 = vsub.f32 %v209, %v1980
        %1982 = vmatpush.msra.mxu0 %v1981
        %v1983 = vand.u32 %v208, 4294901760
        %v1984 = vsub.f32 %v208, %v1983
        %1985 = vmatpush.msra.mxu0 %v1984
        %v1986 = vand.u32 %v1906, 4294901760
        %v1987 = vsub.f32 %v1906, %v1986
        %1988 = vmatmul.f32.gmra.mxu0 %v1987
        %v1989 = vpop.f32.mrf.mxu0
        %v1990 = vadd.f32 %v1964, %v1989
        %1991 = vdwg.mxu0
        %1992 = vmatpush.msra.mxu0 0.0
        %1993 = vmatpush.msra.mxu0 0.0
        %1994 = vmatpush.msra.mxu0 0.0
        %1995 = vmatpush.msra.mxu0 0.0
        %1996 = vmatpush.msra.mxu0 0.0
        %1997 = vmatpush.msra.mxu0 0.0
        %1998 = vmatpush.msra.mxu0 0.0
        %1999 = vmatpush.msra.mxu0 0.0
        %2000 = vmatpush.msra.mxu0 0.0
        %2001 = vmatpush.msra.mxu0 0.0
        %2002 = vmatpush.msra.mxu0 0.0
        %2003 = vmatpush.msra.mxu0 0.0
        %2004 = vmatpush.msra.mxu0 0.0
        %2005 = vmatpush.msra.mxu0 0.0
        %v2006 = vand.u32 %v209, 4294901760
        %2007 = vmatpush.msra.mxu0 %v2006
        %v2008 = vand.u32 %v208, 4294901760
        %2009 = vmatpush.msra.mxu0 %v2008
        %v2010 = vand.u32 %v1906, 4294901760
        %v2011 = vsub.f32 %v1906, %v2010
        %v2012 = vand.u32 %v2011, 4294901760
        %2013 = vmatmul.f32.gmra.mxu0 %v2012
        %v2014 = vpop.f32.mrf.mxu0
        %v2015 = vadd.f32 %v1990, %v2014
        %2016 = vdwg.mxu0
        %2017 = vmatpush.msra.mxu0 0.0
        %2018 = vmatpush.msra.mxu0 0.0
        %2019 = vmatpush.msra.mxu0 0.0
        %2020 = vmatpush.msra.mxu0 0.0
        %2021 = vmatpush.msra.mxu0 0.0
        %2022 = vmatpush.msra.mxu0 0.0
        %2023 = vmatpush.msra.mxu0 0.0
        %2024 = vmatpush.msra.mxu0 0.0
        %2025 = vmatpush.msra.mxu0 0.0
        %2026 = vmatpush.msra.mxu0 0.0
        %2027 = vmatpush.msra.mxu0 0.0
        %2028 = vmatpush.msra.mxu0 0.0
        %2029 = vmatpush.msra.mxu0 0.0
        %2030 = vmatpush.msra.mxu0 0.0
        %v2031 = vand.u32 %v209, 4294901760
        %v2032 = vsub.f32 %v209, %v2031
        %v2033 = vand.u32 %v2032, 4294901760
        %2034 = vmatpush.msra.mxu0 %v2033
        %v2035 = vand.u32 %v208, 4294901760
        %v2036 = vsub.f32 %v208, %v2035
        %v2037 = vand.u32 %v2036, 4294901760
        %2038 = vmatpush.msra.mxu0 %v2037
        %v2039 = vand.u32 %v1906, 4294901760
        %2040 = vmatmul.f32.gmra.mxu0 %v2039
        %v2041 = vpop.f32.mrf.mxu0
        %v2042 = vadd.f32 %v2015, %v2041
        %2043 = vdwg.mxu0
        %2044 = vmatpush.msra.mxu0 0.0
        %2045 = vmatpush.msra.mxu0 0.0
        %2046 = vmatpush.msra.mxu0 0.0
        %2047 = vmatpush.msra.mxu0 0.0
        %2048 = vmatpush.msra.mxu0 0.0
        %2049 = vmatpush.msra.mxu0 0.0
        %2050 = vmatpush.msra.mxu0 0.0
        %2051 = vmatpush.msra.mxu0 0.0
        %2052 = vmatpush.msra.mxu0 0.0
        %2053 = vmatpush.msra.mxu0 0.0
        %2054 = vmatpush.msra.mxu0 0.0
        %2055 = vmatpush.msra.mxu0 0.0
        %2056 = vmatpush.msra.mxu0 0.0
        %2057 = vmatpush.msra.mxu0 0.0
        %v2058 = vand.u32 %v209, 4294901760
        %2059 = vmatpush.msra.mxu0 %v2058
        %v2060 = vand.u32 %v208, 4294901760
        %2061 = vmatpush.msra.mxu0 %v2060
        %v2062 = vand.u32 %v1906, 4294901760
        %2063 = vmatmul.f32.gmra.mxu0 %v2062
        %v2064 = vpop.f32.mrf.mxu0
        %v2065 = vadd.f32 %v2042, %v2064
        %2066 = vdwg.mxu0
        %2068 = vrot.lane.b32.xlu0 %v2065, 32
        %v2069 = vpop.permute.xlu0 %2068
        %v2071 = vsel %vm1138, %v1741, %v2069
        %v2073 = vrot.slane %v2071, 1
        %v2074 = vrot.slane %v2071, 2
        %v2075 = vrot.slane %v2071, 3
        %v2076 = vrot.slane %v2071, 4
        %v2077 = vrot.slane %v2071, 5
        %v2078 = vrot.slane %v2071, 6
        %v2079 = vrot.slane %v2071, 7
        %2087 = vst.msk [vmem:[%s203 + $0x1] sm:$0x1] %vm1155, %v2071
        %2088 = vst.msk [vmem:[%s203 + $0x9] sm:$0x1] %vm1155, %v2073
        %2089 = vst.msk [vmem:[%s203 + $0x11] sm:$0x1] %vm1155, %v2074
        %2090 = vst.msk [vmem:[%s203 + $0x19] sm:$0x1] %vm1155, %v2075
        %2091 = vst.msk [vmem:[%s203 + $0x21] sm:$0x1] %vm1155, %v2076
        %2092 = vst.msk [vmem:[%s203 + $0x29] sm:$0x1] %vm1155, %v2077
        %2093 = vst.msk [vmem:[%s203 + $0x31] sm:$0x1] %vm1155, %v2078
        %2094 = vst.msk [vmem:[%s203 + $0x39] sm:$0x1] %vm1155, %v2079
        %v2095 = vld [vmem:[%s181 + $0x2] sm:$0x1]
        %v2096 = vld [vmem:[%s181 + $0xa] sm:$0x1]
        %v2097 = vld [vmem:[%s181 + $0x12] sm:$0x1]
        %v2098 = vld [vmem:[%s181 + $0x1a] sm:$0x1]
        %v2103 = vrot.slane %v2096, 7
        %v2104 = vsel %vm222, %v2103, %v2095
        %v2105 = vrot.slane %v2097, 6
        %v2106 = vsel %vm225, %v2105, %v2104
        %v2107 = vrot.slane %v2098, 5
        %v2108 = vsel %vm228, %v2107, %v2106
        %v2109 = vsel %vm243, %v2108, 0
        %2111 = vmatpush.msra.mxu0 0.0
        %2112 = vmatpush.msra.mxu0 0.0
        %2113 = vmatpush.msra.mxu0 0.0
        %2114 = vmatpush.msra.mxu0 0.0
        %2115 = vmatpush.msra.mxu0 0.0
        %2116 = vmatpush.msra.mxu0 0.0
        %2117 = vmatpush.msra.mxu0 0.0
        %2118 = vmatpush.msra.mxu0 0.0
        %2119 = vmatpush.msra.mxu0 0.0
        %2120 = vmatpush.msra.mxu0 0.0
        %2121 = vmatpush.msra.mxu0 0.0
        %2122 = vmatpush.msra.mxu0 0.0
        %2123 = vmatpush.msra.mxu0 0.0
        %2124 = vmatpush.msra.mxu0 0.0
        %2125 = vmatpush.msra.mxu0 0.0
        %v2126 = vand.u32 %v2109, 4294901760
        %2127 = vmatpush.msra.mxu0 %v2126
        %v2128 = vand.u32 %v232, 4294901760
        %v2129 = vsub.f32 %v232, %v2128
        %v2130 = vand.u32 %v2129, 4294901760
        %v2131 = vsub.f32 %v2129, %v2130
        %v2132 = vand.u32 %v2131, 4294901760
        %2133 = vmatmul.f32.gmra.mxu0 %v2132
        %v2134 = vpop.f32.mrf.mxu0
        %v2135 = vadd.f32 0.0, %v2134
        %v2136 = vand.u32 %v235, 4294901760
        %v2137 = vsub.f32 %v235, %v2136
        %v2138 = vand.u32 %v2137, 4294901760
        %v2139 = vsub.f32 %v2137, %v2138
        %v2140 = vand.u32 %v2139, 4294901760
        %2141 = vmatmul.f32.gmra.mxu0 %v2140
        %v2142 = vpop.f32.mrf.mxu0
        %v2143 = vadd.f32 0.0, %v2142
        %v2144 = vand.u32 %v238, 4294901760
        %v2145 = vsub.f32 %v238, %v2144
        %v2146 = vand.u32 %v2145, 4294901760
        %v2147 = vsub.f32 %v2145, %v2146
        %v2148 = vand.u32 %v2147, 4294901760
        %2149 = vmatmul.f32.gmra.mxu0 %v2148
        %v2150 = vpop.f32.mrf.mxu0
        %v2151 = vadd.f32 0.0, %v2150
        %v2152 = vand.u32 %v241, 4294901760
        %v2153 = vsub.f32 %v241, %v2152
        %v2154 = vand.u32 %v2153, 4294901760
        %v2155 = vsub.f32 %v2153, %v2154
        %v2156 = vand.u32 %v2155, 4294901760
        %2157 = vmatmul.f32.gmra.mxu0 %v2156
        %v2158 = vpop.f32.mrf.mxu0
        %v2159 = vadd.f32 0.0, %v2158
        %2160 = vdwg.mxu0
        %2161 = vmatpush.msra.mxu0 0.0
        %2162 = vmatpush.msra.mxu0 0.0
        %2163 = vmatpush.msra.mxu0 0.0
        %2164 = vmatpush.msra.mxu0 0.0
        %2165 = vmatpush.msra.mxu0 0.0
        %2166 = vmatpush.msra.mxu0 0.0
        %2167 = vmatpush.msra.mxu0 0.0
        %2168 = vmatpush.msra.mxu0 0.0
        %2169 = vmatpush.msra.mxu0 0.0
        %2170 = vmatpush.msra.mxu0 0.0
        %2171 = vmatpush.msra.mxu0 0.0
        %2172 = vmatpush.msra.mxu0 0.0
        %2173 = vmatpush.msra.mxu0 0.0
        %2174 = vmatpush.msra.mxu0 0.0
        %2175 = vmatpush.msra.mxu0 0.0
        %v2176 = vand.u32 %v2109, 4294901760
        %v2177 = vsub.f32 %v2109, %v2176
        %v2178 = vand.u32 %v2177, 4294901760
        %v2179 = vsub.f32 %v2177, %v2178
        %v2180 = vand.u32 %v2179, 4294901760
        %2181 = vmatpush.msra.mxu0 %v2180
        %v2182 = vand.u32 %v232, 4294901760
        %2183 = vmatmul.f32.gmra.mxu0 %v2182
        %v2184 = vpop.f32.mrf.mxu0
        %v2185 = vadd.f32 %v2135, %v2184
        %v2186 = vand.u32 %v235, 4294901760
        %2187 = vmatmul.f32.gmra.mxu0 %v2186
        %v2188 = vpop.f32.mrf.mxu0
        %v2189 = vadd.f32 %v2143, %v2188
        %v2190 = vand.u32 %v238, 4294901760
        %2191 = vmatmul.f32.gmra.mxu0 %v2190
        %v2192 = vpop.f32.mrf.mxu0
        %v2193 = vadd.f32 %v2151, %v2192
        %v2194 = vand.u32 %v241, 4294901760
        %2195 = vmatmul.f32.gmra.mxu0 %v2194
        %v2196 = vpop.f32.mrf.mxu0
        %v2197 = vadd.f32 %v2159, %v2196
        %2198 = vdwg.mxu0
        %2199 = vmatpush.msra.mxu0 0.0
        %2200 = vmatpush.msra.mxu0 0.0
        %2201 = vmatpush.msra.mxu0 0.0
        %2202 = vmatpush.msra.mxu0 0.0
        %2203 = vmatpush.msra.mxu0 0.0
        %2204 = vmatpush.msra.mxu0 0.0
        %2205 = vmatpush.msra.mxu0 0.0
        %2206 = vmatpush.msra.mxu0 0.0
        %2207 = vmatpush.msra.mxu0 0.0
        %2208 = vmatpush.msra.mxu0 0.0
        %2209 = vmatpush.msra.mxu0 0.0
        %2210 = vmatpush.msra.mxu0 0.0
        %2211 = vmatpush.msra.mxu0 0.0
        %2212 = vmatpush.msra.mxu0 0.0
        %2213 = vmatpush.msra.mxu0 0.0
        %v2214 = vand.u32 %v2109, 4294901760
        %v2215 = vsub.f32 %v2109, %v2214
        %2216 = vmatpush.msra.mxu0 %v2215
        %v2217 = vand.u32 %v232, 4294901760
        %v2218 = vsub.f32 %v232, %v2217
        %2219 = vmatmul.f32.gmra.mxu0 %v2218
        %v2220 = vpop.f32.mrf.mxu0
        %v2221 = vadd.f32 %v2185, %v2220
        %v2222 = vand.u32 %v235, 4294901760
        %v2223 = vsub.f32 %v235, %v2222
        %2224 = vmatmul.f32.gmra.mxu0 %v2223
        %v2225 = vpop.f32.mrf.mxu0
        %v2226 = vadd.f32 %v2189, %v2225
        %v2227 = vand.u32 %v238, 4294901760
        %v2228 = vsub.f32 %v238, %v2227
        %2229 = vmatmul.f32.gmra.mxu0 %v2228
        %v2230 = vpop.f32.mrf.mxu0
        %v2231 = vadd.f32 %v2193, %v2230
        %v2232 = vand.u32 %v241, 4294901760
        %v2233 = vsub.f32 %v241, %v2232
        %2234 = vmatmul.f32.gmra.mxu0 %v2233
        %v2235 = vpop.f32.mrf.mxu0
        %v2236 = vadd.f32 %v2197, %v2235
        %2237 = vdwg.mxu0
        %2238 = vmatpush.msra.mxu0 0.0
        %2239 = vmatpush.msra.mxu0 0.0
        %2240 = vmatpush.msra.mxu0 0.0
        %2241 = vmatpush.msra.mxu0 0.0
        %2242 = vmatpush.msra.mxu0 0.0
        %2243 = vmatpush.msra.mxu0 0.0
        %2244 = vmatpush.msra.mxu0 0.0
        %2245 = vmatpush.msra.mxu0 0.0
        %2246 = vmatpush.msra.mxu0 0.0
        %2247 = vmatpush.msra.mxu0 0.0
        %2248 = vmatpush.msra.mxu0 0.0
        %2249 = vmatpush.msra.mxu0 0.0
        %2250 = vmatpush.msra.mxu0 0.0
        %2251 = vmatpush.msra.mxu0 0.0
        %2252 = vmatpush.msra.mxu0 0.0
        %v2253 = vand.u32 %v2109, 4294901760
        %2254 = vmatpush.msra.mxu0 %v2253
        %v2255 = vand.u32 %v232, 4294901760
        %v2256 = vsub.f32 %v232, %v2255
        %v2257 = vand.u32 %v2256, 4294901760
        %2258 = vmatmul.f32.gmra.mxu0 %v2257
        %v2259 = vpop.f32.mrf.mxu0
        %v2260 = vadd.f32 %v2221, %v2259
        %v2261 = vand.u32 %v235, 4294901760
        %v2262 = vsub.f32 %v235, %v2261
        %v2263 = vand.u32 %v2262, 4294901760
        %2264 = vmatmul.f32.gmra.mxu0 %v2263
        %v2265 = vpop.f32.mrf.mxu0
        %v2266 = vadd.f32 %v2226, %v2265
        %v2267 = vand.u32 %v238, 4294901760
        %v2268 = vsub.f32 %v238, %v2267
        %v2269 = vand.u32 %v2268, 4294901760
        %2270 = vmatmul.f32.gmra.mxu0 %v2269
        %v2271 = vpop.f32.mrf.mxu0
        %v2272 = vadd.f32 %v2231, %v2271
        %v2273 = vand.u32 %v241, 4294901760
        %v2274 = vsub.f32 %v241, %v2273
        %v2275 = vand.u32 %v2274, 4294901760
        %2276 = vmatmul.f32.gmra.mxu0 %v2275
        %v2277 = vpop.f32.mrf.mxu0
        %v2278 = vadd.f32 %v2236, %v2277
        %2279 = vdwg.mxu0
        %2280 = vmatpush.msra.mxu0 0.0
        %2281 = vmatpush.msra.mxu0 0.0
        %2282 = vmatpush.msra.mxu0 0.0
        %2283 = vmatpush.msra.mxu0 0.0
        %2284 = vmatpush.msra.mxu0 0.0
        %2285 = vmatpush.msra.mxu0 0.0
        %2286 = vmatpush.msra.mxu0 0.0
        %2287 = vmatpush.msra.mxu0 0.0
        %2288 = vmatpush.msra.mxu0 0.0
        %2289 = vmatpush.msra.mxu0 0.0
        %2290 = vmatpush.msra.mxu0 0.0
        %2291 = vmatpush.msra.mxu0 0.0
        %2292 = vmatpush.msra.mxu0 0.0
        %2293 = vmatpush.msra.mxu0 0.0
        %2294 = vmatpush.msra.mxu0 0.0
        %v2295 = vand.u32 %v2109, 4294901760
        %v2296 = vsub.f32 %v2109, %v2295
        %v2297 = vand.u32 %v2296, 4294901760
        %2298 = vmatpush.msra.mxu0 %v2297
        %v2299 = vand.u32 %v232, 4294901760
        %2300 = vmatmul.f32.gmra.mxu0 %v2299
        %v2301 = vpop.f32.mrf.mxu0
        %v2302 = vadd.f32 %v2260, %v2301
        %v2303 = vand.u32 %v235, 4294901760
        %2304 = vmatmul.f32.gmra.mxu0 %v2303
        %v2305 = vpop.f32.mrf.mxu0
        %v2306 = vadd.f32 %v2266, %v2305
        %v2307 = vand.u32 %v238, 4294901760
        %2308 = vmatmul.f32.gmra.mxu0 %v2307
        %v2309 = vpop.f32.mrf.mxu0
        %v2310 = vadd.f32 %v2272, %v2309
        %v2311 = vand.u32 %v241, 4294901760
        %2312 = vmatmul.f32.gmra.mxu0 %v2311
        %v2313 = vpop.f32.mrf.mxu0
        %v2314 = vadd.f32 %v2278, %v2313
        %2315 = vdwg.mxu0
        %2316 = vmatpush.msra.mxu0 0.0
        %2317 = vmatpush.msra.mxu0 0.0
        %2318 = vmatpush.msra.mxu0 0.0
        %2319 = vmatpush.msra.mxu0 0.0
        %2320 = vmatpush.msra.mxu0 0.0
        %2321 = vmatpush.msra.mxu0 0.0
        %2322 = vmatpush.msra.mxu0 0.0
        %2323 = vmatpush.msra.mxu0 0.0
        %2324 = vmatpush.msra.mxu0 0.0
        %2325 = vmatpush.msra.mxu0 0.0
        %2326 = vmatpush.msra.mxu0 0.0
        %2327 = vmatpush.msra.mxu0 0.0
        %2328 = vmatpush.msra.mxu0 0.0
        %2329 = vmatpush.msra.mxu0 0.0
        %2330 = vmatpush.msra.mxu0 0.0
        %v2331 = vand.u32 %v2109, 4294901760
        %2332 = vmatpush.msra.mxu0 %v2331
        %v2333 = vand.u32 %v232, 4294901760
        %2334 = vmatmul.f32.gmra.mxu0 %v2333
        %v2335 = vpop.f32.mrf.mxu0
        %v2336 = vadd.f32 %v2302, %v2335
        %v2337 = vand.u32 %v235, 4294901760
        %2338 = vmatmul.f32.gmra.mxu0 %v2337
        %v2339 = vpop.f32.mrf.mxu0
        %v2340 = vadd.f32 %v2306, %v2339
        %v2341 = vand.u32 %v238, 4294901760
        %2342 = vmatmul.f32.gmra.mxu0 %v2341
        %v2343 = vpop.f32.mrf.mxu0
        %v2344 = vadd.f32 %v2310, %v2343
        %v2345 = vand.u32 %v241, 4294901760
        %2346 = vmatmul.f32.gmra.mxu0 %v2345
        %v2347 = vpop.f32.mrf.mxu0
        %v2348 = vadd.f32 %v2314, %v2347
        %2349 = vdwg.mxu0
        %v2351 = vsel %vm485, %v2340, 0
        %2353 = vmatpush.msra.mxu0 0.0
        %2354 = vmatpush.msra.mxu0 0.0
        %2355 = vmatpush.msra.mxu0 0.0
        %2356 = vmatpush.msra.mxu0 0.0
        %2357 = vmatpush.msra.mxu0 0.0
        %2358 = vmatpush.msra.mxu0 0.0
        %2359 = vmatpush.msra.mxu0 0.0
        %2360 = vmatpush.msra.mxu0 0.0
        %2361 = vmatpush.msra.mxu0 0.0
        %2362 = vmatpush.msra.mxu0 0.0
        %2363 = vmatpush.msra.mxu0 0.0
        %2364 = vmatpush.msra.mxu0 0.0
        %2365 = vmatpush.msra.mxu0 0.0
        %2366 = vmatpush.msra.mxu0 0.0
        %v2367 = vand.u32 %v212, 4294901760
        %2368 = vmatpush.msra.mxu0 %v2367
        %v2369 = vand.u32 %v211, 4294901760
        %2370 = vmatpush.msra.mxu0 %v2369
        %v2371 = vand.u32 %v2351, 4294901760
        %v2372 = vsub.f32 %v2351, %v2371
        %v2373 = vand.u32 %v2372, 4294901760
        %v2374 = vsub.f32 %v2372, %v2373
        %v2375 = vand.u32 %v2374, 4294901760
        %2376 = vmatmul.f32.gmra.mxu0 %v2375
        %v2377 = vpop.f32.mrf.mxu0
        %v2378 = vadd.f32 0.0, %v2377
        %2379 = vdwg.mxu0
        %2380 = vmatpush.msra.mxu0 0.0
        %2381 = vmatpush.msra.mxu0 0.0
        %2382 = vmatpush.msra.mxu0 0.0
        %2383 = vmatpush.msra.mxu0 0.0
        %2384 = vmatpush.msra.mxu0 0.0
        %2385 = vmatpush.msra.mxu0 0.0
        %2386 = vmatpush.msra.mxu0 0.0
        %2387 = vmatpush.msra.mxu0 0.0
        %2388 = vmatpush.msra.mxu0 0.0
        %2389 = vmatpush.msra.mxu0 0.0
        %2390 = vmatpush.msra.mxu0 0.0
        %2391 = vmatpush.msra.mxu0 0.0
        %2392 = vmatpush.msra.mxu0 0.0
        %2393 = vmatpush.msra.mxu0 0.0
        %v2394 = vand.u32 %v212, 4294901760
        %v2395 = vsub.f32 %v212, %v2394
        %v2396 = vand.u32 %v2395, 4294901760
        %v2397 = vsub.f32 %v2395, %v2396
        %v2398 = vand.u32 %v2397, 4294901760
        %2399 = vmatpush.msra.mxu0 %v2398
        %v2400 = vand.u32 %v211, 4294901760
        %v2401 = vsub.f32 %v211, %v2400
        %v2402 = vand.u32 %v2401, 4294901760
        %v2403 = vsub.f32 %v2401, %v2402
        %v2404 = vand.u32 %v2403, 4294901760
        %2405 = vmatpush.msra.mxu0 %v2404
        %v2406 = vand.u32 %v2351, 4294901760
        %2407 = vmatmul.f32.gmra.mxu0 %v2406
        %v2408 = vpop.f32.mrf.mxu0
        %v2409 = vadd.f32 %v2378, %v2408
        %2410 = vdwg.mxu0
        %2411 = vmatpush.msra.mxu0 0.0
        %2412 = vmatpush.msra.mxu0 0.0
        %2413 = vmatpush.msra.mxu0 0.0
        %2414 = vmatpush.msra.mxu0 0.0
        %2415 = vmatpush.msra.mxu0 0.0
        %2416 = vmatpush.msra.mxu0 0.0
        %2417 = vmatpush.msra.mxu0 0.0
        %2418 = vmatpush.msra.mxu0 0.0
        %2419 = vmatpush.msra.mxu0 0.0
        %2420 = vmatpush.msra.mxu0 0.0
        %2421 = vmatpush.msra.mxu0 0.0
        %2422 = vmatpush.msra.mxu0 0.0
        %2423 = vmatpush.msra.mxu0 0.0
        %2424 = vmatpush.msra.mxu0 0.0
        %v2425 = vand.u32 %v212, 4294901760
        %v2426 = vsub.f32 %v212, %v2425
        %2427 = vmatpush.msra.mxu0 %v2426
        %v2428 = vand.u32 %v211, 4294901760
        %v2429 = vsub.f32 %v211, %v2428
        %2430 = vmatpush.msra.mxu0 %v2429
        %v2431 = vand.u32 %v2351, 4294901760
        %v2432 = vsub.f32 %v2351, %v2431
        %2433 = vmatmul.f32.gmra.mxu0 %v2432
        %v2434 = vpop.f32.mrf.mxu0
        %v2435 = vadd.f32 %v2409, %v2434
        %2436 = vdwg.mxu0
        %2437 = vmatpush.msra.mxu0 0.0
        %2438 = vmatpush.msra.mxu0 0.0
        %2439 = vmatpush.msra.mxu0 0.0
        %2440 = vmatpush.msra.mxu0 0.0
        %2441 = vmatpush.msra.mxu0 0.0
        %2442 = vmatpush.msra.mxu0 0.0
        %2443 = vmatpush.msra.mxu0 0.0
        %2444 = vmatpush.msra.mxu0 0.0
        %2445 = vmatpush.msra.mxu0 0.0
        %2446 = vmatpush.msra.mxu0 0.0
        %2447 = vmatpush.msra.mxu0 0.0
        %2448 = vmatpush.msra.mxu0 0.0
        %2449 = vmatpush.msra.mxu0 0.0
        %2450 = vmatpush.msra.mxu0 0.0
        %v2451 = vand.u32 %v212, 4294901760
        %2452 = vmatpush.msra.mxu0 %v2451
        %v2453 = vand.u32 %v211, 4294901760
        %2454 = vmatpush.msra.mxu0 %v2453
        %v2455 = vand.u32 %v2351, 4294901760
        %v2456 = vsub.f32 %v2351, %v2455
        %v2457 = vand.u32 %v2456, 4294901760
        %2458 = vmatmul.f32.gmra.mxu0 %v2457
        %v2459 = vpop.f32.mrf.mxu0
        %v2460 = vadd.f32 %v2435, %v2459
        %2461 = vdwg.mxu0
        %2462 = vmatpush.msra.mxu0 0.0
        %2463 = vmatpush.msra.mxu0 0.0
        %2464 = vmatpush.msra.mxu0 0.0
        %2465 = vmatpush.msra.mxu0 0.0
        %2466 = vmatpush.msra.mxu0 0.0
        %2467 = vmatpush.msra.mxu0 0.0
        %2468 = vmatpush.msra.mxu0 0.0
        %2469 = vmatpush.msra.mxu0 0.0
        %2470 = vmatpush.msra.mxu0 0.0
        %2471 = vmatpush.msra.mxu0 0.0
        %2472 = vmatpush.msra.mxu0 0.0
        %2473 = vmatpush.msra.mxu0 0.0
        %2474 = vmatpush.msra.mxu0 0.0
        %2475 = vmatpush.msra.mxu0 0.0
        %v2476 = vand.u32 %v212, 4294901760
        %v2477 = vsub.f32 %v212, %v2476
        %v2478 = vand.u32 %v2477, 4294901760
        %2479 = vmatpush.msra.mxu0 %v2478
        %v2480 = vand.u32 %v211, 4294901760
        %v2481 = vsub.f32 %v211, %v2480
        %v2482 = vand.u32 %v2481, 4294901760
        %2483 = vmatpush.msra.mxu0 %v2482
        %v2484 = vand.u32 %v2351, 4294901760
        %2485 = vmatmul.f32.gmra.mxu0 %v2484
        %v2486 = vpop.f32.mrf.mxu0
        %v2487 = vadd.f32 %v2460, %v2486
        %2488 = vdwg.mxu0
        %2489 = vmatpush.msra.mxu0 0.0
        %2490 = vmatpush.msra.mxu0 0.0
        %2491 = vmatpush.msra.mxu0 0.0
        %2492 = vmatpush.msra.mxu0 0.0
        %2493 = vmatpush.msra.mxu0 0.0
        %2494 = vmatpush.msra.mxu0 0.0
        %2495 = vmatpush.msra.mxu0 0.0
        %2496 = vmatpush.msra.mxu0 0.0
        %2497 = vmatpush.msra.mxu0 0.0
        %2498 = vmatpush.msra.mxu0 0.0
        %2499 = vmatpush.msra.mxu0 0.0
        %2500 = vmatpush.msra.mxu0 0.0
        %2501 = vmatpush.msra.mxu0 0.0
        %2502 = vmatpush.msra.mxu0 0.0
        %v2503 = vand.u32 %v212, 4294901760
        %2504 = vmatpush.msra.mxu0 %v2503
        %v2505 = vand.u32 %v211, 4294901760
        %2506 = vmatpush.msra.mxu0 %v2505
        %v2507 = vand.u32 %v2351, 4294901760
        %2508 = vmatmul.f32.gmra.mxu0 %v2507
        %v2509 = vpop.f32.mrf.mxu0
        %v2510 = vadd.f32 %v2487, %v2509
        %2511 = vdwg.mxu0
        %v2513 = vsel %vm485, %v2336, 0
        %2515 = vmatpush.msra.mxu0 0.0
        %2516 = vmatpush.msra.mxu0 0.0
        %2517 = vmatpush.msra.mxu0 0.0
        %2518 = vmatpush.msra.mxu0 0.0
        %2519 = vmatpush.msra.mxu0 0.0
        %2520 = vmatpush.msra.mxu0 0.0
        %2521 = vmatpush.msra.mxu0 0.0
        %2522 = vmatpush.msra.mxu0 0.0
        %2523 = vmatpush.msra.mxu0 0.0
        %2524 = vmatpush.msra.mxu0 0.0
        %2525 = vmatpush.msra.mxu0 0.0
        %2526 = vmatpush.msra.mxu0 0.0
        %2527 = vmatpush.msra.mxu0 0.0
        %2528 = vmatpush.msra.mxu0 0.0
        %v2529 = vand.u32 %v209, 4294901760
        %2530 = vmatpush.msra.mxu0 %v2529
        %v2531 = vand.u32 %v208, 4294901760
        %2532 = vmatpush.msra.mxu0 %v2531
        %v2533 = vand.u32 %v2513, 4294901760
        %v2534 = vsub.f32 %v2513, %v2533
        %v2535 = vand.u32 %v2534, 4294901760
        %v2536 = vsub.f32 %v2534, %v2535
        %v2537 = vand.u32 %v2536, 4294901760
        %2538 = vmatmul.f32.gmra.mxu0 %v2537
        %v2539 = vpop.f32.mrf.mxu0
        %v2540 = vadd.f32 %v2510, %v2539
        %2541 = vdwg.mxu0
        %2542 = vmatpush.msra.mxu0 0.0
        %2543 = vmatpush.msra.mxu0 0.0
        %2544 = vmatpush.msra.mxu0 0.0
        %2545 = vmatpush.msra.mxu0 0.0
        %2546 = vmatpush.msra.mxu0 0.0
        %2547 = vmatpush.msra.mxu0 0.0
        %2548 = vmatpush.msra.mxu0 0.0
        %2549 = vmatpush.msra.mxu0 0.0
        %2550 = vmatpush.msra.mxu0 0.0
        %2551 = vmatpush.msra.mxu0 0.0
        %2552 = vmatpush.msra.mxu0 0.0
        %2553 = vmatpush.msra.mxu0 0.0
        %2554 = vmatpush.msra.mxu0 0.0
        %2555 = vmatpush.msra.mxu0 0.0
        %v2556 = vand.u32 %v209, 4294901760
        %v2557 = vsub.f32 %v209, %v2556
        %v2558 = vand.u32 %v2557, 4294901760
        %v2559 = vsub.f32 %v2557, %v2558
        %v2560 = vand.u32 %v2559, 4294901760
        %2561 = vmatpush.msra.mxu0 %v2560
        %v2562 = vand.u32 %v208, 4294901760
        %v2563 = vsub.f32 %v208, %v2562
        %v2564 = vand.u32 %v2563, 4294901760
        %v2565 = vsub.f32 %v2563, %v2564
        %v2566 = vand.u32 %v2565, 4294901760
        %2567 = vmatpush.msra.mxu0 %v2566
        %v2568 = vand.u32 %v2513, 4294901760
        %2569 = vmatmul.f32.gmra.mxu0 %v2568
        %v2570 = vpop.f32.mrf.mxu0
        %v2571 = vadd.f32 %v2540, %v2570
        %2572 = vdwg.mxu0
        %2573 = vmatpush.msra.mxu0 0.0
        %2574 = vmatpush.msra.mxu0 0.0
        %2575 = vmatpush.msra.mxu0 0.0
        %2576 = vmatpush.msra.mxu0 0.0
        %2577 = vmatpush.msra.mxu0 0.0
        %2578 = vmatpush.msra.mxu0 0.0
        %2579 = vmatpush.msra.mxu0 0.0
        %2580 = vmatpush.msra.mxu0 0.0
        %2581 = vmatpush.msra.mxu0 0.0
        %2582 = vmatpush.msra.mxu0 0.0
        %2583 = vmatpush.msra.mxu0 0.0
        %2584 = vmatpush.msra.mxu0 0.0
        %2585 = vmatpush.msra.mxu0 0.0
        %2586 = vmatpush.msra.mxu0 0.0
        %v2587 = vand.u32 %v209, 4294901760
        %v2588 = vsub.f32 %v209, %v2587
        %2589 = vmatpush.msra.mxu0 %v2588
        %v2590 = vand.u32 %v208, 4294901760
        %v2591 = vsub.f32 %v208, %v2590
        %2592 = vmatpush.msra.mxu0 %v2591
        %v2593 = vand.u32 %v2513, 4294901760
        %v2594 = vsub.f32 %v2513, %v2593
        %2595 = vmatmul.f32.gmra.mxu0 %v2594
        %v2596 = vpop.f32.mrf.mxu0
        %v2597 = vadd.f32 %v2571, %v2596
        %2598 = vdwg.mxu0
        %2599 = vmatpush.msra.mxu0 0.0
        %2600 = vmatpush.msra.mxu0 0.0
        %2601 = vmatpush.msra.mxu0 0.0
        %2602 = vmatpush.msra.mxu0 0.0
        %2603 = vmatpush.msra.mxu0 0.0
        %2604 = vmatpush.msra.mxu0 0.0
        %2605 = vmatpush.msra.mxu0 0.0
        %2606 = vmatpush.msra.mxu0 0.0
        %2607 = vmatpush.msra.mxu0 0.0
        %2608 = vmatpush.msra.mxu0 0.0
        %2609 = vmatpush.msra.mxu0 0.0
        %2610 = vmatpush.msra.mxu0 0.0
        %2611 = vmatpush.msra.mxu0 0.0
        %2612 = vmatpush.msra.mxu0 0.0
        %v2613 = vand.u32 %v209, 4294901760
        %2614 = vmatpush.msra.mxu0 %v2613
        %v2615 = vand.u32 %v208, 4294901760
        %2616 = vmatpush.msra.mxu0 %v2615
        %v2617 = vand.u32 %v2513, 4294901760
        %v2618 = vsub.f32 %v2513, %v2617
        %v2619 = vand.u32 %v2618, 4294901760
        %2620 = vmatmul.f32.gmra.mxu0 %v2619
        %v2621 = vpop.f32.mrf.mxu0
        %v2622 = vadd.f32 %v2597, %v2621
        %2623 = vdwg.mxu0
        %2624 = vmatpush.msra.mxu0 0.0
        %2625 = vmatpush.msra.mxu0 0.0
        %2626 = vmatpush.msra.mxu0 0.0
        %2627 = vmatpush.msra.mxu0 0.0
        %2628 = vmatpush.msra.mxu0 0.0
        %2629 = vmatpush.msra.mxu0 0.0
        %2630 = vmatpush.msra.mxu0 0.0
        %2631 = vmatpush.msra.mxu0 0.0
        %2632 = vmatpush.msra.mxu0 0.0
        %2633 = vmatpush.msra.mxu0 0.0
        %2634 = vmatpush.msra.mxu0 0.0
        %2635 = vmatpush.msra.mxu0 0.0
        %2636 = vmatpush.msra.mxu0 0.0
        %2637 = vmatpush.msra.mxu0 0.0
        %v2638 = vand.u32 %v209, 4294901760
        %v2639 = vsub.f32 %v209, %v2638
        %v2640 = vand.u32 %v2639, 4294901760
        %2641 = vmatpush.msra.mxu0 %v2640
        %v2642 = vand.u32 %v208, 4294901760
        %v2643 = vsub.f32 %v208, %v2642
        %v2644 = vand.u32 %v2643, 4294901760
        %2645 = vmatpush.msra.mxu0 %v2644
        %v2646 = vand.u32 %v2513, 4294901760
        %2647 = vmatmul.f32.gmra.mxu0 %v2646
        %v2648 = vpop.f32.mrf.mxu0
        %v2649 = vadd.f32 %v2622, %v2648
        %2650 = vdwg.mxu0
        %2651 = vmatpush.msra.mxu0 0.0
        %2652 = vmatpush.msra.mxu0 0.0
        %2653 = vmatpush.msra.mxu0 0.0
        %2654 = vmatpush.msra.mxu0 0.0
        %2655 = vmatpush.msra.mxu0 0.0
        %2656 = vmatpush.msra.mxu0 0.0
        %2657 = vmatpush.msra.mxu0 0.0
        %2658 = vmatpush.msra.mxu0 0.0
        %2659 = vmatpush.msra.mxu0 0.0
        %2660 = vmatpush.msra.mxu0 0.0
        %2661 = vmatpush.msra.mxu0 0.0
        %2662 = vmatpush.msra.mxu0 0.0
        %2663 = vmatpush.msra.mxu0 0.0
        %2664 = vmatpush.msra.mxu0 0.0
        %v2665 = vand.u32 %v209, 4294901760
        %2666 = vmatpush.msra.mxu0 %v2665
        %v2667 = vand.u32 %v208, 4294901760
        %2668 = vmatpush.msra.mxu0 %v2667
        %v2669 = vand.u32 %v2513, 4294901760
        %2670 = vmatmul.f32.gmra.mxu0 %v2669
        %v2671 = vpop.f32.mrf.mxu0
        %v2672 = vadd.f32 %v2649, %v2671
        %2673 = vdwg.mxu0
        %v2675 = vsel %vm485, %v2348, 0
        %2677 = vmatpush.msra.mxu0 0.0
        %2678 = vmatpush.msra.mxu0 0.0
        %2679 = vmatpush.msra.mxu0 0.0
        %2680 = vmatpush.msra.mxu0 0.0
        %2681 = vmatpush.msra.mxu0 0.0
        %2682 = vmatpush.msra.mxu0 0.0
        %2683 = vmatpush.msra.mxu0 0.0
        %2684 = vmatpush.msra.mxu0 0.0
        %2685 = vmatpush.msra.mxu0 0.0
        %2686 = vmatpush.msra.mxu0 0.0
        %2687 = vmatpush.msra.mxu0 0.0
        %2688 = vmatpush.msra.mxu0 0.0
        %2689 = vmatpush.msra.mxu0 0.0
        %2690 = vmatpush.msra.mxu0 0.0
        %v2691 = vand.u32 %v212, 4294901760
        %2692 = vmatpush.msra.mxu0 %v2691
        %v2693 = vand.u32 %v211, 4294901760
        %2694 = vmatpush.msra.mxu0 %v2693
        %v2695 = vand.u32 %v2675, 4294901760
        %v2696 = vsub.f32 %v2675, %v2695
        %v2697 = vand.u32 %v2696, 4294901760
        %v2698 = vsub.f32 %v2696, %v2697
        %v2699 = vand.u32 %v2698, 4294901760
        %2700 = vmatmul.f32.gmra.mxu0 %v2699
        %v2701 = vpop.f32.mrf.mxu0
        %v2702 = vadd.f32 0.0, %v2701
        %2703 = vdwg.mxu0
        %2704 = vmatpush.msra.mxu0 0.0
        %2705 = vmatpush.msra.mxu0 0.0
        %2706 = vmatpush.msra.mxu0 0.0
        %2707 = vmatpush.msra.mxu0 0.0
        %2708 = vmatpush.msra.mxu0 0.0
        %2709 = vmatpush.msra.mxu0 0.0
        %2710 = vmatpush.msra.mxu0 0.0
        %2711 = vmatpush.msra.mxu0 0.0
        %2712 = vmatpush.msra.mxu0 0.0
        %2713 = vmatpush.msra.mxu0 0.0
        %2714 = vmatpush.msra.mxu0 0.0
        %2715 = vmatpush.msra.mxu0 0.0
        %2716 = vmatpush.msra.mxu0 0.0
        %2717 = vmatpush.msra.mxu0 0.0
        %v2718 = vand.u32 %v212, 4294901760
        %v2719 = vsub.f32 %v212, %v2718
        %v2720 = vand.u32 %v2719, 4294901760
        %v2721 = vsub.f32 %v2719, %v2720
        %v2722 = vand.u32 %v2721, 4294901760
        %2723 = vmatpush.msra.mxu0 %v2722
        %v2724 = vand.u32 %v211, 4294901760
        %v2725 = vsub.f32 %v211, %v2724
        %v2726 = vand.u32 %v2725, 4294901760
        %v2727 = vsub.f32 %v2725, %v2726
        %v2728 = vand.u32 %v2727, 4294901760
        %2729 = vmatpush.msra.mxu0 %v2728
        %v2730 = vand.u32 %v2675, 4294901760
        %2731 = vmatmul.f32.gmra.mxu0 %v2730
        %v2732 = vpop.f32.mrf.mxu0
        %v2733 = vadd.f32 %v2702, %v2732
        %2734 = vdwg.mxu0
        %2735 = vmatpush.msra.mxu0 0.0
        %2736 = vmatpush.msra.mxu0 0.0
        %2737 = vmatpush.msra.mxu0 0.0
        %2738 = vmatpush.msra.mxu0 0.0
        %2739 = vmatpush.msra.mxu0 0.0
        %2740 = vmatpush.msra.mxu0 0.0
        %2741 = vmatpush.msra.mxu0 0.0
        %2742 = vmatpush.msra.mxu0 0.0
        %2743 = vmatpush.msra.mxu0 0.0
        %2744 = vmatpush.msra.mxu0 0.0
        %2745 = vmatpush.msra.mxu0 0.0
        %2746 = vmatpush.msra.mxu0 0.0
        %2747 = vmatpush.msra.mxu0 0.0
        %2748 = vmatpush.msra.mxu0 0.0
        %v2749 = vand.u32 %v212, 4294901760
        %v2750 = vsub.f32 %v212, %v2749
        %2751 = vmatpush.msra.mxu0 %v2750
        %v2752 = vand.u32 %v211, 4294901760
        %v2753 = vsub.f32 %v211, %v2752
        %2754 = vmatpush.msra.mxu0 %v2753
        %v2755 = vand.u32 %v2675, 4294901760
        %v2756 = vsub.f32 %v2675, %v2755
        %2757 = vmatmul.f32.gmra.mxu0 %v2756
        %v2758 = vpop.f32.mrf.mxu0
        %v2759 = vadd.f32 %v2733, %v2758
        %2760 = vdwg.mxu0
        %2761 = vmatpush.msra.mxu0 0.0
        %2762 = vmatpush.msra.mxu0 0.0
        %2763 = vmatpush.msra.mxu0 0.0
        %2764 = vmatpush.msra.mxu0 0.0
        %2765 = vmatpush.msra.mxu0 0.0
        %2766 = vmatpush.msra.mxu0 0.0
        %2767 = vmatpush.msra.mxu0 0.0
        %2768 = vmatpush.msra.mxu0 0.0
        %2769 = vmatpush.msra.mxu0 0.0
        %2770 = vmatpush.msra.mxu0 0.0
        %2771 = vmatpush.msra.mxu0 0.0
        %2772 = vmatpush.msra.mxu0 0.0
        %2773 = vmatpush.msra.mxu0 0.0
        %2774 = vmatpush.msra.mxu0 0.0
        %v2775 = vand.u32 %v212, 4294901760
        %2776 = vmatpush.msra.mxu0 %v2775
        %v2777 = vand.u32 %v211, 4294901760
        %2778 = vmatpush.msra.mxu0 %v2777
        %v2779 = vand.u32 %v2675, 4294901760
        %v2780 = vsub.f32 %v2675, %v2779
        %v2781 = vand.u32 %v2780, 4294901760
        %2782 = vmatmul.f32.gmra.mxu0 %v2781
        %v2783 = vpop.f32.mrf.mxu0
        %v2784 = vadd.f32 %v2759, %v2783
        %2785 = vdwg.mxu0
        %2786 = vmatpush.msra.mxu0 0.0
        %2787 = vmatpush.msra.mxu0 0.0
        %2788 = vmatpush.msra.mxu0 0.0
        %2789 = vmatpush.msra.mxu0 0.0
        %2790 = vmatpush.msra.mxu0 0.0
        %2791 = vmatpush.msra.mxu0 0.0
        %2792 = vmatpush.msra.mxu0 0.0
        %2793 = vmatpush.msra.mxu0 0.0
        %2794 = vmatpush.msra.mxu0 0.0
        %2795 = vmatpush.msra.mxu0 0.0
        %2796 = vmatpush.msra.mxu0 0.0
        %2797 = vmatpush.msra.mxu0 0.0
        %2798 = vmatpush.msra.mxu0 0.0
        %2799 = vmatpush.msra.mxu0 0.0
        %v2800 = vand.u32 %v212, 4294901760
        %v2801 = vsub.f32 %v212, %v2800
        %v2802 = vand.u32 %v2801, 4294901760
        %2803 = vmatpush.msra.mxu0 %v2802
        %v2804 = vand.u32 %v211, 4294901760
        %v2805 = vsub.f32 %v211, %v2804
        %v2806 = vand.u32 %v2805, 4294901760
        %2807 = vmatpush.msra.mxu0 %v2806
        %v2808 = vand.u32 %v2675, 4294901760
        %2809 = vmatmul.f32.gmra.mxu0 %v2808
        %v2810 = vpop.f32.mrf.mxu0
        %v2811 = vadd.f32 %v2784, %v2810
        %2812 = vdwg.mxu0
        %2813 = vmatpush.msra.mxu0 0.0
        %2814 = vmatpush.msra.mxu0 0.0
        %2815 = vmatpush.msra.mxu0 0.0
        %2816 = vmatpush.msra.mxu0 0.0
        %2817 = vmatpush.msra.mxu0 0.0
        %2818 = vmatpush.msra.mxu0 0.0
        %2819 = vmatpush.msra.mxu0 0.0
        %2820 = vmatpush.msra.mxu0 0.0
        %2821 = vmatpush.msra.mxu0 0.0
        %2822 = vmatpush.msra.mxu0 0.0
        %2823 = vmatpush.msra.mxu0 0.0
        %2824 = vmatpush.msra.mxu0 0.0
        %2825 = vmatpush.msra.mxu0 0.0
        %2826 = vmatpush.msra.mxu0 0.0
        %v2827 = vand.u32 %v212, 4294901760
        %2828 = vmatpush.msra.mxu0 %v2827
        %v2829 = vand.u32 %v211, 4294901760
        %2830 = vmatpush.msra.mxu0 %v2829
        %v2831 = vand.u32 %v2675, 4294901760
        %2832 = vmatmul.f32.gmra.mxu0 %v2831
        %v2833 = vpop.f32.mrf.mxu0
        %v2834 = vadd.f32 %v2811, %v2833
        %2835 = vdwg.mxu0
        %v2837 = vsel %vm485, %v2344, 0
        %2839 = vmatpush.msra.mxu0 0.0
        %2840 = vmatpush.msra.mxu0 0.0
        %2841 = vmatpush.msra.mxu0 0.0
        %2842 = vmatpush.msra.mxu0 0.0
        %2843 = vmatpush.msra.mxu0 0.0
        %2844 = vmatpush.msra.mxu0 0.0
        %2845 = vmatpush.msra.mxu0 0.0
        %2846 = vmatpush.msra.mxu0 0.0
        %2847 = vmatpush.msra.mxu0 0.0
        %2848 = vmatpush.msra.mxu0 0.0
        %2849 = vmatpush.msra.mxu0 0.0
        %2850 = vmatpush.msra.mxu0 0.0
        %2851 = vmatpush.msra.mxu0 0.0
        %2852 = vmatpush.msra.mxu0 0.0
        %v2853 = vand.u32 %v209, 4294901760
        %2854 = vmatpush.msra.mxu0 %v2853
        %v2855 = vand.u32 %v208, 4294901760
        %2856 = vmatpush.msra.mxu0 %v2855
        %v2857 = vand.u32 %v2837, 4294901760
        %v2858 = vsub.f32 %v2837, %v2857
        %v2859 = vand.u32 %v2858, 4294901760
        %v2860 = vsub.f32 %v2858, %v2859
        %v2861 = vand.u32 %v2860, 4294901760
        %2862 = vmatmul.f32.gmra.mxu0 %v2861
        %v2863 = vpop.f32.mrf.mxu0
        %v2864 = vadd.f32 %v2834, %v2863
        %2865 = vdwg.mxu0
        %2866 = vmatpush.msra.mxu0 0.0
        %2867 = vmatpush.msra.mxu0 0.0
        %2868 = vmatpush.msra.mxu0 0.0
        %2869 = vmatpush.msra.mxu0 0.0
        %2870 = vmatpush.msra.mxu0 0.0
        %2871 = vmatpush.msra.mxu0 0.0
        %2872 = vmatpush.msra.mxu0 0.0
        %2873 = vmatpush.msra.mxu0 0.0
        %2874 = vmatpush.msra.mxu0 0.0
        %2875 = vmatpush.msra.mxu0 0.0
        %2876 = vmatpush.msra.mxu0 0.0
        %2877 = vmatpush.msra.mxu0 0.0
        %2878 = vmatpush.msra.mxu0 0.0
        %2879 = vmatpush.msra.mxu0 0.0
        %v2880 = vand.u32 %v209, 4294901760
        %v2881 = vsub.f32 %v209, %v2880
        %v2882 = vand.u32 %v2881, 4294901760
        %v2883 = vsub.f32 %v2881, %v2882
        %v2884 = vand.u32 %v2883, 4294901760
        %2885 = vmatpush.msra.mxu0 %v2884
        %v2886 = vand.u32 %v208, 4294901760
        %v2887 = vsub.f32 %v208, %v2886
        %v2888 = vand.u32 %v2887, 4294901760
        %v2889 = vsub.f32 %v2887, %v2888
        %v2890 = vand.u32 %v2889, 4294901760
        %2891 = vmatpush.msra.mxu0 %v2890
        %v2892 = vand.u32 %v2837, 4294901760
        %2893 = vmatmul.f32.gmra.mxu0 %v2892
        %v2894 = vpop.f32.mrf.mxu0
        %v2895 = vadd.f32 %v2864, %v2894
        %2896 = vdwg.mxu0
        %2897 = vmatpush.msra.mxu0 0.0
        %2898 = vmatpush.msra.mxu0 0.0
        %2899 = vmatpush.msra.mxu0 0.0
        %2900 = vmatpush.msra.mxu0 0.0
        %2901 = vmatpush.msra.mxu0 0.0
        %2902 = vmatpush.msra.mxu0 0.0
        %2903 = vmatpush.msra.mxu0 0.0
        %2904 = vmatpush.msra.mxu0 0.0
        %2905 = vmatpush.msra.mxu0 0.0
        %2906 = vmatpush.msra.mxu0 0.0
        %2907 = vmatpush.msra.mxu0 0.0
        %2908 = vmatpush.msra.mxu0 0.0
        %2909 = vmatpush.msra.mxu0 0.0
        %2910 = vmatpush.msra.mxu0 0.0
        %v2911 = vand.u32 %v209, 4294901760
        %v2912 = vsub.f32 %v209, %v2911
        %2913 = vmatpush.msra.mxu0 %v2912
        %v2914 = vand.u32 %v208, 4294901760
        %v2915 = vsub.f32 %v208, %v2914
        %2916 = vmatpush.msra.mxu0 %v2915
        %v2917 = vand.u32 %v2837, 4294901760
        %v2918 = vsub.f32 %v2837, %v2917
        %2919 = vmatmul.f32.gmra.mxu0 %v2918
        %v2920 = vpop.f32.mrf.mxu0
        %v2921 = vadd.f32 %v2895, %v2920
        %2922 = vdwg.mxu0
        %2923 = vmatpush.msra.mxu0 0.0
        %2924 = vmatpush.msra.mxu0 0.0
        %2925 = vmatpush.msra.mxu0 0.0
        %2926 = vmatpush.msra.mxu0 0.0
        %2927 = vmatpush.msra.mxu0 0.0
        %2928 = vmatpush.msra.mxu0 0.0
        %2929 = vmatpush.msra.mxu0 0.0
        %2930 = vmatpush.msra.mxu0 0.0
        %2931 = vmatpush.msra.mxu0 0.0
        %2932 = vmatpush.msra.mxu0 0.0
        %2933 = vmatpush.msra.mxu0 0.0
        %2934 = vmatpush.msra.mxu0 0.0
        %2935 = vmatpush.msra.mxu0 0.0
        %2936 = vmatpush.msra.mxu0 0.0
        %v2937 = vand.u32 %v209, 4294901760
        %2938 = vmatpush.msra.mxu0 %v2937
        %v2939 = vand.u32 %v208, 4294901760
        %2940 = vmatpush.msra.mxu0 %v2939
        %v2941 = vand.u32 %v2837, 4294901760
        %v2942 = vsub.f32 %v2837, %v2941
        %v2943 = vand.u32 %v2942, 4294901760
        %2944 = vmatmul.f32.gmra.mxu0 %v2943
        %v2945 = vpop.f32.mrf.mxu0
        %v2946 = vadd.f32 %v2921, %v2945
        %2947 = vdwg.mxu0
        %2948 = vmatpush.msra.mxu0 0.0
        %2949 = vmatpush.msra.mxu0 0.0
        %2950 = vmatpush.msra.mxu0 0.0
        %2951 = vmatpush.msra.mxu0 0.0
        %2952 = vmatpush.msra.mxu0 0.0
        %2953 = vmatpush.msra.mxu0 0.0
        %2954 = vmatpush.msra.mxu0 0.0
        %2955 = vmatpush.msra.mxu0 0.0
        %2956 = vmatpush.msra.mxu0 0.0
        %2957 = vmatpush.msra.mxu0 0.0
        %2958 = vmatpush.msra.mxu0 0.0
        %2959 = vmatpush.msra.mxu0 0.0
        %2960 = vmatpush.msra.mxu0 0.0
        %2961 = vmatpush.msra.mxu0 0.0
        %v2962 = vand.u32 %v209, 4294901760
        %v2963 = vsub.f32 %v209, %v2962
        %v2964 = vand.u32 %v2963, 4294901760
        %2965 = vmatpush.msra.mxu0 %v2964
        %v2966 = vand.u32 %v208, 4294901760
        %v2967 = vsub.f32 %v208, %v2966
        %v2968 = vand.u32 %v2967, 4294901760
        %2969 = vmatpush.msra.mxu0 %v2968
        %v2970 = vand.u32 %v2837, 4294901760
        %2971 = vmatmul.f32.gmra.mxu0 %v2970
        %v2972 = vpop.f32.mrf.mxu0
        %v2973 = vadd.f32 %v2946, %v2972
        %2974 = vdwg.mxu0
        %2975 = vmatpush.msra.mxu0 0.0
        %2976 = vmatpush.msra.mxu0 0.0
        %2977 = vmatpush.msra.mxu0 0.0
        %2978 = vmatpush.msra.mxu0 0.0
        %2979 = vmatpush.msra.mxu0 0.0
        %2980 = vmatpush.msra.mxu0 0.0
        %2981 = vmatpush.msra.mxu0 0.0
        %2982 = vmatpush.msra.mxu0 0.0
        %2983 = vmatpush.msra.mxu0 0.0
        %2984 = vmatpush.msra.mxu0 0.0
        %2985 = vmatpush.msra.mxu0 0.0
        %2986 = vmatpush.msra.mxu0 0.0
        %2987 = vmatpush.msra.mxu0 0.0
        %2988 = vmatpush.msra.mxu0 0.0
        %v2989 = vand.u32 %v209, 4294901760
        %2990 = vmatpush.msra.mxu0 %v2989
        %v2991 = vand.u32 %v208, 4294901760
        %2992 = vmatpush.msra.mxu0 %v2991
        %v2993 = vand.u32 %v2837, 4294901760
        %2994 = vmatmul.f32.gmra.mxu0 %v2993
        %v2995 = vpop.f32.mrf.mxu0
        %v2996 = vadd.f32 %v2973, %v2995
        %2997 = vdwg.mxu0
        %2999 = vrot.lane.b32.xlu0 %v2996, 32
        %v3000 = vpop.permute.xlu0 %2999
        %v3002 = vsel %vm1138, %v2672, %v3000
        %v3004 = vrot.slane %v3002, 1
        %v3005 = vrot.slane %v3002, 2
        %v3006 = vrot.slane %v3002, 3
        %v3007 = vrot.slane %v3002, 4
        %v3008 = vrot.slane %v3002, 5
        %v3009 = vrot.slane %v3002, 6
        %v3010 = vrot.slane %v3002, 7
        %3018 = vst.msk [vmem:[%s203 + $0x2] sm:$0x1] %vm1155, %v3002
        %3019 = vst.msk [vmem:[%s203 + $0xa] sm:$0x1] %vm1155, %v3004
        %3020 = vst.msk [vmem:[%s203 + $0x12] sm:$0x1] %vm1155, %v3005
        %3021 = vst.msk [vmem:[%s203 + $0x1a] sm:$0x1] %vm1155, %v3006
        %3022 = vst.msk [vmem:[%s203 + $0x22] sm:$0x1] %vm1155, %v3007
        %3023 = vst.msk [vmem:[%s203 + $0x2a] sm:$0x1] %vm1155, %v3008
        %3024 = vst.msk [vmem:[%s203 + $0x32] sm:$0x1] %vm1155, %v3009
        %3025 = vst.msk [vmem:[%s203 + $0x3a] sm:$0x1] %vm1155, %v3010
        %v3026 = vld [vmem:[%s181 + $0x3] sm:$0x1]
        %v3027 = vld [vmem:[%s181 + $0xb] sm:$0x1]
        %v3028 = vld [vmem:[%s181 + $0x13] sm:$0x1]
        %v3029 = vld [vmem:[%s181 + $0x1b] sm:$0x1]
        %v3034 = vrot.slane %v3027, 7
        %v3035 = vsel %vm222, %v3034, %v3026
        %v3036 = vrot.slane %v3028, 6
        %v3037 = vsel %vm225, %v3036, %v3035
        %v3038 = vrot.slane %v3029, 5
        %v3039 = vsel %vm228, %v3038, %v3037
        %v3040 = vsel %vm243, %v3039, 0
        %3042 = vmatpush.msra.mxu0 0.0
        %3043 = vmatpush.msra.mxu0 0.0
        %3044 = vmatpush.msra.mxu0 0.0
        %3045 = vmatpush.msra.mxu0 0.0
        %3046 = vmatpush.msra.mxu0 0.0
        %3047 = vmatpush.msra.mxu0 0.0
        %3048 = vmatpush.msra.mxu0 0.0
        %3049 = vmatpush.msra.mxu0 0.0
        %3050 = vmatpush.msra.mxu0 0.0
        %3051 = vmatpush.msra.mxu0 0.0
        %3052 = vmatpush.msra.mxu0 0.0
        %3053 = vmatpush.msra.mxu0 0.0
        %3054 = vmatpush.msra.mxu0 0.0
        %3055 = vmatpush.msra.mxu0 0.0
        %3056 = vmatpush.msra.mxu0 0.0
        %v3057 = vand.u32 %v3040, 4294901760
        %3058 = vmatpush.msra.mxu0 %v3057
        %v3059 = vand.u32 %v232, 4294901760
        %v3060 = vsub.f32 %v232, %v3059
        %v3061 = vand.u32 %v3060, 4294901760
        %v3062 = vsub.f32 %v3060, %v3061
        %v3063 = vand.u32 %v3062, 4294901760
        %3064 = vmatmul.f32.gmra.mxu0 %v3063
        %v3065 = vpop.f32.mrf.mxu0
        %v3066 = vadd.f32 0.0, %v3065
        %v3067 = vand.u32 %v235, 4294901760
        %v3068 = vsub.f32 %v235, %v3067
        %v3069 = vand.u32 %v3068, 4294901760
        %v3070 = vsub.f32 %v3068, %v3069
        %v3071 = vand.u32 %v3070, 4294901760
        %3072 = vmatmul.f32.gmra.mxu0 %v3071
        %v3073 = vpop.f32.mrf.mxu0
        %v3074 = vadd.f32 0.0, %v3073
        %v3075 = vand.u32 %v238, 4294901760
        %v3076 = vsub.f32 %v238, %v3075
        %v3077 = vand.u32 %v3076, 4294901760
        %v3078 = vsub.f32 %v3076, %v3077
        %v3079 = vand.u32 %v3078, 4294901760
        %3080 = vmatmul.f32.gmra.mxu0 %v3079
        %v3081 = vpop.f32.mrf.mxu0
        %v3082 = vadd.f32 0.0, %v3081
        %v3083 = vand.u32 %v241, 4294901760
        %v3084 = vsub.f32 %v241, %v3083
        %v3085 = vand.u32 %v3084, 4294901760
        %v3086 = vsub.f32 %v3084, %v3085
        %v3087 = vand.u32 %v3086, 4294901760
        %3088 = vmatmul.f32.gmra.mxu0 %v3087
        %v3089 = vpop.f32.mrf.mxu0
        %v3090 = vadd.f32 0.0, %v3089
        %3091 = vdwg.mxu0
        %3092 = vmatpush.msra.mxu0 0.0
        %3093 = vmatpush.msra.mxu0 0.0
        %3094 = vmatpush.msra.mxu0 0.0
        %3095 = vmatpush.msra.mxu0 0.0
        %3096 = vmatpush.msra.mxu0 0.0
        %3097 = vmatpush.msra.mxu0 0.0
        %3098 = vmatpush.msra.mxu0 0.0
        %3099 = vmatpush.msra.mxu0 0.0
        %3100 = vmatpush.msra.mxu0 0.0
        %3101 = vmatpush.msra.mxu0 0.0
        %3102 = vmatpush.msra.mxu0 0.0
        %3103 = vmatpush.msra.mxu0 0.0
        %3104 = vmatpush.msra.mxu0 0.0
        %3105 = vmatpush.msra.mxu0 0.0
        %3106 = vmatpush.msra.mxu0 0.0
        %v3107 = vand.u32 %v3040, 4294901760
        %v3108 = vsub.f32 %v3040, %v3107
        %v3109 = vand.u32 %v3108, 4294901760
        %v3110 = vsub.f32 %v3108, %v3109
        %v3111 = vand.u32 %v3110, 4294901760
        %3112 = vmatpush.msra.mxu0 %v3111
        %v3113 = vand.u32 %v232, 4294901760
        %3114 = vmatmul.f32.gmra.mxu0 %v3113
        %v3115 = vpop.f32.mrf.mxu0
        %v3116 = vadd.f32 %v3066, %v3115
        %v3117 = vand.u32 %v235, 4294901760
        %3118 = vmatmul.f32.gmra.mxu0 %v3117
        %v3119 = vpop.f32.mrf.mxu0
        %v3120 = vadd.f32 %v3074, %v3119
        %v3121 = vand.u32 %v238, 4294901760
        %3122 = vmatmul.f32.gmra.mxu0 %v3121
        %v3123 = vpop.f32.mrf.mxu0
        %v3124 = vadd.f32 %v3082, %v3123
        %v3125 = vand.u32 %v241, 4294901760
        %3126 = vmatmul.f32.gmra.mxu0 %v3125
        %v3127 = vpop.f32.mrf.mxu0
        %v3128 = vadd.f32 %v3090, %v3127
        %3129 = vdwg.mxu0
        %3130 = vmatpush.msra.mxu0 0.0
        %3131 = vmatpush.msra.mxu0 0.0
        %3132 = vmatpush.msra.mxu0 0.0
        %3133 = vmatpush.msra.mxu0 0.0
        %3134 = vmatpush.msra.mxu0 0.0
        %3135 = vmatpush.msra.mxu0 0.0
        %3136 = vmatpush.msra.mxu0 0.0
        %3137 = vmatpush.msra.mxu0 0.0
        %3138 = vmatpush.msra.mxu0 0.0
        %3139 = vmatpush.msra.mxu0 0.0
        %3140 = vmatpush.msra.mxu0 0.0
        %3141 = vmatpush.msra.mxu0 0.0
        %3142 = vmatpush.msra.mxu0 0.0
        %3143 = vmatpush.msra.mxu0 0.0
        %3144 = vmatpush.msra.mxu0 0.0
        %v3145 = vand.u32 %v3040, 4294901760
        %v3146 = vsub.f32 %v3040, %v3145
        %3147 = vmatpush.msra.mxu0 %v3146
        %v3148 = vand.u32 %v232, 4294901760
        %v3149 = vsub.f32 %v232, %v3148
        %3150 = vmatmul.f32.gmra.mxu0 %v3149
        %v3151 = vpop.f32.mrf.mxu0
        %v3152 = vadd.f32 %v3116, %v3151
        %v3153 = vand.u32 %v235, 4294901760
        %v3154 = vsub.f32 %v235, %v3153
        %3155 = vmatmul.f32.gmra.mxu0 %v3154
        %v3156 = vpop.f32.mrf.mxu0
        %v3157 = vadd.f32 %v3120, %v3156
        %v3158 = vand.u32 %v238, 4294901760
        %v3159 = vsub.f32 %v238, %v3158
        %3160 = vmatmul.f32.gmra.mxu0 %v3159
        %v3161 = vpop.f32.mrf.mxu0
        %v3162 = vadd.f32 %v3124, %v3161
        %v3163 = vand.u32 %v241, 4294901760
        %v3164 = vsub.f32 %v241, %v3163
        %3165 = vmatmul.f32.gmra.mxu0 %v3164
        %v3166 = vpop.f32.mrf.mxu0
        %v3167 = vadd.f32 %v3128, %v3166
        %3168 = vdwg.mxu0
        %3169 = vmatpush.msra.mxu0 0.0
        %3170 = vmatpush.msra.mxu0 0.0
        %3171 = vmatpush.msra.mxu0 0.0
        %3172 = vmatpush.msra.mxu0 0.0
        %3173 = vmatpush.msra.mxu0 0.0
        %3174 = vmatpush.msra.mxu0 0.0
        %3175 = vmatpush.msra.mxu0 0.0
        %3176 = vmatpush.msra.mxu0 0.0
        %3177 = vmatpush.msra.mxu0 0.0
        %3178 = vmatpush.msra.mxu0 0.0
        %3179 = vmatpush.msra.mxu0 0.0
        %3180 = vmatpush.msra.mxu0 0.0
        %3181 = vmatpush.msra.mxu0 0.0
        %3182 = vmatpush.msra.mxu0 0.0
        %3183 = vmatpush.msra.mxu0 0.0
        %v3184 = vand.u32 %v3040, 4294901760
        %3185 = vmatpush.msra.mxu0 %v3184
        %v3186 = vand.u32 %v232, 4294901760
        %v3187 = vsub.f32 %v232, %v3186
        %v3188 = vand.u32 %v3187, 4294901760
        %3189 = vmatmul.f32.gmra.mxu0 %v3188
        %v3190 = vpop.f32.mrf.mxu0
        %v3191 = vadd.f32 %v3152, %v3190
        %v3192 = vand.u32 %v235, 4294901760
        %v3193 = vsub.f32 %v235, %v3192
        %v3194 = vand.u32 %v3193, 4294901760
        %3195 = vmatmul.f32.gmra.mxu0 %v3194
        %v3196 = vpop.f32.mrf.mxu0
        %v3197 = vadd.f32 %v3157, %v3196
        %v3198 = vand.u32 %v238, 4294901760
        %v3199 = vsub.f32 %v238, %v3198
        %v3200 = vand.u32 %v3199, 4294901760
        %3201 = vmatmul.f32.gmra.mxu0 %v3200
        %v3202 = vpop.f32.mrf.mxu0
        %v3203 = vadd.f32 %v3162, %v3202
        %v3204 = vand.u32 %v241, 4294901760
        %v3205 = vsub.f32 %v241, %v3204
        %v3206 = vand.u32 %v3205, 4294901760
        %3207 = vmatmul.f32.gmra.mxu0 %v3206
        %v3208 = vpop.f32.mrf.mxu0
        %v3209 = vadd.f32 %v3167, %v3208
        %3210 = vdwg.mxu0
        %3211 = vmatpush.msra.mxu0 0.0
        %3212 = vmatpush.msra.mxu0 0.0
        %3213 = vmatpush.msra.mxu0 0.0
        %3214 = vmatpush.msra.mxu0 0.0
        %3215 = vmatpush.msra.mxu0 0.0
        %3216 = vmatpush.msra.mxu0 0.0
        %3217 = vmatpush.msra.mxu0 0.0
        %3218 = vmatpush.msra.mxu0 0.0
        %3219 = vmatpush.msra.mxu0 0.0
        %3220 = vmatpush.msra.mxu0 0.0
        %3221 = vmatpush.msra.mxu0 0.0
        %3222 = vmatpush.msra.mxu0 0.0
        %3223 = vmatpush.msra.mxu0 0.0
        %3224 = vmatpush.msra.mxu0 0.0
        %3225 = vmatpush.msra.mxu0 0.0
        %v3226 = vand.u32 %v3040, 4294901760
        %v3227 = vsub.f32 %v3040, %v3226
        %v3228 = vand.u32 %v3227, 4294901760
        %3229 = vmatpush.msra.mxu0 %v3228
        %v3230 = vand.u32 %v232, 4294901760
        %3231 = vmatmul.f32.gmra.mxu0 %v3230
        %v3232 = vpop.f32.mrf.mxu0
        %v3233 = vadd.f32 %v3191, %v3232
        %v3234 = vand.u32 %v235, 4294901760
        %3235 = vmatmul.f32.gmra.mxu0 %v3234
        %v3236 = vpop.f32.mrf.mxu0
        %v3237 = vadd.f32 %v3197, %v3236
        %v3238 = vand.u32 %v238, 4294901760
        %3239 = vmatmul.f32.gmra.mxu0 %v3238
        %v3240 = vpop.f32.mrf.mxu0
        %v3241 = vadd.f32 %v3203, %v3240
        %v3242 = vand.u32 %v241, 4294901760
        %3243 = vmatmul.f32.gmra.mxu0 %v3242
        %v3244 = vpop.f32.mrf.mxu0
        %v3245 = vadd.f32 %v3209, %v3244
        %3246 = vdwg.mxu0
        %3247 = vmatpush.msra.mxu0 0.0
        %3248 = vmatpush.msra.mxu0 0.0
        %3249 = vmatpush.msra.mxu0 0.0
        %3250 = vmatpush.msra.mxu0 0.0
        %3251 = vmatpush.msra.mxu0 0.0
        %3252 = vmatpush.msra.mxu0 0.0
        %3253 = vmatpush.msra.mxu0 0.0
        %3254 = vmatpush.msra.mxu0 0.0
        %3255 = vmatpush.msra.mxu0 0.0
        %3256 = vmatpush.msra.mxu0 0.0
        %3257 = vmatpush.msra.mxu0 0.0
        %3258 = vmatpush.msra.mxu0 0.0
        %3259 = vmatpush.msra.mxu0 0.0
        %3260 = vmatpush.msra.mxu0 0.0
        %3261 = vmatpush.msra.mxu0 0.0
        %v3262 = vand.u32 %v3040, 4294901760
        %3263 = vmatpush.msra.mxu0 %v3262
        %v3264 = vand.u32 %v232, 4294901760
        %3265 = vmatmul.f32.gmra.mxu0 %v3264
        %v3266 = vpop.f32.mrf.mxu0
        %v3267 = vadd.f32 %v3233, %v3266
        %v3268 = vand.u32 %v235, 4294901760
        %3269 = vmatmul.f32.gmra.mxu0 %v3268
        %v3270 = vpop.f32.mrf.mxu0
        %v3271 = vadd.f32 %v3237, %v3270
        %v3272 = vand.u32 %v238, 4294901760
        %3273 = vmatmul.f32.gmra.mxu0 %v3272
        %v3274 = vpop.f32.mrf.mxu0
        %v3275 = vadd.f32 %v3241, %v3274
        %v3276 = vand.u32 %v241, 4294901760
        %3277 = vmatmul.f32.gmra.mxu0 %v3276
        %v3278 = vpop.f32.mrf.mxu0
        %v3279 = vadd.f32 %v3245, %v3278
        %3280 = vdwg.mxu0
        %v3282 = vsel %vm485, %v3271, 0
        %3284 = vmatpush.msra.mxu0 0.0
        %3285 = vmatpush.msra.mxu0 0.0
        %3286 = vmatpush.msra.mxu0 0.0
        %3287 = vmatpush.msra.mxu0 0.0
        %3288 = vmatpush.msra.mxu0 0.0
        %3289 = vmatpush.msra.mxu0 0.0
        %3290 = vmatpush.msra.mxu0 0.0
        %3291 = vmatpush.msra.mxu0 0.0
        %3292 = vmatpush.msra.mxu0 0.0
        %3293 = vmatpush.msra.mxu0 0.0
        %3294 = vmatpush.msra.mxu0 0.0
        %3295 = vmatpush.msra.mxu0 0.0
        %3296 = vmatpush.msra.mxu0 0.0
        %3297 = vmatpush.msra.mxu0 0.0
        %v3298 = vand.u32 %v212, 4294901760
        %3299 = vmatpush.msra.mxu0 %v3298
        %v3300 = vand.u32 %v211, 4294901760
        %3301 = vmatpush.msra.mxu0 %v3300
        %v3302 = vand.u32 %v3282, 4294901760
        %v3303 = vsub.f32 %v3282, %v3302
        %v3304 = vand.u32 %v3303, 4294901760
        %v3305 = vsub.f32 %v3303, %v3304
        %v3306 = vand.u32 %v3305, 4294901760
        %3307 = vmatmul.f32.gmra.mxu0 %v3306
        %v3308 = vpop.f32.mrf.mxu0
        %v3309 = vadd.f32 0.0, %v3308
        %3310 = vdwg.mxu0
        %3311 = vmatpush.msra.mxu0 0.0
        %3312 = vmatpush.msra.mxu0 0.0
        %3313 = vmatpush.msra.mxu0 0.0
        %3314 = vmatpush.msra.mxu0 0.0
        %3315 = vmatpush.msra.mxu0 0.0
        %3316 = vmatpush.msra.mxu0 0.0
        %3317 = vmatpush.msra.mxu0 0.0
        %3318 = vmatpush.msra.mxu0 0.0
        %3319 = vmatpush.msra.mxu0 0.0
        %3320 = vmatpush.msra.mxu0 0.0
        %3321 = vmatpush.msra.mxu0 0.0
        %3322 = vmatpush.msra.mxu0 0.0
        %3323 = vmatpush.msra.mxu0 0.0
        %3324 = vmatpush.msra.mxu0 0.0
        %v3325 = vand.u32 %v212, 4294901760
        %v3326 = vsub.f32 %v212, %v3325
        %v3327 = vand.u32 %v3326, 4294901760
        %v3328 = vsub.f32 %v3326, %v3327
        %v3329 = vand.u32 %v3328, 4294901760
        %3330 = vmatpush.msra.mxu0 %v3329
        %v3331 = vand.u32 %v211, 4294901760
        %v3332 = vsub.f32 %v211, %v3331
        %v3333 = vand.u32 %v3332, 4294901760
        %v3334 = vsub.f32 %v3332, %v3333
        %v3335 = vand.u32 %v3334, 4294901760
        %3336 = vmatpush.msra.mxu0 %v3335
        %v3337 = vand.u32 %v3282, 4294901760
        %3338 = vmatmul.f32.gmra.mxu0 %v3337
        %v3339 = vpop.f32.mrf.mxu0
        %v3340 = vadd.f32 %v3309, %v3339
        %3341 = vdwg.mxu0
        %3342 = vmatpush.msra.mxu0 0.0
        %3343 = vmatpush.msra.mxu0 0.0
        %3344 = vmatpush.msra.mxu0 0.0
        %3345 = vmatpush.msra.mxu0 0.0
        %3346 = vmatpush.msra.mxu0 0.0
        %3347 = vmatpush.msra.mxu0 0.0
        %3348 = vmatpush.msra.mxu0 0.0
        %3349 = vmatpush.msra.mxu0 0.0
        %3350 = vmatpush.msra.mxu0 0.0
        %3351 = vmatpush.msra.mxu0 0.0
        %3352 = vmatpush.msra.mxu0 0.0
        %3353 = vmatpush.msra.mxu0 0.0
        %3354 = vmatpush.msra.mxu0 0.0
        %3355 = vmatpush.msra.mxu0 0.0
        %v3356 = vand.u32 %v212, 4294901760
        %v3357 = vsub.f32 %v212, %v3356
        %3358 = vmatpush.msra.mxu0 %v3357
        %v3359 = vand.u32 %v211, 4294901760
        %v3360 = vsub.f32 %v211, %v3359
        %3361 = vmatpush.msra.mxu0 %v3360
        %v3362 = vand.u32 %v3282, 4294901760
        %v3363 = vsub.f32 %v3282, %v3362
        %3364 = vmatmul.f32.gmra.mxu0 %v3363
        %v3365 = vpop.f32.mrf.mxu0
        %v3366 = vadd.f32 %v3340, %v3365
        %3367 = vdwg.mxu0
        %3368 = vmatpush.msra.mxu0 0.0
        %3369 = vmatpush.msra.mxu0 0.0
        %3370 = vmatpush.msra.mxu0 0.0
        %3371 = vmatpush.msra.mxu0 0.0
        %3372 = vmatpush.msra.mxu0 0.0
        %3373 = vmatpush.msra.mxu0 0.0
        %3374 = vmatpush.msra.mxu0 0.0
        %3375 = vmatpush.msra.mxu0 0.0
        %3376 = vmatpush.msra.mxu0 0.0
        %3377 = vmatpush.msra.mxu0 0.0
        %3378 = vmatpush.msra.mxu0 0.0
        %3379 = vmatpush.msra.mxu0 0.0
        %3380 = vmatpush.msra.mxu0 0.0
        %3381 = vmatpush.msra.mxu0 0.0
        %v3382 = vand.u32 %v212, 4294901760
        %3383 = vmatpush.msra.mxu0 %v3382
        %v3384 = vand.u32 %v211, 4294901760
        %3385 = vmatpush.msra.mxu0 %v3384
        %v3386 = vand.u32 %v3282, 4294901760
        %v3387 = vsub.f32 %v3282, %v3386
        %v3388 = vand.u32 %v3387, 4294901760
        %3389 = vmatmul.f32.gmra.mxu0 %v3388
        %v3390 = vpop.f32.mrf.mxu0
        %v3391 = vadd.f32 %v3366, %v3390
        %3392 = vdwg.mxu0
        %3393 = vmatpush.msra.mxu0 0.0
        %3394 = vmatpush.msra.mxu0 0.0
        %3395 = vmatpush.msra.mxu0 0.0
        %3396 = vmatpush.msra.mxu0 0.0
        %3397 = vmatpush.msra.mxu0 0.0
        %3398 = vmatpush.msra.mxu0 0.0
        %3399 = vmatpush.msra.mxu0 0.0
        %3400 = vmatpush.msra.mxu0 0.0
        %3401 = vmatpush.msra.mxu0 0.0
        %3402 = vmatpush.msra.mxu0 0.0
        %3403 = vmatpush.msra.mxu0 0.0
        %3404 = vmatpush.msra.mxu0 0.0
        %3405 = vmatpush.msra.mxu0 0.0
        %3406 = vmatpush.msra.mxu0 0.0
        %v3407 = vand.u32 %v212, 4294901760
        %v3408 = vsub.f32 %v212, %v3407
        %v3409 = vand.u32 %v3408, 4294901760
        %3410 = vmatpush.msra.mxu0 %v3409
        %v3411 = vand.u32 %v211, 4294901760
        %v3412 = vsub.f32 %v211, %v3411
        %v3413 = vand.u32 %v3412, 4294901760
        %3414 = vmatpush.msra.mxu0 %v3413
        %v3415 = vand.u32 %v3282, 4294901760
        %3416 = vmatmul.f32.gmra.mxu0 %v3415
        %v3417 = vpop.f32.mrf.mxu0
        %v3418 = vadd.f32 %v3391, %v3417
        %3419 = vdwg.mxu0
        %3420 = vmatpush.msra.mxu0 0.0
        %3421 = vmatpush.msra.mxu0 0.0
        %3422 = vmatpush.msra.mxu0 0.0
        %3423 = vmatpush.msra.mxu0 0.0
        %3424 = vmatpush.msra.mxu0 0.0
        %3425 = vmatpush.msra.mxu0 0.0
        %3426 = vmatpush.msra.mxu0 0.0
        %3427 = vmatpush.msra.mxu0 0.0
        %3428 = vmatpush.msra.mxu0 0.0
        %3429 = vmatpush.msra.mxu0 0.0
        %3430 = vmatpush.msra.mxu0 0.0
        %3431 = vmatpush.msra.mxu0 0.0
        %3432 = vmatpush.msra.mxu0 0.0
        %3433 = vmatpush.msra.mxu0 0.0
        %v3434 = vand.u32 %v212, 4294901760
        %3435 = vmatpush.msra.mxu0 %v3434
        %v3436 = vand.u32 %v211, 4294901760
        %3437 = vmatpush.msra.mxu0 %v3436
        %v3438 = vand.u32 %v3282, 4294901760
        %3439 = vmatmul.f32.gmra.mxu0 %v3438
        %v3440 = vpop.f32.mrf.mxu0
        %v3441 = vadd.f32 %v3418, %v3440
        %3442 = vdwg.mxu0
        %v3444 = vsel %vm485, %v3267, 0
        %3446 = vmatpush.msra.mxu0 0.0
        %3447 = vmatpush.msra.mxu0 0.0
        %3448 = vmatpush.msra.mxu0 0.0
        %3449 = vmatpush.msra.mxu0 0.0
        %3450 = vmatpush.msra.mxu0 0.0
        %3451 = vmatpush.msra.mxu0 0.0
        %3452 = vmatpush.msra.mxu0 0.0
        %3453 = vmatpush.msra.mxu0 0.0
        %3454 = vmatpush.msra.mxu0 0.0
        %3455 = vmatpush.msra.mxu0 0.0
        %3456 = vmatpush.msra.mxu0 0.0
        %3457 = vmatpush.msra.mxu0 0.0
        %3458 = vmatpush.msra.mxu0 0.0
        %3459 = vmatpush.msra.mxu0 0.0
        %v3460 = vand.u32 %v209, 4294901760
        %3461 = vmatpush.msra.mxu0 %v3460
        %v3462 = vand.u32 %v208, 4294901760
        %3463 = vmatpush.msra.mxu0 %v3462
        %v3464 = vand.u32 %v3444, 4294901760
        %v3465 = vsub.f32 %v3444, %v3464
        %v3466 = vand.u32 %v3465, 4294901760
        %v3467 = vsub.f32 %v3465, %v3466
        %v3468 = vand.u32 %v3467, 4294901760
        %3469 = vmatmul.f32.gmra.mxu0 %v3468
        %v3470 = vpop.f32.mrf.mxu0
        %v3471 = vadd.f32 %v3441, %v3470
        %3472 = vdwg.mxu0
        %3473 = vmatpush.msra.mxu0 0.0
        %3474 = vmatpush.msra.mxu0 0.0
        %3475 = vmatpush.msra.mxu0 0.0
        %3476 = vmatpush.msra.mxu0 0.0
        %3477 = vmatpush.msra.mxu0 0.0
        %3478 = vmatpush.msra.mxu0 0.0
        %3479 = vmatpush.msra.mxu0 0.0
        %3480 = vmatpush.msra.mxu0 0.0
        %3481 = vmatpush.msra.mxu0 0.0
        %3482 = vmatpush.msra.mxu0 0.0
        %3483 = vmatpush.msra.mxu0 0.0
        %3484 = vmatpush.msra.mxu0 0.0
        %3485 = vmatpush.msra.mxu0 0.0
        %3486 = vmatpush.msra.mxu0 0.0
        %v3487 = vand.u32 %v209, 4294901760
        %v3488 = vsub.f32 %v209, %v3487
        %v3489 = vand.u32 %v3488, 4294901760
        %v3490 = vsub.f32 %v3488, %v3489
        %v3491 = vand.u32 %v3490, 4294901760
        %3492 = vmatpush.msra.mxu0 %v3491
        %v3493 = vand.u32 %v208, 4294901760
        %v3494 = vsub.f32 %v208, %v3493
        %v3495 = vand.u32 %v3494, 4294901760
        %v3496 = vsub.f32 %v3494, %v3495
        %v3497 = vand.u32 %v3496, 4294901760
        %3498 = vmatpush.msra.mxu0 %v3497
        %v3499 = vand.u32 %v3444, 4294901760
        %3500 = vmatmul.f32.gmra.mxu0 %v3499
        %v3501 = vpop.f32.mrf.mxu0
        %v3502 = vadd.f32 %v3471, %v3501
        %3503 = vdwg.mxu0
        %3504 = vmatpush.msra.mxu0 0.0
        %3505 = vmatpush.msra.mxu0 0.0
        %3506 = vmatpush.msra.mxu0 0.0
        %3507 = vmatpush.msra.mxu0 0.0
        %3508 = vmatpush.msra.mxu0 0.0
        %3509 = vmatpush.msra.mxu0 0.0
        %3510 = vmatpush.msra.mxu0 0.0
        %3511 = vmatpush.msra.mxu0 0.0
        %3512 = vmatpush.msra.mxu0 0.0
        %3513 = vmatpush.msra.mxu0 0.0
        %3514 = vmatpush.msra.mxu0 0.0
        %3515 = vmatpush.msra.mxu0 0.0
        %3516 = vmatpush.msra.mxu0 0.0
        %3517 = vmatpush.msra.mxu0 0.0
        %v3518 = vand.u32 %v209, 4294901760
        %v3519 = vsub.f32 %v209, %v3518
        %3520 = vmatpush.msra.mxu0 %v3519
        %v3521 = vand.u32 %v208, 4294901760
        %v3522 = vsub.f32 %v208, %v3521
        %3523 = vmatpush.msra.mxu0 %v3522
        %v3524 = vand.u32 %v3444, 4294901760
        %v3525 = vsub.f32 %v3444, %v3524
        %3526 = vmatmul.f32.gmra.mxu0 %v3525
        %v3527 = vpop.f32.mrf.mxu0
        %v3528 = vadd.f32 %v3502, %v3527
        %3529 = vdwg.mxu0
        %3530 = vmatpush.msra.mxu0 0.0
        %3531 = vmatpush.msra.mxu0 0.0
        %3532 = vmatpush.msra.mxu0 0.0
        %3533 = vmatpush.msra.mxu0 0.0
        %3534 = vmatpush.msra.mxu0 0.0
        %3535 = vmatpush.msra.mxu0 0.0
        %3536 = vmatpush.msra.mxu0 0.0
        %3537 = vmatpush.msra.mxu0 0.0
        %3538 = vmatpush.msra.mxu0 0.0
        %3539 = vmatpush.msra.mxu0 0.0
        %3540 = vmatpush.msra.mxu0 0.0
        %3541 = vmatpush.msra.mxu0 0.0
        %3542 = vmatpush.msra.mxu0 0.0
        %3543 = vmatpush.msra.mxu0 0.0
        %v3544 = vand.u32 %v209, 4294901760
        %3545 = vmatpush.msra.mxu0 %v3544
        %v3546 = vand.u32 %v208, 4294901760
        %3547 = vmatpush.msra.mxu0 %v3546
        %v3548 = vand.u32 %v3444, 4294901760
        %v3549 = vsub.f32 %v3444, %v3548
        %v3550 = vand.u32 %v3549, 4294901760
        %3551 = vmatmul.f32.gmra.mxu0 %v3550
        %v3552 = vpop.f32.mrf.mxu0
        %v3553 = vadd.f32 %v3528, %v3552
        %3554 = vdwg.mxu0
        %3555 = vmatpush.msra.mxu0 0.0
        %3556 = vmatpush.msra.mxu0 0.0
        %3557 = vmatpush.msra.mxu0 0.0
        %3558 = vmatpush.msra.mxu0 0.0
        %3559 = vmatpush.msra.mxu0 0.0
        %3560 = vmatpush.msra.mxu0 0.0
        %3561 = vmatpush.msra.mxu0 0.0
        %3562 = vmatpush.msra.mxu0 0.0
        %3563 = vmatpush.msra.mxu0 0.0
        %3564 = vmatpush.msra.mxu0 0.0
        %3565 = vmatpush.msra.mxu0 0.0
        %3566 = vmatpush.msra.mxu0 0.0
        %3567 = vmatpush.msra.mxu0 0.0
        %3568 = vmatpush.msra.mxu0 0.0
        %v3569 = vand.u32 %v209, 4294901760
        %v3570 = vsub.f32 %v209, %v3569
        %v3571 = vand.u32 %v3570, 4294901760
        %3572 = vmatpush.msra.mxu0 %v3571
        %v3573 = vand.u32 %v208, 4294901760
        %v3574 = vsub.f32 %v208, %v3573
        %v3575 = vand.u32 %v3574, 4294901760
        %3576 = vmatpush.msra.mxu0 %v3575
        %v3577 = vand.u32 %v3444, 4294901760
        %3578 = vmatmul.f32.gmra.mxu0 %v3577
        %v3579 = vpop.f32.mrf.mxu0
        %v3580 = vadd.f32 %v3553, %v3579
        %3581 = vdwg.mxu0
        %3582 = vmatpush.msra.mxu0 0.0
        %3583 = vmatpush.msra.mxu0 0.0
        %3584 = vmatpush.msra.mxu0 0.0
        %3585 = vmatpush.msra.mxu0 0.0
        %3586 = vmatpush.msra.mxu0 0.0
        %3587 = vmatpush.msra.mxu0 0.0
        %3588 = vmatpush.msra.mxu0 0.0
        %3589 = vmatpush.msra.mxu0 0.0
        %3590 = vmatpush.msra.mxu0 0.0
        %3591 = vmatpush.msra.mxu0 0.0
        %3592 = vmatpush.msra.mxu0 0.0
        %3593 = vmatpush.msra.mxu0 0.0
        %3594 = vmatpush.msra.mxu0 0.0
        %3595 = vmatpush.msra.mxu0 0.0
        %v3596 = vand.u32 %v209, 4294901760
        %3597 = vmatpush.msra.mxu0 %v3596
        %v3598 = vand.u32 %v208, 4294901760
        %3599 = vmatpush.msra.mxu0 %v3598
        %v3600 = vand.u32 %v3444, 4294901760
        %3601 = vmatmul.f32.gmra.mxu0 %v3600
        %v3602 = vpop.f32.mrf.mxu0
        %v3603 = vadd.f32 %v3580, %v3602
        %3604 = vdwg.mxu0
        %v3606 = vsel %vm485, %v3279, 0
        %3608 = vmatpush.msra.mxu0 0.0
        %3609 = vmatpush.msra.mxu0 0.0
        %3610 = vmatpush.msra.mxu0 0.0
        %3611 = vmatpush.msra.mxu0 0.0
        %3612 = vmatpush.msra.mxu0 0.0
        %3613 = vmatpush.msra.mxu0 0.0
        %3614 = vmatpush.msra.mxu0 0.0
        %3615 = vmatpush.msra.mxu0 0.0
        %3616 = vmatpush.msra.mxu0 0.0
        %3617 = vmatpush.msra.mxu0 0.0
        %3618 = vmatpush.msra.mxu0 0.0
        %3619 = vmatpush.msra.mxu0 0.0
        %3620 = vmatpush.msra.mxu0 0.0
        %3621 = vmatpush.msra.mxu0 0.0
        %v3622 = vand.u32 %v212, 4294901760
        %3623 = vmatpush.msra.mxu0 %v3622
        %v3624 = vand.u32 %v211, 4294901760
        %3625 = vmatpush.msra.mxu0 %v3624
        %v3626 = vand.u32 %v3606, 4294901760
        %v3627 = vsub.f32 %v3606, %v3626
        %v3628 = vand.u32 %v3627, 4294901760
        %v3629 = vsub.f32 %v3627, %v3628
        %v3630 = vand.u32 %v3629, 4294901760
        %3631 = vmatmul.f32.gmra.mxu0 %v3630
        %v3632 = vpop.f32.mrf.mxu0
        %v3633 = vadd.f32 0.0, %v3632
        %3634 = vdwg.mxu0
        %3635 = vmatpush.msra.mxu0 0.0
        %3636 = vmatpush.msra.mxu0 0.0
        %3637 = vmatpush.msra.mxu0 0.0
        %3638 = vmatpush.msra.mxu0 0.0
        %3639 = vmatpush.msra.mxu0 0.0
        %3640 = vmatpush.msra.mxu0 0.0
        %3641 = vmatpush.msra.mxu0 0.0
        %3642 = vmatpush.msra.mxu0 0.0
        %3643 = vmatpush.msra.mxu0 0.0
        %3644 = vmatpush.msra.mxu0 0.0
        %3645 = vmatpush.msra.mxu0 0.0
        %3646 = vmatpush.msra.mxu0 0.0
        %3647 = vmatpush.msra.mxu0 0.0
        %3648 = vmatpush.msra.mxu0 0.0
        %v3649 = vand.u32 %v212, 4294901760
        %v3650 = vsub.f32 %v212, %v3649
        %v3651 = vand.u32 %v3650, 4294901760
        %v3652 = vsub.f32 %v3650, %v3651
        %v3653 = vand.u32 %v3652, 4294901760
        %3654 = vmatpush.msra.mxu0 %v3653
        %v3655 = vand.u32 %v211, 4294901760
        %v3656 = vsub.f32 %v211, %v3655
        %v3657 = vand.u32 %v3656, 4294901760
        %v3658 = vsub.f32 %v3656, %v3657
        %v3659 = vand.u32 %v3658, 4294901760
        %3660 = vmatpush.msra.mxu0 %v3659
        %v3661 = vand.u32 %v3606, 4294901760
        %3662 = vmatmul.f32.gmra.mxu0 %v3661
        %v3663 = vpop.f32.mrf.mxu0
        %v3664 = vadd.f32 %v3633, %v3663
        %3665 = vdwg.mxu0
        %3666 = vmatpush.msra.mxu0 0.0
        %3667 = vmatpush.msra.mxu0 0.0
        %3668 = vmatpush.msra.mxu0 0.0
        %3669 = vmatpush.msra.mxu0 0.0
        %3670 = vmatpush.msra.mxu0 0.0
        %3671 = vmatpush.msra.mxu0 0.0
        %3672 = vmatpush.msra.mxu0 0.0
        %3673 = vmatpush.msra.mxu0 0.0
        %3674 = vmatpush.msra.mxu0 0.0
        %3675 = vmatpush.msra.mxu0 0.0
        %3676 = vmatpush.msra.mxu0 0.0
        %3677 = vmatpush.msra.mxu0 0.0
        %3678 = vmatpush.msra.mxu0 0.0
        %3679 = vmatpush.msra.mxu0 0.0
        %v3680 = vand.u32 %v212, 4294901760
        %v3681 = vsub.f32 %v212, %v3680
        %3682 = vmatpush.msra.mxu0 %v3681
        %v3683 = vand.u32 %v211, 4294901760
        %v3684 = vsub.f32 %v211, %v3683
        %3685 = vmatpush.msra.mxu0 %v3684
        %v3686 = vand.u32 %v3606, 4294901760
        %v3687 = vsub.f32 %v3606, %v3686
        %3688 = vmatmul.f32.gmra.mxu0 %v3687
        %v3689 = vpop.f32.mrf.mxu0
        %v3690 = vadd.f32 %v3664, %v3689
        %3691 = vdwg.mxu0
        %3692 = vmatpush.msra.mxu0 0.0
        %3693 = vmatpush.msra.mxu0 0.0
        %3694 = vmatpush.msra.mxu0 0.0
        %3695 = vmatpush.msra.mxu0 0.0
        %3696 = vmatpush.msra.mxu0 0.0
        %3697 = vmatpush.msra.mxu0 0.0
        %3698 = vmatpush.msra.mxu0 0.0
        %3699 = vmatpush.msra.mxu0 0.0
        %3700 = vmatpush.msra.mxu0 0.0
        %3701 = vmatpush.msra.mxu0 0.0
        %3702 = vmatpush.msra.mxu0 0.0
        %3703 = vmatpush.msra.mxu0 0.0
        %3704 = vmatpush.msra.mxu0 0.0
        %3705 = vmatpush.msra.mxu0 0.0
        %v3706 = vand.u32 %v212, 4294901760
        %3707 = vmatpush.msra.mxu0 %v3706
        %v3708 = vand.u32 %v211, 4294901760
        %3709 = vmatpush.msra.mxu0 %v3708
        %v3710 = vand.u32 %v3606, 4294901760
        %v3711 = vsub.f32 %v3606, %v3710
        %v3712 = vand.u32 %v3711, 4294901760
        %3713 = vmatmul.f32.gmra.mxu0 %v3712
        %v3714 = vpop.f32.mrf.mxu0
        %v3715 = vadd.f32 %v3690, %v3714
        %3716 = vdwg.mxu0
        %3717 = vmatpush.msra.mxu0 0.0
        %3718 = vmatpush.msra.mxu0 0.0
        %3719 = vmatpush.msra.mxu0 0.0
        %3720 = vmatpush.msra.mxu0 0.0
        %3721 = vmatpush.msra.mxu0 0.0
        %3722 = vmatpush.msra.mxu0 0.0
        %3723 = vmatpush.msra.mxu0 0.0
        %3724 = vmatpush.msra.mxu0 0.0
        %3725 = vmatpush.msra.mxu0 0.0
        %3726 = vmatpush.msra.mxu0 0.0
        %3727 = vmatpush.msra.mxu0 0.0
        %3728 = vmatpush.msra.mxu0 0.0
        %3729 = vmatpush.msra.mxu0 0.0
        %3730 = vmatpush.msra.mxu0 0.0
        %v3731 = vand.u32 %v212, 4294901760
        %v3732 = vsub.f32 %v212, %v3731
        %v3733 = vand.u32 %v3732, 4294901760
        %3734 = vmatpush.msra.mxu0 %v3733
        %v3735 = vand.u32 %v211, 4294901760
        %v3736 = vsub.f32 %v211, %v3735
        %v3737 = vand.u32 %v3736, 4294901760
        %3738 = vmatpush.msra.mxu0 %v3737
        %v3739 = vand.u32 %v3606, 4294901760
        %3740 = vmatmul.f32.gmra.mxu0 %v3739
        %v3741 = vpop.f32.mrf.mxu0
        %v3742 = vadd.f32 %v3715, %v3741
        %3743 = vdwg.mxu0
        %3744 = vmatpush.msra.mxu0 0.0
        %3745 = vmatpush.msra.mxu0 0.0
        %3746 = vmatpush.msra.mxu0 0.0
        %3747 = vmatpush.msra.mxu0 0.0
        %3748 = vmatpush.msra.mxu0 0.0
        %3749 = vmatpush.msra.mxu0 0.0
        %3750 = vmatpush.msra.mxu0 0.0
        %3751 = vmatpush.msra.mxu0 0.0
        %3752 = vmatpush.msra.mxu0 0.0
        %3753 = vmatpush.msra.mxu0 0.0
        %3754 = vmatpush.msra.mxu0 0.0
        %3755 = vmatpush.msra.mxu0 0.0
        %3756 = vmatpush.msra.mxu0 0.0
        %3757 = vmatpush.msra.mxu0 0.0
        %v3758 = vand.u32 %v212, 4294901760
        %3759 = vmatpush.msra.mxu0 %v3758
        %v3760 = vand.u32 %v211, 4294901760
        %3761 = vmatpush.msra.mxu0 %v3760
        %v3762 = vand.u32 %v3606, 4294901760
        %3763 = vmatmul.f32.gmra.mxu0 %v3762
        %v3764 = vpop.f32.mrf.mxu0
        %v3765 = vadd.f32 %v3742, %v3764
        %3766 = vdwg.mxu0
        %v3768 = vsel %vm485, %v3275, 0
        %3770 = vmatpush.msra.mxu0 0.0
        %3771 = vmatpush.msra.mxu0 0.0
        %3772 = vmatpush.msra.mxu0 0.0
        %3773 = vmatpush.msra.mxu0 0.0
        %3774 = vmatpush.msra.mxu0 0.0
        %3775 = vmatpush.msra.mxu0 0.0
        %3776 = vmatpush.msra.mxu0 0.0
        %3777 = vmatpush.msra.mxu0 0.0
        %3778 = vmatpush.msra.mxu0 0.0
        %3779 = vmatpush.msra.mxu0 0.0
        %3780 = vmatpush.msra.mxu0 0.0
        %3781 = vmatpush.msra.mxu0 0.0
        %3782 = vmatpush.msra.mxu0 0.0
        %3783 = vmatpush.msra.mxu0 0.0
        %v3784 = vand.u32 %v209, 4294901760
        %3785 = vmatpush.msra.mxu0 %v3784
        %v3786 = vand.u32 %v208, 4294901760
        %3787 = vmatpush.msra.mxu0 %v3786
        %v3788 = vand.u32 %v3768, 4294901760
        %v3789 = vsub.f32 %v3768, %v3788
        %v3790 = vand.u32 %v3789, 4294901760
        %v3791 = vsub.f32 %v3789, %v3790
        %v3792 = vand.u32 %v3791, 4294901760
        %3793 = vmatmul.f32.gmra.mxu0 %v3792
        %v3794 = vpop.f32.mrf.mxu0
        %v3795 = vadd.f32 %v3765, %v3794
        %3796 = vdwg.mxu0
        %3797 = vmatpush.msra.mxu0 0.0
        %3798 = vmatpush.msra.mxu0 0.0
        %3799 = vmatpush.msra.mxu0 0.0
        %3800 = vmatpush.msra.mxu0 0.0
        %3801 = vmatpush.msra.mxu0 0.0
        %3802 = vmatpush.msra.mxu0 0.0
        %3803 = vmatpush.msra.mxu0 0.0
        %3804 = vmatpush.msra.mxu0 0.0
        %3805 = vmatpush.msra.mxu0 0.0
        %3806 = vmatpush.msra.mxu0 0.0
        %3807 = vmatpush.msra.mxu0 0.0
        %3808 = vmatpush.msra.mxu0 0.0
        %3809 = vmatpush.msra.mxu0 0.0
        %3810 = vmatpush.msra.mxu0 0.0
        %v3811 = vand.u32 %v209, 4294901760
        %v3812 = vsub.f32 %v209, %v3811
        %v3813 = vand.u32 %v3812, 4294901760
        %v3814 = vsub.f32 %v3812, %v3813
        %v3815 = vand.u32 %v3814, 4294901760
        %3816 = vmatpush.msra.mxu0 %v3815
        %v3817 = vand.u32 %v208, 4294901760
        %v3818 = vsub.f32 %v208, %v3817
        %v3819 = vand.u32 %v3818, 4294901760
        %v3820 = vsub.f32 %v3818, %v3819
        %v3821 = vand.u32 %v3820, 4294901760
        %3822 = vmatpush.msra.mxu0 %v3821
        %v3823 = vand.u32 %v3768, 4294901760
        %3824 = vmatmul.f32.gmra.mxu0 %v3823
        %v3825 = vpop.f32.mrf.mxu0
        %v3826 = vadd.f32 %v3795, %v3825
        %3827 = vdwg.mxu0
        %3828 = vmatpush.msra.mxu0 0.0
        %3829 = vmatpush.msra.mxu0 0.0
        %3830 = vmatpush.msra.mxu0 0.0
        %3831 = vmatpush.msra.mxu0 0.0
        %3832 = vmatpush.msra.mxu0 0.0
        %3833 = vmatpush.msra.mxu0 0.0
        %3834 = vmatpush.msra.mxu0 0.0
        %3835 = vmatpush.msra.mxu0 0.0
        %3836 = vmatpush.msra.mxu0 0.0
        %3837 = vmatpush.msra.mxu0 0.0
        %3838 = vmatpush.msra.mxu0 0.0
        %3839 = vmatpush.msra.mxu0 0.0
        %3840 = vmatpush.msra.mxu0 0.0
        %3841 = vmatpush.msra.mxu0 0.0
        %v3842 = vand.u32 %v209, 4294901760
        %v3843 = vsub.f32 %v209, %v3842
        %3844 = vmatpush.msra.mxu0 %v3843
        %v3845 = vand.u32 %v208, 4294901760
        %v3846 = vsub.f32 %v208, %v3845
        %3847 = vmatpush.msra.mxu0 %v3846
        %v3848 = vand.u32 %v3768, 4294901760
        %v3849 = vsub.f32 %v3768, %v3848
        %3850 = vmatmul.f32.gmra.mxu0 %v3849
        %v3851 = vpop.f32.mrf.mxu0
        %v3852 = vadd.f32 %v3826, %v3851
        %3853 = vdwg.mxu0
        %3854 = vmatpush.msra.mxu0 0.0
        %3855 = vmatpush.msra.mxu0 0.0
        %3856 = vmatpush.msra.mxu0 0.0
        %3857 = vmatpush.msra.mxu0 0.0
        %3858 = vmatpush.msra.mxu0 0.0
        %3859 = vmatpush.msra.mxu0 0.0
        %3860 = vmatpush.msra.mxu0 0.0
        %3861 = vmatpush.msra.mxu0 0.0
        %3862 = vmatpush.msra.mxu0 0.0
        %3863 = vmatpush.msra.mxu0 0.0
        %3864 = vmatpush.msra.mxu0 0.0
        %3865 = vmatpush.msra.mxu0 0.0
        %3866 = vmatpush.msra.mxu0 0.0
        %3867 = vmatpush.msra.mxu0 0.0
        %v3868 = vand.u32 %v209, 4294901760
        %3869 = vmatpush.msra.mxu0 %v3868
        %v3870 = vand.u32 %v208, 4294901760
        %3871 = vmatpush.msra.mxu0 %v3870
        %v3872 = vand.u32 %v3768, 4294901760
        %v3873 = vsub.f32 %v3768, %v3872
        %v3874 = vand.u32 %v3873, 4294901760
        %3875 = vmatmul.f32.gmra.mxu0 %v3874
        %v3876 = vpop.f32.mrf.mxu0
        %v3877 = vadd.f32 %v3852, %v3876
        %3878 = vdwg.mxu0
        %3879 = vmatpush.msra.mxu0 0.0
        %3880 = vmatpush.msra.mxu0 0.0
        %3881 = vmatpush.msra.mxu0 0.0
        %3882 = vmatpush.msra.mxu0 0.0
        %3883 = vmatpush.msra.mxu0 0.0
        %3884 = vmatpush.msra.mxu0 0.0
        %3885 = vmatpush.msra.mxu0 0.0
        %3886 = vmatpush.msra.mxu0 0.0
        %3887 = vmatpush.msra.mxu0 0.0
        %3888 = vmatpush.msra.mxu0 0.0
        %3889 = vmatpush.msra.mxu0 0.0
        %3890 = vmatpush.msra.mxu0 0.0
        %3891 = vmatpush.msra.mxu0 0.0
        %3892 = vmatpush.msra.mxu0 0.0
        %v3893 = vand.u32 %v209, 4294901760
        %v3894 = vsub.f32 %v209, %v3893
        %v3895 = vand.u32 %v3894, 4294901760
        %3896 = vmatpush.msra.mxu0 %v3895
        %v3897 = vand.u32 %v208, 4294901760
        %v3898 = vsub.f32 %v208, %v3897
        %v3899 = vand.u32 %v3898, 4294901760
        %3900 = vmatpush.msra.mxu0 %v3899
        %v3901 = vand.u32 %v3768, 4294901760
        %3902 = vmatmul.f32.gmra.mxu0 %v3901
        %v3903 = vpop.f32.mrf.mxu0
        %v3904 = vadd.f32 %v3877, %v3903
        %3905 = vdwg.mxu0
        %3906 = vmatpush.msra.mxu0 0.0
        %3907 = vmatpush.msra.mxu0 0.0
        %3908 = vmatpush.msra.mxu0 0.0
        %3909 = vmatpush.msra.mxu0 0.0
        %3910 = vmatpush.msra.mxu0 0.0
        %3911 = vmatpush.msra.mxu0 0.0
        %3912 = vmatpush.msra.mxu0 0.0
        %3913 = vmatpush.msra.mxu0 0.0
        %3914 = vmatpush.msra.mxu0 0.0
        %3915 = vmatpush.msra.mxu0 0.0
        %3916 = vmatpush.msra.mxu0 0.0
        %3917 = vmatpush.msra.mxu0 0.0
        %3918 = vmatpush.msra.mxu0 0.0
        %3919 = vmatpush.msra.mxu0 0.0
        %v3920 = vand.u32 %v209, 4294901760
        %3921 = vmatpush.msra.mxu0 %v3920
        %v3922 = vand.u32 %v208, 4294901760
        %3923 = vmatpush.msra.mxu0 %v3922
        %v3924 = vand.u32 %v3768, 4294901760
        %3925 = vmatmul.f32.gmra.mxu0 %v3924
        %v3926 = vpop.f32.mrf.mxu0
        %v3927 = vadd.f32 %v3904, %v3926
        %3928 = vdwg.mxu0
        %3930 = vrot.lane.b32.xlu0 %v3927, 32
        %v3931 = vpop.permute.xlu0 %3930
        %v3933 = vsel %vm1138, %v3603, %v3931
        %v3935 = vrot.slane %v3933, 1
        %v3936 = vrot.slane %v3933, 2
        %v3937 = vrot.slane %v3933, 3
        %v3938 = vrot.slane %v3933, 4
        %v3939 = vrot.slane %v3933, 5
        %v3940 = vrot.slane %v3933, 6
        %v3941 = vrot.slane %v3933, 7
        %3949 = vst.msk [vmem:[%s203 + $0x3] sm:$0x1] %vm1155, %v3933
        %3950 = vst.msk [vmem:[%s203 + $0xb] sm:$0x1] %vm1155, %v3935
        %3951 = vst.msk [vmem:[%s203 + $0x13] sm:$0x1] %vm1155, %v3936
        %3952 = vst.msk [vmem:[%s203 + $0x1b] sm:$0x1] %vm1155, %v3937
        %3953 = vst.msk [vmem:[%s203 + $0x23] sm:$0x1] %vm1155, %v3938
        %3954 = vst.msk [vmem:[%s203 + $0x2b] sm:$0x1] %vm1155, %v3939
        %3955 = vst.msk [vmem:[%s203 + $0x33] sm:$0x1] %vm1155, %v3940
        %3956 = vst.msk [vmem:[%s203 + $0x3b] sm:$0x1] %vm1155, %v3941
        %v3957 = vld [vmem:[%s181 + $0x4] sm:$0x1]
        %v3958 = vld [vmem:[%s181 + $0xc] sm:$0x1]
        %v3959 = vld [vmem:[%s181 + $0x14] sm:$0x1]
        %v3960 = vld [vmem:[%s181 + $0x1c] sm:$0x1]
        %v3965 = vrot.slane %v3958, 7
        %v3966 = vsel %vm222, %v3965, %v3957
        %v3967 = vrot.slane %v3959, 6
        %v3968 = vsel %vm225, %v3967, %v3966
        %v3969 = vrot.slane %v3960, 5
        %v3970 = vsel %vm228, %v3969, %v3968
        %v3971 = vsel %vm243, %v3970, 0
        %3973 = vmatpush.msra.mxu0 0.0
        %3974 = vmatpush.msra.mxu0 0.0
        %3975 = vmatpush.msra.mxu0 0.0
        %3976 = vmatpush.msra.mxu0 0.0
        %3977 = vmatpush.msra.mxu0 0.0
        %3978 = vmatpush.msra.mxu0 0.0
        %3979 = vmatpush.msra.mxu0 0.0
        %3980 = vmatpush.msra.mxu0 0.0
        %3981 = vmatpush.msra.mxu0 0.0
        %3982 = vmatpush.msra.mxu0 0.0
        %3983 = vmatpush.msra.mxu0 0.0
        %3984 = vmatpush.msra.mxu0 0.0
        %3985 = vmatpush.msra.mxu0 0.0
        %3986 = vmatpush.msra.mxu0 0.0
        %3987 = vmatpush.msra.mxu0 0.0
        %v3988 = vand.u32 %v3971, 4294901760
        %3989 = vmatpush.msra.mxu0 %v3988
        %v3990 = vand.u32 %v232, 4294901760
        %v3991 = vsub.f32 %v232, %v3990
        %v3992 = vand.u32 %v3991, 4294901760
        %v3993 = vsub.f32 %v3991, %v3992
        %v3994 = vand.u32 %v3993, 4294901760
        %3995 = vmatmul.f32.gmra.mxu0 %v3994
        %v3996 = vpop.f32.mrf.mxu0
        %v3997 = vadd.f32 0.0, %v3996
        %v3998 = vand.u32 %v235, 4294901760
        %v3999 = vsub.f32 %v235, %v3998
        %v4000 = vand.u32 %v3999, 4294901760
        %v4001 = vsub.f32 %v3999, %v4000
        %v4002 = vand.u32 %v4001, 4294901760
        %4003 = vmatmul.f32.gmra.mxu0 %v4002
        %v4004 = vpop.f32.mrf.mxu0
        %v4005 = vadd.f32 0.0, %v4004
        %v4006 = vand.u32 %v238, 4294901760
        %v4007 = vsub.f32 %v238, %v4006
        %v4008 = vand.u32 %v4007, 4294901760
        %v4009 = vsub.f32 %v4007, %v4008
        %v4010 = vand.u32 %v4009, 4294901760
        %4011 = vmatmul.f32.gmra.mxu0 %v4010
        %v4012 = vpop.f32.mrf.mxu0
        %v4013 = vadd.f32 0.0, %v4012
        %v4014 = vand.u32 %v241, 4294901760
        %v4015 = vsub.f32 %v241, %v4014
        %v4016 = vand.u32 %v4015, 4294901760
        %v4017 = vsub.f32 %v4015, %v4016
        %v4018 = vand.u32 %v4017, 4294901760
        %4019 = vmatmul.f32.gmra.mxu0 %v4018
        %v4020 = vpop.f32.mrf.mxu0
        %v4021 = vadd.f32 0.0, %v4020
        %4022 = vdwg.mxu0
        %4023 = vmatpush.msra.mxu0 0.0
        %4024 = vmatpush.msra.mxu0 0.0
        %4025 = vmatpush.msra.mxu0 0.0
        %4026 = vmatpush.msra.mxu0 0.0
        %4027 = vmatpush.msra.mxu0 0.0
        %4028 = vmatpush.msra.mxu0 0.0
        %4029 = vmatpush.msra.mxu0 0.0
        %4030 = vmatpush.msra.mxu0 0.0
        %4031 = vmatpush.msra.mxu0 0.0
        %4032 = vmatpush.msra.mxu0 0.0
        %4033 = vmatpush.msra.mxu0 0.0
        %4034 = vmatpush.msra.mxu0 0.0
        %4035 = vmatpush.msra.mxu0 0.0
        %4036 = vmatpush.msra.mxu0 0.0
        %4037 = vmatpush.msra.mxu0 0.0
        %v4038 = vand.u32 %v3971, 4294901760
        %v4039 = vsub.f32 %v3971, %v4038
        %v4040 = vand.u32 %v4039, 4294901760
        %v4041 = vsub.f32 %v4039, %v4040
        %v4042 = vand.u32 %v4041, 4294901760
        %4043 = vmatpush.msra.mxu0 %v4042
        %v4044 = vand.u32 %v232, 4294901760
        %4045 = vmatmul.f32.gmra.mxu0 %v4044
        %v4046 = vpop.f32.mrf.mxu0
        %v4047 = vadd.f32 %v3997, %v4046
        %v4048 = vand.u32 %v235, 4294901760
        %4049 = vmatmul.f32.gmra.mxu0 %v4048
        %v4050 = vpop.f32.mrf.mxu0
        %v4051 = vadd.f32 %v4005, %v4050
        %v4052 = vand.u32 %v238, 4294901760
        %4053 = vmatmul.f32.gmra.mxu0 %v4052
        %v4054 = vpop.f32.mrf.mxu0
        %v4055 = vadd.f32 %v4013, %v4054
        %v4056 = vand.u32 %v241, 4294901760
        %4057 = vmatmul.f32.gmra.mxu0 %v4056
        %v4058 = vpop.f32.mrf.mxu0
        %v4059 = vadd.f32 %v4021, %v4058
        %4060 = vdwg.mxu0
        %4061 = vmatpush.msra.mxu0 0.0
        %4062 = vmatpush.msra.mxu0 0.0
        %4063 = vmatpush.msra.mxu0 0.0
        %4064 = vmatpush.msra.mxu0 0.0
        %4065 = vmatpush.msra.mxu0 0.0
        %4066 = vmatpush.msra.mxu0 0.0
        %4067 = vmatpush.msra.mxu0 0.0
        %4068 = vmatpush.msra.mxu0 0.0
        %4069 = vmatpush.msra.mxu0 0.0
        %4070 = vmatpush.msra.mxu0 0.0
        %4071 = vmatpush.msra.mxu0 0.0
        %4072 = vmatpush.msra.mxu0 0.0
        %4073 = vmatpush.msra.mxu0 0.0
        %4074 = vmatpush.msra.mxu0 0.0
        %4075 = vmatpush.msra.mxu0 0.0
        %v4076 = vand.u32 %v3971, 4294901760
        %v4077 = vsub.f32 %v3971, %v4076
        %4078 = vmatpush.msra.mxu0 %v4077
        %v4079 = vand.u32 %v232, 4294901760
        %v4080 = vsub.f32 %v232, %v4079
        %4081 = vmatmul.f32.gmra.mxu0 %v4080
        %v4082 = vpop.f32.mrf.mxu0
        %v4083 = vadd.f32 %v4047, %v4082
        %v4084 = vand.u32 %v235, 4294901760
        %v4085 = vsub.f32 %v235, %v4084
        %4086 = vmatmul.f32.gmra.mxu0 %v4085
        %v4087 = vpop.f32.mrf.mxu0
        %v4088 = vadd.f32 %v4051, %v4087
        %v4089 = vand.u32 %v238, 4294901760
        %v4090 = vsub.f32 %v238, %v4089
        %4091 = vmatmul.f32.gmra.mxu0 %v4090
        %v4092 = vpop.f32.mrf.mxu0
        %v4093 = vadd.f32 %v4055, %v4092
        %v4094 = vand.u32 %v241, 4294901760
        %v4095 = vsub.f32 %v241, %v4094
        %4096 = vmatmul.f32.gmra.mxu0 %v4095
        %v4097 = vpop.f32.mrf.mxu0
        %v4098 = vadd.f32 %v4059, %v4097
        %4099 = vdwg.mxu0
        %4100 = vmatpush.msra.mxu0 0.0
        %4101 = vmatpush.msra.mxu0 0.0
        %4102 = vmatpush.msra.mxu0 0.0
        %4103 = vmatpush.msra.mxu0 0.0
        %4104 = vmatpush.msra.mxu0 0.0
        %4105 = vmatpush.msra.mxu0 0.0
        %4106 = vmatpush.msra.mxu0 0.0
        %4107 = vmatpush.msra.mxu0 0.0
        %4108 = vmatpush.msra.mxu0 0.0
        %4109 = vmatpush.msra.mxu0 0.0
        %4110 = vmatpush.msra.mxu0 0.0
        %4111 = vmatpush.msra.mxu0 0.0
        %4112 = vmatpush.msra.mxu0 0.0
        %4113 = vmatpush.msra.mxu0 0.0
        %4114 = vmatpush.msra.mxu0 0.0
        %v4115 = vand.u32 %v3971, 4294901760
        %4116 = vmatpush.msra.mxu0 %v4115
        %v4117 = vand.u32 %v232, 4294901760
        %v4118 = vsub.f32 %v232, %v4117
        %v4119 = vand.u32 %v4118, 4294901760
        %4120 = vmatmul.f32.gmra.mxu0 %v4119
        %v4121 = vpop.f32.mrf.mxu0
        %v4122 = vadd.f32 %v4083, %v4121
        %v4123 = vand.u32 %v235, 4294901760
        %v4124 = vsub.f32 %v235, %v4123
        %v4125 = vand.u32 %v4124, 4294901760
        %4126 = vmatmul.f32.gmra.mxu0 %v4125
        %v4127 = vpop.f32.mrf.mxu0
        %v4128 = vadd.f32 %v4088, %v4127
        %v4129 = vand.u32 %v238, 4294901760
        %v4130 = vsub.f32 %v238, %v4129
        %v4131 = vand.u32 %v4130, 4294901760
        %4132 = vmatmul.f32.gmra.mxu0 %v4131
        %v4133 = vpop.f32.mrf.mxu0
        %v4134 = vadd.f32 %v4093, %v4133
        %v4135 = vand.u32 %v241, 4294901760
        %v4136 = vsub.f32 %v241, %v4135
        %v4137 = vand.u32 %v4136, 4294901760
        %4138 = vmatmul.f32.gmra.mxu0 %v4137
        %v4139 = vpop.f32.mrf.mxu0
        %v4140 = vadd.f32 %v4098, %v4139
        %4141 = vdwg.mxu0
        %4142 = vmatpush.msra.mxu0 0.0
        %4143 = vmatpush.msra.mxu0 0.0
        %4144 = vmatpush.msra.mxu0 0.0
        %4145 = vmatpush.msra.mxu0 0.0
        %4146 = vmatpush.msra.mxu0 0.0
        %4147 = vmatpush.msra.mxu0 0.0
        %4148 = vmatpush.msra.mxu0 0.0
        %4149 = vmatpush.msra.mxu0 0.0
        %4150 = vmatpush.msra.mxu0 0.0
        %4151 = vmatpush.msra.mxu0 0.0
        %4152 = vmatpush.msra.mxu0 0.0
        %4153 = vmatpush.msra.mxu0 0.0
        %4154 = vmatpush.msra.mxu0 0.0
        %4155 = vmatpush.msra.mxu0 0.0
        %4156 = vmatpush.msra.mxu0 0.0
        %v4157 = vand.u32 %v3971, 4294901760
        %v4158 = vsub.f32 %v3971, %v4157
        %v4159 = vand.u32 %v4158, 4294901760
        %4160 = vmatpush.msra.mxu0 %v4159
        %v4161 = vand.u32 %v232, 4294901760
        %4162 = vmatmul.f32.gmra.mxu0 %v4161
        %v4163 = vpop.f32.mrf.mxu0
        %v4164 = vadd.f32 %v4122, %v4163
        %v4165 = vand.u32 %v235, 4294901760
        %4166 = vmatmul.f32.gmra.mxu0 %v4165
        %v4167 = vpop.f32.mrf.mxu0
        %v4168 = vadd.f32 %v4128, %v4167
        %v4169 = vand.u32 %v238, 4294901760
        %4170 = vmatmul.f32.gmra.mxu0 %v4169
        %v4171 = vpop.f32.mrf.mxu0
        %v4172 = vadd.f32 %v4134, %v4171
        %v4173 = vand.u32 %v241, 4294901760
        %4174 = vmatmul.f32.gmra.mxu0 %v4173
        %v4175 = vpop.f32.mrf.mxu0
        %v4176 = vadd.f32 %v4140, %v4175
        %4177 = vdwg.mxu0
        %4178 = vmatpush.msra.mxu0 0.0
        %4179 = vmatpush.msra.mxu0 0.0
        %4180 = vmatpush.msra.mxu0 0.0
        %4181 = vmatpush.msra.mxu0 0.0
        %4182 = vmatpush.msra.mxu0 0.0
        %4183 = vmatpush.msra.mxu0 0.0
        %4184 = vmatpush.msra.mxu0 0.0
        %4185 = vmatpush.msra.mxu0 0.0
        %4186 = vmatpush.msra.mxu0 0.0
        %4187 = vmatpush.msra.mxu0 0.0
        %4188 = vmatpush.msra.mxu0 0.0
        %4189 = vmatpush.msra.mxu0 0.0
        %4190 = vmatpush.msra.mxu0 0.0
        %4191 = vmatpush.msra.mxu0 0.0
        %4192 = vmatpush.msra.mxu0 0.0
        %v4193 = vand.u32 %v3971, 4294901760
        %4194 = vmatpush.msra.mxu0 %v4193
        %v4195 = vand.u32 %v232, 4294901760
        %4196 = vmatmul.f32.gmra.mxu0 %v4195
        %v4197 = vpop.f32.mrf.mxu0
        %v4198 = vadd.f32 %v4164, %v4197
        %v4199 = vand.u32 %v235, 4294901760
        %4200 = vmatmul.f32.gmra.mxu0 %v4199
        %v4201 = vpop.f32.mrf.mxu0
        %v4202 = vadd.f32 %v4168, %v4201
        %v4203 = vand.u32 %v238, 4294901760
        %4204 = vmatmul.f32.gmra.mxu0 %v4203
        %v4205 = vpop.f32.mrf.mxu0
        %v4206 = vadd.f32 %v4172, %v4205
        %v4207 = vand.u32 %v241, 4294901760
        %4208 = vmatmul.f32.gmra.mxu0 %v4207
        %v4209 = vpop.f32.mrf.mxu0
        %v4210 = vadd.f32 %v4176, %v4209
        %4211 = vdwg.mxu0
        %v4213 = vsel %vm485, %v4202, 0
        %4215 = vmatpush.msra.mxu0 0.0
        %4216 = vmatpush.msra.mxu0 0.0
        %4217 = vmatpush.msra.mxu0 0.0
        %4218 = vmatpush.msra.mxu0 0.0
        %4219 = vmatpush.msra.mxu0 0.0
        %4220 = vmatpush.msra.mxu0 0.0
        %4221 = vmatpush.msra.mxu0 0.0
        %4222 = vmatpush.msra.mxu0 0.0
        %4223 = vmatpush.msra.mxu0 0.0
        %4224 = vmatpush.msra.mxu0 0.0
        %4225 = vmatpush.msra.mxu0 0.0
        %4226 = vmatpush.msra.mxu0 0.0
        %4227 = vmatpush.msra.mxu0 0.0
        %4228 = vmatpush.msra.mxu0 0.0
        %v4229 = vand.u32 %v212, 4294901760
        %4230 = vmatpush.msra.mxu0 %v4229
        %v4231 = vand.u32 %v211, 4294901760
        %4232 = vmatpush.msra.mxu0 %v4231
        %v4233 = vand.u32 %v4213, 4294901760
        %v4234 = vsub.f32 %v4213, %v4233
        %v4235 = vand.u32 %v4234, 4294901760
        %v4236 = vsub.f32 %v4234, %v4235
        %v4237 = vand.u32 %v4236, 4294901760
        %4238 = vmatmul.f32.gmra.mxu0 %v4237
        %v4239 = vpop.f32.mrf.mxu0
        %v4240 = vadd.f32 0.0, %v4239
        %4241 = vdwg.mxu0
        %4242 = vmatpush.msra.mxu0 0.0
        %4243 = vmatpush.msra.mxu0 0.0
        %4244 = vmatpush.msra.mxu0 0.0
        %4245 = vmatpush.msra.mxu0 0.0
        %4246 = vmatpush.msra.mxu0 0.0
        %4247 = vmatpush.msra.mxu0 0.0
        %4248 = vmatpush.msra.mxu0 0.0
        %4249 = vmatpush.msra.mxu0 0.0
        %4250 = vmatpush.msra.mxu0 0.0
        %4251 = vmatpush.msra.mxu0 0.0
        %4252 = vmatpush.msra.mxu0 0.0
        %4253 = vmatpush.msra.mxu0 0.0
        %4254 = vmatpush.msra.mxu0 0.0
        %4255 = vmatpush.msra.mxu0 0.0
        %v4256 = vand.u32 %v212, 4294901760
        %v4257 = vsub.f32 %v212, %v4256
        %v4258 = vand.u32 %v4257, 4294901760
        %v4259 = vsub.f32 %v4257, %v4258
        %v4260 = vand.u32 %v4259, 4294901760
        %4261 = vmatpush.msra.mxu0 %v4260
        %v4262 = vand.u32 %v211, 4294901760
        %v4263 = vsub.f32 %v211, %v4262
        %v4264 = vand.u32 %v4263, 4294901760
        %v4265 = vsub.f32 %v4263, %v4264
        %v4266 = vand.u32 %v4265, 4294901760
        %4267 = vmatpush.msra.mxu0 %v4266
        %v4268 = vand.u32 %v4213, 4294901760
        %4269 = vmatmul.f32.gmra.mxu0 %v4268
        %v4270 = vpop.f32.mrf.mxu0
        %v4271 = vadd.f32 %v4240, %v4270
        %4272 = vdwg.mxu0
        %4273 = vmatpush.msra.mxu0 0.0
        %4274 = vmatpush.msra.mxu0 0.0
        %4275 = vmatpush.msra.mxu0 0.0
        %4276 = vmatpush.msra.mxu0 0.0
        %4277 = vmatpush.msra.mxu0 0.0
        %4278 = vmatpush.msra.mxu0 0.0
        %4279 = vmatpush.msra.mxu0 0.0
        %4280 = vmatpush.msra.mxu0 0.0
        %4281 = vmatpush.msra.mxu0 0.0
        %4282 = vmatpush.msra.mxu0 0.0
        %4283 = vmatpush.msra.mxu0 0.0
        %4284 = vmatpush.msra.mxu0 0.0
        %4285 = vmatpush.msra.mxu0 0.0
        %4286 = vmatpush.msra.mxu0 0.0
        %v4287 = vand.u32 %v212, 4294901760
        %v4288 = vsub.f32 %v212, %v4287
        %4289 = vmatpush.msra.mxu0 %v4288
        %v4290 = vand.u32 %v211, 4294901760
        %v4291 = vsub.f32 %v211, %v4290
        %4292 = vmatpush.msra.mxu0 %v4291
        %v4293 = vand.u32 %v4213, 4294901760
        %v4294 = vsub.f32 %v4213, %v4293
        %4295 = vmatmul.f32.gmra.mxu0 %v4294
        %v4296 = vpop.f32.mrf.mxu0
        %v4297 = vadd.f32 %v4271, %v4296
        %4298 = vdwg.mxu0
        %4299 = vmatpush.msra.mxu0 0.0
        %4300 = vmatpush.msra.mxu0 0.0
        %4301 = vmatpush.msra.mxu0 0.0
        %4302 = vmatpush.msra.mxu0 0.0
        %4303 = vmatpush.msra.mxu0 0.0
        %4304 = vmatpush.msra.mxu0 0.0
        %4305 = vmatpush.msra.mxu0 0.0
        %4306 = vmatpush.msra.mxu0 0.0
        %4307 = vmatpush.msra.mxu0 0.0
        %4308 = vmatpush.msra.mxu0 0.0
        %4309 = vmatpush.msra.mxu0 0.0
        %4310 = vmatpush.msra.mxu0 0.0
        %4311 = vmatpush.msra.mxu0 0.0
        %4312 = vmatpush.msra.mxu0 0.0
        %v4313 = vand.u32 %v212, 4294901760
        %4314 = vmatpush.msra.mxu0 %v4313
        %v4315 = vand.u32 %v211, 4294901760
        %4316 = vmatpush.msra.mxu0 %v4315
        %v4317 = vand.u32 %v4213, 4294901760
        %v4318 = vsub.f32 %v4213, %v4317
        %v4319 = vand.u32 %v4318, 4294901760
        %4320 = vmatmul.f32.gmra.mxu0 %v4319
        %v4321 = vpop.f32.mrf.mxu0
        %v4322 = vadd.f32 %v4297, %v4321
        %4323 = vdwg.mxu0
        %4324 = vmatpush.msra.mxu0 0.0
        %4325 = vmatpush.msra.mxu0 0.0
        %4326 = vmatpush.msra.mxu0 0.0
        %4327 = vmatpush.msra.mxu0 0.0
        %4328 = vmatpush.msra.mxu0 0.0
        %4329 = vmatpush.msra.mxu0 0.0
        %4330 = vmatpush.msra.mxu0 0.0
        %4331 = vmatpush.msra.mxu0 0.0
        %4332 = vmatpush.msra.mxu0 0.0
        %4333 = vmatpush.msra.mxu0 0.0
        %4334 = vmatpush.msra.mxu0 0.0
        %4335 = vmatpush.msra.mxu0 0.0
        %4336 = vmatpush.msra.mxu0 0.0
        %4337 = vmatpush.msra.mxu0 0.0
        %v4338 = vand.u32 %v212, 4294901760
        %v4339 = vsub.f32 %v212, %v4338
        %v4340 = vand.u32 %v4339, 4294901760
        %4341 = vmatpush.msra.mxu0 %v4340
        %v4342 = vand.u32 %v211, 4294901760
        %v4343 = vsub.f32 %v211, %v4342
        %v4344 = vand.u32 %v4343, 4294901760
        %4345 = vmatpush.msra.mxu0 %v4344
        %v4346 = vand.u32 %v4213, 4294901760
        %4347 = vmatmul.f32.gmra.mxu0 %v4346
        %v4348 = vpop.f32.mrf.mxu0
        %v4349 = vadd.f32 %v4322, %v4348
        %4350 = vdwg.mxu0
        %4351 = vmatpush.msra.mxu0 0.0
        %4352 = vmatpush.msra.mxu0 0.0
        %4353 = vmatpush.msra.mxu0 0.0
        %4354 = vmatpush.msra.mxu0 0.0
        %4355 = vmatpush.msra.mxu0 0.0
        %4356 = vmatpush.msra.mxu0 0.0
        %4357 = vmatpush.msra.mxu0 0.0
        %4358 = vmatpush.msra.mxu0 0.0
        %4359 = vmatpush.msra.mxu0 0.0
        %4360 = vmatpush.msra.mxu0 0.0
        %4361 = vmatpush.msra.mxu0 0.0
        %4362 = vmatpush.msra.mxu0 0.0
        %4363 = vmatpush.msra.mxu0 0.0
        %4364 = vmatpush.msra.mxu0 0.0
        %v4365 = vand.u32 %v212, 4294901760
        %4366 = vmatpush.msra.mxu0 %v4365
        %v4367 = vand.u32 %v211, 4294901760
        %4368 = vmatpush.msra.mxu0 %v4367
        %v4369 = vand.u32 %v4213, 4294901760
        %4370 = vmatmul.f32.gmra.mxu0 %v4369
        %v4371 = vpop.f32.mrf.mxu0
        %v4372 = vadd.f32 %v4349, %v4371
        %4373 = vdwg.mxu0
        %v4375 = vsel %vm485, %v4198, 0
        %4377 = vmatpush.msra.mxu0 0.0
        %4378 = vmatpush.msra.mxu0 0.0
        %4379 = vmatpush.msra.mxu0 0.0
        %4380 = vmatpush.msra.mxu0 0.0
        %4381 = vmatpush.msra.mxu0 0.0
        %4382 = vmatpush.msra.mxu0 0.0
        %4383 = vmatpush.msra.mxu0 0.0
        %4384 = vmatpush.msra.mxu0 0.0
        %4385 = vmatpush.msra.mxu0 0.0
        %4386 = vmatpush.msra.mxu0 0.0
        %4387 = vmatpush.msra.mxu0 0.0
        %4388 = vmatpush.msra.mxu0 0.0
        %4389 = vmatpush.msra.mxu0 0.0
        %4390 = vmatpush.msra.mxu0 0.0
        %v4391 = vand.u32 %v209, 4294901760
        %4392 = vmatpush.msra.mxu0 %v4391
        %v4393 = vand.u32 %v208, 4294901760
        %4394 = vmatpush.msra.mxu0 %v4393
        %v4395 = vand.u32 %v4375, 4294901760
        %v4396 = vsub.f32 %v4375, %v4395
        %v4397 = vand.u32 %v4396, 4294901760
        %v4398 = vsub.f32 %v4396, %v4397
        %v4399 = vand.u32 %v4398, 4294901760
        %4400 = vmatmul.f32.gmra.mxu0 %v4399
        %v4401 = vpop.f32.mrf.mxu0
        %v4402 = vadd.f32 %v4372, %v4401
        %4403 = vdwg.mxu0
        %4404 = vmatpush.msra.mxu0 0.0
        %4405 = vmatpush.msra.mxu0 0.0
        %4406 = vmatpush.msra.mxu0 0.0
        %4407 = vmatpush.msra.mxu0 0.0
        %4408 = vmatpush.msra.mxu0 0.0
        %4409 = vmatpush.msra.mxu0 0.0
        %4410 = vmatpush.msra.mxu0 0.0
        %4411 = vmatpush.msra.mxu0 0.0
        %4412 = vmatpush.msra.mxu0 0.0
        %4413 = vmatpush.msra.mxu0 0.0
        %4414 = vmatpush.msra.mxu0 0.0
        %4415 = vmatpush.msra.mxu0 0.0
        %4416 = vmatpush.msra.mxu0 0.0
        %4417 = vmatpush.msra.mxu0 0.0
        %v4418 = vand.u32 %v209, 4294901760
        %v4419 = vsub.f32 %v209, %v4418
        %v4420 = vand.u32 %v4419, 4294901760
        %v4421 = vsub.f32 %v4419, %v4420
        %v4422 = vand.u32 %v4421, 4294901760
        %4423 = vmatpush.msra.mxu0 %v4422
        %v4424 = vand.u32 %v208, 4294901760
        %v4425 = vsub.f32 %v208, %v4424
        %v4426 = vand.u32 %v4425, 4294901760
        %v4427 = vsub.f32 %v4425, %v4426
        %v4428 = vand.u32 %v4427, 4294901760
        %4429 = vmatpush.msra.mxu0 %v4428
        %v4430 = vand.u32 %v4375, 4294901760
        %4431 = vmatmul.f32.gmra.mxu0 %v4430
        %v4432 = vpop.f32.mrf.mxu0
        %v4433 = vadd.f32 %v4402, %v4432
        %4434 = vdwg.mxu0
        %4435 = vmatpush.msra.mxu0 0.0
        %4436 = vmatpush.msra.mxu0 0.0
        %4437 = vmatpush.msra.mxu0 0.0
        %4438 = vmatpush.msra.mxu0 0.0
        %4439 = vmatpush.msra.mxu0 0.0
        %4440 = vmatpush.msra.mxu0 0.0
        %4441 = vmatpush.msra.mxu0 0.0
        %4442 = vmatpush.msra.mxu0 0.0
        %4443 = vmatpush.msra.mxu0 0.0
        %4444 = vmatpush.msra.mxu0 0.0
        %4445 = vmatpush.msra.mxu0 0.0
        %4446 = vmatpush.msra.mxu0 0.0
        %4447 = vmatpush.msra.mxu0 0.0
        %4448 = vmatpush.msra.mxu0 0.0
        %v4449 = vand.u32 %v209, 4294901760
        %v4450 = vsub.f32 %v209, %v4449
        %4451 = vmatpush.msra.mxu0 %v4450
        %v4452 = vand.u32 %v208, 4294901760
        %v4453 = vsub.f32 %v208, %v4452
        %4454 = vmatpush.msra.mxu0 %v4453
        %v4455 = vand.u32 %v4375, 4294901760
        %v4456 = vsub.f32 %v4375, %v4455
        %4457 = vmatmul.f32.gmra.mxu0 %v4456
        %v4458 = vpop.f32.mrf.mxu0
        %v4459 = vadd.f32 %v4433, %v4458
        %4460 = vdwg.mxu0
        %4461 = vmatpush.msra.mxu0 0.0
        %4462 = vmatpush.msra.mxu0 0.0
        %4463 = vmatpush.msra.mxu0 0.0
        %4464 = vmatpush.msra.mxu0 0.0
        %4465 = vmatpush.msra.mxu0 0.0
        %4466 = vmatpush.msra.mxu0 0.0
        %4467 = vmatpush.msra.mxu0 0.0
        %4468 = vmatpush.msra.mxu0 0.0
        %4469 = vmatpush.msra.mxu0 0.0
        %4470 = vmatpush.msra.mxu0 0.0
        %4471 = vmatpush.msra.mxu0 0.0
        %4472 = vmatpush.msra.mxu0 0.0
        %4473 = vmatpush.msra.mxu0 0.0
        %4474 = vmatpush.msra.mxu0 0.0
        %v4475 = vand.u32 %v209, 4294901760
        %4476 = vmatpush.msra.mxu0 %v4475
        %v4477 = vand.u32 %v208, 4294901760
        %4478 = vmatpush.msra.mxu0 %v4477
        %v4479 = vand.u32 %v4375, 4294901760
        %v4480 = vsub.f32 %v4375, %v4479
        %v4481 = vand.u32 %v4480, 4294901760
        %4482 = vmatmul.f32.gmra.mxu0 %v4481
        %v4483 = vpop.f32.mrf.mxu0
        %v4484 = vadd.f32 %v4459, %v4483
        %4485 = vdwg.mxu0
        %4486 = vmatpush.msra.mxu0 0.0
        %4487 = vmatpush.msra.mxu0 0.0
        %4488 = vmatpush.msra.mxu0 0.0
        %4489 = vmatpush.msra.mxu0 0.0
        %4490 = vmatpush.msra.mxu0 0.0
        %4491 = vmatpush.msra.mxu0 0.0
        %4492 = vmatpush.msra.mxu0 0.0
        %4493 = vmatpush.msra.mxu0 0.0
        %4494 = vmatpush.msra.mxu0 0.0
        %4495 = vmatpush.msra.mxu0 0.0
        %4496 = vmatpush.msra.mxu0 0.0
        %4497 = vmatpush.msra.mxu0 0.0
        %4498 = vmatpush.msra.mxu0 0.0
        %4499 = vmatpush.msra.mxu0 0.0
        %v4500 = vand.u32 %v209, 4294901760
        %v4501 = vsub.f32 %v209, %v4500
        %v4502 = vand.u32 %v4501, 4294901760
        %4503 = vmatpush.msra.mxu0 %v4502
        %v4504 = vand.u32 %v208, 4294901760
        %v4505 = vsub.f32 %v208, %v4504
        %v4506 = vand.u32 %v4505, 4294901760
        %4507 = vmatpush.msra.mxu0 %v4506
        %v4508 = vand.u32 %v4375, 4294901760
        %4509 = vmatmul.f32.gmra.mxu0 %v4508
        %v4510 = vpop.f32.mrf.mxu0
        %v4511 = vadd.f32 %v4484, %v4510
        %4512 = vdwg.mxu0
        %4513 = vmatpush.msra.mxu0 0.0
        %4514 = vmatpush.msra.mxu0 0.0
        %4515 = vmatpush.msra.mxu0 0.0
        %4516 = vmatpush.msra.mxu0 0.0
        %4517 = vmatpush.msra.mxu0 0.0
        %4518 = vmatpush.msra.mxu0 0.0
        %4519 = vmatpush.msra.mxu0 0.0
        %4520 = vmatpush.msra.mxu0 0.0
        %4521 = vmatpush.msra.mxu0 0.0
        %4522 = vmatpush.msra.mxu0 0.0
        %4523 = vmatpush.msra.mxu0 0.0
        %4524 = vmatpush.msra.mxu0 0.0
        %4525 = vmatpush.msra.mxu0 0.0
        %4526 = vmatpush.msra.mxu0 0.0
        %v4527 = vand.u32 %v209, 4294901760
        %4528 = vmatpush.msra.mxu0 %v4527
        %v4529 = vand.u32 %v208, 4294901760
        %4530 = vmatpush.msra.mxu0 %v4529
        %v4531 = vand.u32 %v4375, 4294901760
        %4532 = vmatmul.f32.gmra.mxu0 %v4531
        %v4533 = vpop.f32.mrf.mxu0
        %v4534 = vadd.f32 %v4511, %v4533
        %4535 = vdwg.mxu0
        %v4537 = vsel %vm485, %v4210, 0
        %4539 = vmatpush.msra.mxu0 0.0
        %4540 = vmatpush.msra.mxu0 0.0
        %4541 = vmatpush.msra.mxu0 0.0
        %4542 = vmatpush.msra.mxu0 0.0
        %4543 = vmatpush.msra.mxu0 0.0
        %4544 = vmatpush.msra.mxu0 0.0
        %4545 = vmatpush.msra.mxu0 0.0
        %4546 = vmatpush.msra.mxu0 0.0
        %4547 = vmatpush.msra.mxu0 0.0
        %4548 = vmatpush.msra.mxu0 0.0
        %4549 = vmatpush.msra.mxu0 0.0
        %4550 = vmatpush.msra.mxu0 0.0
        %4551 = vmatpush.msra.mxu0 0.0
        %4552 = vmatpush.msra.mxu0 0.0
        %v4553 = vand.u32 %v212, 4294901760
        %4554 = vmatpush.msra.mxu0 %v4553
        %v4555 = vand.u32 %v211, 4294901760
        %4556 = vmatpush.msra.mxu0 %v4555
        %v4557 = vand.u32 %v4537, 4294901760
        %v4558 = vsub.f32 %v4537, %v4557
        %v4559 = vand.u32 %v4558, 4294901760
        %v4560 = vsub.f32 %v4558, %v4559
        %v4561 = vand.u32 %v4560, 4294901760
        %4562 = vmatmul.f32.gmra.mxu0 %v4561
        %v4563 = vpop.f32.mrf.mxu0
        %v4564 = vadd.f32 0.0, %v4563
        %4565 = vdwg.mxu0
        %4566 = vmatpush.msra.mxu0 0.0
        %4567 = vmatpush.msra.mxu0 0.0
        %4568 = vmatpush.msra.mxu0 0.0
        %4569 = vmatpush.msra.mxu0 0.0
        %4570 = vmatpush.msra.mxu0 0.0
        %4571 = vmatpush.msra.mxu0 0.0
        %4572 = vmatpush.msra.mxu0 0.0
        %4573 = vmatpush.msra.mxu0 0.0
        %4574 = vmatpush.msra.mxu0 0.0
        %4575 = vmatpush.msra.mxu0 0.0
        %4576 = vmatpush.msra.mxu0 0.0
        %4577 = vmatpush.msra.mxu0 0.0
        %4578 = vmatpush.msra.mxu0 0.0
        %4579 = vmatpush.msra.mxu0 0.0
        %v4580 = vand.u32 %v212, 4294901760
        %v4581 = vsub.f32 %v212, %v4580
        %v4582 = vand.u32 %v4581, 4294901760
        %v4583 = vsub.f32 %v4581, %v4582
        %v4584 = vand.u32 %v4583, 4294901760
        %4585 = vmatpush.msra.mxu0 %v4584
        %v4586 = vand.u32 %v211, 4294901760
        %v4587 = vsub.f32 %v211, %v4586
        %v4588 = vand.u32 %v4587, 4294901760
        %v4589 = vsub.f32 %v4587, %v4588
        %v4590 = vand.u32 %v4589, 4294901760
        %4591 = vmatpush.msra.mxu0 %v4590
        %v4592 = vand.u32 %v4537, 4294901760
        %4593 = vmatmul.f32.gmra.mxu0 %v4592
        %v4594 = vpop.f32.mrf.mxu0
        %v4595 = vadd.f32 %v4564, %v4594
        %4596 = vdwg.mxu0
        %4597 = vmatpush.msra.mxu0 0.0
        %4598 = vmatpush.msra.mxu0 0.0
        %4599 = vmatpush.msra.mxu0 0.0
        %4600 = vmatpush.msra.mxu0 0.0
        %4601 = vmatpush.msra.mxu0 0.0
        %4602 = vmatpush.msra.mxu0 0.0
        %4603 = vmatpush.msra.mxu0 0.0
        %4604 = vmatpush.msra.mxu0 0.0
        %4605 = vmatpush.msra.mxu0 0.0
        %4606 = vmatpush.msra.mxu0 0.0
        %4607 = vmatpush.msra.mxu0 0.0
        %4608 = vmatpush.msra.mxu0 0.0
        %4609 = vmatpush.msra.mxu0 0.0
        %4610 = vmatpush.msra.mxu0 0.0
        %v4611 = vand.u32 %v212, 4294901760
        %v4612 = vsub.f32 %v212, %v4611
        %4613 = vmatpush.msra.mxu0 %v4612
        %v4614 = vand.u32 %v211, 4294901760
        %v4615 = vsub.f32 %v211, %v4614
        %4616 = vmatpush.msra.mxu0 %v4615
        %v4617 = vand.u32 %v4537, 4294901760
        %v4618 = vsub.f32 %v4537, %v4617
        %4619 = vmatmul.f32.gmra.mxu0 %v4618
        %v4620 = vpop.f32.mrf.mxu0
        %v4621 = vadd.f32 %v4595, %v4620
        %4622 = vdwg.mxu0
        %4623 = vmatpush.msra.mxu0 0.0
        %4624 = vmatpush.msra.mxu0 0.0
        %4625 = vmatpush.msra.mxu0 0.0
        %4626 = vmatpush.msra.mxu0 0.0
        %4627 = vmatpush.msra.mxu0 0.0
        %4628 = vmatpush.msra.mxu0 0.0
        %4629 = vmatpush.msra.mxu0 0.0
        %4630 = vmatpush.msra.mxu0 0.0
        %4631 = vmatpush.msra.mxu0 0.0
        %4632 = vmatpush.msra.mxu0 0.0
        %4633 = vmatpush.msra.mxu0 0.0
        %4634 = vmatpush.msra.mxu0 0.0
        %4635 = vmatpush.msra.mxu0 0.0
        %4636 = vmatpush.msra.mxu0 0.0
        %v4637 = vand.u32 %v212, 4294901760
        %4638 = vmatpush.msra.mxu0 %v4637
        %v4639 = vand.u32 %v211, 4294901760
        %4640 = vmatpush.msra.mxu0 %v4639
        %v4641 = vand.u32 %v4537, 4294901760
        %v4642 = vsub.f32 %v4537, %v4641
        %v4643 = vand.u32 %v4642, 4294901760
        %4644 = vmatmul.f32.gmra.mxu0 %v4643
        %v4645 = vpop.f32.mrf.mxu0
        %v4646 = vadd.f32 %v4621, %v4645
        %4647 = vdwg.mxu0
        %4648 = vmatpush.msra.mxu0 0.0
        %4649 = vmatpush.msra.mxu0 0.0
        %4650 = vmatpush.msra.mxu0 0.0
        %4651 = vmatpush.msra.mxu0 0.0
        %4652 = vmatpush.msra.mxu0 0.0
        %4653 = vmatpush.msra.mxu0 0.0
        %4654 = vmatpush.msra.mxu0 0.0
        %4655 = vmatpush.msra.mxu0 0.0
        %4656 = vmatpush.msra.mxu0 0.0
        %4657 = vmatpush.msra.mxu0 0.0
        %4658 = vmatpush.msra.mxu0 0.0
        %4659 = vmatpush.msra.mxu0 0.0
        %4660 = vmatpush.msra.mxu0 0.0
        %4661 = vmatpush.msra.mxu0 0.0
        %v4662 = vand.u32 %v212, 4294901760
        %v4663 = vsub.f32 %v212, %v4662
        %v4664 = vand.u32 %v4663, 4294901760
        %4665 = vmatpush.msra.mxu0 %v4664
        %v4666 = vand.u32 %v211, 4294901760
        %v4667 = vsub.f32 %v211, %v4666
        %v4668 = vand.u32 %v4667, 4294901760
        %4669 = vmatpush.msra.mxu0 %v4668
        %v4670 = vand.u32 %v4537, 4294901760
        %4671 = vmatmul.f32.gmra.mxu0 %v4670
        %v4672 = vpop.f32.mrf.mxu0
        %v4673 = vadd.f32 %v4646, %v4672
        %4674 = vdwg.mxu0
        %4675 = vmatpush.msra.mxu0 0.0
        %4676 = vmatpush.msra.mxu0 0.0
        %4677 = vmatpush.msra.mxu0 0.0
        %4678 = vmatpush.msra.mxu0 0.0
        %4679 = vmatpush.msra.mxu0 0.0
        %4680 = vmatpush.msra.mxu0 0.0
        %4681 = vmatpush.msra.mxu0 0.0
        %4682 = vmatpush.msra.mxu0 0.0
        %4683 = vmatpush.msra.mxu0 0.0
        %4684 = vmatpush.msra.mxu0 0.0
        %4685 = vmatpush.msra.mxu0 0.0
        %4686 = vmatpush.msra.mxu0 0.0
        %4687 = vmatpush.msra.mxu0 0.0
        %4688 = vmatpush.msra.mxu0 0.0
        %v4689 = vand.u32 %v212, 4294901760
        %4690 = vmatpush.msra.mxu0 %v4689
        %v4691 = vand.u32 %v211, 4294901760
        %4692 = vmatpush.msra.mxu0 %v4691
        %v4693 = vand.u32 %v4537, 4294901760
        %4694 = vmatmul.f32.gmra.mxu0 %v4693
        %v4695 = vpop.f32.mrf.mxu0
        %v4696 = vadd.f32 %v4673, %v4695
        %4697 = vdwg.mxu0
        %v4699 = vsel %vm485, %v4206, 0
        %4701 = vmatpush.msra.mxu0 0.0
        %4702 = vmatpush.msra.mxu0 0.0
        %4703 = vmatpush.msra.mxu0 0.0
        %4704 = vmatpush.msra.mxu0 0.0
        %4705 = vmatpush.msra.mxu0 0.0
        %4706 = vmatpush.msra.mxu0 0.0
        %4707 = vmatpush.msra.mxu0 0.0
        %4708 = vmatpush.msra.mxu0 0.0
        %4709 = vmatpush.msra.mxu0 0.0
        %4710 = vmatpush.msra.mxu0 0.0
        %4711 = vmatpush.msra.mxu0 0.0
        %4712 = vmatpush.msra.mxu0 0.0
        %4713 = vmatpush.msra.mxu0 0.0
        %4714 = vmatpush.msra.mxu0 0.0
        %v4715 = vand.u32 %v209, 4294901760
        %4716 = vmatpush.msra.mxu0 %v4715
        %v4717 = vand.u32 %v208, 4294901760
        %4718 = vmatpush.msra.mxu0 %v4717
        %v4719 = vand.u32 %v4699, 4294901760
        %v4720 = vsub.f32 %v4699, %v4719
        %v4721 = vand.u32 %v4720, 4294901760
        %v4722 = vsub.f32 %v4720, %v4721
        %v4723 = vand.u32 %v4722, 4294901760
        %4724 = vmatmul.f32.gmra.mxu0 %v4723
        %v4725 = vpop.f32.mrf.mxu0
        %v4726 = vadd.f32 %v4696, %v4725
        %4727 = vdwg.mxu0
        %4728 = vmatpush.msra.mxu0 0.0
        %4729 = vmatpush.msra.mxu0 0.0
        %4730 = vmatpush.msra.mxu0 0.0
        %4731 = vmatpush.msra.mxu0 0.0
        %4732 = vmatpush.msra.mxu0 0.0
        %4733 = vmatpush.msra.mxu0 0.0
        %4734 = vmatpush.msra.mxu0 0.0
        %4735 = vmatpush.msra.mxu0 0.0
        %4736 = vmatpush.msra.mxu0 0.0
        %4737 = vmatpush.msra.mxu0 0.0
        %4738 = vmatpush.msra.mxu0 0.0
        %4739 = vmatpush.msra.mxu0 0.0
        %4740 = vmatpush.msra.mxu0 0.0
        %4741 = vmatpush.msra.mxu0 0.0
        %v4742 = vand.u32 %v209, 4294901760
        %v4743 = vsub.f32 %v209, %v4742
        %v4744 = vand.u32 %v4743, 4294901760
        %v4745 = vsub.f32 %v4743, %v4744
        %v4746 = vand.u32 %v4745, 4294901760
        %4747 = vmatpush.msra.mxu0 %v4746
        %v4748 = vand.u32 %v208, 4294901760
        %v4749 = vsub.f32 %v208, %v4748
        %v4750 = vand.u32 %v4749, 4294901760
        %v4751 = vsub.f32 %v4749, %v4750
        %v4752 = vand.u32 %v4751, 4294901760
        %4753 = vmatpush.msra.mxu0 %v4752
        %v4754 = vand.u32 %v4699, 4294901760
        %4755 = vmatmul.f32.gmra.mxu0 %v4754
        %v4756 = vpop.f32.mrf.mxu0
        %v4757 = vadd.f32 %v4726, %v4756
        %4758 = vdwg.mxu0
        %4759 = vmatpush.msra.mxu0 0.0
        %4760 = vmatpush.msra.mxu0 0.0
        %4761 = vmatpush.msra.mxu0 0.0
        %4762 = vmatpush.msra.mxu0 0.0
        %4763 = vmatpush.msra.mxu0 0.0
        %4764 = vmatpush.msra.mxu0 0.0
        %4765 = vmatpush.msra.mxu0 0.0
        %4766 = vmatpush.msra.mxu0 0.0
        %4767 = vmatpush.msra.mxu0 0.0
        %4768 = vmatpush.msra.mxu0 0.0
        %4769 = vmatpush.msra.mxu0 0.0
        %4770 = vmatpush.msra.mxu0 0.0
        %4771 = vmatpush.msra.mxu0 0.0
        %4772 = vmatpush.msra.mxu0 0.0
        %v4773 = vand.u32 %v209, 4294901760
        %v4774 = vsub.f32 %v209, %v4773
        %4775 = vmatpush.msra.mxu0 %v4774
        %v4776 = vand.u32 %v208, 4294901760
        %v4777 = vsub.f32 %v208, %v4776
        %4778 = vmatpush.msra.mxu0 %v4777
        %v4779 = vand.u32 %v4699, 4294901760
        %v4780 = vsub.f32 %v4699, %v4779
        %4781 = vmatmul.f32.gmra.mxu0 %v4780
        %v4782 = vpop.f32.mrf.mxu0
        %v4783 = vadd.f32 %v4757, %v4782
        %4784 = vdwg.mxu0
        %4785 = vmatpush.msra.mxu0 0.0
        %4786 = vmatpush.msra.mxu0 0.0
        %4787 = vmatpush.msra.mxu0 0.0
        %4788 = vmatpush.msra.mxu0 0.0
        %4789 = vmatpush.msra.mxu0 0.0
        %4790 = vmatpush.msra.mxu0 0.0
        %4791 = vmatpush.msra.mxu0 0.0
        %4792 = vmatpush.msra.mxu0 0.0
        %4793 = vmatpush.msra.mxu0 0.0
        %4794 = vmatpush.msra.mxu0 0.0
        %4795 = vmatpush.msra.mxu0 0.0
        %4796 = vmatpush.msra.mxu0 0.0
        %4797 = vmatpush.msra.mxu0 0.0
        %4798 = vmatpush.msra.mxu0 0.0
        %v4799 = vand.u32 %v209, 4294901760
        %4800 = vmatpush.msra.mxu0 %v4799
        %v4801 = vand.u32 %v208, 4294901760
        %4802 = vmatpush.msra.mxu0 %v4801
        %v4803 = vand.u32 %v4699, 4294901760
        %v4804 = vsub.f32 %v4699, %v4803
        %v4805 = vand.u32 %v4804, 4294901760
        %4806 = vmatmul.f32.gmra.mxu0 %v4805
        %v4807 = vpop.f32.mrf.mxu0
        %v4808 = vadd.f32 %v4783, %v4807
        %4809 = vdwg.mxu0
        %4810 = vmatpush.msra.mxu0 0.0
        %4811 = vmatpush.msra.mxu0 0.0
        %4812 = vmatpush.msra.mxu0 0.0
        %4813 = vmatpush.msra.mxu0 0.0
        %4814 = vmatpush.msra.mxu0 0.0
        %4815 = vmatpush.msra.mxu0 0.0
        %4816 = vmatpush.msra.mxu0 0.0
        %4817 = vmatpush.msra.mxu0 0.0
        %4818 = vmatpush.msra.mxu0 0.0
        %4819 = vmatpush.msra.mxu0 0.0
        %4820 = vmatpush.msra.mxu0 0.0
        %4821 = vmatpush.msra.mxu0 0.0
        %4822 = vmatpush.msra.mxu0 0.0
        %4823 = vmatpush.msra.mxu0 0.0
        %v4824 = vand.u32 %v209, 4294901760
        %v4825 = vsub.f32 %v209, %v4824
        %v4826 = vand.u32 %v4825, 4294901760
        %4827 = vmatpush.msra.mxu0 %v4826
        %v4828 = vand.u32 %v208, 4294901760
        %v4829 = vsub.f32 %v208, %v4828
        %v4830 = vand.u32 %v4829, 4294901760
        %4831 = vmatpush.msra.mxu0 %v4830
        %v4832 = vand.u32 %v4699, 4294901760
        %4833 = vmatmul.f32.gmra.mxu0 %v4832
        %v4834 = vpop.f32.mrf.mxu0
        %v4835 = vadd.f32 %v4808, %v4834
        %4836 = vdwg.mxu0
        %4837 = vmatpush.msra.mxu0 0.0
        %4838 = vmatpush.msra.mxu0 0.0
        %4839 = vmatpush.msra.mxu0 0.0
        %4840 = vmatpush.msra.mxu0 0.0
        %4841 = vmatpush.msra.mxu0 0.0
        %4842 = vmatpush.msra.mxu0 0.0
        %4843 = vmatpush.msra.mxu0 0.0
        %4844 = vmatpush.msra.mxu0 0.0
        %4845 = vmatpush.msra.mxu0 0.0
        %4846 = vmatpush.msra.mxu0 0.0
        %4847 = vmatpush.msra.mxu0 0.0
        %4848 = vmatpush.msra.mxu0 0.0
        %4849 = vmatpush.msra.mxu0 0.0
        %4850 = vmatpush.msra.mxu0 0.0
        %v4851 = vand.u32 %v209, 4294901760
        %4852 = vmatpush.msra.mxu0 %v4851
        %v4853 = vand.u32 %v208, 4294901760
        %4854 = vmatpush.msra.mxu0 %v4853
        %v4855 = vand.u32 %v4699, 4294901760
        %4856 = vmatmul.f32.gmra.mxu0 %v4855
        %v4857 = vpop.f32.mrf.mxu0
        %v4858 = vadd.f32 %v4835, %v4857
        %4859 = vdwg.mxu0
        %4861 = vrot.lane.b32.xlu0 %v4858, 32
        %v4862 = vpop.permute.xlu0 %4861
        %v4864 = vsel %vm1138, %v4534, %v4862
        %v4866 = vrot.slane %v4864, 1
        %v4867 = vrot.slane %v4864, 2
        %v4868 = vrot.slane %v4864, 3
        %v4869 = vrot.slane %v4864, 4
        %v4870 = vrot.slane %v4864, 5
        %v4871 = vrot.slane %v4864, 6
        %v4872 = vrot.slane %v4864, 7
        %4880 = vst.msk [vmem:[%s203 + $0x4] sm:$0x1] %vm1155, %v4864
        %4881 = vst.msk [vmem:[%s203 + $0xc] sm:$0x1] %vm1155, %v4866
        %4882 = vst.msk [vmem:[%s203 + $0x14] sm:$0x1] %vm1155, %v4867
        %4883 = vst.msk [vmem:[%s203 + $0x1c] sm:$0x1] %vm1155, %v4868
        %4884 = vst.msk [vmem:[%s203 + $0x24] sm:$0x1] %vm1155, %v4869
        %4885 = vst.msk [vmem:[%s203 + $0x2c] sm:$0x1] %vm1155, %v4870
        %4886 = vst.msk [vmem:[%s203 + $0x34] sm:$0x1] %vm1155, %v4871
        %4887 = vst.msk [vmem:[%s203 + $0x3c] sm:$0x1] %vm1155, %v4872
        %v4888 = vld [vmem:[%s181 + $0x5] sm:$0x1]
        %v4889 = vld [vmem:[%s181 + $0xd] sm:$0x1]
        %v4890 = vld [vmem:[%s181 + $0x15] sm:$0x1]
        %v4891 = vld [vmem:[%s181 + $0x1d] sm:$0x1]
        %v4896 = vrot.slane %v4889, 7
        %v4897 = vsel %vm222, %v4896, %v4888
        %v4898 = vrot.slane %v4890, 6
        %v4899 = vsel %vm225, %v4898, %v4897
        %v4900 = vrot.slane %v4891, 5
        %v4901 = vsel %vm228, %v4900, %v4899
        %v4902 = vsel %vm243, %v4901, 0
        %4904 = vmatpush.msra.mxu0 0.0
        %4905 = vmatpush.msra.mxu0 0.0
        %4906 = vmatpush.msra.mxu0 0.0
        %4907 = vmatpush.msra.mxu0 0.0
        %4908 = vmatpush.msra.mxu0 0.0
        %4909 = vmatpush.msra.mxu0 0.0
        %4910 = vmatpush.msra.mxu0 0.0
        %4911 = vmatpush.msra.mxu0 0.0
        %4912 = vmatpush.msra.mxu0 0.0
        %4913 = vmatpush.msra.mxu0 0.0
        %4914 = vmatpush.msra.mxu0 0.0
        %4915 = vmatpush.msra.mxu0 0.0
        %4916 = vmatpush.msra.mxu0 0.0
        %4917 = vmatpush.msra.mxu0 0.0
        %4918 = vmatpush.msra.mxu0 0.0
        %v4919 = vand.u32 %v4902, 4294901760
        %4920 = vmatpush.msra.mxu0 %v4919
        %v4921 = vand.u32 %v232, 4294901760
        %v4922 = vsub.f32 %v232, %v4921
        %v4923 = vand.u32 %v4922, 4294901760
        %v4924 = vsub.f32 %v4922, %v4923
        %v4925 = vand.u32 %v4924, 4294901760
        %4926 = vmatmul.f32.gmra.mxu0 %v4925
        %v4927 = vpop.f32.mrf.mxu0
        %v4928 = vadd.f32 0.0, %v4927
        %v4929 = vand.u32 %v235, 4294901760
        %v4930 = vsub.f32 %v235, %v4929
        %v4931 = vand.u32 %v4930, 4294901760
        %v4932 = vsub.f32 %v4930, %v4931
        %v4933 = vand.u32 %v4932, 4294901760
        %4934 = vmatmul.f32.gmra.mxu0 %v4933
        %v4935 = vpop.f32.mrf.mxu0
        %v4936 = vadd.f32 0.0, %v4935
        %v4937 = vand.u32 %v238, 4294901760
        %v4938 = vsub.f32 %v238, %v4937
        %v4939 = vand.u32 %v4938, 4294901760
        %v4940 = vsub.f32 %v4938, %v4939
        %v4941 = vand.u32 %v4940, 4294901760
        %4942 = vmatmul.f32.gmra.mxu0 %v4941
        %v4943 = vpop.f32.mrf.mxu0
        %v4944 = vadd.f32 0.0, %v4943
        %v4945 = vand.u32 %v241, 4294901760
        %v4946 = vsub.f32 %v241, %v4945
        %v4947 = vand.u32 %v4946, 4294901760
        %v4948 = vsub.f32 %v4946, %v4947
        %v4949 = vand.u32 %v4948, 4294901760
        %4950 = vmatmul.f32.gmra.mxu0 %v4949
        %v4951 = vpop.f32.mrf.mxu0
        %v4952 = vadd.f32 0.0, %v4951
        %4953 = vdwg.mxu0
        %4954 = vmatpush.msra.mxu0 0.0
        %4955 = vmatpush.msra.mxu0 0.0
        %4956 = vmatpush.msra.mxu0 0.0
        %4957 = vmatpush.msra.mxu0 0.0
        %4958 = vmatpush.msra.mxu0 0.0
        %4959 = vmatpush.msra.mxu0 0.0
        %4960 = vmatpush.msra.mxu0 0.0
        %4961 = vmatpush.msra.mxu0 0.0
        %4962 = vmatpush.msra.mxu0 0.0
        %4963 = vmatpush.msra.mxu0 0.0
        %4964 = vmatpush.msra.mxu0 0.0
        %4965 = vmatpush.msra.mxu0 0.0
        %4966 = vmatpush.msra.mxu0 0.0
        %4967 = vmatpush.msra.mxu0 0.0
        %4968 = vmatpush.msra.mxu0 0.0
        %v4969 = vand.u32 %v4902, 4294901760
        %v4970 = vsub.f32 %v4902, %v4969
        %v4971 = vand.u32 %v4970, 4294901760
        %v4972 = vsub.f32 %v4970, %v4971
        %v4973 = vand.u32 %v4972, 4294901760
        %4974 = vmatpush.msra.mxu0 %v4973
        %v4975 = vand.u32 %v232, 4294901760
        %4976 = vmatmul.f32.gmra.mxu0 %v4975
        %v4977 = vpop.f32.mrf.mxu0
        %v4978 = vadd.f32 %v4928, %v4977
        %v4979 = vand.u32 %v235, 4294901760
        %4980 = vmatmul.f32.gmra.mxu0 %v4979
        %v4981 = vpop.f32.mrf.mxu0
        %v4982 = vadd.f32 %v4936, %v4981
        %v4983 = vand.u32 %v238, 4294901760
        %4984 = vmatmul.f32.gmra.mxu0 %v4983
        %v4985 = vpop.f32.mrf.mxu0
        %v4986 = vadd.f32 %v4944, %v4985
        %v4987 = vand.u32 %v241, 4294901760
        %4988 = vmatmul.f32.gmra.mxu0 %v4987
        %v4989 = vpop.f32.mrf.mxu0
        %v4990 = vadd.f32 %v4952, %v4989
        %4991 = vdwg.mxu0
        %4992 = vmatpush.msra.mxu0 0.0
        %4993 = vmatpush.msra.mxu0 0.0
        %4994 = vmatpush.msra.mxu0 0.0
        %4995 = vmatpush.msra.mxu0 0.0
        %4996 = vmatpush.msra.mxu0 0.0
        %4997 = vmatpush.msra.mxu0 0.0
        %4998 = vmatpush.msra.mxu0 0.0
        %4999 = vmatpush.msra.mxu0 0.0
        %5000 = vmatpush.msra.mxu0 0.0
        %5001 = vmatpush.msra.mxu0 0.0
        %5002 = vmatpush.msra.mxu0 0.0
        %5003 = vmatpush.msra.mxu0 0.0
        %5004 = vmatpush.msra.mxu0 0.0
        %5005 = vmatpush.msra.mxu0 0.0
        %5006 = vmatpush.msra.mxu0 0.0
        %v5007 = vand.u32 %v4902, 4294901760
        %v5008 = vsub.f32 %v4902, %v5007
        %5009 = vmatpush.msra.mxu0 %v5008
        %v5010 = vand.u32 %v232, 4294901760
        %v5011 = vsub.f32 %v232, %v5010
        %5012 = vmatmul.f32.gmra.mxu0 %v5011
        %v5013 = vpop.f32.mrf.mxu0
        %v5014 = vadd.f32 %v4978, %v5013
        %v5015 = vand.u32 %v235, 4294901760
        %v5016 = vsub.f32 %v235, %v5015
        %5017 = vmatmul.f32.gmra.mxu0 %v5016
        %v5018 = vpop.f32.mrf.mxu0
        %v5019 = vadd.f32 %v4982, %v5018
        %v5020 = vand.u32 %v238, 4294901760
        %v5021 = vsub.f32 %v238, %v5020
        %5022 = vmatmul.f32.gmra.mxu0 %v5021
        %v5023 = vpop.f32.mrf.mxu0
        %v5024 = vadd.f32 %v4986, %v5023
        %v5025 = vand.u32 %v241, 4294901760
        %v5026 = vsub.f32 %v241, %v5025
        %5027 = vmatmul.f32.gmra.mxu0 %v5026
        %v5028 = vpop.f32.mrf.mxu0
        %v5029 = vadd.f32 %v4990, %v5028
        %5030 = vdwg.mxu0
        %5031 = vmatpush.msra.mxu0 0.0
        %5032 = vmatpush.msra.mxu0 0.0
        %5033 = vmatpush.msra.mxu0 0.0
        %5034 = vmatpush.msra.mxu0 0.0
        %5035 = vmatpush.msra.mxu0 0.0
        %5036 = vmatpush.msra.mxu0 0.0
        %5037 = vmatpush.msra.mxu0 0.0
        %5038 = vmatpush.msra.mxu0 0.0
        %5039 = vmatpush.msra.mxu0 0.0
        %5040 = vmatpush.msra.mxu0 0.0
        %5041 = vmatpush.msra.mxu0 0.0
        %5042 = vmatpush.msra.mxu0 0.0
        %5043 = vmatpush.msra.mxu0 0.0
        %5044 = vmatpush.msra.mxu0 0.0
        %5045 = vmatpush.msra.mxu0 0.0
        %v5046 = vand.u32 %v4902, 4294901760
        %5047 = vmatpush.msra.mxu0 %v5046
        %v5048 = vand.u32 %v232, 4294901760
        %v5049 = vsub.f32 %v232, %v5048
        %v5050 = vand.u32 %v5049, 4294901760
        %5051 = vmatmul.f32.gmra.mxu0 %v5050
        %v5052 = vpop.f32.mrf.mxu0
        %v5053 = vadd.f32 %v5014, %v5052
        %v5054 = vand.u32 %v235, 4294901760
        %v5055 = vsub.f32 %v235, %v5054
        %v5056 = vand.u32 %v5055, 4294901760
        %5057 = vmatmul.f32.gmra.mxu0 %v5056
        %v5058 = vpop.f32.mrf.mxu0
        %v5059 = vadd.f32 %v5019, %v5058
        %v5060 = vand.u32 %v238, 4294901760
        %v5061 = vsub.f32 %v238, %v5060
        %v5062 = vand.u32 %v5061, 4294901760
        %5063 = vmatmul.f32.gmra.mxu0 %v5062
        %v5064 = vpop.f32.mrf.mxu0
        %v5065 = vadd.f32 %v5024, %v5064
        %v5066 = vand.u32 %v241, 4294901760
        %v5067 = vsub.f32 %v241, %v5066
        %v5068 = vand.u32 %v5067, 4294901760
        %5069 = vmatmul.f32.gmra.mxu0 %v5068
        %v5070 = vpop.f32.mrf.mxu0
        %v5071 = vadd.f32 %v5029, %v5070
        %5072 = vdwg.mxu0
        %5073 = vmatpush.msra.mxu0 0.0
        %5074 = vmatpush.msra.mxu0 0.0
        %5075 = vmatpush.msra.mxu0 0.0
        %5076 = vmatpush.msra.mxu0 0.0
        %5077 = vmatpush.msra.mxu0 0.0
        %5078 = vmatpush.msra.mxu0 0.0
        %5079 = vmatpush.msra.mxu0 0.0
        %5080 = vmatpush.msra.mxu0 0.0
        %5081 = vmatpush.msra.mxu0 0.0
        %5082 = vmatpush.msra.mxu0 0.0
        %5083 = vmatpush.msra.mxu0 0.0
        %5084 = vmatpush.msra.mxu0 0.0
        %5085 = vmatpush.msra.mxu0 0.0
        %5086 = vmatpush.msra.mxu0 0.0
        %5087 = vmatpush.msra.mxu0 0.0
        %v5088 = vand.u32 %v4902, 4294901760
        %v5089 = vsub.f32 %v4902, %v5088
        %v5090 = vand.u32 %v5089, 4294901760
        %5091 = vmatpush.msra.mxu0 %v5090
        %v5092 = vand.u32 %v232, 4294901760
        %5093 = vmatmul.f32.gmra.mxu0 %v5092
        %v5094 = vpop.f32.mrf.mxu0
        %v5095 = vadd.f32 %v5053, %v5094
        %v5096 = vand.u32 %v235, 4294901760
        %5097 = vmatmul.f32.gmra.mxu0 %v5096
        %v5098 = vpop.f32.mrf.mxu0
        %v5099 = vadd.f32 %v5059, %v5098
        %v5100 = vand.u32 %v238, 4294901760
        %5101 = vmatmul.f32.gmra.mxu0 %v5100
        %v5102 = vpop.f32.mrf.mxu0
        %v5103 = vadd.f32 %v5065, %v5102
        %v5104 = vand.u32 %v241, 4294901760
        %5105 = vmatmul.f32.gmra.mxu0 %v5104
        %v5106 = vpop.f32.mrf.mxu0
        %v5107 = vadd.f32 %v5071, %v5106
        %5108 = vdwg.mxu0
        %5109 = vmatpush.msra.mxu0 0.0
        %5110 = vmatpush.msra.mxu0 0.0
        %5111 = vmatpush.msra.mxu0 0.0
        %5112 = vmatpush.msra.mxu0 0.0
        %5113 = vmatpush.msra.mxu0 0.0
        %5114 = vmatpush.msra.mxu0 0.0
        %5115 = vmatpush.msra.mxu0 0.0
        %5116 = vmatpush.msra.mxu0 0.0
        %5117 = vmatpush.msra.mxu0 0.0
        %5118 = vmatpush.msra.mxu0 0.0
        %5119 = vmatpush.msra.mxu0 0.0
        %5120 = vmatpush.msra.mxu0 0.0
        %5121 = vmatpush.msra.mxu0 0.0
        %5122 = vmatpush.msra.mxu0 0.0
        %5123 = vmatpush.msra.mxu0 0.0
        %v5124 = vand.u32 %v4902, 4294901760
        %5125 = vmatpush.msra.mxu0 %v5124
        %v5126 = vand.u32 %v232, 4294901760
        %5127 = vmatmul.f32.gmra.mxu0 %v5126
        %v5128 = vpop.f32.mrf.mxu0
        %v5129 = vadd.f32 %v5095, %v5128
        %v5130 = vand.u32 %v235, 4294901760
        %5131 = vmatmul.f32.gmra.mxu0 %v5130
        %v5132 = vpop.f32.mrf.mxu0
        %v5133 = vadd.f32 %v5099, %v5132
        %v5134 = vand.u32 %v238, 4294901760
        %5135 = vmatmul.f32.gmra.mxu0 %v5134
        %v5136 = vpop.f32.mrf.mxu0
        %v5137 = vadd.f32 %v5103, %v5136
        %v5138 = vand.u32 %v241, 4294901760
        %5139 = vmatmul.f32.gmra.mxu0 %v5138
        %v5140 = vpop.f32.mrf.mxu0
        %v5141 = vadd.f32 %v5107, %v5140
        %5142 = vdwg.mxu0
        %v5144 = vsel %vm485, %v5133, 0
        %5146 = vmatpush.msra.mxu0 0.0
        %5147 = vmatpush.msra.mxu0 0.0
        %5148 = vmatpush.msra.mxu0 0.0
        %5149 = vmatpush.msra.mxu0 0.0
        %5150 = vmatpush.msra.mxu0 0.0
        %5151 = vmatpush.msra.mxu0 0.0
        %5152 = vmatpush.msra.mxu0 0.0
        %5153 = vmatpush.msra.mxu0 0.0
        %5154 = vmatpush.msra.mxu0 0.0
        %5155 = vmatpush.msra.mxu0 0.0
        %5156 = vmatpush.msra.mxu0 0.0
        %5157 = vmatpush.msra.mxu0 0.0
        %5158 = vmatpush.msra.mxu0 0.0
        %5159 = vmatpush.msra.mxu0 0.0
        %v5160 = vand.u32 %v212, 4294901760
        %5161 = vmatpush.msra.mxu0 %v5160
        %v5162 = vand.u32 %v211, 4294901760
        %5163 = vmatpush.msra.mxu0 %v5162
        %v5164 = vand.u32 %v5144, 4294901760
        %v5165 = vsub.f32 %v5144, %v5164
        %v5166 = vand.u32 %v5165, 4294901760
        %v5167 = vsub.f32 %v5165, %v5166
        %v5168 = vand.u32 %v5167, 4294901760
        %5169 = vmatmul.f32.gmra.mxu0 %v5168
        %v5170 = vpop.f32.mrf.mxu0
        %v5171 = vadd.f32 0.0, %v5170
        %5172 = vdwg.mxu0
        %5173 = vmatpush.msra.mxu0 0.0
        %5174 = vmatpush.msra.mxu0 0.0
        %5175 = vmatpush.msra.mxu0 0.0
        %5176 = vmatpush.msra.mxu0 0.0
        %5177 = vmatpush.msra.mxu0 0.0
        %5178 = vmatpush.msra.mxu0 0.0
        %5179 = vmatpush.msra.mxu0 0.0
        %5180 = vmatpush.msra.mxu0 0.0
        %5181 = vmatpush.msra.mxu0 0.0
        %5182 = vmatpush.msra.mxu0 0.0
        %5183 = vmatpush.msra.mxu0 0.0
        %5184 = vmatpush.msra.mxu0 0.0
        %5185 = vmatpush.msra.mxu0 0.0
        %5186 = vmatpush.msra.mxu0 0.0
        %v5187 = vand.u32 %v212, 4294901760
        %v5188 = vsub.f32 %v212, %v5187
        %v5189 = vand.u32 %v5188, 4294901760
        %v5190 = vsub.f32 %v5188, %v5189
        %v5191 = vand.u32 %v5190, 4294901760
        %5192 = vmatpush.msra.mxu0 %v5191
        %v5193 = vand.u32 %v211, 4294901760
        %v5194 = vsub.f32 %v211, %v5193
        %v5195 = vand.u32 %v5194, 4294901760
        %v5196 = vsub.f32 %v5194, %v5195
        %v5197 = vand.u32 %v5196, 4294901760
        %5198 = vmatpush.msra.mxu0 %v5197
        %v5199 = vand.u32 %v5144, 4294901760
        %5200 = vmatmul.f32.gmra.mxu0 %v5199
        %v5201 = vpop.f32.mrf.mxu0
        %v5202 = vadd.f32 %v5171, %v5201
        %5203 = vdwg.mxu0
        %5204 = vmatpush.msra.mxu0 0.0
        %5205 = vmatpush.msra.mxu0 0.0
        %5206 = vmatpush.msra.mxu0 0.0
        %5207 = vmatpush.msra.mxu0 0.0
        %5208 = vmatpush.msra.mxu0 0.0
        %5209 = vmatpush.msra.mxu0 0.0
        %5210 = vmatpush.msra.mxu0 0.0
        %5211 = vmatpush.msra.mxu0 0.0
        %5212 = vmatpush.msra.mxu0 0.0
        %5213 = vmatpush.msra.mxu0 0.0
        %5214 = vmatpush.msra.mxu0 0.0
        %5215 = vmatpush.msra.mxu0 0.0
        %5216 = vmatpush.msra.mxu0 0.0
        %5217 = vmatpush.msra.mxu0 0.0
        %v5218 = vand.u32 %v212, 4294901760
        %v5219 = vsub.f32 %v212, %v5218
        %5220 = vmatpush.msra.mxu0 %v5219
        %v5221 = vand.u32 %v211, 4294901760
        %v5222 = vsub.f32 %v211, %v5221
        %5223 = vmatpush.msra.mxu0 %v5222
        %v5224 = vand.u32 %v5144, 4294901760
        %v5225 = vsub.f32 %v5144, %v5224
        %5226 = vmatmul.f32.gmra.mxu0 %v5225
        %v5227 = vpop.f32.mrf.mxu0
        %v5228 = vadd.f32 %v5202, %v5227
        %5229 = vdwg.mxu0
        %5230 = vmatpush.msra.mxu0 0.0
        %5231 = vmatpush.msra.mxu0 0.0
        %5232 = vmatpush.msra.mxu0 0.0
        %5233 = vmatpush.msra.mxu0 0.0
        %5234 = vmatpush.msra.mxu0 0.0
        %5235 = vmatpush.msra.mxu0 0.0
        %5236 = vmatpush.msra.mxu0 0.0
        %5237 = vmatpush.msra.mxu0 0.0
        %5238 = vmatpush.msra.mxu0 0.0
        %5239 = vmatpush.msra.mxu0 0.0
        %5240 = vmatpush.msra.mxu0 0.0
        %5241 = vmatpush.msra.mxu0 0.0
        %5242 = vmatpush.msra.mxu0 0.0
        %5243 = vmatpush.msra.mxu0 0.0
        %v5244 = vand.u32 %v212, 4294901760
        %5245 = vmatpush.msra.mxu0 %v5244
        %v5246 = vand.u32 %v211, 4294901760
        %5247 = vmatpush.msra.mxu0 %v5246
        %v5248 = vand.u32 %v5144, 4294901760
        %v5249 = vsub.f32 %v5144, %v5248
        %v5250 = vand.u32 %v5249, 4294901760
        %5251 = vmatmul.f32.gmra.mxu0 %v5250
        %v5252 = vpop.f32.mrf.mxu0
        %v5253 = vadd.f32 %v5228, %v5252
        %5254 = vdwg.mxu0
        %5255 = vmatpush.msra.mxu0 0.0
        %5256 = vmatpush.msra.mxu0 0.0
        %5257 = vmatpush.msra.mxu0 0.0
        %5258 = vmatpush.msra.mxu0 0.0
        %5259 = vmatpush.msra.mxu0 0.0
        %5260 = vmatpush.msra.mxu0 0.0
        %5261 = vmatpush.msra.mxu0 0.0
        %5262 = vmatpush.msra.mxu0 0.0
        %5263 = vmatpush.msra.mxu0 0.0
        %5264 = vmatpush.msra.mxu0 0.0
        %5265 = vmatpush.msra.mxu0 0.0
        %5266 = vmatpush.msra.mxu0 0.0
        %5267 = vmatpush.msra.mxu0 0.0
        %5268 = vmatpush.msra.mxu0 0.0
        %v5269 = vand.u32 %v212, 4294901760
        %v5270 = vsub.f32 %v212, %v5269
        %v5271 = vand.u32 %v5270, 4294901760
        %5272 = vmatpush.msra.mxu0 %v5271
        %v5273 = vand.u32 %v211, 4294901760
        %v5274 = vsub.f32 %v211, %v5273
        %v5275 = vand.u32 %v5274, 4294901760
        %5276 = vmatpush.msra.mxu0 %v5275
        %v5277 = vand.u32 %v5144, 4294901760
        %5278 = vmatmul.f32.gmra.mxu0 %v5277
        %v5279 = vpop.f32.mrf.mxu0
        %v5280 = vadd.f32 %v5253, %v5279
        %5281 = vdwg.mxu0
        %5282 = vmatpush.msra.mxu0 0.0
        %5283 = vmatpush.msra.mxu0 0.0
        %5284 = vmatpush.msra.mxu0 0.0
        %5285 = vmatpush.msra.mxu0 0.0
        %5286 = vmatpush.msra.mxu0 0.0
        %5287 = vmatpush.msra.mxu0 0.0
        %5288 = vmatpush.msra.mxu0 0.0
        %5289 = vmatpush.msra.mxu0 0.0
        %5290 = vmatpush.msra.mxu0 0.0
        %5291 = vmatpush.msra.mxu0 0.0
        %5292 = vmatpush.msra.mxu0 0.0
        %5293 = vmatpush.msra.mxu0 0.0
        %5294 = vmatpush.msra.mxu0 0.0
        %5295 = vmatpush.msra.mxu0 0.0
        %v5296 = vand.u32 %v212, 4294901760
        %5297 = vmatpush.msra.mxu0 %v5296
        %v5298 = vand.u32 %v211, 4294901760
        %5299 = vmatpush.msra.mxu0 %v5298
        %v5300 = vand.u32 %v5144, 4294901760
        %5301 = vmatmul.f32.gmra.mxu0 %v5300
        %v5302 = vpop.f32.mrf.mxu0
        %v5303 = vadd.f32 %v5280, %v5302
        %5304 = vdwg.mxu0
        %v5306 = vsel %vm485, %v5129, 0
        %5308 = vmatpush.msra.mxu0 0.0
        %5309 = vmatpush.msra.mxu0 0.0
        %5310 = vmatpush.msra.mxu0 0.0
        %5311 = vmatpush.msra.mxu0 0.0
        %5312 = vmatpush.msra.mxu0 0.0
        %5313 = vmatpush.msra.mxu0 0.0
        %5314 = vmatpush.msra.mxu0 0.0
        %5315 = vmatpush.msra.mxu0 0.0
        %5316 = vmatpush.msra.mxu0 0.0
        %5317 = vmatpush.msra.mxu0 0.0
        %5318 = vmatpush.msra.mxu0 0.0
        %5319 = vmatpush.msra.mxu0 0.0
        %5320 = vmatpush.msra.mxu0 0.0
        %5321 = vmatpush.msra.mxu0 0.0
        %v5322 = vand.u32 %v209, 4294901760
        %5323 = vmatpush.msra.mxu0 %v5322
        %v5324 = vand.u32 %v208, 4294901760
        %5325 = vmatpush.msra.mxu0 %v5324
        %v5326 = vand.u32 %v5306, 4294901760
        %v5327 = vsub.f32 %v5306, %v5326
        %v5328 = vand.u32 %v5327, 4294901760
        %v5329 = vsub.f32 %v5327, %v5328
        %v5330 = vand.u32 %v5329, 4294901760
        %5331 = vmatmul.f32.gmra.mxu0 %v5330
        %v5332 = vpop.f32.mrf.mxu0
        %v5333 = vadd.f32 %v5303, %v5332
        %5334 = vdwg.mxu0
        %5335 = vmatpush.msra.mxu0 0.0
        %5336 = vmatpush.msra.mxu0 0.0
        %5337 = vmatpush.msra.mxu0 0.0
        %5338 = vmatpush.msra.mxu0 0.0
        %5339 = vmatpush.msra.mxu0 0.0
        %5340 = vmatpush.msra.mxu0 0.0
        %5341 = vmatpush.msra.mxu0 0.0
        %5342 = vmatpush.msra.mxu0 0.0
        %5343 = vmatpush.msra.mxu0 0.0
        %5344 = vmatpush.msra.mxu0 0.0
        %5345 = vmatpush.msra.mxu0 0.0
        %5346 = vmatpush.msra.mxu0 0.0
        %5347 = vmatpush.msra.mxu0 0.0
        %5348 = vmatpush.msra.mxu0 0.0
        %v5349 = vand.u32 %v209, 4294901760
        %v5350 = vsub.f32 %v209, %v5349
        %v5351 = vand.u32 %v5350, 4294901760
        %v5352 = vsub.f32 %v5350, %v5351
        %v5353 = vand.u32 %v5352, 4294901760
        %5354 = vmatpush.msra.mxu0 %v5353
        %v5355 = vand.u32 %v208, 4294901760
        %v5356 = vsub.f32 %v208, %v5355
        %v5357 = vand.u32 %v5356, 4294901760
        %v5358 = vsub.f32 %v5356, %v5357
        %v5359 = vand.u32 %v5358, 4294901760
        %5360 = vmatpush.msra.mxu0 %v5359
        %v5361 = vand.u32 %v5306, 4294901760
        %5362 = vmatmul.f32.gmra.mxu0 %v5361
        %v5363 = vpop.f32.mrf.mxu0
        %v5364 = vadd.f32 %v5333, %v5363
        %5365 = vdwg.mxu0
        %5366 = vmatpush.msra.mxu0 0.0
        %5367 = vmatpush.msra.mxu0 0.0
        %5368 = vmatpush.msra.mxu0 0.0
        %5369 = vmatpush.msra.mxu0 0.0
        %5370 = vmatpush.msra.mxu0 0.0
        %5371 = vmatpush.msra.mxu0 0.0
        %5372 = vmatpush.msra.mxu0 0.0
        %5373 = vmatpush.msra.mxu0 0.0
        %5374 = vmatpush.msra.mxu0 0.0
        %5375 = vmatpush.msra.mxu0 0.0
        %5376 = vmatpush.msra.mxu0 0.0
        %5377 = vmatpush.msra.mxu0 0.0
        %5378 = vmatpush.msra.mxu0 0.0
        %5379 = vmatpush.msra.mxu0 0.0
        %v5380 = vand.u32 %v209, 4294901760
        %v5381 = vsub.f32 %v209, %v5380
        %5382 = vmatpush.msra.mxu0 %v5381
        %v5383 = vand.u32 %v208, 4294901760
        %v5384 = vsub.f32 %v208, %v5383
        %5385 = vmatpush.msra.mxu0 %v5384
        %v5386 = vand.u32 %v5306, 4294901760
        %v5387 = vsub.f32 %v5306, %v5386
        %5388 = vmatmul.f32.gmra.mxu0 %v5387
        %v5389 = vpop.f32.mrf.mxu0
        %v5390 = vadd.f32 %v5364, %v5389
        %5391 = vdwg.mxu0
        %5392 = vmatpush.msra.mxu0 0.0
        %5393 = vmatpush.msra.mxu0 0.0
        %5394 = vmatpush.msra.mxu0 0.0
        %5395 = vmatpush.msra.mxu0 0.0
        %5396 = vmatpush.msra.mxu0 0.0
        %5397 = vmatpush.msra.mxu0 0.0
        %5398 = vmatpush.msra.mxu0 0.0
        %5399 = vmatpush.msra.mxu0 0.0
        %5400 = vmatpush.msra.mxu0 0.0
        %5401 = vmatpush.msra.mxu0 0.0
        %5402 = vmatpush.msra.mxu0 0.0
        %5403 = vmatpush.msra.mxu0 0.0
        %5404 = vmatpush.msra.mxu0 0.0
        %5405 = vmatpush.msra.mxu0 0.0
        %v5406 = vand.u32 %v209, 4294901760
        %5407 = vmatpush.msra.mxu0 %v5406
        %v5408 = vand.u32 %v208, 4294901760
        %5409 = vmatpush.msra.mxu0 %v5408
        %v5410 = vand.u32 %v5306, 4294901760
        %v5411 = vsub.f32 %v5306, %v5410
        %v5412 = vand.u32 %v5411, 4294901760
        %5413 = vmatmul.f32.gmra.mxu0 %v5412
        %v5414 = vpop.f32.mrf.mxu0
        %v5415 = vadd.f32 %v5390, %v5414
        %5416 = vdwg.mxu0
        %5417 = vmatpush.msra.mxu0 0.0
        %5418 = vmatpush.msra.mxu0 0.0
        %5419 = vmatpush.msra.mxu0 0.0
        %5420 = vmatpush.msra.mxu0 0.0
        %5421 = vmatpush.msra.mxu0 0.0
        %5422 = vmatpush.msra.mxu0 0.0
        %5423 = vmatpush.msra.mxu0 0.0
        %5424 = vmatpush.msra.mxu0 0.0
        %5425 = vmatpush.msra.mxu0 0.0
        %5426 = vmatpush.msra.mxu0 0.0
        %5427 = vmatpush.msra.mxu0 0.0
        %5428 = vmatpush.msra.mxu0 0.0
        %5429 = vmatpush.msra.mxu0 0.0
        %5430 = vmatpush.msra.mxu0 0.0
        %v5431 = vand.u32 %v209, 4294901760
        %v5432 = vsub.f32 %v209, %v5431
        %v5433 = vand.u32 %v5432, 4294901760
        %5434 = vmatpush.msra.mxu0 %v5433
        %v5435 = vand.u32 %v208, 4294901760
        %v5436 = vsub.f32 %v208, %v5435
        %v5437 = vand.u32 %v5436, 4294901760
        %5438 = vmatpush.msra.mxu0 %v5437
        %v5439 = vand.u32 %v5306, 4294901760
        %5440 = vmatmul.f32.gmra.mxu0 %v5439
        %v5441 = vpop.f32.mrf.mxu0
        %v5442 = vadd.f32 %v5415, %v5441
        %5443 = vdwg.mxu0
        %5444 = vmatpush.msra.mxu0 0.0
        %5445 = vmatpush.msra.mxu0 0.0
        %5446 = vmatpush.msra.mxu0 0.0
        %5447 = vmatpush.msra.mxu0 0.0
        %5448 = vmatpush.msra.mxu0 0.0
        %5449 = vmatpush.msra.mxu0 0.0
        %5450 = vmatpush.msra.mxu0 0.0
        %5451 = vmatpush.msra.mxu0 0.0
        %5452 = vmatpush.msra.mxu0 0.0
        %5453 = vmatpush.msra.mxu0 0.0
        %5454 = vmatpush.msra.mxu0 0.0
        %5455 = vmatpush.msra.mxu0 0.0
        %5456 = vmatpush.msra.mxu0 0.0
        %5457 = vmatpush.msra.mxu0 0.0
        %v5458 = vand.u32 %v209, 4294901760
        %5459 = vmatpush.msra.mxu0 %v5458
        %v5460 = vand.u32 %v208, 4294901760
        %5461 = vmatpush.msra.mxu0 %v5460
        %v5462 = vand.u32 %v5306, 4294901760
        %5463 = vmatmul.f32.gmra.mxu0 %v5462
        %v5464 = vpop.f32.mrf.mxu0
        %v5465 = vadd.f32 %v5442, %v5464
        %5466 = vdwg.mxu0
        %v5468 = vsel %vm485, %v5141, 0
        %5470 = vmatpush.msra.mxu0 0.0
        %5471 = vmatpush.msra.mxu0 0.0
        %5472 = vmatpush.msra.mxu0 0.0
        %5473 = vmatpush.msra.mxu0 0.0
        %5474 = vmatpush.msra.mxu0 0.0
        %5475 = vmatpush.msra.mxu0 0.0
        %5476 = vmatpush.msra.mxu0 0.0
        %5477 = vmatpush.msra.mxu0 0.0
        %5478 = vmatpush.msra.mxu0 0.0
        %5479 = vmatpush.msra.mxu0 0.0
        %5480 = vmatpush.msra.mxu0 0.0
        %5481 = vmatpush.msra.mxu0 0.0
        %5482 = vmatpush.msra.mxu0 0.0
        %5483 = vmatpush.msra.mxu0 0.0
        %v5484 = vand.u32 %v212, 4294901760
        %5485 = vmatpush.msra.mxu0 %v5484
        %v5486 = vand.u32 %v211, 4294901760
        %5487 = vmatpush.msra.mxu0 %v5486
        %v5488 = vand.u32 %v5468, 4294901760
        %v5489 = vsub.f32 %v5468, %v5488
        %v5490 = vand.u32 %v5489, 4294901760
        %v5491 = vsub.f32 %v5489, %v5490
        %v5492 = vand.u32 %v5491, 4294901760
        %5493 = vmatmul.f32.gmra.mxu0 %v5492
        %v5494 = vpop.f32.mrf.mxu0
        %v5495 = vadd.f32 0.0, %v5494
        %5496 = vdwg.mxu0
        %5497 = vmatpush.msra.mxu0 0.0
        %5498 = vmatpush.msra.mxu0 0.0
        %5499 = vmatpush.msra.mxu0 0.0
        %5500 = vmatpush.msra.mxu0 0.0
        %5501 = vmatpush.msra.mxu0 0.0
        %5502 = vmatpush.msra.mxu0 0.0
        %5503 = vmatpush.msra.mxu0 0.0
        %5504 = vmatpush.msra.mxu0 0.0
        %5505 = vmatpush.msra.mxu0 0.0
        %5506 = vmatpush.msra.mxu0 0.0
        %5507 = vmatpush.msra.mxu0 0.0
        %5508 = vmatpush.msra.mxu0 0.0
        %5509 = vmatpush.msra.mxu0 0.0
        %5510 = vmatpush.msra.mxu0 0.0
        %v5511 = vand.u32 %v212, 4294901760
        %v5512 = vsub.f32 %v212, %v5511
        %v5513 = vand.u32 %v5512, 4294901760
        %v5514 = vsub.f32 %v5512, %v5513
        %v5515 = vand.u32 %v5514, 4294901760
        %5516 = vmatpush.msra.mxu0 %v5515
        %v5517 = vand.u32 %v211, 4294901760
        %v5518 = vsub.f32 %v211, %v5517
        %v5519 = vand.u32 %v5518, 4294901760
        %v5520 = vsub.f32 %v5518, %v5519
        %v5521 = vand.u32 %v5520, 4294901760
        %5522 = vmatpush.msra.mxu0 %v5521
        %v5523 = vand.u32 %v5468, 4294901760
        %5524 = vmatmul.f32.gmra.mxu0 %v5523
        %v5525 = vpop.f32.mrf.mxu0
        %v5526 = vadd.f32 %v5495, %v5525
        %5527 = vdwg.mxu0
        %5528 = vmatpush.msra.mxu0 0.0
        %5529 = vmatpush.msra.mxu0 0.0
        %5530 = vmatpush.msra.mxu0 0.0
        %5531 = vmatpush.msra.mxu0 0.0
        %5532 = vmatpush.msra.mxu0 0.0
        %5533 = vmatpush.msra.mxu0 0.0
        %5534 = vmatpush.msra.mxu0 0.0
        %5535 = vmatpush.msra.mxu0 0.0
        %5536 = vmatpush.msra.mxu0 0.0
        %5537 = vmatpush.msra.mxu0 0.0
        %5538 = vmatpush.msra.mxu0 0.0
        %5539 = vmatpush.msra.mxu0 0.0
        %5540 = vmatpush.msra.mxu0 0.0
        %5541 = vmatpush.msra.mxu0 0.0
        %v5542 = vand.u32 %v212, 4294901760
        %v5543 = vsub.f32 %v212, %v5542
        %5544 = vmatpush.msra.mxu0 %v5543
        %v5545 = vand.u32 %v211, 4294901760
        %v5546 = vsub.f32 %v211, %v5545
        %5547 = vmatpush.msra.mxu0 %v5546
        %v5548 = vand.u32 %v5468, 4294901760
        %v5549 = vsub.f32 %v5468, %v5548
        %5550 = vmatmul.f32.gmra.mxu0 %v5549
        %v5551 = vpop.f32.mrf.mxu0
        %v5552 = vadd.f32 %v5526, %v5551
        %5553 = vdwg.mxu0
        %5554 = vmatpush.msra.mxu0 0.0
        %5555 = vmatpush.msra.mxu0 0.0
        %5556 = vmatpush.msra.mxu0 0.0
        %5557 = vmatpush.msra.mxu0 0.0
        %5558 = vmatpush.msra.mxu0 0.0
        %5559 = vmatpush.msra.mxu0 0.0
        %5560 = vmatpush.msra.mxu0 0.0
        %5561 = vmatpush.msra.mxu0 0.0
        %5562 = vmatpush.msra.mxu0 0.0
        %5563 = vmatpush.msra.mxu0 0.0
        %5564 = vmatpush.msra.mxu0 0.0
        %5565 = vmatpush.msra.mxu0 0.0
        %5566 = vmatpush.msra.mxu0 0.0
        %5567 = vmatpush.msra.mxu0 0.0
        %v5568 = vand.u32 %v212, 4294901760
        %5569 = vmatpush.msra.mxu0 %v5568
        %v5570 = vand.u32 %v211, 4294901760
        %5571 = vmatpush.msra.mxu0 %v5570
        %v5572 = vand.u32 %v5468, 4294901760
        %v5573 = vsub.f32 %v5468, %v5572
        %v5574 = vand.u32 %v5573, 4294901760
        %5575 = vmatmul.f32.gmra.mxu0 %v5574
        %v5576 = vpop.f32.mrf.mxu0
        %v5577 = vadd.f32 %v5552, %v5576
        %5578 = vdwg.mxu0
        %5579 = vmatpush.msra.mxu0 0.0
        %5580 = vmatpush.msra.mxu0 0.0
        %5581 = vmatpush.msra.mxu0 0.0
        %5582 = vmatpush.msra.mxu0 0.0
        %5583 = vmatpush.msra.mxu0 0.0
        %5584 = vmatpush.msra.mxu0 0.0
        %5585 = vmatpush.msra.mxu0 0.0
        %5586 = vmatpush.msra.mxu0 0.0
        %5587 = vmatpush.msra.mxu0 0.0
        %5588 = vmatpush.msra.mxu0 0.0
        %5589 = vmatpush.msra.mxu0 0.0
        %5590 = vmatpush.msra.mxu0 0.0
        %5591 = vmatpush.msra.mxu0 0.0
        %5592 = vmatpush.msra.mxu0 0.0
        %v5593 = vand.u32 %v212, 4294901760
        %v5594 = vsub.f32 %v212, %v5593
        %v5595 = vand.u32 %v5594, 4294901760
        %5596 = vmatpush.msra.mxu0 %v5595
        %v5597 = vand.u32 %v211, 4294901760
        %v5598 = vsub.f32 %v211, %v5597
        %v5599 = vand.u32 %v5598, 4294901760
        %5600 = vmatpush.msra.mxu0 %v5599
        %v5601 = vand.u32 %v5468, 4294901760
        %5602 = vmatmul.f32.gmra.mxu0 %v5601
        %v5603 = vpop.f32.mrf.mxu0
        %v5604 = vadd.f32 %v5577, %v5603
        %5605 = vdwg.mxu0
        %5606 = vmatpush.msra.mxu0 0.0
        %5607 = vmatpush.msra.mxu0 0.0
        %5608 = vmatpush.msra.mxu0 0.0
        %5609 = vmatpush.msra.mxu0 0.0
        %5610 = vmatpush.msra.mxu0 0.0
        %5611 = vmatpush.msra.mxu0 0.0
        %5612 = vmatpush.msra.mxu0 0.0
        %5613 = vmatpush.msra.mxu0 0.0
        %5614 = vmatpush.msra.mxu0 0.0
        %5615 = vmatpush.msra.mxu0 0.0
        %5616 = vmatpush.msra.mxu0 0.0
        %5617 = vmatpush.msra.mxu0 0.0
        %5618 = vmatpush.msra.mxu0 0.0
        %5619 = vmatpush.msra.mxu0 0.0
        %v5620 = vand.u32 %v212, 4294901760
        %5621 = vmatpush.msra.mxu0 %v5620
        %v5622 = vand.u32 %v211, 4294901760
        %5623 = vmatpush.msra.mxu0 %v5622
        %v5624 = vand.u32 %v5468, 4294901760
        %5625 = vmatmul.f32.gmra.mxu0 %v5624
        %v5626 = vpop.f32.mrf.mxu0
        %v5627 = vadd.f32 %v5604, %v5626
        %5628 = vdwg.mxu0
        %v5630 = vsel %vm485, %v5137, 0
        %5632 = vmatpush.msra.mxu0 0.0
        %5633 = vmatpush.msra.mxu0 0.0
        %5634 = vmatpush.msra.mxu0 0.0
        %5635 = vmatpush.msra.mxu0 0.0
        %5636 = vmatpush.msra.mxu0 0.0
        %5637 = vmatpush.msra.mxu0 0.0
        %5638 = vmatpush.msra.mxu0 0.0
        %5639 = vmatpush.msra.mxu0 0.0
        %5640 = vmatpush.msra.mxu0 0.0
        %5641 = vmatpush.msra.mxu0 0.0
        %5642 = vmatpush.msra.mxu0 0.0
        %5643 = vmatpush.msra.mxu0 0.0
        %5644 = vmatpush.msra.mxu0 0.0
        %5645 = vmatpush.msra.mxu0 0.0
        %v5646 = vand.u32 %v209, 4294901760
        %5647 = vmatpush.msra.mxu0 %v5646
        %v5648 = vand.u32 %v208, 4294901760
        %5649 = vmatpush.msra.mxu0 %v5648
        %v5650 = vand.u32 %v5630, 4294901760
        %v5651 = vsub.f32 %v5630, %v5650
        %v5652 = vand.u32 %v5651, 4294901760
        %v5653 = vsub.f32 %v5651, %v5652
        %v5654 = vand.u32 %v5653, 4294901760
        %5655 = vmatmul.f32.gmra.mxu0 %v5654
        %v5656 = vpop.f32.mrf.mxu0
        %v5657 = vadd.f32 %v5627, %v5656
        %5658 = vdwg.mxu0
        %5659 = vmatpush.msra.mxu0 0.0
        %5660 = vmatpush.msra.mxu0 0.0
        %5661 = vmatpush.msra.mxu0 0.0
        %5662 = vmatpush.msra.mxu0 0.0
        %5663 = vmatpush.msra.mxu0 0.0
        %5664 = vmatpush.msra.mxu0 0.0
        %5665 = vmatpush.msra.mxu0 0.0
        %5666 = vmatpush.msra.mxu0 0.0
        %5667 = vmatpush.msra.mxu0 0.0
        %5668 = vmatpush.msra.mxu0 0.0
        %5669 = vmatpush.msra.mxu0 0.0
        %5670 = vmatpush.msra.mxu0 0.0
        %5671 = vmatpush.msra.mxu0 0.0
        %5672 = vmatpush.msra.mxu0 0.0
        %v5673 = vand.u32 %v209, 4294901760
        %v5674 = vsub.f32 %v209, %v5673
        %v5675 = vand.u32 %v5674, 4294901760
        %v5676 = vsub.f32 %v5674, %v5675
        %v5677 = vand.u32 %v5676, 4294901760
        %5678 = vmatpush.msra.mxu0 %v5677
        %v5679 = vand.u32 %v208, 4294901760
        %v5680 = vsub.f32 %v208, %v5679
        %v5681 = vand.u32 %v5680, 4294901760
        %v5682 = vsub.f32 %v5680, %v5681
        %v5683 = vand.u32 %v5682, 4294901760
        %5684 = vmatpush.msra.mxu0 %v5683
        %v5685 = vand.u32 %v5630, 4294901760
        %5686 = vmatmul.f32.gmra.mxu0 %v5685
        %v5687 = vpop.f32.mrf.mxu0
        %v5688 = vadd.f32 %v5657, %v5687
        %5689 = vdwg.mxu0
        %5690 = vmatpush.msra.mxu0 0.0
        %5691 = vmatpush.msra.mxu0 0.0
        %5692 = vmatpush.msra.mxu0 0.0
        %5693 = vmatpush.msra.mxu0 0.0
        %5694 = vmatpush.msra.mxu0 0.0
        %5695 = vmatpush.msra.mxu0 0.0
        %5696 = vmatpush.msra.mxu0 0.0
        %5697 = vmatpush.msra.mxu0 0.0
        %5698 = vmatpush.msra.mxu0 0.0
        %5699 = vmatpush.msra.mxu0 0.0
        %5700 = vmatpush.msra.mxu0 0.0
        %5701 = vmatpush.msra.mxu0 0.0
        %5702 = vmatpush.msra.mxu0 0.0
        %5703 = vmatpush.msra.mxu0 0.0
        %v5704 = vand.u32 %v209, 4294901760
        %v5705 = vsub.f32 %v209, %v5704
        %5706 = vmatpush.msra.mxu0 %v5705
        %v5707 = vand.u32 %v208, 4294901760
        %v5708 = vsub.f32 %v208, %v5707
        %5709 = vmatpush.msra.mxu0 %v5708
        %v5710 = vand.u32 %v5630, 4294901760
        %v5711 = vsub.f32 %v5630, %v5710
        %5712 = vmatmul.f32.gmra.mxu0 %v5711
        %v5713 = vpop.f32.mrf.mxu0
        %v5714 = vadd.f32 %v5688, %v5713
        %5715 = vdwg.mxu0
        %5716 = vmatpush.msra.mxu0 0.0
        %5717 = vmatpush.msra.mxu0 0.0
        %5718 = vmatpush.msra.mxu0 0.0
        %5719 = vmatpush.msra.mxu0 0.0
        %5720 = vmatpush.msra.mxu0 0.0
        %5721 = vmatpush.msra.mxu0 0.0
        %5722 = vmatpush.msra.mxu0 0.0
        %5723 = vmatpush.msra.mxu0 0.0
        %5724 = vmatpush.msra.mxu0 0.0
        %5725 = vmatpush.msra.mxu0 0.0
        %5726 = vmatpush.msra.mxu0 0.0
        %5727 = vmatpush.msra.mxu0 0.0
        %5728 = vmatpush.msra.mxu0 0.0
        %5729 = vmatpush.msra.mxu0 0.0
        %v5730 = vand.u32 %v209, 4294901760
        %5731 = vmatpush.msra.mxu0 %v5730
        %v5732 = vand.u32 %v208, 4294901760
        %5733 = vmatpush.msra.mxu0 %v5732
        %v5734 = vand.u32 %v5630, 4294901760
        %v5735 = vsub.f32 %v5630, %v5734
        %v5736 = vand.u32 %v5735, 4294901760
        %5737 = vmatmul.f32.gmra.mxu0 %v5736
        %v5738 = vpop.f32.mrf.mxu0
        %v5739 = vadd.f32 %v5714, %v5738
        %5740 = vdwg.mxu0
        %5741 = vmatpush.msra.mxu0 0.0
        %5742 = vmatpush.msra.mxu0 0.0
        %5743 = vmatpush.msra.mxu0 0.0
        %5744 = vmatpush.msra.mxu0 0.0
        %5745 = vmatpush.msra.mxu0 0.0
        %5746 = vmatpush.msra.mxu0 0.0
        %5747 = vmatpush.msra.mxu0 0.0
        %5748 = vmatpush.msra.mxu0 0.0
        %5749 = vmatpush.msra.mxu0 0.0
        %5750 = vmatpush.msra.mxu0 0.0
        %5751 = vmatpush.msra.mxu0 0.0
        %5752 = vmatpush.msra.mxu0 0.0
        %5753 = vmatpush.msra.mxu0 0.0
        %5754 = vmatpush.msra.mxu0 0.0
        %v5755 = vand.u32 %v209, 4294901760
        %v5756 = vsub.f32 %v209, %v5755
        %v5757 = vand.u32 %v5756, 4294901760
        %5758 = vmatpush.msra.mxu0 %v5757
        %v5759 = vand.u32 %v208, 4294901760
        %v5760 = vsub.f32 %v208, %v5759
        %v5761 = vand.u32 %v5760, 4294901760
        %5762 = vmatpush.msra.mxu0 %v5761
        %v5763 = vand.u32 %v5630, 4294901760
        %5764 = vmatmul.f32.gmra.mxu0 %v5763
        %v5765 = vpop.f32.mrf.mxu0
        %v5766 = vadd.f32 %v5739, %v5765
        %5767 = vdwg.mxu0
        %5768 = vmatpush.msra.mxu0 0.0
        %5769 = vmatpush.msra.mxu0 0.0
        %5770 = vmatpush.msra.mxu0 0.0
        %5771 = vmatpush.msra.mxu0 0.0
        %5772 = vmatpush.msra.mxu0 0.0
        %5773 = vmatpush.msra.mxu0 0.0
        %5774 = vmatpush.msra.mxu0 0.0
        %5775 = vmatpush.msra.mxu0 0.0
        %5776 = vmatpush.msra.mxu0 0.0
        %5777 = vmatpush.msra.mxu0 0.0
        %5778 = vmatpush.msra.mxu0 0.0
        %5779 = vmatpush.msra.mxu0 0.0
        %5780 = vmatpush.msra.mxu0 0.0
        %5781 = vmatpush.msra.mxu0 0.0
        %v5782 = vand.u32 %v209, 4294901760
        %5783 = vmatpush.msra.mxu0 %v5782
        %v5784 = vand.u32 %v208, 4294901760
        %5785 = vmatpush.msra.mxu0 %v5784
        %v5786 = vand.u32 %v5630, 4294901760
        %5787 = vmatmul.f32.gmra.mxu0 %v5786
        %v5788 = vpop.f32.mrf.mxu0
        %v5789 = vadd.f32 %v5766, %v5788
        %5790 = vdwg.mxu0
        %5792 = vrot.lane.b32.xlu0 %v5789, 32
        %v5793 = vpop.permute.xlu0 %5792
        %v5795 = vsel %vm1138, %v5465, %v5793
        %v5797 = vrot.slane %v5795, 1
        %v5798 = vrot.slane %v5795, 2
        %v5799 = vrot.slane %v5795, 3
        %v5800 = vrot.slane %v5795, 4
        %v5801 = vrot.slane %v5795, 5
        %v5802 = vrot.slane %v5795, 6
        %v5803 = vrot.slane %v5795, 7
        %5811 = vst.msk [vmem:[%s203 + $0x5] sm:$0x1] %vm1155, %v5795
        %5812 = vst.msk [vmem:[%s203 + $0xd] sm:$0x1] %vm1155, %v5797
        %5813 = vst.msk [vmem:[%s203 + $0x15] sm:$0x1] %vm1155, %v5798
        %5814 = vst.msk [vmem:[%s203 + $0x1d] sm:$0x1] %vm1155, %v5799
        %5815 = vst.msk [vmem:[%s203 + $0x25] sm:$0x1] %vm1155, %v5800
        %5816 = vst.msk [vmem:[%s203 + $0x2d] sm:$0x1] %vm1155, %v5801
        %5817 = vst.msk [vmem:[%s203 + $0x35] sm:$0x1] %vm1155, %v5802
        %5818 = vst.msk [vmem:[%s203 + $0x3d] sm:$0x1] %vm1155, %v5803
        %v5819 = vld [vmem:[%s181 + $0x6] sm:$0x1]
        %v5820 = vld [vmem:[%s181 + $0xe] sm:$0x1]
        %v5821 = vld [vmem:[%s181 + $0x16] sm:$0x1]
        %v5822 = vld [vmem:[%s181 + $0x1e] sm:$0x1]
        %v5827 = vrot.slane %v5820, 7
        %v5828 = vsel %vm222, %v5827, %v5819
        %v5829 = vrot.slane %v5821, 6
        %v5830 = vsel %vm225, %v5829, %v5828
        %v5831 = vrot.slane %v5822, 5
        %v5832 = vsel %vm228, %v5831, %v5830
        %v5833 = vsel %vm243, %v5832, 0
        %5835 = vmatpush.msra.mxu0 0.0
        %5836 = vmatpush.msra.mxu0 0.0
        %5837 = vmatpush.msra.mxu0 0.0
        %5838 = vmatpush.msra.mxu0 0.0
        %5839 = vmatpush.msra.mxu0 0.0
        %5840 = vmatpush.msra.mxu0 0.0
        %5841 = vmatpush.msra.mxu0 0.0
        %5842 = vmatpush.msra.mxu0 0.0
        %5843 = vmatpush.msra.mxu0 0.0
        %5844 = vmatpush.msra.mxu0 0.0
        %5845 = vmatpush.msra.mxu0 0.0
        %5846 = vmatpush.msra.mxu0 0.0
        %5847 = vmatpush.msra.mxu0 0.0
        %5848 = vmatpush.msra.mxu0 0.0
        %5849 = vmatpush.msra.mxu0 0.0
        %v5850 = vand.u32 %v5833, 4294901760
        %5851 = vmatpush.msra.mxu0 %v5850
        %v5852 = vand.u32 %v232, 4294901760
        %v5853 = vsub.f32 %v232, %v5852
        %v5854 = vand.u32 %v5853, 4294901760
        %v5855 = vsub.f32 %v5853, %v5854
        %v5856 = vand.u32 %v5855, 4294901760
        %5857 = vmatmul.f32.gmra.mxu0 %v5856
        %v5858 = vpop.f32.mrf.mxu0
        %v5859 = vadd.f32 0.0, %v5858
        %v5860 = vand.u32 %v235, 4294901760
        %v5861 = vsub.f32 %v235, %v5860
        %v5862 = vand.u32 %v5861, 4294901760
        %v5863 = vsub.f32 %v5861, %v5862
        %v5864 = vand.u32 %v5863, 4294901760
        %5865 = vmatmul.f32.gmra.mxu0 %v5864
        %v5866 = vpop.f32.mrf.mxu0
        %v5867 = vadd.f32 0.0, %v5866
        %v5868 = vand.u32 %v238, 4294901760
        %v5869 = vsub.f32 %v238, %v5868
        %v5870 = vand.u32 %v5869, 4294901760
        %v5871 = vsub.f32 %v5869, %v5870
        %v5872 = vand.u32 %v5871, 4294901760
        %5873 = vmatmul.f32.gmra.mxu0 %v5872
        %v5874 = vpop.f32.mrf.mxu0
        %v5875 = vadd.f32 0.0, %v5874
        %v5876 = vand.u32 %v241, 4294901760
        %v5877 = vsub.f32 %v241, %v5876
        %v5878 = vand.u32 %v5877, 4294901760
        %v5879 = vsub.f32 %v5877, %v5878
        %v5880 = vand.u32 %v5879, 4294901760
        %5881 = vmatmul.f32.gmra.mxu0 %v5880
        %v5882 = vpop.f32.mrf.mxu0
        %v5883 = vadd.f32 0.0, %v5882
        %5884 = vdwg.mxu0
        %5885 = vmatpush.msra.mxu0 0.0
        %5886 = vmatpush.msra.mxu0 0.0
        %5887 = vmatpush.msra.mxu0 0.0
        %5888 = vmatpush.msra.mxu0 0.0
        %5889 = vmatpush.msra.mxu0 0.0
        %5890 = vmatpush.msra.mxu0 0.0
        %5891 = vmatpush.msra.mxu0 0.0
        %5892 = vmatpush.msra.mxu0 0.0
        %5893 = vmatpush.msra.mxu0 0.0
        %5894 = vmatpush.msra.mxu0 0.0
        %5895 = vmatpush.msra.mxu0 0.0
        %5896 = vmatpush.msra.mxu0 0.0
        %5897 = vmatpush.msra.mxu0 0.0
        %5898 = vmatpush.msra.mxu0 0.0
        %5899 = vmatpush.msra.mxu0 0.0
        %v5900 = vand.u32 %v5833, 4294901760
        %v5901 = vsub.f32 %v5833, %v5900
        %v5902 = vand.u32 %v5901, 4294901760
        %v5903 = vsub.f32 %v5901, %v5902
        %v5904 = vand.u32 %v5903, 4294901760
        %5905 = vmatpush.msra.mxu0 %v5904
        %v5906 = vand.u32 %v232, 4294901760
        %5907 = vmatmul.f32.gmra.mxu0 %v5906
        %v5908 = vpop.f32.mrf.mxu0
        %v5909 = vadd.f32 %v5859, %v5908
        %v5910 = vand.u32 %v235, 4294901760
        %5911 = vmatmul.f32.gmra.mxu0 %v5910
        %v5912 = vpop.f32.mrf.mxu0
        %v5913 = vadd.f32 %v5867, %v5912
        %v5914 = vand.u32 %v238, 4294901760
        %5915 = vmatmul.f32.gmra.mxu0 %v5914
        %v5916 = vpop.f32.mrf.mxu0
        %v5917 = vadd.f32 %v5875, %v5916
        %v5918 = vand.u32 %v241, 4294901760
        %5919 = vmatmul.f32.gmra.mxu0 %v5918
        %v5920 = vpop.f32.mrf.mxu0
        %v5921 = vadd.f32 %v5883, %v5920
        %5922 = vdwg.mxu0
        %5923 = vmatpush.msra.mxu0 0.0
        %5924 = vmatpush.msra.mxu0 0.0
        %5925 = vmatpush.msra.mxu0 0.0
        %5926 = vmatpush.msra.mxu0 0.0
        %5927 = vmatpush.msra.mxu0 0.0
        %5928 = vmatpush.msra.mxu0 0.0
        %5929 = vmatpush.msra.mxu0 0.0
        %5930 = vmatpush.msra.mxu0 0.0
        %5931 = vmatpush.msra.mxu0 0.0
        %5932 = vmatpush.msra.mxu0 0.0
        %5933 = vmatpush.msra.mxu0 0.0
        %5934 = vmatpush.msra.mxu0 0.0
        %5935 = vmatpush.msra.mxu0 0.0
        %5936 = vmatpush.msra.mxu0 0.0
        %5937 = vmatpush.msra.mxu0 0.0
        %v5938 = vand.u32 %v5833, 4294901760
        %v5939 = vsub.f32 %v5833, %v5938
        %5940 = vmatpush.msra.mxu0 %v5939
        %v5941 = vand.u32 %v232, 4294901760
        %v5942 = vsub.f32 %v232, %v5941
        %5943 = vmatmul.f32.gmra.mxu0 %v5942
        %v5944 = vpop.f32.mrf.mxu0
        %v5945 = vadd.f32 %v5909, %v5944
        %v5946 = vand.u32 %v235, 4294901760
        %v5947 = vsub.f32 %v235, %v5946
        %5948 = vmatmul.f32.gmra.mxu0 %v5947
        %v5949 = vpop.f32.mrf.mxu0
        %v5950 = vadd.f32 %v5913, %v5949
        %v5951 = vand.u32 %v238, 4294901760
        %v5952 = vsub.f32 %v238, %v5951
        %5953 = vmatmul.f32.gmra.mxu0 %v5952
        %v5954 = vpop.f32.mrf.mxu0
        %v5955 = vadd.f32 %v5917, %v5954
        %v5956 = vand.u32 %v241, 4294901760
        %v5957 = vsub.f32 %v241, %v5956
        %5958 = vmatmul.f32.gmra.mxu0 %v5957
        %v5959 = vpop.f32.mrf.mxu0
        %v5960 = vadd.f32 %v5921, %v5959
        %5961 = vdwg.mxu0
        %5962 = vmatpush.msra.mxu0 0.0
        %5963 = vmatpush.msra.mxu0 0.0
        %5964 = vmatpush.msra.mxu0 0.0
        %5965 = vmatpush.msra.mxu0 0.0
        %5966 = vmatpush.msra.mxu0 0.0
        %5967 = vmatpush.msra.mxu0 0.0
        %5968 = vmatpush.msra.mxu0 0.0
        %5969 = vmatpush.msra.mxu0 0.0
        %5970 = vmatpush.msra.mxu0 0.0
        %5971 = vmatpush.msra.mxu0 0.0
        %5972 = vmatpush.msra.mxu0 0.0
        %5973 = vmatpush.msra.mxu0 0.0
        %5974 = vmatpush.msra.mxu0 0.0
        %5975 = vmatpush.msra.mxu0 0.0
        %5976 = vmatpush.msra.mxu0 0.0
        %v5977 = vand.u32 %v5833, 4294901760
        %5978 = vmatpush.msra.mxu0 %v5977
        %v5979 = vand.u32 %v232, 4294901760
        %v5980 = vsub.f32 %v232, %v5979
        %v5981 = vand.u32 %v5980, 4294901760
        %5982 = vmatmul.f32.gmra.mxu0 %v5981
        %v5983 = vpop.f32.mrf.mxu0
        %v5984 = vadd.f32 %v5945, %v5983
        %v5985 = vand.u32 %v235, 4294901760
        %v5986 = vsub.f32 %v235, %v5985
        %v5987 = vand.u32 %v5986, 4294901760
        %5988 = vmatmul.f32.gmra.mxu0 %v5987
        %v5989 = vpop.f32.mrf.mxu0
        %v5990 = vadd.f32 %v5950, %v5989
        %v5991 = vand.u32 %v238, 4294901760
        %v5992 = vsub.f32 %v238, %v5991
        %v5993 = vand.u32 %v5992, 4294901760
        %5994 = vmatmul.f32.gmra.mxu0 %v5993
        %v5995 = vpop.f32.mrf.mxu0
        %v5996 = vadd.f32 %v5955, %v5995
        %v5997 = vand.u32 %v241, 4294901760
        %v5998 = vsub.f32 %v241, %v5997
        %v5999 = vand.u32 %v5998, 4294901760
        %6000 = vmatmul.f32.gmra.mxu0 %v5999
        %v6001 = vpop.f32.mrf.mxu0
        %v6002 = vadd.f32 %v5960, %v6001
        %6003 = vdwg.mxu0
        %6004 = vmatpush.msra.mxu0 0.0
        %6005 = vmatpush.msra.mxu0 0.0
        %6006 = vmatpush.msra.mxu0 0.0
        %6007 = vmatpush.msra.mxu0 0.0
        %6008 = vmatpush.msra.mxu0 0.0
        %6009 = vmatpush.msra.mxu0 0.0
        %6010 = vmatpush.msra.mxu0 0.0
        %6011 = vmatpush.msra.mxu0 0.0
        %6012 = vmatpush.msra.mxu0 0.0
        %6013 = vmatpush.msra.mxu0 0.0
        %6014 = vmatpush.msra.mxu0 0.0
        %6015 = vmatpush.msra.mxu0 0.0
        %6016 = vmatpush.msra.mxu0 0.0
        %6017 = vmatpush.msra.mxu0 0.0
        %6018 = vmatpush.msra.mxu0 0.0
        %v6019 = vand.u32 %v5833, 4294901760
        %v6020 = vsub.f32 %v5833, %v6019
        %v6021 = vand.u32 %v6020, 4294901760
        %6022 = vmatpush.msra.mxu0 %v6021
        %v6023 = vand.u32 %v232, 4294901760
        %6024 = vmatmul.f32.gmra.mxu0 %v6023
        %v6025 = vpop.f32.mrf.mxu0
        %v6026 = vadd.f32 %v5984, %v6025
        %v6027 = vand.u32 %v235, 4294901760
        %6028 = vmatmul.f32.gmra.mxu0 %v6027
        %v6029 = vpop.f32.mrf.mxu0
        %v6030 = vadd.f32 %v5990, %v6029
        %v6031 = vand.u32 %v238, 4294901760
        %6032 = vmatmul.f32.gmra.mxu0 %v6031
        %v6033 = vpop.f32.mrf.mxu0
        %v6034 = vadd.f32 %v5996, %v6033
        %v6035 = vand.u32 %v241, 4294901760
        %6036 = vmatmul.f32.gmra.mxu0 %v6035
        %v6037 = vpop.f32.mrf.mxu0
        %v6038 = vadd.f32 %v6002, %v6037
        %6039 = vdwg.mxu0
        %6040 = vmatpush.msra.mxu0 0.0
        %6041 = vmatpush.msra.mxu0 0.0
        %6042 = vmatpush.msra.mxu0 0.0
        %6043 = vmatpush.msra.mxu0 0.0
        %6044 = vmatpush.msra.mxu0 0.0
        %6045 = vmatpush.msra.mxu0 0.0
        %6046 = vmatpush.msra.mxu0 0.0
        %6047 = vmatpush.msra.mxu0 0.0
        %6048 = vmatpush.msra.mxu0 0.0
        %6049 = vmatpush.msra.mxu0 0.0
        %6050 = vmatpush.msra.mxu0 0.0
        %6051 = vmatpush.msra.mxu0 0.0
        %6052 = vmatpush.msra.mxu0 0.0
        %6053 = vmatpush.msra.mxu0 0.0
        %6054 = vmatpush.msra.mxu0 0.0
        %v6055 = vand.u32 %v5833, 4294901760
        %6056 = vmatpush.msra.mxu0 %v6055
        %v6057 = vand.u32 %v232, 4294901760
        %6058 = vmatmul.f32.gmra.mxu0 %v6057
        %v6059 = vpop.f32.mrf.mxu0
        %v6060 = vadd.f32 %v6026, %v6059
        %v6061 = vand.u32 %v235, 4294901760
        %6062 = vmatmul.f32.gmra.mxu0 %v6061
        %v6063 = vpop.f32.mrf.mxu0
        %v6064 = vadd.f32 %v6030, %v6063
        %v6065 = vand.u32 %v238, 4294901760
        %6066 = vmatmul.f32.gmra.mxu0 %v6065
        %v6067 = vpop.f32.mrf.mxu0
        %v6068 = vadd.f32 %v6034, %v6067
        %v6069 = vand.u32 %v241, 4294901760
        %6070 = vmatmul.f32.gmra.mxu0 %v6069
        %v6071 = vpop.f32.mrf.mxu0
        %v6072 = vadd.f32 %v6038, %v6071
        %6073 = vdwg.mxu0
        %v6075 = vsel %vm485, %v6064, 0
        %6077 = vmatpush.msra.mxu0 0.0
        %6078 = vmatpush.msra.mxu0 0.0
        %6079 = vmatpush.msra.mxu0 0.0
        %6080 = vmatpush.msra.mxu0 0.0
        %6081 = vmatpush.msra.mxu0 0.0
        %6082 = vmatpush.msra.mxu0 0.0
        %6083 = vmatpush.msra.mxu0 0.0
        %6084 = vmatpush.msra.mxu0 0.0
        %6085 = vmatpush.msra.mxu0 0.0
        %6086 = vmatpush.msra.mxu0 0.0
        %6087 = vmatpush.msra.mxu0 0.0
        %6088 = vmatpush.msra.mxu0 0.0
        %6089 = vmatpush.msra.mxu0 0.0
        %6090 = vmatpush.msra.mxu0 0.0
        %v6091 = vand.u32 %v212, 4294901760
        %6092 = vmatpush.msra.mxu0 %v6091
        %v6093 = vand.u32 %v211, 4294901760
        %6094 = vmatpush.msra.mxu0 %v6093
        %v6095 = vand.u32 %v6075, 4294901760
        %v6096 = vsub.f32 %v6075, %v6095
        %v6097 = vand.u32 %v6096, 4294901760
        %v6098 = vsub.f32 %v6096, %v6097
        %v6099 = vand.u32 %v6098, 4294901760
        %6100 = vmatmul.f32.gmra.mxu0 %v6099
        %v6101 = vpop.f32.mrf.mxu0
        %v6102 = vadd.f32 0.0, %v6101
        %6103 = vdwg.mxu0
        %6104 = vmatpush.msra.mxu0 0.0
        %6105 = vmatpush.msra.mxu0 0.0
        %6106 = vmatpush.msra.mxu0 0.0
        %6107 = vmatpush.msra.mxu0 0.0
        %6108 = vmatpush.msra.mxu0 0.0
        %6109 = vmatpush.msra.mxu0 0.0
        %6110 = vmatpush.msra.mxu0 0.0
        %6111 = vmatpush.msra.mxu0 0.0
        %6112 = vmatpush.msra.mxu0 0.0
        %6113 = vmatpush.msra.mxu0 0.0
        %6114 = vmatpush.msra.mxu0 0.0
        %6115 = vmatpush.msra.mxu0 0.0
        %6116 = vmatpush.msra.mxu0 0.0
        %6117 = vmatpush.msra.mxu0 0.0
        %v6118 = vand.u32 %v212, 4294901760
        %v6119 = vsub.f32 %v212, %v6118
        %v6120 = vand.u32 %v6119, 4294901760
        %v6121 = vsub.f32 %v6119, %v6120
        %v6122 = vand.u32 %v6121, 4294901760
        %6123 = vmatpush.msra.mxu0 %v6122
        %v6124 = vand.u32 %v211, 4294901760
        %v6125 = vsub.f32 %v211, %v6124
        %v6126 = vand.u32 %v6125, 4294901760
        %v6127 = vsub.f32 %v6125, %v6126
        %v6128 = vand.u32 %v6127, 4294901760
        %6129 = vmatpush.msra.mxu0 %v6128
        %v6130 = vand.u32 %v6075, 4294901760
        %6131 = vmatmul.f32.gmra.mxu0 %v6130
        %v6132 = vpop.f32.mrf.mxu0
        %v6133 = vadd.f32 %v6102, %v6132
        %6134 = vdwg.mxu0
        %6135 = vmatpush.msra.mxu0 0.0
        %6136 = vmatpush.msra.mxu0 0.0
        %6137 = vmatpush.msra.mxu0 0.0
        %6138 = vmatpush.msra.mxu0 0.0
        %6139 = vmatpush.msra.mxu0 0.0
        %6140 = vmatpush.msra.mxu0 0.0
        %6141 = vmatpush.msra.mxu0 0.0
        %6142 = vmatpush.msra.mxu0 0.0
        %6143 = vmatpush.msra.mxu0 0.0
        %6144 = vmatpush.msra.mxu0 0.0
        %6145 = vmatpush.msra.mxu0 0.0
        %6146 = vmatpush.msra.mxu0 0.0
        %6147 = vmatpush.msra.mxu0 0.0
        %6148 = vmatpush.msra.mxu0 0.0
        %v6149 = vand.u32 %v212, 4294901760
        %v6150 = vsub.f32 %v212, %v6149
        %6151 = vmatpush.msra.mxu0 %v6150
        %v6152 = vand.u32 %v211, 4294901760
        %v6153 = vsub.f32 %v211, %v6152
        %6154 = vmatpush.msra.mxu0 %v6153
        %v6155 = vand.u32 %v6075, 4294901760
        %v6156 = vsub.f32 %v6075, %v6155
        %6157 = vmatmul.f32.gmra.mxu0 %v6156
        %v6158 = vpop.f32.mrf.mxu0
        %v6159 = vadd.f32 %v6133, %v6158
        %6160 = vdwg.mxu0
        %6161 = vmatpush.msra.mxu0 0.0
        %6162 = vmatpush.msra.mxu0 0.0
        %6163 = vmatpush.msra.mxu0 0.0
        %6164 = vmatpush.msra.mxu0 0.0
        %6165 = vmatpush.msra.mxu0 0.0
        %6166 = vmatpush.msra.mxu0 0.0
        %6167 = vmatpush.msra.mxu0 0.0
        %6168 = vmatpush.msra.mxu0 0.0
        %6169 = vmatpush.msra.mxu0 0.0
        %6170 = vmatpush.msra.mxu0 0.0
        %6171 = vmatpush.msra.mxu0 0.0
        %6172 = vmatpush.msra.mxu0 0.0
        %6173 = vmatpush.msra.mxu0 0.0
        %6174 = vmatpush.msra.mxu0 0.0
        %v6175 = vand.u32 %v212, 4294901760
        %6176 = vmatpush.msra.mxu0 %v6175
        %v6177 = vand.u32 %v211, 4294901760
        %6178 = vmatpush.msra.mxu0 %v6177
        %v6179 = vand.u32 %v6075, 4294901760
        %v6180 = vsub.f32 %v6075, %v6179
        %v6181 = vand.u32 %v6180, 4294901760
        %6182 = vmatmul.f32.gmra.mxu0 %v6181
        %v6183 = vpop.f32.mrf.mxu0
        %v6184 = vadd.f32 %v6159, %v6183
        %6185 = vdwg.mxu0
        %6186 = vmatpush.msra.mxu0 0.0
        %6187 = vmatpush.msra.mxu0 0.0
        %6188 = vmatpush.msra.mxu0 0.0
        %6189 = vmatpush.msra.mxu0 0.0
        %6190 = vmatpush.msra.mxu0 0.0
        %6191 = vmatpush.msra.mxu0 0.0
        %6192 = vmatpush.msra.mxu0 0.0
        %6193 = vmatpush.msra.mxu0 0.0
        %6194 = vmatpush.msra.mxu0 0.0
        %6195 = vmatpush.msra.mxu0 0.0
        %6196 = vmatpush.msra.mxu0 0.0
        %6197 = vmatpush.msra.mxu0 0.0
        %6198 = vmatpush.msra.mxu0 0.0
        %6199 = vmatpush.msra.mxu0 0.0
        %v6200 = vand.u32 %v212, 4294901760
        %v6201 = vsub.f32 %v212, %v6200
        %v6202 = vand.u32 %v6201, 4294901760
        %6203 = vmatpush.msra.mxu0 %v6202
        %v6204 = vand.u32 %v211, 4294901760
        %v6205 = vsub.f32 %v211, %v6204
        %v6206 = vand.u32 %v6205, 4294901760
        %6207 = vmatpush.msra.mxu0 %v6206
        %v6208 = vand.u32 %v6075, 4294901760
        %6209 = vmatmul.f32.gmra.mxu0 %v6208
        %v6210 = vpop.f32.mrf.mxu0
        %v6211 = vadd.f32 %v6184, %v6210
        %6212 = vdwg.mxu0
        %6213 = vmatpush.msra.mxu0 0.0
        %6214 = vmatpush.msra.mxu0 0.0
        %6215 = vmatpush.msra.mxu0 0.0
        %6216 = vmatpush.msra.mxu0 0.0
        %6217 = vmatpush.msra.mxu0 0.0
        %6218 = vmatpush.msra.mxu0 0.0
        %6219 = vmatpush.msra.mxu0 0.0
        %6220 = vmatpush.msra.mxu0 0.0
        %6221 = vmatpush.msra.mxu0 0.0
        %6222 = vmatpush.msra.mxu0 0.0
        %6223 = vmatpush.msra.mxu0 0.0
        %6224 = vmatpush.msra.mxu0 0.0
        %6225 = vmatpush.msra.mxu0 0.0
        %6226 = vmatpush.msra.mxu0 0.0
        %v6227 = vand.u32 %v212, 4294901760
        %6228 = vmatpush.msra.mxu0 %v6227
        %v6229 = vand.u32 %v211, 4294901760
        %6230 = vmatpush.msra.mxu0 %v6229
        %v6231 = vand.u32 %v6075, 4294901760
        %6232 = vmatmul.f32.gmra.mxu0 %v6231
        %v6233 = vpop.f32.mrf.mxu0
        %v6234 = vadd.f32 %v6211, %v6233
        %6235 = vdwg.mxu0
        %v6237 = vsel %vm485, %v6060, 0
        %6239 = vmatpush.msra.mxu0 0.0
        %6240 = vmatpush.msra.mxu0 0.0
        %6241 = vmatpush.msra.mxu0 0.0
        %6242 = vmatpush.msra.mxu0 0.0
        %6243 = vmatpush.msra.mxu0 0.0
        %6244 = vmatpush.msra.mxu0 0.0
        %6245 = vmatpush.msra.mxu0 0.0
        %6246 = vmatpush.msra.mxu0 0.0
        %6247 = vmatpush.msra.mxu0 0.0
        %6248 = vmatpush.msra.mxu0 0.0
        %6249 = vmatpush.msra.mxu0 0.0
        %6250 = vmatpush.msra.mxu0 0.0
        %6251 = vmatpush.msra.mxu0 0.0
        %6252 = vmatpush.msra.mxu0 0.0
        %v6253 = vand.u32 %v209, 4294901760
        %6254 = vmatpush.msra.mxu0 %v6253
        %v6255 = vand.u32 %v208, 4294901760
        %6256 = vmatpush.msra.mxu0 %v6255
        %v6257 = vand.u32 %v6237, 4294901760
        %v6258 = vsub.f32 %v6237, %v6257
        %v6259 = vand.u32 %v6258, 4294901760
        %v6260 = vsub.f32 %v6258, %v6259
        %v6261 = vand.u32 %v6260, 4294901760
        %6262 = vmatmul.f32.gmra.mxu0 %v6261
        %v6263 = vpop.f32.mrf.mxu0
        %v6264 = vadd.f32 %v6234, %v6263
        %6265 = vdwg.mxu0
        %6266 = vmatpush.msra.mxu0 0.0
        %6267 = vmatpush.msra.mxu0 0.0
        %6268 = vmatpush.msra.mxu0 0.0
        %6269 = vmatpush.msra.mxu0 0.0
        %6270 = vmatpush.msra.mxu0 0.0
        %6271 = vmatpush.msra.mxu0 0.0
        %6272 = vmatpush.msra.mxu0 0.0
        %6273 = vmatpush.msra.mxu0 0.0
        %6274 = vmatpush.msra.mxu0 0.0
        %6275 = vmatpush.msra.mxu0 0.0
        %6276 = vmatpush.msra.mxu0 0.0
        %6277 = vmatpush.msra.mxu0 0.0
        %6278 = vmatpush.msra.mxu0 0.0
        %6279 = vmatpush.msra.mxu0 0.0
        %v6280 = vand.u32 %v209, 4294901760
        %v6281 = vsub.f32 %v209, %v6280
        %v6282 = vand.u32 %v6281, 4294901760
        %v6283 = vsub.f32 %v6281, %v6282
        %v6284 = vand.u32 %v6283, 4294901760
        %6285 = vmatpush.msra.mxu0 %v6284
        %v6286 = vand.u32 %v208, 4294901760
        %v6287 = vsub.f32 %v208, %v6286
        %v6288 = vand.u32 %v6287, 4294901760
        %v6289 = vsub.f32 %v6287, %v6288
        %v6290 = vand.u32 %v6289, 4294901760
        %6291 = vmatpush.msra.mxu0 %v6290
        %v6292 = vand.u32 %v6237, 4294901760
        %6293 = vmatmul.f32.gmra.mxu0 %v6292
        %v6294 = vpop.f32.mrf.mxu0
        %v6295 = vadd.f32 %v6264, %v6294
        %6296 = vdwg.mxu0
        %6297 = vmatpush.msra.mxu0 0.0
        %6298 = vmatpush.msra.mxu0 0.0
        %6299 = vmatpush.msra.mxu0 0.0
        %6300 = vmatpush.msra.mxu0 0.0
        %6301 = vmatpush.msra.mxu0 0.0
        %6302 = vmatpush.msra.mxu0 0.0
        %6303 = vmatpush.msra.mxu0 0.0
        %6304 = vmatpush.msra.mxu0 0.0
        %6305 = vmatpush.msra.mxu0 0.0
        %6306 = vmatpush.msra.mxu0 0.0
        %6307 = vmatpush.msra.mxu0 0.0
        %6308 = vmatpush.msra.mxu0 0.0
        %6309 = vmatpush.msra.mxu0 0.0
        %6310 = vmatpush.msra.mxu0 0.0
        %v6311 = vand.u32 %v209, 4294901760
        %v6312 = vsub.f32 %v209, %v6311
        %6313 = vmatpush.msra.mxu0 %v6312
        %v6314 = vand.u32 %v208, 4294901760
        %v6315 = vsub.f32 %v208, %v6314
        %6316 = vmatpush.msra.mxu0 %v6315
        %v6317 = vand.u32 %v6237, 4294901760
        %v6318 = vsub.f32 %v6237, %v6317
        %6319 = vmatmul.f32.gmra.mxu0 %v6318
        %v6320 = vpop.f32.mrf.mxu0
        %v6321 = vadd.f32 %v6295, %v6320
        %6322 = vdwg.mxu0
        %6323 = vmatpush.msra.mxu0 0.0
        %6324 = vmatpush.msra.mxu0 0.0
        %6325 = vmatpush.msra.mxu0 0.0
        %6326 = vmatpush.msra.mxu0 0.0
        %6327 = vmatpush.msra.mxu0 0.0
        %6328 = vmatpush.msra.mxu0 0.0
        %6329 = vmatpush.msra.mxu0 0.0
        %6330 = vmatpush.msra.mxu0 0.0
        %6331 = vmatpush.msra.mxu0 0.0
        %6332 = vmatpush.msra.mxu0 0.0
        %6333 = vmatpush.msra.mxu0 0.0
        %6334 = vmatpush.msra.mxu0 0.0
        %6335 = vmatpush.msra.mxu0 0.0
        %6336 = vmatpush.msra.mxu0 0.0
        %v6337 = vand.u32 %v209, 4294901760
        %6338 = vmatpush.msra.mxu0 %v6337
        %v6339 = vand.u32 %v208, 4294901760
        %6340 = vmatpush.msra.mxu0 %v6339
        %v6341 = vand.u32 %v6237, 4294901760
        %v6342 = vsub.f32 %v6237, %v6341
        %v6343 = vand.u32 %v6342, 4294901760
        %6344 = vmatmul.f32.gmra.mxu0 %v6343
        %v6345 = vpop.f32.mrf.mxu0
        %v6346 = vadd.f32 %v6321, %v6345
        %6347 = vdwg.mxu0
        %6348 = vmatpush.msra.mxu0 0.0
        %6349 = vmatpush.msra.mxu0 0.0
        %6350 = vmatpush.msra.mxu0 0.0
        %6351 = vmatpush.msra.mxu0 0.0
        %6352 = vmatpush.msra.mxu0 0.0
        %6353 = vmatpush.msra.mxu0 0.0
        %6354 = vmatpush.msra.mxu0 0.0
        %6355 = vmatpush.msra.mxu0 0.0
        %6356 = vmatpush.msra.mxu0 0.0
        %6357 = vmatpush.msra.mxu0 0.0
        %6358 = vmatpush.msra.mxu0 0.0
        %6359 = vmatpush.msra.mxu0 0.0
        %6360 = vmatpush.msra.mxu0 0.0
        %6361 = vmatpush.msra.mxu0 0.0
        %v6362 = vand.u32 %v209, 4294901760
        %v6363 = vsub.f32 %v209, %v6362
        %v6364 = vand.u32 %v6363, 4294901760
        %6365 = vmatpush.msra.mxu0 %v6364
        %v6366 = vand.u32 %v208, 4294901760
        %v6367 = vsub.f32 %v208, %v6366
        %v6368 = vand.u32 %v6367, 4294901760
        %6369 = vmatpush.msra.mxu0 %v6368
        %v6370 = vand.u32 %v6237, 4294901760
        %6371 = vmatmul.f32.gmra.mxu0 %v6370
        %v6372 = vpop.f32.mrf.mxu0
        %v6373 = vadd.f32 %v6346, %v6372
        %6374 = vdwg.mxu0
        %6375 = vmatpush.msra.mxu0 0.0
        %6376 = vmatpush.msra.mxu0 0.0
        %6377 = vmatpush.msra.mxu0 0.0
        %6378 = vmatpush.msra.mxu0 0.0
        %6379 = vmatpush.msra.mxu0 0.0
        %6380 = vmatpush.msra.mxu0 0.0
        %6381 = vmatpush.msra.mxu0 0.0
        %6382 = vmatpush.msra.mxu0 0.0
        %6383 = vmatpush.msra.mxu0 0.0
        %6384 = vmatpush.msra.mxu0 0.0
        %6385 = vmatpush.msra.mxu0 0.0
        %6386 = vmatpush.msra.mxu0 0.0
        %6387 = vmatpush.msra.mxu0 0.0
        %6388 = vmatpush.msra.mxu0 0.0
        %v6389 = vand.u32 %v209, 4294901760
        %6390 = vmatpush.msra.mxu0 %v6389
        %v6391 = vand.u32 %v208, 4294901760
        %6392 = vmatpush.msra.mxu0 %v6391
        %v6393 = vand.u32 %v6237, 4294901760
        %6394 = vmatmul.f32.gmra.mxu0 %v6393
        %v6395 = vpop.f32.mrf.mxu0
        %v6396 = vadd.f32 %v6373, %v6395
        %6397 = vdwg.mxu0
        %v6399 = vsel %vm485, %v6072, 0
        %6401 = vmatpush.msra.mxu0 0.0
        %6402 = vmatpush.msra.mxu0 0.0
        %6403 = vmatpush.msra.mxu0 0.0
        %6404 = vmatpush.msra.mxu0 0.0
        %6405 = vmatpush.msra.mxu0 0.0
        %6406 = vmatpush.msra.mxu0 0.0
        %6407 = vmatpush.msra.mxu0 0.0
        %6408 = vmatpush.msra.mxu0 0.0
        %6409 = vmatpush.msra.mxu0 0.0
        %6410 = vmatpush.msra.mxu0 0.0
        %6411 = vmatpush.msra.mxu0 0.0
        %6412 = vmatpush.msra.mxu0 0.0
        %6413 = vmatpush.msra.mxu0 0.0
        %6414 = vmatpush.msra.mxu0 0.0
        %v6415 = vand.u32 %v212, 4294901760
        %6416 = vmatpush.msra.mxu0 %v6415
        %v6417 = vand.u32 %v211, 4294901760
        %6418 = vmatpush.msra.mxu0 %v6417
        %v6419 = vand.u32 %v6399, 4294901760
        %v6420 = vsub.f32 %v6399, %v6419
        %v6421 = vand.u32 %v6420, 4294901760
        %v6422 = vsub.f32 %v6420, %v6421
        %v6423 = vand.u32 %v6422, 4294901760
        %6424 = vmatmul.f32.gmra.mxu0 %v6423
        %v6425 = vpop.f32.mrf.mxu0
        %v6426 = vadd.f32 0.0, %v6425
        %6427 = vdwg.mxu0
        %6428 = vmatpush.msra.mxu0 0.0
        %6429 = vmatpush.msra.mxu0 0.0
        %6430 = vmatpush.msra.mxu0 0.0
        %6431 = vmatpush.msra.mxu0 0.0
        %6432 = vmatpush.msra.mxu0 0.0
        %6433 = vmatpush.msra.mxu0 0.0
        %6434 = vmatpush.msra.mxu0 0.0
        %6435 = vmatpush.msra.mxu0 0.0
        %6436 = vmatpush.msra.mxu0 0.0
        %6437 = vmatpush.msra.mxu0 0.0
        %6438 = vmatpush.msra.mxu0 0.0
        %6439 = vmatpush.msra.mxu0 0.0
        %6440 = vmatpush.msra.mxu0 0.0
        %6441 = vmatpush.msra.mxu0 0.0
        %v6442 = vand.u32 %v212, 4294901760
        %v6443 = vsub.f32 %v212, %v6442
        %v6444 = vand.u32 %v6443, 4294901760
        %v6445 = vsub.f32 %v6443, %v6444
        %v6446 = vand.u32 %v6445, 4294901760
        %6447 = vmatpush.msra.mxu0 %v6446
        %v6448 = vand.u32 %v211, 4294901760
        %v6449 = vsub.f32 %v211, %v6448
        %v6450 = vand.u32 %v6449, 4294901760
        %v6451 = vsub.f32 %v6449, %v6450
        %v6452 = vand.u32 %v6451, 4294901760
        %6453 = vmatpush.msra.mxu0 %v6452
        %v6454 = vand.u32 %v6399, 4294901760
        %6455 = vmatmul.f32.gmra.mxu0 %v6454
        %v6456 = vpop.f32.mrf.mxu0
        %v6457 = vadd.f32 %v6426, %v6456
        %6458 = vdwg.mxu0
        %6459 = vmatpush.msra.mxu0 0.0
        %6460 = vmatpush.msra.mxu0 0.0
        %6461 = vmatpush.msra.mxu0 0.0
        %6462 = vmatpush.msra.mxu0 0.0
        %6463 = vmatpush.msra.mxu0 0.0
        %6464 = vmatpush.msra.mxu0 0.0
        %6465 = vmatpush.msra.mxu0 0.0
        %6466 = vmatpush.msra.mxu0 0.0
        %6467 = vmatpush.msra.mxu0 0.0
        %6468 = vmatpush.msra.mxu0 0.0
        %6469 = vmatpush.msra.mxu0 0.0
        %6470 = vmatpush.msra.mxu0 0.0
        %6471 = vmatpush.msra.mxu0 0.0
        %6472 = vmatpush.msra.mxu0 0.0
        %v6473 = vand.u32 %v212, 4294901760
        %v6474 = vsub.f32 %v212, %v6473
        %6475 = vmatpush.msra.mxu0 %v6474
        %v6476 = vand.u32 %v211, 4294901760
        %v6477 = vsub.f32 %v211, %v6476
        %6478 = vmatpush.msra.mxu0 %v6477
        %v6479 = vand.u32 %v6399, 4294901760
        %v6480 = vsub.f32 %v6399, %v6479
        %6481 = vmatmul.f32.gmra.mxu0 %v6480
        %v6482 = vpop.f32.mrf.mxu0
        %v6483 = vadd.f32 %v6457, %v6482
        %6484 = vdwg.mxu0
        %6485 = vmatpush.msra.mxu0 0.0
        %6486 = vmatpush.msra.mxu0 0.0
        %6487 = vmatpush.msra.mxu0 0.0
        %6488 = vmatpush.msra.mxu0 0.0
        %6489 = vmatpush.msra.mxu0 0.0
        %6490 = vmatpush.msra.mxu0 0.0
        %6491 = vmatpush.msra.mxu0 0.0
        %6492 = vmatpush.msra.mxu0 0.0
        %6493 = vmatpush.msra.mxu0 0.0
        %6494 = vmatpush.msra.mxu0 0.0
        %6495 = vmatpush.msra.mxu0 0.0
        %6496 = vmatpush.msra.mxu0 0.0
        %6497 = vmatpush.msra.mxu0 0.0
        %6498 = vmatpush.msra.mxu0 0.0
        %v6499 = vand.u32 %v212, 4294901760
        %6500 = vmatpush.msra.mxu0 %v6499
        %v6501 = vand.u32 %v211, 4294901760
        %6502 = vmatpush.msra.mxu0 %v6501
        %v6503 = vand.u32 %v6399, 4294901760
        %v6504 = vsub.f32 %v6399, %v6503
        %v6505 = vand.u32 %v6504, 4294901760
        %6506 = vmatmul.f32.gmra.mxu0 %v6505
        %v6507 = vpop.f32.mrf.mxu0
        %v6508 = vadd.f32 %v6483, %v6507
        %6509 = vdwg.mxu0
        %6510 = vmatpush.msra.mxu0 0.0
        %6511 = vmatpush.msra.mxu0 0.0
        %6512 = vmatpush.msra.mxu0 0.0
        %6513 = vmatpush.msra.mxu0 0.0
        %6514 = vmatpush.msra.mxu0 0.0
        %6515 = vmatpush.msra.mxu0 0.0
        %6516 = vmatpush.msra.mxu0 0.0
        %6517 = vmatpush.msra.mxu0 0.0
        %6518 = vmatpush.msra.mxu0 0.0
        %6519 = vmatpush.msra.mxu0 0.0
        %6520 = vmatpush.msra.mxu0 0.0
        %6521 = vmatpush.msra.mxu0 0.0
        %6522 = vmatpush.msra.mxu0 0.0
        %6523 = vmatpush.msra.mxu0 0.0
        %v6524 = vand.u32 %v212, 4294901760
        %v6525 = vsub.f32 %v212, %v6524
        %v6526 = vand.u32 %v6525, 4294901760
        %6527 = vmatpush.msra.mxu0 %v6526
        %v6528 = vand.u32 %v211, 4294901760
        %v6529 = vsub.f32 %v211, %v6528
        %v6530 = vand.u32 %v6529, 4294901760
        %6531 = vmatpush.msra.mxu0 %v6530
        %v6532 = vand.u32 %v6399, 4294901760
        %6533 = vmatmul.f32.gmra.mxu0 %v6532
        %v6534 = vpop.f32.mrf.mxu0
        %v6535 = vadd.f32 %v6508, %v6534
        %6536 = vdwg.mxu0
        %6537 = vmatpush.msra.mxu0 0.0
        %6538 = vmatpush.msra.mxu0 0.0
        %6539 = vmatpush.msra.mxu0 0.0
        %6540 = vmatpush.msra.mxu0 0.0
        %6541 = vmatpush.msra.mxu0 0.0
        %6542 = vmatpush.msra.mxu0 0.0
        %6543 = vmatpush.msra.mxu0 0.0
        %6544 = vmatpush.msra.mxu0 0.0
        %6545 = vmatpush.msra.mxu0 0.0
        %6546 = vmatpush.msra.mxu0 0.0
        %6547 = vmatpush.msra.mxu0 0.0
        %6548 = vmatpush.msra.mxu0 0.0
        %6549 = vmatpush.msra.mxu0 0.0
        %6550 = vmatpush.msra.mxu0 0.0
        %v6551 = vand.u32 %v212, 4294901760
        %6552 = vmatpush.msra.mxu0 %v6551
        %v6553 = vand.u32 %v211, 4294901760
        %6554 = vmatpush.msra.mxu0 %v6553
        %v6555 = vand.u32 %v6399, 4294901760
        %6556 = vmatmul.f32.gmra.mxu0 %v6555
        %v6557 = vpop.f32.mrf.mxu0
        %v6558 = vadd.f32 %v6535, %v6557
        %6559 = vdwg.mxu0
        %v6561 = vsel %vm485, %v6068, 0
        %6563 = vmatpush.msra.mxu0 0.0
        %6564 = vmatpush.msra.mxu0 0.0
        %6565 = vmatpush.msra.mxu0 0.0
        %6566 = vmatpush.msra.mxu0 0.0
        %6567 = vmatpush.msra.mxu0 0.0
        %6568 = vmatpush.msra.mxu0 0.0
        %6569 = vmatpush.msra.mxu0 0.0
        %6570 = vmatpush.msra.mxu0 0.0
        %6571 = vmatpush.msra.mxu0 0.0
        %6572 = vmatpush.msra.mxu0 0.0
        %6573 = vmatpush.msra.mxu0 0.0
        %6574 = vmatpush.msra.mxu0 0.0
        %6575 = vmatpush.msra.mxu0 0.0
        %6576 = vmatpush.msra.mxu0 0.0
        %v6577 = vand.u32 %v209, 4294901760
        %6578 = vmatpush.msra.mxu0 %v6577
        %v6579 = vand.u32 %v208, 4294901760
        %6580 = vmatpush.msra.mxu0 %v6579
        %v6581 = vand.u32 %v6561, 4294901760
        %v6582 = vsub.f32 %v6561, %v6581
        %v6583 = vand.u32 %v6582, 4294901760
        %v6584 = vsub.f32 %v6582, %v6583
        %v6585 = vand.u32 %v6584, 4294901760
        %6586 = vmatmul.f32.gmra.mxu0 %v6585
        %v6587 = vpop.f32.mrf.mxu0
        %v6588 = vadd.f32 %v6558, %v6587
        %6589 = vdwg.mxu0
        %6590 = vmatpush.msra.mxu0 0.0
        %6591 = vmatpush.msra.mxu0 0.0
        %6592 = vmatpush.msra.mxu0 0.0
        %6593 = vmatpush.msra.mxu0 0.0
        %6594 = vmatpush.msra.mxu0 0.0
        %6595 = vmatpush.msra.mxu0 0.0
        %6596 = vmatpush.msra.mxu0 0.0
        %6597 = vmatpush.msra.mxu0 0.0
        %6598 = vmatpush.msra.mxu0 0.0
        %6599 = vmatpush.msra.mxu0 0.0
        %6600 = vmatpush.msra.mxu0 0.0
        %6601 = vmatpush.msra.mxu0 0.0
        %6602 = vmatpush.msra.mxu0 0.0
        %6603 = vmatpush.msra.mxu0 0.0
        %v6604 = vand.u32 %v209, 4294901760
        %v6605 = vsub.f32 %v209, %v6604
        %v6606 = vand.u32 %v6605, 4294901760
        %v6607 = vsub.f32 %v6605, %v6606
        %v6608 = vand.u32 %v6607, 4294901760
        %6609 = vmatpush.msra.mxu0 %v6608
        %v6610 = vand.u32 %v208, 4294901760
        %v6611 = vsub.f32 %v208, %v6610
        %v6612 = vand.u32 %v6611, 4294901760
        %v6613 = vsub.f32 %v6611, %v6612
        %v6614 = vand.u32 %v6613, 4294901760
        %6615 = vmatpush.msra.mxu0 %v6614
        %v6616 = vand.u32 %v6561, 4294901760
        %6617 = vmatmul.f32.gmra.mxu0 %v6616
        %v6618 = vpop.f32.mrf.mxu0
        %v6619 = vadd.f32 %v6588, %v6618
        %6620 = vdwg.mxu0
        %6621 = vmatpush.msra.mxu0 0.0
        %6622 = vmatpush.msra.mxu0 0.0
        %6623 = vmatpush.msra.mxu0 0.0
        %6624 = vmatpush.msra.mxu0 0.0
        %6625 = vmatpush.msra.mxu0 0.0
        %6626 = vmatpush.msra.mxu0 0.0
        %6627 = vmatpush.msra.mxu0 0.0
        %6628 = vmatpush.msra.mxu0 0.0
        %6629 = vmatpush.msra.mxu0 0.0
        %6630 = vmatpush.msra.mxu0 0.0
        %6631 = vmatpush.msra.mxu0 0.0
        %6632 = vmatpush.msra.mxu0 0.0
        %6633 = vmatpush.msra.mxu0 0.0
        %6634 = vmatpush.msra.mxu0 0.0
        %v6635 = vand.u32 %v209, 4294901760
        %v6636 = vsub.f32 %v209, %v6635
        %6637 = vmatpush.msra.mxu0 %v6636
        %v6638 = vand.u32 %v208, 4294901760
        %v6639 = vsub.f32 %v208, %v6638
        %6640 = vmatpush.msra.mxu0 %v6639
        %v6641 = vand.u32 %v6561, 4294901760
        %v6642 = vsub.f32 %v6561, %v6641
        %6643 = vmatmul.f32.gmra.mxu0 %v6642
        %v6644 = vpop.f32.mrf.mxu0
        %v6645 = vadd.f32 %v6619, %v6644
        %6646 = vdwg.mxu0
        %6647 = vmatpush.msra.mxu0 0.0
        %6648 = vmatpush.msra.mxu0 0.0
        %6649 = vmatpush.msra.mxu0 0.0
        %6650 = vmatpush.msra.mxu0 0.0
        %6651 = vmatpush.msra.mxu0 0.0
        %6652 = vmatpush.msra.mxu0 0.0
        %6653 = vmatpush.msra.mxu0 0.0
        %6654 = vmatpush.msra.mxu0 0.0
        %6655 = vmatpush.msra.mxu0 0.0
        %6656 = vmatpush.msra.mxu0 0.0
        %6657 = vmatpush.msra.mxu0 0.0
        %6658 = vmatpush.msra.mxu0 0.0
        %6659 = vmatpush.msra.mxu0 0.0
        %6660 = vmatpush.msra.mxu0 0.0
        %v6661 = vand.u32 %v209, 4294901760
        %6662 = vmatpush.msra.mxu0 %v6661
        %v6663 = vand.u32 %v208, 4294901760
        %6664 = vmatpush.msra.mxu0 %v6663
        %v6665 = vand.u32 %v6561, 4294901760
        %v6666 = vsub.f32 %v6561, %v6665
        %v6667 = vand.u32 %v6666, 4294901760
        %6668 = vmatmul.f32.gmra.mxu0 %v6667
        %v6669 = vpop.f32.mrf.mxu0
        %v6670 = vadd.f32 %v6645, %v6669
        %6671 = vdwg.mxu0
        %6672 = vmatpush.msra.mxu0 0.0
        %6673 = vmatpush.msra.mxu0 0.0
        %6674 = vmatpush.msra.mxu0 0.0
        %6675 = vmatpush.msra.mxu0 0.0
        %6676 = vmatpush.msra.mxu0 0.0
        %6677 = vmatpush.msra.mxu0 0.0
        %6678 = vmatpush.msra.mxu0 0.0
        %6679 = vmatpush.msra.mxu0 0.0
        %6680 = vmatpush.msra.mxu0 0.0
        %6681 = vmatpush.msra.mxu0 0.0
        %6682 = vmatpush.msra.mxu0 0.0
        %6683 = vmatpush.msra.mxu0 0.0
        %6684 = vmatpush.msra.mxu0 0.0
        %6685 = vmatpush.msra.mxu0 0.0
        %v6686 = vand.u32 %v209, 4294901760
        %v6687 = vsub.f32 %v209, %v6686
        %v6688 = vand.u32 %v6687, 4294901760
        %6689 = vmatpush.msra.mxu0 %v6688
        %v6690 = vand.u32 %v208, 4294901760
        %v6691 = vsub.f32 %v208, %v6690
        %v6692 = vand.u32 %v6691, 4294901760
        %6693 = vmatpush.msra.mxu0 %v6692
        %v6694 = vand.u32 %v6561, 4294901760
        %6695 = vmatmul.f32.gmra.mxu0 %v6694
        %v6696 = vpop.f32.mrf.mxu0
        %v6697 = vadd.f32 %v6670, %v6696
        %6698 = vdwg.mxu0
        %6699 = vmatpush.msra.mxu0 0.0
        %6700 = vmatpush.msra.mxu0 0.0
        %6701 = vmatpush.msra.mxu0 0.0
        %6702 = vmatpush.msra.mxu0 0.0
        %6703 = vmatpush.msra.mxu0 0.0
        %6704 = vmatpush.msra.mxu0 0.0
        %6705 = vmatpush.msra.mxu0 0.0
        %6706 = vmatpush.msra.mxu0 0.0
        %6707 = vmatpush.msra.mxu0 0.0
        %6708 = vmatpush.msra.mxu0 0.0
        %6709 = vmatpush.msra.mxu0 0.0
        %6710 = vmatpush.msra.mxu0 0.0
        %6711 = vmatpush.msra.mxu0 0.0
        %6712 = vmatpush.msra.mxu0 0.0
        %v6713 = vand.u32 %v209, 4294901760
        %6714 = vmatpush.msra.mxu0 %v6713
        %v6715 = vand.u32 %v208, 4294901760
        %6716 = vmatpush.msra.mxu0 %v6715
        %v6717 = vand.u32 %v6561, 4294901760
        %6718 = vmatmul.f32.gmra.mxu0 %v6717
        %v6719 = vpop.f32.mrf.mxu0
        %v6720 = vadd.f32 %v6697, %v6719
        %6721 = vdwg.mxu0
        %6723 = vrot.lane.b32.xlu0 %v6720, 32
        %v6724 = vpop.permute.xlu0 %6723
        %v6726 = vsel %vm1138, %v6396, %v6724
        %v6728 = vrot.slane %v6726, 1
        %v6729 = vrot.slane %v6726, 2
        %v6730 = vrot.slane %v6726, 3
        %v6731 = vrot.slane %v6726, 4
        %v6732 = vrot.slane %v6726, 5
        %v6733 = vrot.slane %v6726, 6
        %v6734 = vrot.slane %v6726, 7
        %6742 = vst.msk [vmem:[%s203 + $0x6] sm:$0x1] %vm1155, %v6726
        %6743 = vst.msk [vmem:[%s203 + $0xe] sm:$0x1] %vm1155, %v6728
        %6744 = vst.msk [vmem:[%s203 + $0x16] sm:$0x1] %vm1155, %v6729
        %6745 = vst.msk [vmem:[%s203 + $0x1e] sm:$0x1] %vm1155, %v6730
        %6746 = vst.msk [vmem:[%s203 + $0x26] sm:$0x1] %vm1155, %v6731
        %6747 = vst.msk [vmem:[%s203 + $0x2e] sm:$0x1] %vm1155, %v6732
        %6748 = vst.msk [vmem:[%s203 + $0x36] sm:$0x1] %vm1155, %v6733
        %6749 = vst.msk [vmem:[%s203 + $0x3e] sm:$0x1] %vm1155, %v6734
        %v6750 = vld [vmem:[%s181 + $0x7] sm:$0x1]
        %v6751 = vld [vmem:[%s181 + $0xf] sm:$0x1]
        %v6752 = vld [vmem:[%s181 + $0x17] sm:$0x1]
        %v6753 = vld [vmem:[%s181 + $0x1f] sm:$0x1]
        %v6758 = vrot.slane %v6751, 7
        %v6759 = vsel %vm222, %v6758, %v6750
        %v6760 = vrot.slane %v6752, 6
        %v6761 = vsel %vm225, %v6760, %v6759
        %v6762 = vrot.slane %v6753, 5
        %v6763 = vsel %vm228, %v6762, %v6761
        %v6764 = vsel %vm243, %v6763, 0
        %6766 = vmatpush.msra.mxu0 0.0
        %6767 = vmatpush.msra.mxu0 0.0
        %6768 = vmatpush.msra.mxu0 0.0
        %6769 = vmatpush.msra.mxu0 0.0
        %6770 = vmatpush.msra.mxu0 0.0
        %6771 = vmatpush.msra.mxu0 0.0
        %6772 = vmatpush.msra.mxu0 0.0
        %6773 = vmatpush.msra.mxu0 0.0
        %6774 = vmatpush.msra.mxu0 0.0
        %6775 = vmatpush.msra.mxu0 0.0
        %6776 = vmatpush.msra.mxu0 0.0
        %6777 = vmatpush.msra.mxu0 0.0
        %6778 = vmatpush.msra.mxu0 0.0
        %6779 = vmatpush.msra.mxu0 0.0
        %6780 = vmatpush.msra.mxu0 0.0
        %v6781 = vand.u32 %v6764, 4294901760
        %6782 = vmatpush.msra.mxu0 %v6781
        %v6783 = vand.u32 %v232, 4294901760
        %v6784 = vsub.f32 %v232, %v6783
        %v6785 = vand.u32 %v6784, 4294901760
        %v6786 = vsub.f32 %v6784, %v6785
        %v6787 = vand.u32 %v6786, 4294901760
        %6788 = vmatmul.f32.gmra.mxu0 %v6787
        %v6789 = vpop.f32.mrf.mxu0
        %v6790 = vadd.f32 0.0, %v6789
        %v6791 = vand.u32 %v235, 4294901760
        %v6792 = vsub.f32 %v235, %v6791
        %v6793 = vand.u32 %v6792, 4294901760
        %v6794 = vsub.f32 %v6792, %v6793
        %v6795 = vand.u32 %v6794, 4294901760
        %6796 = vmatmul.f32.gmra.mxu0 %v6795
        %v6797 = vpop.f32.mrf.mxu0
        %v6798 = vadd.f32 0.0, %v6797
        %v6799 = vand.u32 %v238, 4294901760
        %v6800 = vsub.f32 %v238, %v6799
        %v6801 = vand.u32 %v6800, 4294901760
        %v6802 = vsub.f32 %v6800, %v6801
        %v6803 = vand.u32 %v6802, 4294901760
        %6804 = vmatmul.f32.gmra.mxu0 %v6803
        %v6805 = vpop.f32.mrf.mxu0
        %v6806 = vadd.f32 0.0, %v6805
        %v6807 = vand.u32 %v241, 4294901760
        %v6808 = vsub.f32 %v241, %v6807
        %v6809 = vand.u32 %v6808, 4294901760
        %v6810 = vsub.f32 %v6808, %v6809
        %v6811 = vand.u32 %v6810, 4294901760
        %6812 = vmatmul.f32.gmra.mxu0 %v6811
        %v6813 = vpop.f32.mrf.mxu0
        %v6814 = vadd.f32 0.0, %v6813
        %6815 = vdwg.mxu0
        %6816 = vmatpush.msra.mxu0 0.0
        %6817 = vmatpush.msra.mxu0 0.0
        %6818 = vmatpush.msra.mxu0 0.0
        %6819 = vmatpush.msra.mxu0 0.0
        %6820 = vmatpush.msra.mxu0 0.0
        %6821 = vmatpush.msra.mxu0 0.0
        %6822 = vmatpush.msra.mxu0 0.0
        %6823 = vmatpush.msra.mxu0 0.0
        %6824 = vmatpush.msra.mxu0 0.0
        %6825 = vmatpush.msra.mxu0 0.0
        %6826 = vmatpush.msra.mxu0 0.0
        %6827 = vmatpush.msra.mxu0 0.0
        %6828 = vmatpush.msra.mxu0 0.0
        %6829 = vmatpush.msra.mxu0 0.0
        %6830 = vmatpush.msra.mxu0 0.0
        %v6831 = vand.u32 %v6764, 4294901760
        %v6832 = vsub.f32 %v6764, %v6831
        %v6833 = vand.u32 %v6832, 4294901760
        %v6834 = vsub.f32 %v6832, %v6833
        %v6835 = vand.u32 %v6834, 4294901760
        %6836 = vmatpush.msra.mxu0 %v6835
        %v6837 = vand.u32 %v232, 4294901760
        %6838 = vmatmul.f32.gmra.mxu0 %v6837
        %v6839 = vpop.f32.mrf.mxu0
        %v6840 = vadd.f32 %v6790, %v6839
        %v6841 = vand.u32 %v235, 4294901760
        %6842 = vmatmul.f32.gmra.mxu0 %v6841
        %v6843 = vpop.f32.mrf.mxu0
        %v6844 = vadd.f32 %v6798, %v6843
        %v6845 = vand.u32 %v238, 4294901760
        %6846 = vmatmul.f32.gmra.mxu0 %v6845
        %v6847 = vpop.f32.mrf.mxu0
        %v6848 = vadd.f32 %v6806, %v6847
        %v6849 = vand.u32 %v241, 4294901760
        %6850 = vmatmul.f32.gmra.mxu0 %v6849
        %v6851 = vpop.f32.mrf.mxu0
        %v6852 = vadd.f32 %v6814, %v6851
        %6853 = vdwg.mxu0
        %6854 = vmatpush.msra.mxu0 0.0
        %6855 = vmatpush.msra.mxu0 0.0
        %6856 = vmatpush.msra.mxu0 0.0
        %6857 = vmatpush.msra.mxu0 0.0
        %6858 = vmatpush.msra.mxu0 0.0
        %6859 = vmatpush.msra.mxu0 0.0
        %6860 = vmatpush.msra.mxu0 0.0
        %6861 = vmatpush.msra.mxu0 0.0
        %6862 = vmatpush.msra.mxu0 0.0
        %6863 = vmatpush.msra.mxu0 0.0
        %6864 = vmatpush.msra.mxu0 0.0
        %6865 = vmatpush.msra.mxu0 0.0
        %6866 = vmatpush.msra.mxu0 0.0
        %6867 = vmatpush.msra.mxu0 0.0
        %6868 = vmatpush.msra.mxu0 0.0
        %v6869 = vand.u32 %v6764, 4294901760
        %v6870 = vsub.f32 %v6764, %v6869
        %6871 = vmatpush.msra.mxu0 %v6870
        %v6872 = vand.u32 %v232, 4294901760
        %v6873 = vsub.f32 %v232, %v6872
        %6874 = vmatmul.f32.gmra.mxu0 %v6873
        %v6875 = vpop.f32.mrf.mxu0
        %v6876 = vadd.f32 %v6840, %v6875
        %v6877 = vand.u32 %v235, 4294901760
        %v6878 = vsub.f32 %v235, %v6877
        %6879 = vmatmul.f32.gmra.mxu0 %v6878
        %v6880 = vpop.f32.mrf.mxu0
        %v6881 = vadd.f32 %v6844, %v6880
        %v6882 = vand.u32 %v238, 4294901760
        %v6883 = vsub.f32 %v238, %v6882
        %6884 = vmatmul.f32.gmra.mxu0 %v6883
        %v6885 = vpop.f32.mrf.mxu0
        %v6886 = vadd.f32 %v6848, %v6885
        %v6887 = vand.u32 %v241, 4294901760
        %v6888 = vsub.f32 %v241, %v6887
        %6889 = vmatmul.f32.gmra.mxu0 %v6888
        %v6890 = vpop.f32.mrf.mxu0
        %v6891 = vadd.f32 %v6852, %v6890
        %6892 = vdwg.mxu0
        %6893 = vmatpush.msra.mxu0 0.0
        %6894 = vmatpush.msra.mxu0 0.0
        %6895 = vmatpush.msra.mxu0 0.0
        %6896 = vmatpush.msra.mxu0 0.0
        %6897 = vmatpush.msra.mxu0 0.0
        %6898 = vmatpush.msra.mxu0 0.0
        %6899 = vmatpush.msra.mxu0 0.0
        %6900 = vmatpush.msra.mxu0 0.0
        %6901 = vmatpush.msra.mxu0 0.0
        %6902 = vmatpush.msra.mxu0 0.0
        %6903 = vmatpush.msra.mxu0 0.0
        %6904 = vmatpush.msra.mxu0 0.0
        %6905 = vmatpush.msra.mxu0 0.0
        %6906 = vmatpush.msra.mxu0 0.0
        %6907 = vmatpush.msra.mxu0 0.0
        %v6908 = vand.u32 %v6764, 4294901760
        %6909 = vmatpush.msra.mxu0 %v6908
        %v6910 = vand.u32 %v232, 4294901760
        %v6911 = vsub.f32 %v232, %v6910
        %v6912 = vand.u32 %v6911, 4294901760
        %6913 = vmatmul.f32.gmra.mxu0 %v6912
        %v6914 = vpop.f32.mrf.mxu0
        %v6915 = vadd.f32 %v6876, %v6914
        %v6916 = vand.u32 %v235, 4294901760
        %v6917 = vsub.f32 %v235, %v6916
        %v6918 = vand.u32 %v6917, 4294901760
        %6919 = vmatmul.f32.gmra.mxu0 %v6918
        %v6920 = vpop.f32.mrf.mxu0
        %v6921 = vadd.f32 %v6881, %v6920
        %v6922 = vand.u32 %v238, 4294901760
        %v6923 = vsub.f32 %v238, %v6922
        %v6924 = vand.u32 %v6923, 4294901760
        %6925 = vmatmul.f32.gmra.mxu0 %v6924
        %v6926 = vpop.f32.mrf.mxu0
        %v6927 = vadd.f32 %v6886, %v6926
        %v6928 = vand.u32 %v241, 4294901760
        %v6929 = vsub.f32 %v241, %v6928
        %v6930 = vand.u32 %v6929, 4294901760
        %6931 = vmatmul.f32.gmra.mxu0 %v6930
        %v6932 = vpop.f32.mrf.mxu0
        %v6933 = vadd.f32 %v6891, %v6932
        %6934 = vdwg.mxu0
        %6935 = vmatpush.msra.mxu0 0.0
        %6936 = vmatpush.msra.mxu0 0.0
        %6937 = vmatpush.msra.mxu0 0.0
        %6938 = vmatpush.msra.mxu0 0.0
        %6939 = vmatpush.msra.mxu0 0.0
        %6940 = vmatpush.msra.mxu0 0.0
        %6941 = vmatpush.msra.mxu0 0.0
        %6942 = vmatpush.msra.mxu0 0.0
        %6943 = vmatpush.msra.mxu0 0.0
        %6944 = vmatpush.msra.mxu0 0.0
        %6945 = vmatpush.msra.mxu0 0.0
        %6946 = vmatpush.msra.mxu0 0.0
        %6947 = vmatpush.msra.mxu0 0.0
        %6948 = vmatpush.msra.mxu0 0.0
        %6949 = vmatpush.msra.mxu0 0.0
        %v6950 = vand.u32 %v6764, 4294901760
        %v6951 = vsub.f32 %v6764, %v6950
        %v6952 = vand.u32 %v6951, 4294901760
        %6953 = vmatpush.msra.mxu0 %v6952
        %v6954 = vand.u32 %v232, 4294901760
        %6955 = vmatmul.f32.gmra.mxu0 %v6954
        %v6956 = vpop.f32.mrf.mxu0
        %v6957 = vadd.f32 %v6915, %v6956
        %v6958 = vand.u32 %v235, 4294901760
        %6959 = vmatmul.f32.gmra.mxu0 %v6958
        %v6960 = vpop.f32.mrf.mxu0
        %v6961 = vadd.f32 %v6921, %v6960
        %v6962 = vand.u32 %v238, 4294901760
        %6963 = vmatmul.f32.gmra.mxu0 %v6962
        %v6964 = vpop.f32.mrf.mxu0
        %v6965 = vadd.f32 %v6927, %v6964
        %v6966 = vand.u32 %v241, 4294901760
        %6967 = vmatmul.f32.gmra.mxu0 %v6966
        %v6968 = vpop.f32.mrf.mxu0
        %v6969 = vadd.f32 %v6933, %v6968
        %6970 = vdwg.mxu0
        %6971 = vmatpush.msra.mxu0 0.0
        %6972 = vmatpush.msra.mxu0 0.0
        %6973 = vmatpush.msra.mxu0 0.0
        %6974 = vmatpush.msra.mxu0 0.0
        %6975 = vmatpush.msra.mxu0 0.0
        %6976 = vmatpush.msra.mxu0 0.0
        %6977 = vmatpush.msra.mxu0 0.0
        %6978 = vmatpush.msra.mxu0 0.0
        %6979 = vmatpush.msra.mxu0 0.0
        %6980 = vmatpush.msra.mxu0 0.0
        %6981 = vmatpush.msra.mxu0 0.0
        %6982 = vmatpush.msra.mxu0 0.0
        %6983 = vmatpush.msra.mxu0 0.0
        %6984 = vmatpush.msra.mxu0 0.0
        %6985 = vmatpush.msra.mxu0 0.0
        %v6986 = vand.u32 %v6764, 4294901760
        %6987 = vmatpush.msra.mxu0 %v6986
        %v6988 = vand.u32 %v232, 4294901760
        %6989 = vmatmul.f32.gmra.mxu0 %v6988
        %v6990 = vpop.f32.mrf.mxu0
        %v6991 = vadd.f32 %v6957, %v6990
        %v6992 = vand.u32 %v235, 4294901760
        %6993 = vmatmul.f32.gmra.mxu0 %v6992
        %v6994 = vpop.f32.mrf.mxu0
        %v6995 = vadd.f32 %v6961, %v6994
        %v6996 = vand.u32 %v238, 4294901760
        %6997 = vmatmul.f32.gmra.mxu0 %v6996
        %v6998 = vpop.f32.mrf.mxu0
        %v6999 = vadd.f32 %v6965, %v6998
        %v7000 = vand.u32 %v241, 4294901760
        %7001 = vmatmul.f32.gmra.mxu0 %v7000
        %v7002 = vpop.f32.mrf.mxu0
        %v7003 = vadd.f32 %v6969, %v7002
        %7004 = vdwg.mxu0
        %v7006 = vsel %vm485, %v6995, 0
        %7008 = vmatpush.msra.mxu0 0.0
        %7009 = vmatpush.msra.mxu0 0.0
        %7010 = vmatpush.msra.mxu0 0.0
        %7011 = vmatpush.msra.mxu0 0.0
        %7012 = vmatpush.msra.mxu0 0.0
        %7013 = vmatpush.msra.mxu0 0.0
        %7014 = vmatpush.msra.mxu0 0.0
        %7015 = vmatpush.msra.mxu0 0.0
        %7016 = vmatpush.msra.mxu0 0.0
        %7017 = vmatpush.msra.mxu0 0.0
        %7018 = vmatpush.msra.mxu0 0.0
        %7019 = vmatpush.msra.mxu0 0.0
        %7020 = vmatpush.msra.mxu0 0.0
        %7021 = vmatpush.msra.mxu0 0.0
        %v7022 = vand.u32 %v212, 4294901760
        %7023 = vmatpush.msra.mxu0 %v7022
        %v7024 = vand.u32 %v211, 4294901760
        %7025 = vmatpush.msra.mxu0 %v7024
        %v7026 = vand.u32 %v7006, 4294901760
        %v7027 = vsub.f32 %v7006, %v7026
        %v7028 = vand.u32 %v7027, 4294901760
        %v7029 = vsub.f32 %v7027, %v7028
        %v7030 = vand.u32 %v7029, 4294901760
        %7031 = vmatmul.f32.gmra.mxu0 %v7030
        %v7032 = vpop.f32.mrf.mxu0
        %v7033 = vadd.f32 0.0, %v7032
        %7034 = vdwg.mxu0
        %7035 = vmatpush.msra.mxu0 0.0
        %7036 = vmatpush.msra.mxu0 0.0
        %7037 = vmatpush.msra.mxu0 0.0
        %7038 = vmatpush.msra.mxu0 0.0
        %7039 = vmatpush.msra.mxu0 0.0
        %7040 = vmatpush.msra.mxu0 0.0
        %7041 = vmatpush.msra.mxu0 0.0
        %7042 = vmatpush.msra.mxu0 0.0
        %7043 = vmatpush.msra.mxu0 0.0
        %7044 = vmatpush.msra.mxu0 0.0
        %7045 = vmatpush.msra.mxu0 0.0
        %7046 = vmatpush.msra.mxu0 0.0
        %7047 = vmatpush.msra.mxu0 0.0
        %7048 = vmatpush.msra.mxu0 0.0
        %v7049 = vand.u32 %v212, 4294901760
        %v7050 = vsub.f32 %v212, %v7049
        %v7051 = vand.u32 %v7050, 4294901760
        %v7052 = vsub.f32 %v7050, %v7051
        %v7053 = vand.u32 %v7052, 4294901760
        %7054 = vmatpush.msra.mxu0 %v7053
        %v7055 = vand.u32 %v211, 4294901760
        %v7056 = vsub.f32 %v211, %v7055
        %v7057 = vand.u32 %v7056, 4294901760
        %v7058 = vsub.f32 %v7056, %v7057
        %v7059 = vand.u32 %v7058, 4294901760
        %7060 = vmatpush.msra.mxu0 %v7059
        %v7061 = vand.u32 %v7006, 4294901760
        %7062 = vmatmul.f32.gmra.mxu0 %v7061
        %v7063 = vpop.f32.mrf.mxu0
        %v7064 = vadd.f32 %v7033, %v7063
        %7065 = vdwg.mxu0
        %7066 = vmatpush.msra.mxu0 0.0
        %7067 = vmatpush.msra.mxu0 0.0
        %7068 = vmatpush.msra.mxu0 0.0
        %7069 = vmatpush.msra.mxu0 0.0
        %7070 = vmatpush.msra.mxu0 0.0
        %7071 = vmatpush.msra.mxu0 0.0
        %7072 = vmatpush.msra.mxu0 0.0
        %7073 = vmatpush.msra.mxu0 0.0
        %7074 = vmatpush.msra.mxu0 0.0
        %7075 = vmatpush.msra.mxu0 0.0
        %7076 = vmatpush.msra.mxu0 0.0
        %7077 = vmatpush.msra.mxu0 0.0
        %7078 = vmatpush.msra.mxu0 0.0
        %7079 = vmatpush.msra.mxu0 0.0
        %v7080 = vand.u32 %v212, 4294901760
        %v7081 = vsub.f32 %v212, %v7080
        %7082 = vmatpush.msra.mxu0 %v7081
        %v7083 = vand.u32 %v211, 4294901760
        %v7084 = vsub.f32 %v211, %v7083
        %7085 = vmatpush.msra.mxu0 %v7084
        %v7086 = vand.u32 %v7006, 4294901760
        %v7087 = vsub.f32 %v7006, %v7086
        %7088 = vmatmul.f32.gmra.mxu0 %v7087
        %v7089 = vpop.f32.mrf.mxu0
        %v7090 = vadd.f32 %v7064, %v7089
        %7091 = vdwg.mxu0
        %7092 = vmatpush.msra.mxu0 0.0
        %7093 = vmatpush.msra.mxu0 0.0
        %7094 = vmatpush.msra.mxu0 0.0
        %7095 = vmatpush.msra.mxu0 0.0
        %7096 = vmatpush.msra.mxu0 0.0
        %7097 = vmatpush.msra.mxu0 0.0
        %7098 = vmatpush.msra.mxu0 0.0
        %7099 = vmatpush.msra.mxu0 0.0
        %7100 = vmatpush.msra.mxu0 0.0
        %7101 = vmatpush.msra.mxu0 0.0
        %7102 = vmatpush.msra.mxu0 0.0
        %7103 = vmatpush.msra.mxu0 0.0
        %7104 = vmatpush.msra.mxu0 0.0
        %7105 = vmatpush.msra.mxu0 0.0
        %v7106 = vand.u32 %v212, 4294901760
        %7107 = vmatpush.msra.mxu0 %v7106
        %v7108 = vand.u32 %v211, 4294901760
        %7109 = vmatpush.msra.mxu0 %v7108
        %v7110 = vand.u32 %v7006, 4294901760
        %v7111 = vsub.f32 %v7006, %v7110
        %v7112 = vand.u32 %v7111, 4294901760
        %7113 = vmatmul.f32.gmra.mxu0 %v7112
        %v7114 = vpop.f32.mrf.mxu0
        %v7115 = vadd.f32 %v7090, %v7114
        %7116 = vdwg.mxu0
        %7117 = vmatpush.msra.mxu0 0.0
        %7118 = vmatpush.msra.mxu0 0.0
        %7119 = vmatpush.msra.mxu0 0.0
        %7120 = vmatpush.msra.mxu0 0.0
        %7121 = vmatpush.msra.mxu0 0.0
        %7122 = vmatpush.msra.mxu0 0.0
        %7123 = vmatpush.msra.mxu0 0.0
        %7124 = vmatpush.msra.mxu0 0.0
        %7125 = vmatpush.msra.mxu0 0.0
        %7126 = vmatpush.msra.mxu0 0.0
        %7127 = vmatpush.msra.mxu0 0.0
        %7128 = vmatpush.msra.mxu0 0.0
        %7129 = vmatpush.msra.mxu0 0.0
        %7130 = vmatpush.msra.mxu0 0.0
        %v7131 = vand.u32 %v212, 4294901760
        %v7132 = vsub.f32 %v212, %v7131
        %v7133 = vand.u32 %v7132, 4294901760
        %7134 = vmatpush.msra.mxu0 %v7133
        %v7135 = vand.u32 %v211, 4294901760
        %v7136 = vsub.f32 %v211, %v7135
        %v7137 = vand.u32 %v7136, 4294901760
        %7138 = vmatpush.msra.mxu0 %v7137
        %v7139 = vand.u32 %v7006, 4294901760
        %7140 = vmatmul.f32.gmra.mxu0 %v7139
        %v7141 = vpop.f32.mrf.mxu0
        %v7142 = vadd.f32 %v7115, %v7141
        %7143 = vdwg.mxu0
        %7144 = vmatpush.msra.mxu0 0.0
        %7145 = vmatpush.msra.mxu0 0.0
        %7146 = vmatpush.msra.mxu0 0.0
        %7147 = vmatpush.msra.mxu0 0.0
        %7148 = vmatpush.msra.mxu0 0.0
        %7149 = vmatpush.msra.mxu0 0.0
        %7150 = vmatpush.msra.mxu0 0.0
        %7151 = vmatpush.msra.mxu0 0.0
        %7152 = vmatpush.msra.mxu0 0.0
        %7153 = vmatpush.msra.mxu0 0.0
        %7154 = vmatpush.msra.mxu0 0.0
        %7155 = vmatpush.msra.mxu0 0.0
        %7156 = vmatpush.msra.mxu0 0.0
        %7157 = vmatpush.msra.mxu0 0.0
        %v7158 = vand.u32 %v212, 4294901760
        %7159 = vmatpush.msra.mxu0 %v7158
        %v7160 = vand.u32 %v211, 4294901760
        %7161 = vmatpush.msra.mxu0 %v7160
        %v7162 = vand.u32 %v7006, 4294901760
        %7163 = vmatmul.f32.gmra.mxu0 %v7162
        %v7164 = vpop.f32.mrf.mxu0
        %v7165 = vadd.f32 %v7142, %v7164
        %7166 = vdwg.mxu0
        %v7168 = vsel %vm485, %v6991, 0
        %7170 = vmatpush.msra.mxu0 0.0
        %7171 = vmatpush.msra.mxu0 0.0
        %7172 = vmatpush.msra.mxu0 0.0
        %7173 = vmatpush.msra.mxu0 0.0
        %7174 = vmatpush.msra.mxu0 0.0
        %7175 = vmatpush.msra.mxu0 0.0
        %7176 = vmatpush.msra.mxu0 0.0
        %7177 = vmatpush.msra.mxu0 0.0
        %7178 = vmatpush.msra.mxu0 0.0
        %7179 = vmatpush.msra.mxu0 0.0
        %7180 = vmatpush.msra.mxu0 0.0
        %7181 = vmatpush.msra.mxu0 0.0
        %7182 = vmatpush.msra.mxu0 0.0
        %7183 = vmatpush.msra.mxu0 0.0
        %v7184 = vand.u32 %v209, 4294901760
        %7185 = vmatpush.msra.mxu0 %v7184
        %v7186 = vand.u32 %v208, 4294901760
        %7187 = vmatpush.msra.mxu0 %v7186
        %v7188 = vand.u32 %v7168, 4294901760
        %v7189 = vsub.f32 %v7168, %v7188
        %v7190 = vand.u32 %v7189, 4294901760
        %v7191 = vsub.f32 %v7189, %v7190
        %v7192 = vand.u32 %v7191, 4294901760
        %7193 = vmatmul.f32.gmra.mxu0 %v7192
        %v7194 = vpop.f32.mrf.mxu0
        %v7195 = vadd.f32 %v7165, %v7194
        %7196 = vdwg.mxu0
        %7197 = vmatpush.msra.mxu0 0.0
        %7198 = vmatpush.msra.mxu0 0.0
        %7199 = vmatpush.msra.mxu0 0.0
        %7200 = vmatpush.msra.mxu0 0.0
        %7201 = vmatpush.msra.mxu0 0.0
        %7202 = vmatpush.msra.mxu0 0.0
        %7203 = vmatpush.msra.mxu0 0.0
        %7204 = vmatpush.msra.mxu0 0.0
        %7205 = vmatpush.msra.mxu0 0.0
        %7206 = vmatpush.msra.mxu0 0.0
        %7207 = vmatpush.msra.mxu0 0.0
        %7208 = vmatpush.msra.mxu0 0.0
        %7209 = vmatpush.msra.mxu0 0.0
        %7210 = vmatpush.msra.mxu0 0.0
        %v7211 = vand.u32 %v209, 4294901760
        %v7212 = vsub.f32 %v209, %v7211
        %v7213 = vand.u32 %v7212, 4294901760
        %v7214 = vsub.f32 %v7212, %v7213
        %v7215 = vand.u32 %v7214, 4294901760
        %7216 = vmatpush.msra.mxu0 %v7215
        %v7217 = vand.u32 %v208, 4294901760
        %v7218 = vsub.f32 %v208, %v7217
        %v7219 = vand.u32 %v7218, 4294901760
        %v7220 = vsub.f32 %v7218, %v7219
        %v7221 = vand.u32 %v7220, 4294901760
        %7222 = vmatpush.msra.mxu0 %v7221
        %v7223 = vand.u32 %v7168, 4294901760
        %7224 = vmatmul.f32.gmra.mxu0 %v7223
        %v7225 = vpop.f32.mrf.mxu0
        %v7226 = vadd.f32 %v7195, %v7225
        %7227 = vdwg.mxu0
        %7228 = vmatpush.msra.mxu0 0.0
        %7229 = vmatpush.msra.mxu0 0.0
        %7230 = vmatpush.msra.mxu0 0.0
        %7231 = vmatpush.msra.mxu0 0.0
        %7232 = vmatpush.msra.mxu0 0.0
        %7233 = vmatpush.msra.mxu0 0.0
        %7234 = vmatpush.msra.mxu0 0.0
        %7235 = vmatpush.msra.mxu0 0.0
        %7236 = vmatpush.msra.mxu0 0.0
        %7237 = vmatpush.msra.mxu0 0.0
        %7238 = vmatpush.msra.mxu0 0.0
        %7239 = vmatpush.msra.mxu0 0.0
        %7240 = vmatpush.msra.mxu0 0.0
        %7241 = vmatpush.msra.mxu0 0.0
        %v7242 = vand.u32 %v209, 4294901760
        %v7243 = vsub.f32 %v209, %v7242
        %7244 = vmatpush.msra.mxu0 %v7243
        %v7245 = vand.u32 %v208, 4294901760
        %v7246 = vsub.f32 %v208, %v7245
        %7247 = vmatpush.msra.mxu0 %v7246
        %v7248 = vand.u32 %v7168, 4294901760
        %v7249 = vsub.f32 %v7168, %v7248
        %7250 = vmatmul.f32.gmra.mxu0 %v7249
        %v7251 = vpop.f32.mrf.mxu0
        %v7252 = vadd.f32 %v7226, %v7251
        %7253 = vdwg.mxu0
        %7254 = vmatpush.msra.mxu0 0.0
        %7255 = vmatpush.msra.mxu0 0.0
        %7256 = vmatpush.msra.mxu0 0.0
        %7257 = vmatpush.msra.mxu0 0.0
        %7258 = vmatpush.msra.mxu0 0.0
        %7259 = vmatpush.msra.mxu0 0.0
        %7260 = vmatpush.msra.mxu0 0.0
        %7261 = vmatpush.msra.mxu0 0.0
        %7262 = vmatpush.msra.mxu0 0.0
        %7263 = vmatpush.msra.mxu0 0.0
        %7264 = vmatpush.msra.mxu0 0.0
        %7265 = vmatpush.msra.mxu0 0.0
        %7266 = vmatpush.msra.mxu0 0.0
        %7267 = vmatpush.msra.mxu0 0.0
        %v7268 = vand.u32 %v209, 4294901760
        %7269 = vmatpush.msra.mxu0 %v7268
        %v7270 = vand.u32 %v208, 4294901760
        %7271 = vmatpush.msra.mxu0 %v7270
        %v7272 = vand.u32 %v7168, 4294901760
        %v7273 = vsub.f32 %v7168, %v7272
        %v7274 = vand.u32 %v7273, 4294901760
        %7275 = vmatmul.f32.gmra.mxu0 %v7274
        %v7276 = vpop.f32.mrf.mxu0
        %v7277 = vadd.f32 %v7252, %v7276
        %7278 = vdwg.mxu0
        %7279 = vmatpush.msra.mxu0 0.0
        %7280 = vmatpush.msra.mxu0 0.0
        %7281 = vmatpush.msra.mxu0 0.0
        %7282 = vmatpush.msra.mxu0 0.0
        %7283 = vmatpush.msra.mxu0 0.0
        %7284 = vmatpush.msra.mxu0 0.0
        %7285 = vmatpush.msra.mxu0 0.0
        %7286 = vmatpush.msra.mxu0 0.0
        %7287 = vmatpush.msra.mxu0 0.0
        %7288 = vmatpush.msra.mxu0 0.0
        %7289 = vmatpush.msra.mxu0 0.0
        %7290 = vmatpush.msra.mxu0 0.0
        %7291 = vmatpush.msra.mxu0 0.0
        %7292 = vmatpush.msra.mxu0 0.0
        %v7293 = vand.u32 %v209, 4294901760
        %v7294 = vsub.f32 %v209, %v7293
        %v7295 = vand.u32 %v7294, 4294901760
        %7296 = vmatpush.msra.mxu0 %v7295
        %v7297 = vand.u32 %v208, 4294901760
        %v7298 = vsub.f32 %v208, %v7297
        %v7299 = vand.u32 %v7298, 4294901760
        %7300 = vmatpush.msra.mxu0 %v7299
        %v7301 = vand.u32 %v7168, 4294901760
        %7302 = vmatmul.f32.gmra.mxu0 %v7301
        %v7303 = vpop.f32.mrf.mxu0
        %v7304 = vadd.f32 %v7277, %v7303
        %7305 = vdwg.mxu0
        %7306 = vmatpush.msra.mxu0 0.0
        %7307 = vmatpush.msra.mxu0 0.0
        %7308 = vmatpush.msra.mxu0 0.0
        %7309 = vmatpush.msra.mxu0 0.0
        %7310 = vmatpush.msra.mxu0 0.0
        %7311 = vmatpush.msra.mxu0 0.0
        %7312 = vmatpush.msra.mxu0 0.0
        %7313 = vmatpush.msra.mxu0 0.0
        %7314 = vmatpush.msra.mxu0 0.0
        %7315 = vmatpush.msra.mxu0 0.0
        %7316 = vmatpush.msra.mxu0 0.0
        %7317 = vmatpush.msra.mxu0 0.0
        %7318 = vmatpush.msra.mxu0 0.0
        %7319 = vmatpush.msra.mxu0 0.0
        %v7320 = vand.u32 %v209, 4294901760
        %7321 = vmatpush.msra.mxu0 %v7320
        %v7322 = vand.u32 %v208, 4294901760
        %7323 = vmatpush.msra.mxu0 %v7322
        %v7324 = vand.u32 %v7168, 4294901760
        %7325 = vmatmul.f32.gmra.mxu0 %v7324
        %v7326 = vpop.f32.mrf.mxu0
        %v7327 = vadd.f32 %v7304, %v7326
        %7328 = vdwg.mxu0
        %v7330 = vsel %vm485, %v7003, 0
        %7332 = vmatpush.msra.mxu0 0.0
        %7333 = vmatpush.msra.mxu0 0.0
        %7334 = vmatpush.msra.mxu0 0.0
        %7335 = vmatpush.msra.mxu0 0.0
        %7336 = vmatpush.msra.mxu0 0.0
        %7337 = vmatpush.msra.mxu0 0.0
        %7338 = vmatpush.msra.mxu0 0.0
        %7339 = vmatpush.msra.mxu0 0.0
        %7340 = vmatpush.msra.mxu0 0.0
        %7341 = vmatpush.msra.mxu0 0.0
        %7342 = vmatpush.msra.mxu0 0.0
        %7343 = vmatpush.msra.mxu0 0.0
        %7344 = vmatpush.msra.mxu0 0.0
        %7345 = vmatpush.msra.mxu0 0.0
        %v7346 = vand.u32 %v212, 4294901760
        %7347 = vmatpush.msra.mxu0 %v7346
        %v7348 = vand.u32 %v211, 4294901760
        %7349 = vmatpush.msra.mxu0 %v7348
        %v7350 = vand.u32 %v7330, 4294901760
        %v7351 = vsub.f32 %v7330, %v7350
        %v7352 = vand.u32 %v7351, 4294901760
        %v7353 = vsub.f32 %v7351, %v7352
        %v7354 = vand.u32 %v7353, 4294901760
        %7355 = vmatmul.f32.gmra.mxu0 %v7354
        %v7356 = vpop.f32.mrf.mxu0
        %v7357 = vadd.f32 0.0, %v7356
        %7358 = vdwg.mxu0
        %7359 = vmatpush.msra.mxu0 0.0
        %7360 = vmatpush.msra.mxu0 0.0
        %7361 = vmatpush.msra.mxu0 0.0
        %7362 = vmatpush.msra.mxu0 0.0
        %7363 = vmatpush.msra.mxu0 0.0
        %7364 = vmatpush.msra.mxu0 0.0
        %7365 = vmatpush.msra.mxu0 0.0
        %7366 = vmatpush.msra.mxu0 0.0
        %7367 = vmatpush.msra.mxu0 0.0
        %7368 = vmatpush.msra.mxu0 0.0
        %7369 = vmatpush.msra.mxu0 0.0
        %7370 = vmatpush.msra.mxu0 0.0
        %7371 = vmatpush.msra.mxu0 0.0
        %7372 = vmatpush.msra.mxu0 0.0
        %v7373 = vand.u32 %v212, 4294901760
        %v7374 = vsub.f32 %v212, %v7373
        %v7375 = vand.u32 %v7374, 4294901760
        %v7376 = vsub.f32 %v7374, %v7375
        %v7377 = vand.u32 %v7376, 4294901760
        %7378 = vmatpush.msra.mxu0 %v7377
        %v7379 = vand.u32 %v211, 4294901760
        %v7380 = vsub.f32 %v211, %v7379
        %v7381 = vand.u32 %v7380, 4294901760
        %v7382 = vsub.f32 %v7380, %v7381
        %v7383 = vand.u32 %v7382, 4294901760
        %7384 = vmatpush.msra.mxu0 %v7383
        %v7385 = vand.u32 %v7330, 4294901760
        %7386 = vmatmul.f32.gmra.mxu0 %v7385
        %v7387 = vpop.f32.mrf.mxu0
        %v7388 = vadd.f32 %v7357, %v7387
        %7389 = vdwg.mxu0
        %7390 = vmatpush.msra.mxu0 0.0
        %7391 = vmatpush.msra.mxu0 0.0
        %7392 = vmatpush.msra.mxu0 0.0
        %7393 = vmatpush.msra.mxu0 0.0
        %7394 = vmatpush.msra.mxu0 0.0
        %7395 = vmatpush.msra.mxu0 0.0
        %7396 = vmatpush.msra.mxu0 0.0
        %7397 = vmatpush.msra.mxu0 0.0
        %7398 = vmatpush.msra.mxu0 0.0
        %7399 = vmatpush.msra.mxu0 0.0
        %7400 = vmatpush.msra.mxu0 0.0
        %7401 = vmatpush.msra.mxu0 0.0
        %7402 = vmatpush.msra.mxu0 0.0
        %7403 = vmatpush.msra.mxu0 0.0
        %v7404 = vand.u32 %v212, 4294901760
        %v7405 = vsub.f32 %v212, %v7404
        %7406 = vmatpush.msra.mxu0 %v7405
        %v7407 = vand.u32 %v211, 4294901760
        %v7408 = vsub.f32 %v211, %v7407
        %7409 = vmatpush.msra.mxu0 %v7408
        %v7410 = vand.u32 %v7330, 4294901760
        %v7411 = vsub.f32 %v7330, %v7410
        %7412 = vmatmul.f32.gmra.mxu0 %v7411
        %v7413 = vpop.f32.mrf.mxu0
        %v7414 = vadd.f32 %v7388, %v7413
        %7415 = vdwg.mxu0
        %7416 = vmatpush.msra.mxu0 0.0
        %7417 = vmatpush.msra.mxu0 0.0
        %7418 = vmatpush.msra.mxu0 0.0
        %7419 = vmatpush.msra.mxu0 0.0
        %7420 = vmatpush.msra.mxu0 0.0
        %7421 = vmatpush.msra.mxu0 0.0
        %7422 = vmatpush.msra.mxu0 0.0
        %7423 = vmatpush.msra.mxu0 0.0
        %7424 = vmatpush.msra.mxu0 0.0
        %7425 = vmatpush.msra.mxu0 0.0
        %7426 = vmatpush.msra.mxu0 0.0
        %7427 = vmatpush.msra.mxu0 0.0
        %7428 = vmatpush.msra.mxu0 0.0
        %7429 = vmatpush.msra.mxu0 0.0
        %v7430 = vand.u32 %v212, 4294901760
        %7431 = vmatpush.msra.mxu0 %v7430
        %v7432 = vand.u32 %v211, 4294901760
        %7433 = vmatpush.msra.mxu0 %v7432
        %v7434 = vand.u32 %v7330, 4294901760
        %v7435 = vsub.f32 %v7330, %v7434
        %v7436 = vand.u32 %v7435, 4294901760
        %7437 = vmatmul.f32.gmra.mxu0 %v7436
        %v7438 = vpop.f32.mrf.mxu0
        %v7439 = vadd.f32 %v7414, %v7438
        %7440 = vdwg.mxu0
        %7441 = vmatpush.msra.mxu0 0.0
        %7442 = vmatpush.msra.mxu0 0.0
        %7443 = vmatpush.msra.mxu0 0.0
        %7444 = vmatpush.msra.mxu0 0.0
        %7445 = vmatpush.msra.mxu0 0.0
        %7446 = vmatpush.msra.mxu0 0.0
        %7447 = vmatpush.msra.mxu0 0.0
        %7448 = vmatpush.msra.mxu0 0.0
        %7449 = vmatpush.msra.mxu0 0.0
        %7450 = vmatpush.msra.mxu0 0.0
        %7451 = vmatpush.msra.mxu0 0.0
        %7452 = vmatpush.msra.mxu0 0.0
        %7453 = vmatpush.msra.mxu0 0.0
        %7454 = vmatpush.msra.mxu0 0.0
        %v7455 = vand.u32 %v212, 4294901760
        %v7456 = vsub.f32 %v212, %v7455
        %v7457 = vand.u32 %v7456, 4294901760
        %7458 = vmatpush.msra.mxu0 %v7457
        %v7459 = vand.u32 %v211, 4294901760
        %v7460 = vsub.f32 %v211, %v7459
        %v7461 = vand.u32 %v7460, 4294901760
        %7462 = vmatpush.msra.mxu0 %v7461
        %v7463 = vand.u32 %v7330, 4294901760
        %7464 = vmatmul.f32.gmra.mxu0 %v7463
        %v7465 = vpop.f32.mrf.mxu0
        %v7466 = vadd.f32 %v7439, %v7465
        %7467 = vdwg.mxu0
        %7468 = vmatpush.msra.mxu0 0.0
        %7469 = vmatpush.msra.mxu0 0.0
        %7470 = vmatpush.msra.mxu0 0.0
        %7471 = vmatpush.msra.mxu0 0.0
        %7472 = vmatpush.msra.mxu0 0.0
        %7473 = vmatpush.msra.mxu0 0.0
        %7474 = vmatpush.msra.mxu0 0.0
        %7475 = vmatpush.msra.mxu0 0.0
        %7476 = vmatpush.msra.mxu0 0.0
        %7477 = vmatpush.msra.mxu0 0.0
        %7478 = vmatpush.msra.mxu0 0.0
        %7479 = vmatpush.msra.mxu0 0.0
        %7480 = vmatpush.msra.mxu0 0.0
        %7481 = vmatpush.msra.mxu0 0.0
        %v7482 = vand.u32 %v212, 4294901760
        %7483 = vmatpush.msra.mxu0 %v7482
        %v7484 = vand.u32 %v211, 4294901760
        %7485 = vmatpush.msra.mxu0 %v7484
        %v7486 = vand.u32 %v7330, 4294901760
        %7487 = vmatmul.f32.gmra.mxu0 %v7486
        %v7488 = vpop.f32.mrf.mxu0
        %v7489 = vadd.f32 %v7466, %v7488
        %7490 = vdwg.mxu0
        %v7492 = vsel %vm485, %v6999, 0
        %7494 = vmatpush.msra.mxu0 0.0
        %7495 = vmatpush.msra.mxu0 0.0
        %7496 = vmatpush.msra.mxu0 0.0
        %7497 = vmatpush.msra.mxu0 0.0
        %7498 = vmatpush.msra.mxu0 0.0
        %7499 = vmatpush.msra.mxu0 0.0
        %7500 = vmatpush.msra.mxu0 0.0
        %7501 = vmatpush.msra.mxu0 0.0
        %7502 = vmatpush.msra.mxu0 0.0
        %7503 = vmatpush.msra.mxu0 0.0
        %7504 = vmatpush.msra.mxu0 0.0
        %7505 = vmatpush.msra.mxu0 0.0
        %7506 = vmatpush.msra.mxu0 0.0
        %7507 = vmatpush.msra.mxu0 0.0
        %v7508 = vand.u32 %v209, 4294901760
        %7509 = vmatpush.msra.mxu0 %v7508
        %v7510 = vand.u32 %v208, 4294901760
        %7511 = vmatpush.msra.mxu0 %v7510
        %v7512 = vand.u32 %v7492, 4294901760
        %v7513 = vsub.f32 %v7492, %v7512
        %v7514 = vand.u32 %v7513, 4294901760
        %v7515 = vsub.f32 %v7513, %v7514
        %v7516 = vand.u32 %v7515, 4294901760
        %7517 = vmatmul.f32.gmra.mxu0 %v7516
        %v7518 = vpop.f32.mrf.mxu0
        %v7519 = vadd.f32 %v7489, %v7518
        %7520 = vdwg.mxu0
        %7521 = vmatpush.msra.mxu0 0.0
        %7522 = vmatpush.msra.mxu0 0.0
        %7523 = vmatpush.msra.mxu0 0.0
        %7524 = vmatpush.msra.mxu0 0.0
        %7525 = vmatpush.msra.mxu0 0.0
        %7526 = vmatpush.msra.mxu0 0.0
        %7527 = vmatpush.msra.mxu0 0.0
        %7528 = vmatpush.msra.mxu0 0.0
        %7529 = vmatpush.msra.mxu0 0.0
        %7530 = vmatpush.msra.mxu0 0.0
        %7531 = vmatpush.msra.mxu0 0.0
        %7532 = vmatpush.msra.mxu0 0.0
        %7533 = vmatpush.msra.mxu0 0.0
        %7534 = vmatpush.msra.mxu0 0.0
        %v7535 = vand.u32 %v209, 4294901760
        %v7536 = vsub.f32 %v209, %v7535
        %v7537 = vand.u32 %v7536, 4294901760
        %v7538 = vsub.f32 %v7536, %v7537
        %v7539 = vand.u32 %v7538, 4294901760
        %7540 = vmatpush.msra.mxu0 %v7539
        %v7541 = vand.u32 %v208, 4294901760
        %v7542 = vsub.f32 %v208, %v7541
        %v7543 = vand.u32 %v7542, 4294901760
        %v7544 = vsub.f32 %v7542, %v7543
        %v7545 = vand.u32 %v7544, 4294901760
        %7546 = vmatpush.msra.mxu0 %v7545
        %v7547 = vand.u32 %v7492, 4294901760
        %7548 = vmatmul.f32.gmra.mxu0 %v7547
        %v7549 = vpop.f32.mrf.mxu0
        %v7550 = vadd.f32 %v7519, %v7549
        %7551 = vdwg.mxu0
        %7552 = vmatpush.msra.mxu0 0.0
        %7553 = vmatpush.msra.mxu0 0.0
        %7554 = vmatpush.msra.mxu0 0.0
        %7555 = vmatpush.msra.mxu0 0.0
        %7556 = vmatpush.msra.mxu0 0.0
        %7557 = vmatpush.msra.mxu0 0.0
        %7558 = vmatpush.msra.mxu0 0.0
        %7559 = vmatpush.msra.mxu0 0.0
        %7560 = vmatpush.msra.mxu0 0.0
        %7561 = vmatpush.msra.mxu0 0.0
        %7562 = vmatpush.msra.mxu0 0.0
        %7563 = vmatpush.msra.mxu0 0.0
        %7564 = vmatpush.msra.mxu0 0.0
        %7565 = vmatpush.msra.mxu0 0.0
        %v7566 = vand.u32 %v209, 4294901760
        %v7567 = vsub.f32 %v209, %v7566
        %7568 = vmatpush.msra.mxu0 %v7567
        %v7569 = vand.u32 %v208, 4294901760
        %v7570 = vsub.f32 %v208, %v7569
        %7571 = vmatpush.msra.mxu0 %v7570
        %v7572 = vand.u32 %v7492, 4294901760
        %v7573 = vsub.f32 %v7492, %v7572
        %7574 = vmatmul.f32.gmra.mxu0 %v7573
        %v7575 = vpop.f32.mrf.mxu0
        %v7576 = vadd.f32 %v7550, %v7575
        %7577 = vdwg.mxu0
        %7578 = vmatpush.msra.mxu0 0.0
        %7579 = vmatpush.msra.mxu0 0.0
        %7580 = vmatpush.msra.mxu0 0.0
        %7581 = vmatpush.msra.mxu0 0.0
        %7582 = vmatpush.msra.mxu0 0.0
        %7583 = vmatpush.msra.mxu0 0.0
        %7584 = vmatpush.msra.mxu0 0.0
        %7585 = vmatpush.msra.mxu0 0.0
        %7586 = vmatpush.msra.mxu0 0.0
        %7587 = vmatpush.msra.mxu0 0.0
        %7588 = vmatpush.msra.mxu0 0.0
        %7589 = vmatpush.msra.mxu0 0.0
        %7590 = vmatpush.msra.mxu0 0.0
        %7591 = vmatpush.msra.mxu0 0.0
        %v7592 = vand.u32 %v209, 4294901760
        %7593 = vmatpush.msra.mxu0 %v7592
        %v7594 = vand.u32 %v208, 4294901760
        %7595 = vmatpush.msra.mxu0 %v7594
        %v7596 = vand.u32 %v7492, 4294901760
        %v7597 = vsub.f32 %v7492, %v7596
        %v7598 = vand.u32 %v7597, 4294901760
        %7599 = vmatmul.f32.gmra.mxu0 %v7598
        %v7600 = vpop.f32.mrf.mxu0
        %v7601 = vadd.f32 %v7576, %v7600
        %7602 = vdwg.mxu0
        %7603 = vmatpush.msra.mxu0 0.0
        %7604 = vmatpush.msra.mxu0 0.0
        %7605 = vmatpush.msra.mxu0 0.0
        %7606 = vmatpush.msra.mxu0 0.0
        %7607 = vmatpush.msra.mxu0 0.0
        %7608 = vmatpush.msra.mxu0 0.0
        %7609 = vmatpush.msra.mxu0 0.0
        %7610 = vmatpush.msra.mxu0 0.0
        %7611 = vmatpush.msra.mxu0 0.0
        %7612 = vmatpush.msra.mxu0 0.0
        %7613 = vmatpush.msra.mxu0 0.0
        %7614 = vmatpush.msra.mxu0 0.0
        %7615 = vmatpush.msra.mxu0 0.0
        %7616 = vmatpush.msra.mxu0 0.0
        %v7617 = vand.u32 %v209, 4294901760
        %v7618 = vsub.f32 %v209, %v7617
        %v7619 = vand.u32 %v7618, 4294901760
        %7620 = vmatpush.msra.mxu0 %v7619
        %v7621 = vand.u32 %v208, 4294901760
        %v7622 = vsub.f32 %v208, %v7621
        %v7623 = vand.u32 %v7622, 4294901760
        %7624 = vmatpush.msra.mxu0 %v7623
        %v7625 = vand.u32 %v7492, 4294901760
        %7626 = vmatmul.f32.gmra.mxu0 %v7625
        %v7627 = vpop.f32.mrf.mxu0
        %v7628 = vadd.f32 %v7601, %v7627
        %7629 = vdwg.mxu0
        %7630 = vmatpush.msra.mxu0 0.0
        %7631 = vmatpush.msra.mxu0 0.0
        %7632 = vmatpush.msra.mxu0 0.0
        %7633 = vmatpush.msra.mxu0 0.0
        %7634 = vmatpush.msra.mxu0 0.0
        %7635 = vmatpush.msra.mxu0 0.0
        %7636 = vmatpush.msra.mxu0 0.0
        %7637 = vmatpush.msra.mxu0 0.0
        %7638 = vmatpush.msra.mxu0 0.0
        %7639 = vmatpush.msra.mxu0 0.0
        %7640 = vmatpush.msra.mxu0 0.0
        %7641 = vmatpush.msra.mxu0 0.0
        %7642 = vmatpush.msra.mxu0 0.0
        %7643 = vmatpush.msra.mxu0 0.0
        %v7644 = vand.u32 %v209, 4294901760
        %7645 = vmatpush.msra.mxu0 %v7644
        %v7646 = vand.u32 %v208, 4294901760
        %7647 = vmatpush.msra.mxu0 %v7646
        %v7648 = vand.u32 %v7492, 4294901760
        %7649 = vmatmul.f32.gmra.mxu0 %v7648
        %v7650 = vpop.f32.mrf.mxu0
        %v7651 = vadd.f32 %v7628, %v7650
        %7652 = vdwg.mxu0
        %7654 = vrot.lane.b32.xlu0 %v7651, 32
        %v7655 = vpop.permute.xlu0 %7654
        %v7657 = vsel %vm1138, %v7327, %v7655
        %v7659 = vrot.slane %v7657, 1
        %v7660 = vrot.slane %v7657, 2
        %v7661 = vrot.slane %v7657, 3
        %v7662 = vrot.slane %v7657, 4
        %v7663 = vrot.slane %v7657, 5
        %v7664 = vrot.slane %v7657, 6
        %v7665 = vrot.slane %v7657, 7
        %7673 = vst.msk [vmem:[%s203 + $0x7] sm:$0x1] %vm1155, %v7657
        %7674 = vst.msk [vmem:[%s203 + $0xf] sm:$0x1] %vm1155, %v7659
        %7675 = vst.msk [vmem:[%s203 + $0x17] sm:$0x1] %vm1155, %v7660
        %7676 = vst.msk [vmem:[%s203 + $0x1f] sm:$0x1] %vm1155, %v7661
        %7677 = vst.msk [vmem:[%s203 + $0x27] sm:$0x1] %vm1155, %v7662
        %7678 = vst.msk [vmem:[%s203 + $0x2f] sm:$0x1] %vm1155, %v7663
        %7679 = vst.msk [vmem:[%s203 + $0x37] sm:$0x1] %vm1155, %v7664
        %7680 = vst.msk [vmem:[%s203 + $0x3f] sm:$0x1] %vm1155, %v7665
        %s7681 = sand.u32 %s109, 1
        %s7682 = sand.u32 %s109, 1
        %s7683 = smul.addr %s7682, 64
        %s7684 = scalar_lea.vmem [#allocation4], %s7683
        // Predicated region
        $region37: #{upsample_block.1} parent=31 // pred_check
          %p7685 = pneg %p119
        $region38: #{upsample_block.1} parent=31 // pred_check_branch
          %7687 = sbr.rel (%p7685) target = $region40
        $region39: #{upsample_block.1} parent=31 // pred_region
          %s7688 = smul.addr %s21, 16
          %s7689 = sadd.s32 %s22, %s7688
          %s7690 = smul.addr %s7689, 8
          %s7691 = scalar_lea.vmem %s3, %s7690
          // Predicated region
          $region41: #{upsample_block.1} parent=39 // pred_check
            _
          $region42: #{upsample_block.1} parent=39 // pred_check_branch
            %7693 = sbr.rel (0) target = $region44
          $region43: #{upsample_block.1} parent=39 // pred_region
            // Predicated region
            $region45: #{upsample_block.1} parent=43 // pred_check
              _
            $region46: #{upsample_block.1} parent=43 // pred_check_branch
              %7695 = sbr.rel (0) target = $region48
            $region47: #{upsample_block.1} parent=43 // pred_region
              // Predicated region
              $region60: #{upsample_block.1} parent=47 // pred_check
                _
              $region61: #{upsample_block.1} parent=47 // pred_check_branch
                %7725 = sbr.rel (0) target = $region63
              $region62: #{upsample_block.1} parent=47 // pred_region
                loop: start=0, step=1, limit=1
                $region64: #{upsample_block.1} parent=62 // loop_pre_header
                  _
                $region65: #{upsample_block.1} parent=62 // loop_header
                  %s7727 = sphi 0, %s7731
                  %p7728 = scmp.ge.s32.totalorder %s7727, 1
                  %s7732 = sphi %s7684, %s7684
                  %s7733 = sphi %s7691, %s7691
                $region66: #{upsample_block.1} parent=62 // loop_header_branch
                  %7730 = sbr.rel (%p7728) target = $region70
                $region67: #{upsample_block.1} parent=62 // loop_body
                  %v7734 = vld [vmem:[%s7732] sm:$0xff]
                  %7735 = vst [vmem:[%s7733] sm:$0xff] %v7734
                  %v7736 = vld [vmem:[%s7732 + $0x8] sm:$0xff]
                  %7737 = vst [vmem:[%s7733 + $0x10] sm:$0xff] %v7736
                  %v7738 = vld [vmem:[%s7732 + $0x10] sm:$0xff]
                  %7739 = vst [vmem:[%s7733 + $0x20] sm:$0xff] %v7738
                  %v7740 = vld [vmem:[%s7732 + $0x18] sm:$0xff]
                  %7741 = vst [vmem:[%s7733 + $0x30] sm:$0xff] %v7740
                  %v7742 = vld [vmem:[%s7732 + $0x20] sm:$0xff]
                  %7743 = vst [vmem:[%s7733 + $0x40] sm:$0xff] %v7742
                  %v7744 = vld [vmem:[%s7732 + $0x28] sm:$0xff]
                  %7745 = vst [vmem:[%s7733 + $0x50] sm:$0xff] %v7744
                  %v7746 = vld [vmem:[%s7732 + $0x30] sm:$0xff]
                  %7747 = vst [vmem:[%s7733 + $0x60] sm:$0xff] %v7746
                  %v7748 = vld [vmem:[%s7732 + $0x38] sm:$0xff]
                  %7749 = vst [vmem:[%s7733 + $0x70] sm:$0xff] %v7748
                $region68: #{upsample_block.1} parent=62 // loop_footer
                  %s7731 = sadd.s32 1, %s7727
                $region69: #{upsample_block.1} parent=62 // loop_footer_branch
                  %7726 = sbr.rel target = $region65
                $region70: #{upsample_block.1} parent=62 // loop_exit
                  _
              $region63: #{upsample_block.1} parent=47 // pred_fallthru
                _
              // Predicated region
              $region71: #{upsample_block.1} parent=47 // pred_check
                _
              $region72: #{upsample_block.1} parent=47 // pred_check_branch
                %7751 = sbr.rel target = $region74
              $region73: #{upsample_block.1} parent=47 // pred_region
                _
              $region74: #{upsample_block.1} parent=47 // pred_fallthru
                _
            $region48: #{upsample_block.1} parent=43 // pred_fallthru
              _
            // Predicated region
            $region49: #{upsample_block.1} parent=43 // pred_check
              _
            $region50: #{upsample_block.1} parent=43 // pred_check_branch
              %7697 = sbr.rel target = $region52
            $region51: #{upsample_block.1} parent=43 // pred_region
              %s7699 = ssub.s32 256, 1
              loop: start=0, step=1, limit=1
              $region53: #{upsample_block.1} parent=51 // loop_pre_header
                _
              $region54: #{upsample_block.1} parent=51 // loop_header
                %s7701 = sphi 0, %s7705
                %p7702 = scmp.ge.s32.totalorder %s7701, 1
                %s7706 = sphi %s7684, %s7684
                %s7707 = sphi %s7691, %s7691
              $region55: #{upsample_block.1} parent=51 // loop_header_branch
                %7704 = sbr.rel (%p7702) target = $region59
              $region56: #{upsample_block.1} parent=51 // loop_body
                %v7708 = vld [vmem:[%s7706] sm:%s7699]
                %7709 = vst [vmem:[%s7707] sm:%s7699] %v7708
                %v7710 = vld [vmem:[%s7706 + $0x8] sm:%s7699]
                %7711 = vst [vmem:[%s7707 + $0x10] sm:%s7699] %v7710
                %v7712 = vld [vmem:[%s7706 + $0x10] sm:%s7699]
                %7713 = vst [vmem:[%s7707 + $0x20] sm:%s7699] %v7712
                %v7714 = vld [vmem:[%s7706 + $0x18] sm:%s7699]
                %7715 = vst [vmem:[%s7707 + $0x30] sm:%s7699] %v7714
                %v7716 = vld [vmem:[%s7706 + $0x20] sm:%s7699]
                %7717 = vst [vmem:[%s7707 + $0x40] sm:%s7699] %v7716
                %v7718 = vld [vmem:[%s7706 + $0x28] sm:%s7699]
                %7719 = vst [vmem:[%s7707 + $0x50] sm:%s7699] %v7718
                %v7720 = vld [vmem:[%s7706 + $0x30] sm:%s7699]
                %7721 = vst [vmem:[%s7707 + $0x60] sm:%s7699] %v7720
                %v7722 = vld [vmem:[%s7706 + $0x38] sm:%s7699]
                %7723 = vst [vmem:[%s7707 + $0x70] sm:%s7699] %v7722
              $region57: #{upsample_block.1} parent=51 // loop_footer
                %s7705 = sadd.s32 1, %s7701
              $region58: #{upsample_block.1} parent=51 // loop_footer_branch
                %7700 = sbr.rel target = $region54
              $region59: #{upsample_block.1} parent=51 // loop_exit
                _
            $region52: #{upsample_block.1} parent=43 // pred_fallthru
              _
          $region44: #{upsample_block.1} parent=39 // pred_fallthru
            _
          %7752 = vnop
        $region40: #{upsample_block.1} parent=31 // pred_fallthru
          _
      $region32: #{upsample_block.1} parent=5 // pred_fallthru
        _
      %p7753 = scmp.le.s32.totalorder 2, %s12
      // Predicated region
      $region75: #{upsample_block.1} parent=5 // pred_check
        %p7754 = pneg %p7753
      $region76: #{upsample_block.1} parent=5 // pred_check_branch
        %7756 = sbr.rel (%p7754) target = $region78
      $region77: #{upsample_block.1} parent=5 // pred_region
        %s7757 = ssub.s32 %s12, 2
        // Predicated region
        $region79: #{upsample_block.1} parent=77 // pred_check
          %p7758 = pneg %p125
        $region80: #{upsample_block.1} parent=77 // pred_check_branch
          %7760 = sbr.rel (%p7758) target = $region82
        $region81: #{upsample_block.1} parent=77 // pred_region
          %s7761 = sand.u32 %s110, 1
          %s7762 = sand.u32 %s110, 1
          %s7763 = smul.addr %s7762, 64
          %s7764 = scalar_lea.vmem [#allocation4], %s7763
        $region82: #{upsample_block.1} parent=77 // pred_fallthru
          _
      $region78: #{upsample_block.1} parent=5 // pred_fallthru
        _
    $region6: #{upsample_block.1} parent=1 // loop_footer
      %s16 = sadd.s32 1, %s12
    $region7: #{upsample_block.1} parent=1 // loop_footer_branch
      %11 = sbr.rel target = $region3
    $region8: #{upsample_block.1} parent=1 // loop_exit
      _
    %7765 = vsyncpa [#allocation3], 1
    %s7766 = scalar_lea.sflag [#allocation3], 1
    %7767 = vsyncpa %s7766, 1

</llo_original>
